<compile_context>
chip_gen: v7x
topology: tpu7x:2x2x1
jax: 0.10.0
libtpu: 0.0.40
codegen_flags: <defaults>
</compile_context>

<pallas_src>
import jax
import jax.numpy as jnp
from jax.experimental import pallas as pl
from jax.experimental.pallas import tpu as pltpu

# ----- module hyper-parameters (defaults of Seq2SeqGRU, shrunk to small sizes) -----
VOCAB_SIZE = 32
EMBEDDING_SIZE = 16
HIDDEN_SIZE = 32
BATCH_SIZE = 2
SEQ_LEN = 8
NUM_LAYERS = 1
ENCODER_BIDIRECTIONAL = True
DROPOUT_RATE = 0.1           # identity in forward/eval
TEACHER_FORCING_RATIO = 0.5  # unused when target is None


# ---------------------------------------------------------------- small helpers
def _log_softmax(x):
    m = jnp.max(x, axis=-1, keepdims=True)
    return x - m - jnp.log(jnp.sum(jnp.exp(x - m), axis=-1, keepdims=True))


def _greedy_onehot(logits, col):
    """One-hot of first argmax along last axis (matches torch.argmax tie-break)."""
    V = logits.shape[-1]
    m = jnp.max(logits, axis=-1, keepdims=True)
    idx = jnp.min(jnp.where(logits >= m, col, V), axis=-1, keepdims=True)
    return (col == idx).astype(jnp.float32)


# ---------------------------------------------------------------- fused kernel
def seq2seq_kernel(
    x_ref,                                              # (T*B, E) encoder input, time-major flattened
    wih_f_ref, whh_f_ref, bih_f_ref, bhh_f_ref,         # encoder forward direction
    wih_b_ref, whh_b_ref, bih_b_ref, bhh_b_ref,         # encoder backward direction
    dec_emb_ref,                                        # (V, E) decoder embedding
    wih0_ref, whh0_ref, bih0_ref, bhh0_ref,             # decoder layer 0 (input = embedding)
    wih1_ref, whh1_ref, bih1_ref, bhh1_ref,             # decoder layer 1 (input = hidden)
    wout_ref, bout_ref,                                 # (H, V), (1, V)
    out_ref,                                            # (T, B, V) log-probabilities
):
    T, B, V = out_ref.shape
    H = whh_f_ref.shape[0]
    f32 = jnp.float32

    # ============================== encoder ==============================
    # Input projection hoisted out of the recurrence: a single (T*B,E)x(E,3H)
    # matmul per direction (no dependence on h); the serial chain per step is
    # only h @ W_hh + gate math.
    x2d = x_ref[...]
    gi_f = jnp.dot(x2d, wih_f_ref[...], preferred_element_type=f32) + bih_f_ref[...]
    gi_b = jnp.dot(x2d, wih_b_ref[...], preferred_element_type=f32) + bih_b_ref[...]

    whh_f, whh_b = whh_f_ref[...], whh_b_ref[...]
    bhh_f = jnp.broadcast_to(bhh_f_ref[...], (B, 3 * H))   # broadcasts hoisted out of the loop
    bhh_b = jnp.broadcast_to(bhh_b_ref[...], (B, 3 * H))

    def recur_step(gi, h, whh, bhh):
        """GRU step given precomputed input gates gi = x@W_ih + b_ih (torch order [r|z|n])."""
        gh = jnp.dot(h, whh, preferred_element_type=f32) + bhh
        r = jax.nn.sigmoid(gi[:, 0 * H:1 * H] + gh[:, 0 * H:1 * H])
        z = jax.nn.sigmoid(gi[:, 1 * H:2 * H] + gh[:, 1 * H:2 * H])
        n = jnp.tanh(gi[:, 2 * H:3 * H] + r * gh[:, 2 * H:3 * H])
        return (1.0 - z) * n + z * h

    hf = jnp.zeros((B, H), f32)
    hb = jnp.zeros((B, H), f32)
    # The two directions are independent: interleave them in one fully-unrolled
    # loop (T small & static) so their MXU/EUP latencies overlap.
    for i in range(T):
        j = T - 1 - i
        hf = recur_step(gi_f[i * B:(i + 1) * B], hf, whh_f, bhh_f)
        hb = recur_step(gi_b[j * B:(j + 1) * B], hb, whh_b, bhh_b)
    # NOTE: full (T,B,2H) encoder outputs are intentionally NOT materialized —
    # the plain (non-attention) decoder only consumes the final hidden states.

    # ============================== decoder ==============================
    # Layer-0 initial hidden = forward final hidden, layer-1 = backward final
    # hidden (matches torch.cat((h_fwd.unsqueeze(0), h_bwd.unsqueeze(0)), 0)).

    # Fold the decoder embedding into layer-0's input projection:
    #   E2G[v] = dec_emb[v] @ W_ih0 + b_ih0 ; one-hot row-select keeps the bias.
    e2g = jnp.dot(dec_emb_ref[...], wih0_ref[...], preferred_element_type=f32) + bih0_ref[...]

    # Pack each decoder layer's two gate matmuls into a single matmul:
    #   [x | h] @ [[Wx_rz, Wx_n, 0   ],
    #              [Wh_rz, 0,    Wh_n]]  ->  [ (gi+gh)_rz | gi_n | gh_n ]   (B, 4H)
    def pack_layer(wx, wh, bx, bh):
        dx = wx.shape[0]
        w_rz = jnp.concatenate([wx[:, :2 * H], wh[:, :2 * H]], axis=0)           # (dx+H, 2H)
        w_ni = jnp.concatenate([wx[:, 2 * H:], jnp.zeros((H, H), f32)], axis=0)  # (dx+H, H)
        w_nh = jnp.concatenate([jnp.zeros((dx, H), f32), wh[:, 2 * H:]], axis=0) # (dx+H, H)
        w_all = jnp.concatenate([w_rz, w_ni, w_nh], axis=1)                      # (dx+H, 4H)
        bias = jnp.concatenate([bx[:, :2 * H] + bh[:, :2 * H],
                                bx[:, 2 * H:], bh[:, 2 * H:]], axis=1)           # (1, 4H)
        return w_all, jnp.broadcast_to(bias, (B, 4 * H))

    zeros_b = jnp.zeros((1, 3 * H), f32)
    w0, b0 = pack_layer(e2g, whh0_ref[...], zeros_b, bhh0_ref[...])   # b_ih0 already inside e2g
    w1, b1 = pack_layer(wih1_ref[...], whh1_ref[...], bih1_ref[...], bhh1_ref[...])

    def packed_cell(x, h, w_all, bias):
        g = jnp.dot(jnp.concatenate([x, h], axis=1), w_all,
                    preferred_element_type=f32) + bias                 # (B, 4H), 128 lanes
        r = jax.nn.sigmoid(g[:, 0 * H:1 * H])
        z = jax.nn.sigmoid(g[:, 1 * H:2 * H])
        n = jnp.tanh(g[:, 2 * H:3 * H] + r * g[:, 3 * H:4 * H])
        return (1.0 - z) * n + z * h

    wout = wout_ref[...]
    bout = jnp.broadcast_to(bout_ref[...], (B, V))
    col = jax.lax.broadcasted_iota(jnp.int32, (B, V), 1)

    onehot = (col == 0).astype(f32)     # SOS token id 0 for every batch element
    h0, h1 = hf, hb
    # Greedy decode (decode length == encoder length), fully unrolled: the serial
    # chain per step is 3 matmuls (packed layer 0, packed layer 1, output proj).
    for t in range(T):
        h0 = packed_cell(onehot, h0, w0, b0)
        h1 = packed_cell(h0, h1, w1, b1)
        logits = jnp.dot(h1, wout, preferred_element_type=f32) + bout   # (B, V)
        out_ref[t] = _log_softmax(logits)
        onehot = _greedy_onehot(logits, col)


# ---------------------------------------------------------------- wrapper (glue)
@jax.jit
def seq2seq_gru_forward(params, input_ids):
    B, T = input_ids.shape
    H, V, E = HIDDEN_SIZE, VOCAB_SIZE, EMBEDDING_SIZE

    # Encoder embedding lookup (glue: gather), then time-major and flattened to
    # (T*B, E) so the kernel hoists the whole input projection into one matmul.
    x = jnp.take(params["enc_emb"], input_ids, axis=0)        # (B, T, E)
    x = jnp.transpose(x, (1, 0, 2)).reshape(T * B, E)         # (T*B, E)

    vmem = pl.BlockSpec(memory_space=pltpu.MemorySpace.VMEM)
    dec_out = pl.pallas_call(
        seq2seq_kernel,
        out_shape=jax.ShapeDtypeStruct((T, B, V), jnp.float32),
        in_specs=[vmem] * 20,
        out_specs=vmem,
    )(x,
      params["enc_wih_f"], params["enc_whh_f"], params["enc_bih_f"], params["enc_bhh_f"],
      params["enc_wih_b"], params["enc_whh_b"], params["enc_bih_b"], params["enc_bhh_b"],
      params["dec_emb"],
      params["dec_wih_0"], params["dec_whh_0"], params["dec_bih_0"], params["dec_bhh_0"],
      params["dec_wih_1"], params["dec_whh_1"], params["dec_bih_1"], params["dec_bhh_1"],
      params["w_out"], params["b_out"])

    return jnp.transpose(dec_out, (1, 0, 2))                  # (B, T, V) log-probs


# ---------------------------------------------------------------- parameter init
def init_params(key):
    H, E, V = HIDDEN_SIZE, EMBEDDING_SIZE, VOCAB_SIZE
    bound = 1.0 / (H ** 0.5)
    keys = iter(jax.random.split(key, 24))

    def u(shape):
        return jax.random.uniform(next(keys), shape, jnp.float32, -bound, bound)

    p = {}
    p["enc_emb"] = jax.random.normal(next(keys), (V, E), jnp.float32)
    p["dec_emb"] = jax.random.normal(next(keys), (V, E), jnp.float32)
    for d in ("f", "b"):                       # bidirectional encoder, 1 layer
        p[f"enc_wih_{d}"] = u((E, 3 * H))
        p[f"enc_whh_{d}"] = u((H, 3 * H))
        p[f"enc_bih_{d}"] = u((1, 3 * H))
        p[f"enc_bhh_{d}"] = u((1, 3 * H))
    p["dec_wih_0"] = u((E, 3 * H))             # decoder layer 0 (input = embedding)
    p["dec_whh_0"] = u((H, 3 * H))
    p["dec_bih_0"] = u((1, 3 * H))
    p["dec_bhh_0"] = u((1, 3 * H))
    p["dec_wih_1"] = u((H, 3 * H))             # decoder layer 1 (input = hidden)
    p["dec_whh_1"] = u((H, 3 * H))
    p["dec_bih_1"] = u((1, 3 * H))
    p["dec_bhh_1"] = u((1, 3 * H))
    p["w_out"] = u((H, V))                     # output projection
    p["b_out"] = u((1, V))
    return p


if __name__ == "__main__":
    key = jax.random.PRNGKey(0)
    pkey, dkey = jax.random.split(key)
    params = init_params(pkey)
    input_ids = jax.random.randint(dkey, (BATCH_SIZE, SEQ_LEN), 0, VOCAB_SIZE, dtype=jnp.int32)

    out = seq2seq_gru_forward(params, input_ids)
    out = jax.block_until_ready(out)
    assert out.shape == (BATCH_SIZE, SEQ_LEN, VOCAB_SIZE)
    assert bool(jnp.all(jnp.isfinite(out)))
    print("KERNEL_OK")
</pallas_src>

<mosaic_0001>
module attributes {stable_mosaic.version = 11 : i64} {
  func.func @seq2seq_kernel(%arg0: memref<16x16xf32, #tpu.memory_space<vmem>>, %arg1: memref<16x96xf32, #tpu.memory_space<vmem>>, %arg2: memref<32x96xf32, #tpu.memory_space<vmem>>, %arg3: memref<1x96xf32, #tpu.memory_space<vmem>>, %arg4: memref<1x96xf32, #tpu.memory_space<vmem>>, %arg5: memref<16x96xf32, #tpu.memory_space<vmem>>, %arg6: memref<32x96xf32, #tpu.memory_space<vmem>>, %arg7: memref<1x96xf32, #tpu.memory_space<vmem>>, %arg8: memref<1x96xf32, #tpu.memory_space<vmem>>, %arg9: memref<32x16xf32, #tpu.memory_space<vmem>>, %arg10: memref<16x96xf32, #tpu.memory_space<vmem>>, %arg11: memref<32x96xf32, #tpu.memory_space<vmem>>, %arg12: memref<1x96xf32, #tpu.memory_space<vmem>>, %arg13: memref<1x96xf32, #tpu.memory_space<vmem>>, %arg14: memref<32x96xf32, #tpu.memory_space<vmem>>, %arg15: memref<32x96xf32, #tpu.memory_space<vmem>>, %arg16: memref<1x96xf32, #tpu.memory_space<vmem>>, %arg17: memref<1x96xf32, #tpu.memory_space<vmem>>, %arg18: memref<32x32xf32, #tpu.memory_space<vmem>>, %arg19: memref<1x32xf32, #tpu.memory_space<vmem>>, %arg20: memref<8x2x32xf32, #tpu.memory_space<vmem>>) attributes {dimension_semantics = [], scalar_prefetch = 0 : i64, scratch_operands = 0 : i64, tpu.core_type = #tpu.core_type<tc>} {
    %c0 = arith.constant 0 : index
    %c0_0 = arith.constant 0 : index
    %0 = vector.load %arg0[%c0, %c0_0] : memref<16x16xf32, #tpu.memory_space<vmem>>, vector<16x16xf32>
    %c0_1 = arith.constant 0 : index
    %c0_2 = arith.constant 0 : index
    %1 = vector.load %arg1[%c0_1, %c0_2] : memref<16x96xf32, #tpu.memory_space<vmem>>, vector<16x96xf32>
    %cst = arith.constant dense<0.000000e+00> : vector<16x96xf32>
    %2 = tpu.matmul %0, %1, %cst {dimension_numbers = #tpu.dot_dimension_numbers<[1], [0], [0], [1], [0, 0, 1, 1], [], []>} : vector<16x16xf32>, vector<16x96xf32>, vector<16x96xf32> -> vector<16x96xf32>
    %c0_3 = arith.constant 0 : index
    %c0_4 = arith.constant 0 : index
    %3 = vector.load %arg3[%c0_3, %c0_4] : memref<1x96xf32, #tpu.memory_space<vmem>>, vector<1x96xf32>
    %4 = vector.broadcast %3 : vector<1x96xf32> to vector<16x96xf32>
    %5 = arith.addf %2, %4 : vector<16x96xf32>
    %c0_5 = arith.constant 0 : index
    %c0_6 = arith.constant 0 : index
    %6 = vector.load %arg5[%c0_5, %c0_6] : memref<16x96xf32, #tpu.memory_space<vmem>>, vector<16x96xf32>
    %cst_7 = arith.constant dense<0.000000e+00> : vector<16x96xf32>
    %7 = tpu.matmul %0, %6, %cst_7 {dimension_numbers = #tpu.dot_dimension_numbers<[1], [0], [0], [1], [0, 0, 1, 1], [], []>} : vector<16x16xf32>, vector<16x96xf32>, vector<16x96xf32> -> vector<16x96xf32>
    %c0_8 = arith.constant 0 : index
    %c0_9 = arith.constant 0 : index
    %8 = vector.load %arg7[%c0_8, %c0_9] : memref<1x96xf32, #tpu.memory_space<vmem>>, vector<1x96xf32>
    %9 = vector.broadcast %8 : vector<1x96xf32> to vector<16x96xf32>
    %10 = arith.addf %7, %9 : vector<16x96xf32>
    %c0_10 = arith.constant 0 : index
    %c0_11 = arith.constant 0 : index
    %11 = vector.load %arg2[%c0_10, %c0_11] : memref<32x96xf32, #tpu.memory_space<vmem>>, vector<32x96xf32>
    %c0_12 = arith.constant 0 : index
    %c0_13 = arith.constant 0 : index
    %12 = vector.load %arg6[%c0_12, %c0_13] : memref<32x96xf32, #tpu.memory_space<vmem>>, vector<32x96xf32>
    %c0_14 = arith.constant 0 : index
    %c0_15 = arith.constant 0 : index
    %13 = vector.load %arg4[%c0_14, %c0_15] : memref<1x96xf32, #tpu.memory_space<vmem>>, vector<1x96xf32>
    %14 = vector.shape_cast %13 : vector<1x96xf32> to vector<1x96xf32>
    %15 = vector.broadcast %14 : vector<1x96xf32> to vector<2x96xf32>
    %c0_16 = arith.constant 0 : index
    %c0_17 = arith.constant 0 : index
    %16 = vector.load %arg8[%c0_16, %c0_17] : memref<1x96xf32, #tpu.memory_space<vmem>>, vector<1x96xf32>
    %17 = vector.shape_cast %16 : vector<1x96xf32> to vector<1x96xf32>
    %18 = vector.broadcast %17 : vector<1x96xf32> to vector<2x96xf32>
    %cst_18 = arith.constant 0.000000e+00 : f32
    %19 = vector.broadcast %cst_18 : f32 to vector<2x32xf32>
    %cst_19 = arith.constant 0.000000e+00 : f32
    %20 = vector.broadcast %cst_19 : f32 to vector<2x32xf32>
    %21 = vector.extract_strided_slice %5 {offsets = [0, 0], sizes = [2, 96], strides = [1, 1]} : vector<16x96xf32> to vector<2x96xf32>
    %cst_20 = arith.constant dense<0.000000e+00> : vector<2x96xf32>
    %22 = tpu.matmul %19, %11, %cst_20 {dimension_numbers = #tpu.dot_dimension_numbers<[1], [0], [0], [1], [0, 0, 1, 1], [], []>} : vector<2x32xf32>, vector<32x96xf32>, vector<2x96xf32> -> vector<2x96xf32>
    %23 = arith.addf %22, %15 : vector<2x96xf32>
    %24 = vector.extract_strided_slice %21 {offsets = [0, 0], sizes = [2, 32], strides = [1, 1]} : vector<2x96xf32> to vector<2x32xf32>
    %25 = vector.extract_strided_slice %23 {offsets = [0, 0], sizes = [2, 32], strides = [1, 1]} : vector<2x96xf32> to vector<2x32xf32>
    %26 = arith.addf %24, %25 : vector<2x32xf32>
    %27 = arith.negf %26 : vector<2x32xf32>
    %28 = math.exp %27 : vector<2x32xf32>
    %cst_21 = arith.constant 1.000000e+00 : f32
    %29 = vector.broadcast %cst_21 : f32 to vector<2x32xf32>
    %30 = arith.addf %29, %28 : vector<2x32xf32>
    %31 = arith.divf %29, %30 : vector<2x32xf32>
    %32 = vector.extract_strided_slice %21 {offsets = [0, 32], sizes = [2, 32], strides = [1, 1]} : vector<2x96xf32> to vector<2x32xf32>
    %33 = vector.extract_strided_slice %23 {offsets = [0, 32], sizes = [2, 32], strides = [1, 1]} : vector<2x96xf32> to vector<2x32xf32>
    %34 = arith.addf %32, %33 : vector<2x32xf32>
    %35 = arith.negf %34 : vector<2x32xf32>
    %36 = math.exp %35 : vector<2x32xf32>
    %cst_22 = arith.constant 1.000000e+00 : f32
    %37 = vector.broadcast %cst_22 : f32 to vector<2x32xf32>
    %38 = arith.addf %37, %36 : vector<2x32xf32>
    %39 = arith.divf %37, %38 : vector<2x32xf32>
    %40 = vector.extract_strided_slice %21 {offsets = [0, 64], sizes = [2, 32], strides = [1, 1]} : vector<2x96xf32> to vector<2x32xf32>
    %41 = vector.extract_strided_slice %23 {offsets = [0, 64], sizes = [2, 32], strides = [1, 1]} : vector<2x96xf32> to vector<2x32xf32>
    %42 = arith.mulf %31, %41 : vector<2x32xf32>
    %43 = arith.addf %40, %42 : vector<2x32xf32>
    %44 = math.tanh %43 : vector<2x32xf32>
    %cst_23 = arith.constant 1.000000e+00 : f32
    %45 = vector.broadcast %cst_23 : f32 to vector<2x32xf32>
    %46 = arith.subf %45, %39 : vector<2x32xf32>
    %47 = arith.mulf %46, %44 : vector<2x32xf32>
    %48 = arith.mulf %39, %19 : vector<2x32xf32>
    %49 = arith.addf %47, %48 : vector<2x32xf32>
    %50 = vector.extract_strided_slice %10 {offsets = [14, 0], sizes = [2, 96], strides = [1, 1]} : vector<16x96xf32> to vector<2x96xf32>
    %cst_24 = arith.constant dense<0.000000e+00> : vector<2x96xf32>
    %51 = tpu.matmul %20, %12, %cst_24 {dimension_numbers = #tpu.dot_dimension_numbers<[1], [0], [0], [1], [0, 0, 1, 1], [], []>} : vector<2x32xf32>, vector<32x96xf32>, vector<2x96xf32> -> vector<2x96xf32>
    %52 = arith.addf %51, %18 : vector<2x96xf32>
    %53 = vector.extract_strided_slice %50 {offsets = [0, 0], sizes = [2, 32], strides = [1, 1]} : vector<2x96xf32> to vector<2x32xf32>
    %54 = vector.extract_strided_slice %52 {offsets = [0, 0], sizes = [2, 32], strides = [1, 1]} : vector<2x96xf32> to vector<2x32xf32>
    %55 = arith.addf %53, %54 : vector<2x32xf32>
    %56 = arith.negf %55 : vector<2x32xf32>
    %57 = math.exp %56 : vector<2x32xf32>
    %cst_25 = arith.constant 1.000000e+00 : f32
    %58 = vector.broadcast %cst_25 : f32 to vector<2x32xf32>
    %59 = arith.addf %58, %57 : vector<2x32xf32>
    %60 = arith.divf %58, %59 : vector<2x32xf32>
    %61 = vector.extract_strided_slice %50 {offsets = [0, 32], sizes = [2, 32], strides = [1, 1]} : vector<2x96xf32> to vector<2x32xf32>
    %62 = vector.extract_strided_slice %52 {offsets = [0, 32], sizes = [2, 32], strides = [1, 1]} : vector<2x96xf32> to vector<2x32xf32>
    %63 = arith.addf %61, %62 : vector<2x32xf32>
    %64 = arith.negf %63 : vector<2x32xf32>
    %65 = math.exp %64 : vector<2x32xf32>
    %cst_26 = arith.constant 1.000000e+00 : f32
    %66 = vector.broadcast %cst_26 : f32 to vector<2x32xf32>
    %67 = arith.addf %66, %65 : vector<2x32xf32>
    %68 = arith.divf %66, %67 : vector<2x32xf32>
    %69 = vector.extract_strided_slice %50 {offsets = [0, 64], sizes = [2, 32], strides = [1, 1]} : vector<2x96xf32> to vector<2x32xf32>
    %70 = vector.extract_strided_slice %52 {offsets = [0, 64], sizes = [2, 32], strides = [1, 1]} : vector<2x96xf32> to vector<2x32xf32>
    %71 = arith.mulf %60, %70 : vector<2x32xf32>
    %72 = arith.addf %69, %71 : vector<2x32xf32>
    %73 = math.tanh %72 : vector<2x32xf32>
    %cst_27 = arith.constant 1.000000e+00 : f32
    %74 = vector.broadcast %cst_27 : f32 to vector<2x32xf32>
    %75 = arith.subf %74, %68 : vector<2x32xf32>
    %76 = arith.mulf %75, %73 : vector<2x32xf32>
    %77 = arith.mulf %68, %20 : vector<2x32xf32>
    %78 = arith.addf %76, %77 : vector<2x32xf32>
    %79 = vector.extract_strided_slice %5 {offsets = [2, 0], sizes = [2, 96], strides = [1, 1]} : vector<16x96xf32> to vector<2x96xf32>
    %cst_28 = arith.constant dense<0.000000e+00> : vector<2x96xf32>
    %80 = tpu.matmul %49, %11, %cst_28 {dimension_numbers = #tpu.dot_dimension_numbers<[1], [0], [0], [1], [0, 0, 1, 1], [], []>} : vector<2x32xf32>, vector<32x96xf32>, vector<2x96xf32> -> vector<2x96xf32>
    %81 = arith.addf %80, %15 : vector<2x96xf32>
    %82 = vector.extract_strided_slice %79 {offsets = [0, 0], sizes = [2, 32], strides = [1, 1]} : vector<2x96xf32> to vector<2x32xf32>
    %83 = vector.extract_strided_slice %81 {offsets = [0, 0], sizes = [2, 32], strides = [1, 1]} : vector<2x96xf32> to vector<2x32xf32>
    %84 = arith.addf %82, %83 : vector<2x32xf32>
    %85 = arith.negf %84 : vector<2x32xf32>
    %86 = math.exp %85 : vector<2x32xf32>
    %cst_29 = arith.constant 1.000000e+00 : f32
    %87 = vector.broadcast %cst_29 : f32 to vector<2x32xf32>
    %88 = arith.addf %87, %86 : vector<2x32xf32>
    %89 = arith.divf %87, %88 : vector<2x32xf32>
    %90 = vector.extract_strided_slice %79 {offsets = [0, 32], sizes = [2, 32], strides = [1, 1]} : vector<2x96xf32> to vector<2x32xf32>
    %91 = vector.extract_strided_slice %81 {offsets = [0, 32], sizes = [2, 32], strides = [1, 1]} : vector<2x96xf32> to vector<2x32xf32>
    %92 = arith.addf %90, %91 : vector<2x32xf32>
    %93 = arith.negf %92 : vector<2x32xf32>
    %94 = math.exp %93 : vector<2x32xf32>
    %cst_30 = arith.constant 1.000000e+00 : f32
    %95 = vector.broadcast %cst_30 : f32 to vector<2x32xf32>
    %96 = arith.addf %95, %94 : vector<2x32xf32>
    %97 = arith.divf %95, %96 : vector<2x32xf32>
    %98 = vector.extract_strided_slice %79 {offsets = [0, 64], sizes = [2, 32], strides = [1, 1]} : vector<2x96xf32> to vector<2x32xf32>
    %99 = vector.extract_strided_slice %81 {offsets = [0, 64], sizes = [2, 32], strides = [1, 1]} : vector<2x96xf32> to vector<2x32xf32>
    %100 = arith.mulf %89, %99 : vector<2x32xf32>
    %101 = arith.addf %98, %100 : vector<2x32xf32>
    %102 = math.tanh %101 : vector<2x32xf32>
    %cst_31 = arith.constant 1.000000e+00 : f32
    %103 = vector.broadcast %cst_31 : f32 to vector<2x32xf32>
    %104 = arith.subf %103, %97 : vector<2x32xf32>
    %105 = arith.mulf %104, %102 : vector<2x32xf32>
    %106 = arith.mulf %97, %49 : vector<2x32xf32>
    %107 = arith.addf %105, %106 : vector<2x32xf32>
    %108 = vector.extract_strided_slice %10 {offsets = [12, 0], sizes = [2, 96], strides = [1, 1]} : vector<16x96xf32> to vector<2x96xf32>
    %cst_32 = arith.constant dense<0.000000e+00> : vector<2x96xf32>
    %109 = tpu.matmul %78, %12, %cst_32 {dimension_numbers = #tpu.dot_dimension_numbers<[1], [0], [0], [1], [0, 0, 1, 1], [], []>} : vector<2x32xf32>, vector<32x96xf32>, vector<2x96xf32> -> vector<2x96xf32>
    %110 = arith.addf %109, %18 : vector<2x96xf32>
    %111 = vector.extract_strided_slice %108 {offsets = [0, 0], sizes = [2, 32], strides = [1, 1]} : vector<2x96xf32> to vector<2x32xf32>
    %112 = vector.extract_strided_slice %110 {offsets = [0, 0], sizes = [2, 32], strides = [1, 1]} : vector<2x96xf32> to vector<2x32xf32>
    %113 = arith.addf %111, %112 : vector<2x32xf32>
    %114 = arith.negf %113 : vector<2x32xf32>
    %115 = math.exp %114 : vector<2x32xf32>
    %cst_33 = arith.constant 1.000000e+00 : f32
    %116 = vector.broadcast %cst_33 : f32 to vector<2x32xf32>
    %117 = arith.addf %116, %115 : vector<2x32xf32>
    %118 = arith.divf %116, %117 : vector<2x32xf32>
    %119 = vector.extract_strided_slice %108 {offsets = [0, 32], sizes = [2, 32], strides = [1, 1]} : vector<2x96xf32> to vector<2x32xf32>
    %120 = vector.extract_strided_slice %110 {offsets = [0, 32], sizes = [2, 32], strides = [1, 1]} : vector<2x96xf32> to vector<2x32xf32>
    %121 = arith.addf %119, %120 : vector<2x32xf32>
    %122 = arith.negf %121 : vector<2x32xf32>
    %123 = math.exp %122 : vector<2x32xf32>
    %cst_34 = arith.constant 1.000000e+00 : f32
    %124 = vector.broadcast %cst_34 : f32 to vector<2x32xf32>
    %125 = arith.addf %124, %123 : vector<2x32xf32>
    %126 = arith.divf %124, %125 : vector<2x32xf32>
    %127 = vector.extract_strided_slice %108 {offsets = [0, 64], sizes = [2, 32], strides = [1, 1]} : vector<2x96xf32> to vector<2x32xf32>
    %128 = vector.extract_strided_slice %110 {offsets = [0, 64], sizes = [2, 32], strides = [1, 1]} : vector<2x96xf32> to vector<2x32xf32>
    %129 = arith.mulf %118, %128 : vector<2x32xf32>
    %130 = arith.addf %127, %129 : vector<2x32xf32>
    %131 = math.tanh %130 : vector<2x32xf32>
    %cst_35 = arith.constant 1.000000e+00 : f32
    %132 = vector.broadcast %cst_35 : f32 to vector<2x32xf32>
    %133 = arith.subf %132, %126 : vector<2x32xf32>
    %134 = arith.mulf %133, %131 : vector<2x32xf32>
    %135 = arith.mulf %126, %78 : vector<2x32xf32>
    %136 = arith.addf %134, %135 : vector<2x32xf32>
    %137 = vector.extract_strided_slice %5 {offsets = [4, 0], sizes = [2, 96], strides = [1, 1]} : vector<16x96xf32> to vector<2x96xf32>
    %cst_36 = arith.constant dense<0.000000e+00> : vector<2x96xf32>
    %138 = tpu.matmul %107, %11, %cst_36 {dimension_numbers = #tpu.dot_dimension_numbers<[1], [0], [0], [1], [0, 0, 1, 1], [], []>} : vector<2x32xf32>, vector<32x96xf32>, vector<2x96xf32> -> vector<2x96xf32>
    %139 = arith.addf %138, %15 : vector<2x96xf32>
    %140 = vector.extract_strided_slice %137 {offsets = [0, 0], sizes = [2, 32], strides = [1, 1]} : vector<2x96xf32> to vector<2x32xf32>
    %141 = vector.extract_strided_slice %139 {offsets = [0, 0], sizes = [2, 32], strides = [1, 1]} : vector<2x96xf32> to vector<2x32xf32>
    %142 = arith.addf %140, %141 : vector<2x32xf32>
    %143 = arith.negf %142 : vector<2x32xf32>
    %144 = math.exp %143 : vector<2x32xf32>
    %cst_37 = arith.constant 1.000000e+00 : f32
    %145 = vector.broadcast %cst_37 : f32 to vector<2x32xf32>
    %146 = arith.addf %145, %144 : vector<2x32xf32>
    %147 = arith.divf %145, %146 : vector<2x32xf32>
    %148 = vector.extract_strided_slice %137 {offsets = [0, 32], sizes = [2, 32], strides = [1, 1]} : vector<2x96xf32> to vector<2x32xf32>
    %149 = vector.extract_strided_slice %139 {offsets = [0, 32], sizes = [2, 32], strides = [1, 1]} : vector<2x96xf32> to vector<2x32xf32>
    %150 = arith.addf %148, %149 : vector<2x32xf32>
    %151 = arith.negf %150 : vector<2x32xf32>
    %152 = math.exp %151 : vector<2x32xf32>
    %cst_38 = arith.constant 1.000000e+00 : f32
    %153 = vector.broadcast %cst_38 : f32 to vector<2x32xf32>
    %154 = arith.addf %153, %152 : vector<2x32xf32>
    %155 = arith.divf %153, %154 : vector<2x32xf32>
    %156 = vector.extract_strided_slice %137 {offsets = [0, 64], sizes = [2, 32], strides = [1, 1]} : vector<2x96xf32> to vector<2x32xf32>
    %157 = vector.extract_strided_slice %139 {offsets = [0, 64], sizes = [2, 32], strides = [1, 1]} : vector<2x96xf32> to vector<2x32xf32>
    %158 = arith.mulf %147, %157 : vector<2x32xf32>
    %159 = arith.addf %156, %158 : vector<2x32xf32>
    %160 = math.tanh %159 : vector<2x32xf32>
    %cst_39 = arith.constant 1.000000e+00 : f32
    %161 = vector.broadcast %cst_39 : f32 to vector<2x32xf32>
    %162 = arith.subf %161, %155 : vector<2x32xf32>
    %163 = arith.mulf %162, %160 : vector<2x32xf32>
    %164 = arith.mulf %155, %107 : vector<2x32xf32>
    %165 = arith.addf %163, %164 : vector<2x32xf32>
    %166 = vector.extract_strided_slice %10 {offsets = [10, 0], sizes = [2, 96], strides = [1, 1]} : vector<16x96xf32> to vector<2x96xf32>
    %cst_40 = arith.constant dense<0.000000e+00> : vector<2x96xf32>
    %167 = tpu.matmul %136, %12, %cst_40 {dimension_numbers = #tpu.dot_dimension_numbers<[1], [0], [0], [1], [0, 0, 1, 1], [], []>} : vector<2x32xf32>, vector<32x96xf32>, vector<2x96xf32> -> vector<2x96xf32>
    %168 = arith.addf %167, %18 : vector<2x96xf32>
    %169 = vector.extract_strided_slice %166 {offsets = [0, 0], sizes = [2, 32], strides = [1, 1]} : vector<2x96xf32> to vector<2x32xf32>
    %170 = vector.extract_strided_slice %168 {offsets = [0, 0], sizes = [2, 32], strides = [1, 1]} : vector<2x96xf32> to vector<2x32xf32>
    %171 = arith.addf %169, %170 : vector<2x32xf32>
    %172 = arith.negf %171 : vector<2x32xf32>
    %173 = math.exp %172 : vector<2x32xf32>
    %cst_41 = arith.constant 1.000000e+00 : f32
    %174 = vector.broadcast %cst_41 : f32 to vector<2x32xf32>
    %175 = arith.addf %174, %173 : vector<2x32xf32>
    %176 = arith.divf %174, %175 : vector<2x32xf32>
    %177 = vector.extract_strided_slice %166 {offsets = [0, 32], sizes = [2, 32], strides = [1, 1]} : vector<2x96xf32> to vector<2x32xf32>
    %178 = vector.extract_strided_slice %168 {offsets = [0, 32], sizes = [2, 32], strides = [1, 1]} : vector<2x96xf32> to vector<2x32xf32>
    %179 = arith.addf %177, %178 : vector<2x32xf32>
    %180 = arith.negf %179 : vector<2x32xf32>
    %181 = math.exp %180 : vector<2x32xf32>
    %cst_42 = arith.constant 1.000000e+00 : f32
    %182 = vector.broadcast %cst_42 : f32 to vector<2x32xf32>
    %183 = arith.addf %182, %181 : vector<2x32xf32>
    %184 = arith.divf %182, %183 : vector<2x32xf32>
    %185 = vector.extract_strided_slice %166 {offsets = [0, 64], sizes = [2, 32], strides = [1, 1]} : vector<2x96xf32> to vector<2x32xf32>
    %186 = vector.extract_strided_slice %168 {offsets = [0, 64], sizes = [2, 32], strides = [1, 1]} : vector<2x96xf32> to vector<2x32xf32>
    %187 = arith.mulf %176, %186 : vector<2x32xf32>
    %188 = arith.addf %185, %187 : vector<2x32xf32>
    %189 = math.tanh %188 : vector<2x32xf32>
    %cst_43 = arith.constant 1.000000e+00 : f32
    %190 = vector.broadcast %cst_43 : f32 to vector<2x32xf32>
    %191 = arith.subf %190, %184 : vector<2x32xf32>
    %192 = arith.mulf %191, %189 : vector<2x32xf32>
    %193 = arith.mulf %184, %136 : vector<2x32xf32>
    %194 = arith.addf %192, %193 : vector<2x32xf32>
    %195 = vector.extract_strided_slice %5 {offsets = [6, 0], sizes = [2, 96], strides = [1, 1]} : vector<16x96xf32> to vector<2x96xf32>
    %cst_44 = arith.constant dense<0.000000e+00> : vector<2x96xf32>
    %196 = tpu.matmul %165, %11, %cst_44 {dimension_numbers = #tpu.dot_dimension_numbers<[1], [0], [0], [1], [0, 0, 1, 1], [], []>} : vector<2x32xf32>, vector<32x96xf32>, vector<2x96xf32> -> vector<2x96xf32>
    %197 = arith.addf %196, %15 : vector<2x96xf32>
    %198 = vector.extract_strided_slice %195 {offsets = [0, 0], sizes = [2, 32], strides = [1, 1]} : vector<2x96xf32> to vector<2x32xf32>
    %199 = vector.extract_strided_slice %197 {offsets = [0, 0], sizes = [2, 32], strides = [1, 1]} : vector<2x96xf32> to vector<2x32xf32>
    %200 = arith.addf %198, %199 : vector<2x32xf32>
    %201 = arith.negf %200 : vector<2x32xf32>
    %202 = math.exp %201 : vector<2x32xf32>
    %cst_45 = arith.constant 1.000000e+00 : f32
    %203 = vector.broadcast %cst_45 : f32 to vector<2x32xf32>
    %204 = arith.addf %203, %202 : vector<2x32xf32>
    %205 = arith.divf %203, %204 : vector<2x32xf32>
    %206 = vector.extract_strided_slice %195 {offsets = [0, 32], sizes = [2, 32], strides = [1, 1]} : vector<2x96xf32> to vector<2x32xf32>
    %207 = vector.extract_strided_slice %197 {offsets = [0, 32], sizes = [2, 32], strides = [1, 1]} : vector<2x96xf32> to vector<2x32xf32>
    %208 = arith.addf %206, %207 : vector<2x32xf32>
    %209 = arith.negf %208 : vector<2x32xf32>
    %210 = math.exp %209 : vector<2x32xf32>
    %cst_46 = arith.constant 1.000000e+00 : f32
    %211 = vector.broadcast %cst_46 : f32 to vector<2x32xf32>
    %212 = arith.addf %211, %210 : vector<2x32xf32>
    %213 = arith.divf %211, %212 : vector<2x32xf32>
    %214 = vector.extract_strided_slice %195 {offsets = [0, 64], sizes = [2, 32], strides = [1, 1]} : vector<2x96xf32> to vector<2x32xf32>
    %215 = vector.extract_strided_slice %197 {offsets = [0, 64], sizes = [2, 32], strides = [1, 1]} : vector<2x96xf32> to vector<2x32xf32>
    %216 = arith.mulf %205, %215 : vector<2x32xf32>
    %217 = arith.addf %214, %216 : vector<2x32xf32>
    %218 = math.tanh %217 : vector<2x32xf32>
    %cst_47 = arith.constant 1.000000e+00 : f32
    %219 = vector.broadcast %cst_47 : f32 to vector<2x32xf32>
    %220 = arith.subf %219, %213 : vector<2x32xf32>
    %221 = arith.mulf %220, %218 : vector<2x32xf32>
    %222 = arith.mulf %213, %165 : vector<2x32xf32>
    %223 = arith.addf %221, %222 : vector<2x32xf32>
    %224 = vector.extract_strided_slice %10 {offsets = [8, 0], sizes = [2, 96], strides = [1, 1]} : vector<16x96xf32> to vector<2x96xf32>
    %cst_48 = arith.constant dense<0.000000e+00> : vector<2x96xf32>
    %225 = tpu.matmul %194, %12, %cst_48 {dimension_numbers = #tpu.dot_dimension_numbers<[1], [0], [0], [1], [0, 0, 1, 1], [], []>} : vector<2x32xf32>, vector<32x96xf32>, vector<2x96xf32> -> vector<2x96xf32>
    %226 = arith.addf %225, %18 : vector<2x96xf32>
    %227 = vector.extract_strided_slice %224 {offsets = [0, 0], sizes = [2, 32], strides = [1, 1]} : vector<2x96xf32> to vector<2x32xf32>
    %228 = vector.extract_strided_slice %226 {offsets = [0, 0], sizes = [2, 32], strides = [1, 1]} : vector<2x96xf32> to vector<2x32xf32>
    %229 = arith.addf %227, %228 : vector<2x32xf32>
    %230 = arith.negf %229 : vector<2x32xf32>
    %231 = math.exp %230 : vector<2x32xf32>
    %cst_49 = arith.constant 1.000000e+00 : f32
    %232 = vector.broadcast %cst_49 : f32 to vector<2x32xf32>
    %233 = arith.addf %232, %231 : vector<2x32xf32>
    %234 = arith.divf %232, %233 : vector<2x32xf32>
    %235 = vector.extract_strided_slice %224 {offsets = [0, 32], sizes = [2, 32], strides = [1, 1]} : vector<2x96xf32> to vector<2x32xf32>
    %236 = vector.extract_strided_slice %226 {offsets = [0, 32], sizes = [2, 32], strides = [1, 1]} : vector<2x96xf32> to vector<2x32xf32>
    %237 = arith.addf %235, %236 : vector<2x32xf32>
    %238 = arith.negf %237 : vector<2x32xf32>
    %239 = math.exp %238 : vector<2x32xf32>
    %cst_50 = arith.constant 1.000000e+00 : f32
    %240 = vector.broadcast %cst_50 : f32 to vector<2x32xf32>
    %241 = arith.addf %240, %239 : vector<2x32xf32>
    %242 = arith.divf %240, %241 : vector<2x32xf32>
    %243 = vector.extract_strided_slice %224 {offsets = [0, 64], sizes = [2, 32], strides = [1, 1]} : vector<2x96xf32> to vector<2x32xf32>
    %244 = vector.extract_strided_slice %226 {offsets = [0, 64], sizes = [2, 32], strides = [1, 1]} : vector<2x96xf32> to vector<2x32xf32>
    %245 = arith.mulf %234, %244 : vector<2x32xf32>
    %246 = arith.addf %243, %245 : vector<2x32xf32>
    %247 = math.tanh %246 : vector<2x32xf32>
    %cst_51 = arith.constant 1.000000e+00 : f32
    %248 = vector.broadcast %cst_51 : f32 to vector<2x32xf32>
    %249 = arith.subf %248, %242 : vector<2x32xf32>
    %250 = arith.mulf %249, %247 : vector<2x32xf32>
    %251 = arith.mulf %242, %194 : vector<2x32xf32>
    %252 = arith.addf %250, %251 : vector<2x32xf32>
    %253 = vector.extract_strided_slice %5 {offsets = [8, 0], sizes = [2, 96], strides = [1, 1]} : vector<16x96xf32> to vector<2x96xf32>
    %cst_52 = arith.constant dense<0.000000e+00> : vector<2x96xf32>
    %254 = tpu.matmul %223, %11, %cst_52 {dimension_numbers = #tpu.dot_dimension_numbers<[1], [0], [0], [1], [0, 0, 1, 1], [], []>} : vector<2x32xf32>, vector<32x96xf32>, vector<2x96xf32> -> vector<2x96xf32>
    %255 = arith.addf %254, %15 : vector<2x96xf32>
    %256 = vector.extract_strided_slice %253 {offsets = [0, 0], sizes = [2, 32], strides = [1, 1]} : vector<2x96xf32> to vector<2x32xf32>
    %257 = vector.extract_strided_slice %255 {offsets = [0, 0], sizes = [2, 32], strides = [1, 1]} : vector<2x96xf32> to vector<2x32xf32>
    %258 = arith.addf %256, %257 : vector<2x32xf32>
    %259 = arith.negf %258 : vector<2x32xf32>
    %260 = math.exp %259 : vector<2x32xf32>
    %cst_53 = arith.constant 1.000000e+00 : f32
    %261 = vector.broadcast %cst_53 : f32 to vector<2x32xf32>
    %262 = arith.addf %261, %260 : vector<2x32xf32>
    %263 = arith.divf %261, %262 : vector<2x32xf32>
    %264 = vector.extract_strided_slice %253 {offsets = [0, 32], sizes = [2, 32], strides = [1, 1]} : vector<2x96xf32> to vector<2x32xf32>
    %265 = vector.extract_strided_slice %255 {offsets = [0, 32], sizes = [2, 32], strides = [1, 1]} : vector<2x96xf32> to vector<2x32xf32>
    %266 = arith.addf %264, %265 : vector<2x32xf32>
    %267 = arith.negf %266 : vector<2x32xf32>
    %268 = math.exp %267 : vector<2x32xf32>
    %cst_54 = arith.constant 1.000000e+00 : f32
    %269 = vector.broadcast %cst_54 : f32 to vector<2x32xf32>
    %270 = arith.addf %269, %268 : vector<2x32xf32>
    %271 = arith.divf %269, %270 : vector<2x32xf32>
    %272 = vector.extract_strided_slice %253 {offsets = [0, 64], sizes = [2, 32], strides = [1, 1]} : vector<2x96xf32> to vector<2x32xf32>
    %273 = vector.extract_strided_slice %255 {offsets = [0, 64], sizes = [2, 32], strides = [1, 1]} : vector<2x96xf32> to vector<2x32xf32>
    %274 = arith.mulf %263, %273 : vector<2x32xf32>
    %275 = arith.addf %272, %274 : vector<2x32xf32>
    %276 = math.tanh %275 : vector<2x32xf32>
    %cst_55 = arith.constant 1.000000e+00 : f32
    %277 = vector.broadcast %cst_55 : f32 to vector<2x32xf32>
    %278 = arith.subf %277, %271 : vector<2x32xf32>
    %279 = arith.mulf %278, %276 : vector<2x32xf32>
    %280 = arith.mulf %271, %223 : vector<2x32xf32>
    %281 = arith.addf %279, %280 : vector<2x32xf32>
    %282 = vector.extract_strided_slice %10 {offsets = [6, 0], sizes = [2, 96], strides = [1, 1]} : vector<16x96xf32> to vector<2x96xf32>
    %cst_56 = arith.constant dense<0.000000e+00> : vector<2x96xf32>
    %283 = tpu.matmul %252, %12, %cst_56 {dimension_numbers = #tpu.dot_dimension_numbers<[1], [0], [0], [1], [0, 0, 1, 1], [], []>} : vector<2x32xf32>, vector<32x96xf32>, vector<2x96xf32> -> vector<2x96xf32>
    %284 = arith.addf %283, %18 : vector<2x96xf32>
    %285 = vector.extract_strided_slice %282 {offsets = [0, 0], sizes = [2, 32], strides = [1, 1]} : vector<2x96xf32> to vector<2x32xf32>
    %286 = vector.extract_strided_slice %284 {offsets = [0, 0], sizes = [2, 32], strides = [1, 1]} : vector<2x96xf32> to vector<2x32xf32>
    %287 = arith.addf %285, %286 : vector<2x32xf32>
    %288 = arith.negf %287 : vector<2x32xf32>
    %289 = math.exp %288 : vector<2x32xf32>
    %cst_57 = arith.constant 1.000000e+00 : f32
    %290 = vector.broadcast %cst_57 : f32 to vector<2x32xf32>
    %291 = arith.addf %290, %289 : vector<2x32xf32>
    %292 = arith.divf %290, %291 : vector<2x32xf32>
    %293 = vector.extract_strided_slice %282 {offsets = [0, 32], sizes = [2, 32], strides = [1, 1]} : vector<2x96xf32> to vector<2x32xf32>
    %294 = vector.extract_strided_slice %284 {offsets = [0, 32], sizes = [2, 32], strides = [1, 1]} : vector<2x96xf32> to vector<2x32xf32>
    %295 = arith.addf %293, %294 : vector<2x32xf32>
    %296 = arith.negf %295 : vector<2x32xf32>
    %297 = math.exp %296 : vector<2x32xf32>
    %cst_58 = arith.constant 1.000000e+00 : f32
    %298 = vector.broadcast %cst_58 : f32 to vector<2x32xf32>
    %299 = arith.addf %298, %297 : vector<2x32xf32>
    %300 = arith.divf %298, %299 : vector<2x32xf32>
    %301 = vector.extract_strided_slice %282 {offsets = [0, 64], sizes = [2, 32], strides = [1, 1]} : vector<2x96xf32> to vector<2x32xf32>
    %302 = vector.extract_strided_slice %284 {offsets = [0, 64], sizes = [2, 32], strides = [1, 1]} : vector<2x96xf32> to vector<2x32xf32>
    %303 = arith.mulf %292, %302 : vector<2x32xf32>
    %304 = arith.addf %301, %303 : vector<2x32xf32>
    %305 = math.tanh %304 : vector<2x32xf32>
    %cst_59 = arith.constant 1.000000e+00 : f32
    %306 = vector.broadcast %cst_59 : f32 to vector<2x32xf32>
    %307 = arith.subf %306, %300 : vector<2x32xf32>
    %308 = arith.mulf %307, %305 : vector<2x32xf32>
    %309 = arith.mulf %300, %252 : vector<2x32xf32>
    %310 = arith.addf %308, %309 : vector<2x32xf32>
    %311 = vector.extract_strided_slice %5 {offsets = [10, 0], sizes = [2, 96], strides = [1, 1]} : vector<16x96xf32> to vector<2x96xf32>
    %cst_60 = arith.constant dense<0.000000e+00> : vector<2x96xf32>
    %312 = tpu.matmul %281, %11, %cst_60 {dimension_numbers = #tpu.dot_dimension_numbers<[1], [0], [0], [1], [0, 0, 1, 1], [], []>} : vector<2x32xf32>, vector<32x96xf32>, vector<2x96xf32> -> vector<2x96xf32>
    %313 = arith.addf %312, %15 : vector<2x96xf32>
    %314 = vector.extract_strided_slice %311 {offsets = [0, 0], sizes = [2, 32], strides = [1, 1]} : vector<2x96xf32> to vector<2x32xf32>
    %315 = vector.extract_strided_slice %313 {offsets = [0, 0], sizes = [2, 32], strides = [1, 1]} : vector<2x96xf32> to vector<2x32xf32>
    %316 = arith.addf %314, %315 : vector<2x32xf32>
    %317 = arith.negf %316 : vector<2x32xf32>
    %318 = math.exp %317 : vector<2x32xf32>
    %cst_61 = arith.constant 1.000000e+00 : f32
    %319 = vector.broadcast %cst_61 : f32 to vector<2x32xf32>
    %320 = arith.addf %319, %318 : vector<2x32xf32>
    %321 = arith.divf %319, %320 : vector<2x32xf32>
    %322 = vector.extract_strided_slice %311 {offsets = [0, 32], sizes = [2, 32], strides = [1, 1]} : vector<2x96xf32> to vector<2x32xf32>
    %323 = vector.extract_strided_slice %313 {offsets = [0, 32], sizes = [2, 32], strides = [1, 1]} : vector<2x96xf32> to vector<2x32xf32>
    %324 = arith.addf %322, %323 : vector<2x32xf32>
    %325 = arith.negf %324 : vector<2x32xf32>
    %326 = math.exp %325 : vector<2x32xf32>
    %cst_62 = arith.constant 1.000000e+00 : f32
    %327 = vector.broadcast %cst_62 : f32 to vector<2x32xf32>
    %328 = arith.addf %327, %326 : vector<2x32xf32>
    %329 = arith.divf %327, %328 : vector<2x32xf32>
    %330 = vector.extract_strided_slice %311 {offsets = [0, 64], sizes = [2, 32], strides = [1, 1]} : vector<2x96xf32> to vector<2x32xf32>
    %331 = vector.extract_strided_slice %313 {offsets = [0, 64], sizes = [2, 32], strides = [1, 1]} : vector<2x96xf32> to vector<2x32xf32>
    %332 = arith.mulf %321, %331 : vector<2x32xf32>
    %333 = arith.addf %330, %332 : vector<2x32xf32>
    %334 = math.tanh %333 : vector<2x32xf32>
    %cst_63 = arith.constant 1.000000e+00 : f32
    %335 = vector.broadcast %cst_63 : f32 to vector<2x32xf32>
    %336 = arith.subf %335, %329 : vector<2x32xf32>
    %337 = arith.mulf %336, %334 : vector<2x32xf32>
    %338 = arith.mulf %329, %281 : vector<2x32xf32>
    %339 = arith.addf %337, %338 : vector<2x32xf32>
    %340 = vector.extract_strided_slice %10 {offsets = [4, 0], sizes = [2, 96], strides = [1, 1]} : vector<16x96xf32> to vector<2x96xf32>
    %cst_64 = arith.constant dense<0.000000e+00> : vector<2x96xf32>
    %341 = tpu.matmul %310, %12, %cst_64 {dimension_numbers = #tpu.dot_dimension_numbers<[1], [0], [0], [1], [0, 0, 1, 1], [], []>} : vector<2x32xf32>, vector<32x96xf32>, vector<2x96xf32> -> vector<2x96xf32>
    %342 = arith.addf %341, %18 : vector<2x96xf32>
    %343 = vector.extract_strided_slice %340 {offsets = [0, 0], sizes = [2, 32], strides = [1, 1]} : vector<2x96xf32> to vector<2x32xf32>
    %344 = vector.extract_strided_slice %342 {offsets = [0, 0], sizes = [2, 32], strides = [1, 1]} : vector<2x96xf32> to vector<2x32xf32>
    %345 = arith.addf %343, %344 : vector<2x32xf32>
    %346 = arith.negf %345 : vector<2x32xf32>
    %347 = math.exp %346 : vector<2x32xf32>
    %cst_65 = arith.constant 1.000000e+00 : f32
    %348 = vector.broadcast %cst_65 : f32 to vector<2x32xf32>
    %349 = arith.addf %348, %347 : vector<2x32xf32>
    %350 = arith.divf %348, %349 : vector<2x32xf32>
    %351 = vector.extract_strided_slice %340 {offsets = [0, 32], sizes = [2, 32], strides = [1, 1]} : vector<2x96xf32> to vector<2x32xf32>
    %352 = vector.extract_strided_slice %342 {offsets = [0, 32], sizes = [2, 32], strides = [1, 1]} : vector<2x96xf32> to vector<2x32xf32>
    %353 = arith.addf %351, %352 : vector<2x32xf32>
    %354 = arith.negf %353 : vector<2x32xf32>
    %355 = math.exp %354 : vector<2x32xf32>
    %cst_66 = arith.constant 1.000000e+00 : f32
    %356 = vector.broadcast %cst_66 : f32 to vector<2x32xf32>
    %357 = arith.addf %356, %355 : vector<2x32xf32>
    %358 = arith.divf %356, %357 : vector<2x32xf32>
    %359 = vector.extract_strided_slice %340 {offsets = [0, 64], sizes = [2, 32], strides = [1, 1]} : vector<2x96xf32> to vector<2x32xf32>
    %360 = vector.extract_strided_slice %342 {offsets = [0, 64], sizes = [2, 32], strides = [1, 1]} : vector<2x96xf32> to vector<2x32xf32>
    %361 = arith.mulf %350, %360 : vector<2x32xf32>
    %362 = arith.addf %359, %361 : vector<2x32xf32>
    %363 = math.tanh %362 : vector<2x32xf32>
    %cst_67 = arith.constant 1.000000e+00 : f32
    %364 = vector.broadcast %cst_67 : f32 to vector<2x32xf32>
    %365 = arith.subf %364, %358 : vector<2x32xf32>
    %366 = arith.mulf %365, %363 : vector<2x32xf32>
    %367 = arith.mulf %358, %310 : vector<2x32xf32>
    %368 = arith.addf %366, %367 : vector<2x32xf32>
    %369 = vector.extract_strided_slice %5 {offsets = [12, 0], sizes = [2, 96], strides = [1, 1]} : vector<16x96xf32> to vector<2x96xf32>
    %cst_68 = arith.constant dense<0.000000e+00> : vector<2x96xf32>
    %370 = tpu.matmul %339, %11, %cst_68 {dimension_numbers = #tpu.dot_dimension_numbers<[1], [0], [0], [1], [0, 0, 1, 1], [], []>} : vector<2x32xf32>, vector<32x96xf32>, vector<2x96xf32> -> vector<2x96xf32>
    %371 = arith.addf %370, %15 : vector<2x96xf32>
    %372 = vector.extract_strided_slice %369 {offsets = [0, 0], sizes = [2, 32], strides = [1, 1]} : vector<2x96xf32> to vector<2x32xf32>
    %373 = vector.extract_strided_slice %371 {offsets = [0, 0], sizes = [2, 32], strides = [1, 1]} : vector<2x96xf32> to vector<2x32xf32>
    %374 = arith.addf %372, %373 : vector<2x32xf32>
    %375 = arith.negf %374 : vector<2x32xf32>
    %376 = math.exp %375 : vector<2x32xf32>
    %cst_69 = arith.constant 1.000000e+00 : f32
    %377 = vector.broadcast %cst_69 : f32 to vector<2x32xf32>
    %378 = arith.addf %377, %376 : vector<2x32xf32>
    %379 = arith.divf %377, %378 : vector<2x32xf32>
    %380 = vector.extract_strided_slice %369 {offsets = [0, 32], sizes = [2, 32], strides = [1, 1]} : vector<2x96xf32> to vector<2x32xf32>
    %381 = vector.extract_strided_slice %371 {offsets = [0, 32], sizes = [2, 32], strides = [1, 1]} : vector<2x96xf32> to vector<2x32xf32>
    %382 = arith.addf %380, %381 : vector<2x32xf32>
    %383 = arith.negf %382 : vector<2x32xf32>
    %384 = math.exp %383 : vector<2x32xf32>
    %cst_70 = arith.constant 1.000000e+00 : f32
    %385 = vector.broadcast %cst_70 : f32 to vector<2x32xf32>
    %386 = arith.addf %385, %384 : vector<2x32xf32>
    %387 = arith.divf %385, %386 : vector<2x32xf32>
    %388 = vector.extract_strided_slice %369 {offsets = [0, 64], sizes = [2, 32], strides = [1, 1]} : vector<2x96xf32> to vector<2x32xf32>
    %389 = vector.extract_strided_slice %371 {offsets = [0, 64], sizes = [2, 32], strides = [1, 1]} : vector<2x96xf32> to vector<2x32xf32>
    %390 = arith.mulf %379, %389 : vector<2x32xf32>
    %391 = arith.addf %388, %390 : vector<2x32xf32>
    %392 = math.tanh %391 : vector<2x32xf32>
    %cst_71 = arith.constant 1.000000e+00 : f32
    %393 = vector.broadcast %cst_71 : f32 to vector<2x32xf32>
    %394 = arith.subf %393, %387 : vector<2x32xf32>
    %395 = arith.mulf %394, %392 : vector<2x32xf32>
    %396 = arith.mulf %387, %339 : vector<2x32xf32>
    %397 = arith.addf %395, %396 : vector<2x32xf32>
    %398 = vector.extract_strided_slice %10 {offsets = [2, 0], sizes = [2, 96], strides = [1, 1]} : vector<16x96xf32> to vector<2x96xf32>
    %cst_72 = arith.constant dense<0.000000e+00> : vector<2x96xf32>
    %399 = tpu.matmul %368, %12, %cst_72 {dimension_numbers = #tpu.dot_dimension_numbers<[1], [0], [0], [1], [0, 0, 1, 1], [], []>} : vector<2x32xf32>, vector<32x96xf32>, vector<2x96xf32> -> vector<2x96xf32>
    %400 = arith.addf %399, %18 : vector<2x96xf32>
    %401 = vector.extract_strided_slice %398 {offsets = [0, 0], sizes = [2, 32], strides = [1, 1]} : vector<2x96xf32> to vector<2x32xf32>
    %402 = vector.extract_strided_slice %400 {offsets = [0, 0], sizes = [2, 32], strides = [1, 1]} : vector<2x96xf32> to vector<2x32xf32>
    %403 = arith.addf %401, %402 : vector<2x32xf32>
    %404 = arith.negf %403 : vector<2x32xf32>
    %405 = math.exp %404 : vector<2x32xf32>
    %cst_73 = arith.constant 1.000000e+00 : f32
    %406 = vector.broadcast %cst_73 : f32 to vector<2x32xf32>
    %407 = arith.addf %406, %405 : vector<2x32xf32>
    %408 = arith.divf %406, %407 : vector<2x32xf32>
    %409 = vector.extract_strided_slice %398 {offsets = [0, 32], sizes = [2, 32], strides = [1, 1]} : vector<2x96xf32> to vector<2x32xf32>
    %410 = vector.extract_strided_slice %400 {offsets = [0, 32], sizes = [2, 32], strides = [1, 1]} : vector<2x96xf32> to vector<2x32xf32>
    %411 = arith.addf %409, %410 : vector<2x32xf32>
    %412 = arith.negf %411 : vector<2x32xf32>
    %413 = math.exp %412 : vector<2x32xf32>
    %cst_74 = arith.constant 1.000000e+00 : f32
    %414 = vector.broadcast %cst_74 : f32 to vector<2x32xf32>
    %415 = arith.addf %414, %413 : vector<2x32xf32>
    %416 = arith.divf %414, %415 : vector<2x32xf32>
    %417 = vector.extract_strided_slice %398 {offsets = [0, 64], sizes = [2, 32], strides = [1, 1]} : vector<2x96xf32> to vector<2x32xf32>
    %418 = vector.extract_strided_slice %400 {offsets = [0, 64], sizes = [2, 32], strides = [1, 1]} : vector<2x96xf32> to vector<2x32xf32>
    %419 = arith.mulf %408, %418 : vector<2x32xf32>
    %420 = arith.addf %417, %419 : vector<2x32xf32>
    %421 = math.tanh %420 : vector<2x32xf32>
    %cst_75 = arith.constant 1.000000e+00 : f32
    %422 = vector.broadcast %cst_75 : f32 to vector<2x32xf32>
    %423 = arith.subf %422, %416 : vector<2x32xf32>
    %424 = arith.mulf %423, %421 : vector<2x32xf32>
    %425 = arith.mulf %416, %368 : vector<2x32xf32>
    %426 = arith.addf %424, %425 : vector<2x32xf32>
    %427 = vector.extract_strided_slice %5 {offsets = [14, 0], sizes = [2, 96], strides = [1, 1]} : vector<16x96xf32> to vector<2x96xf32>
    %cst_76 = arith.constant dense<0.000000e+00> : vector<2x96xf32>
    %428 = tpu.matmul %397, %11, %cst_76 {dimension_numbers = #tpu.dot_dimension_numbers<[1], [0], [0], [1], [0, 0, 1, 1], [], []>} : vector<2x32xf32>, vector<32x96xf32>, vector<2x96xf32> -> vector<2x96xf32>
    %429 = arith.addf %428, %15 : vector<2x96xf32>
    %430 = vector.extract_strided_slice %427 {offsets = [0, 0], sizes = [2, 32], strides = [1, 1]} : vector<2x96xf32> to vector<2x32xf32>
    %431 = vector.extract_strided_slice %429 {offsets = [0, 0], sizes = [2, 32], strides = [1, 1]} : vector<2x96xf32> to vector<2x32xf32>
    %432 = arith.addf %430, %431 : vector<2x32xf32>
    %433 = arith.negf %432 : vector<2x32xf32>
    %434 = math.exp %433 : vector<2x32xf32>
    %cst_77 = arith.constant 1.000000e+00 : f32
    %435 = vector.broadcast %cst_77 : f32 to vector<2x32xf32>
    %436 = arith.addf %435, %434 : vector<2x32xf32>
    %437 = arith.divf %435, %436 : vector<2x32xf32>
    %438 = vector.extract_strided_slice %427 {offsets = [0, 32], sizes = [2, 32], strides = [1, 1]} : vector<2x96xf32> to vector<2x32xf32>
    %439 = vector.extract_strided_slice %429 {offsets = [0, 32], sizes = [2, 32], strides = [1, 1]} : vector<2x96xf32> to vector<2x32xf32>
    %440 = arith.addf %438, %439 : vector<2x32xf32>
    %441 = arith.negf %440 : vector<2x32xf32>
    %442 = math.exp %441 : vector<2x32xf32>
    %cst_78 = arith.constant 1.000000e+00 : f32
    %443 = vector.broadcast %cst_78 : f32 to vector<2x32xf32>
    %444 = arith.addf %443, %442 : vector<2x32xf32>
    %445 = arith.divf %443, %444 : vector<2x32xf32>
    %446 = vector.extract_strided_slice %427 {offsets = [0, 64], sizes = [2, 32], strides = [1, 1]} : vector<2x96xf32> to vector<2x32xf32>
    %447 = vector.extract_strided_slice %429 {offsets = [0, 64], sizes = [2, 32], strides = [1, 1]} : vector<2x96xf32> to vector<2x32xf32>
    %448 = arith.mulf %437, %447 : vector<2x32xf32>
    %449 = arith.addf %446, %448 : vector<2x32xf32>
    %450 = math.tanh %449 : vector<2x32xf32>
    %cst_79 = arith.constant 1.000000e+00 : f32
    %451 = vector.broadcast %cst_79 : f32 to vector<2x32xf32>
    %452 = arith.subf %451, %445 : vector<2x32xf32>
    %453 = arith.mulf %452, %450 : vector<2x32xf32>
    %454 = arith.mulf %445, %397 : vector<2x32xf32>
    %455 = arith.addf %453, %454 : vector<2x32xf32>
    %456 = vector.extract_strided_slice %10 {offsets = [0, 0], sizes = [2, 96], strides = [1, 1]} : vector<16x96xf32> to vector<2x96xf32>
    %cst_80 = arith.constant dense<0.000000e+00> : vector<2x96xf32>
    %457 = tpu.matmul %426, %12, %cst_80 {dimension_numbers = #tpu.dot_dimension_numbers<[1], [0], [0], [1], [0, 0, 1, 1], [], []>} : vector<2x32xf32>, vector<32x96xf32>, vector<2x96xf32> -> vector<2x96xf32>
    %458 = arith.addf %457, %18 : vector<2x96xf32>
    %459 = vector.extract_strided_slice %456 {offsets = [0, 0], sizes = [2, 32], strides = [1, 1]} : vector<2x96xf32> to vector<2x32xf32>
    %460 = vector.extract_strided_slice %458 {offsets = [0, 0], sizes = [2, 32], strides = [1, 1]} : vector<2x96xf32> to vector<2x32xf32>
    %461 = arith.addf %459, %460 : vector<2x32xf32>
    %462 = arith.negf %461 : vector<2x32xf32>
    %463 = math.exp %462 : vector<2x32xf32>
    %cst_81 = arith.constant 1.000000e+00 : f32
    %464 = vector.broadcast %cst_81 : f32 to vector<2x32xf32>
    %465 = arith.addf %464, %463 : vector<2x32xf32>
    %466 = arith.divf %464, %465 : vector<2x32xf32>
    %467 = vector.extract_strided_slice %456 {offsets = [0, 32], sizes = [2, 32], strides = [1, 1]} : vector<2x96xf32> to vector<2x32xf32>
    %468 = vector.extract_strided_slice %458 {offsets = [0, 32], sizes = [2, 32], strides = [1, 1]} : vector<2x96xf32> to vector<2x32xf32>
    %469 = arith.addf %467, %468 : vector<2x32xf32>
    %470 = arith.negf %469 : vector<2x32xf32>
    %471 = math.exp %470 : vector<2x32xf32>
    %cst_82 = arith.constant 1.000000e+00 : f32
    %472 = vector.broadcast %cst_82 : f32 to vector<2x32xf32>
    %473 = arith.addf %472, %471 : vector<2x32xf32>
    %474 = arith.divf %472, %473 : vector<2x32xf32>
    %475 = vector.extract_strided_slice %456 {offsets = [0, 64], sizes = [2, 32], strides = [1, 1]} : vector<2x96xf32> to vector<2x32xf32>
    %476 = vector.extract_strided_slice %458 {offsets = [0, 64], sizes = [2, 32], strides = [1, 1]} : vector<2x96xf32> to vector<2x32xf32>
    %477 = arith.mulf %466, %476 : vector<2x32xf32>
    %478 = arith.addf %475, %477 : vector<2x32xf32>
    %479 = math.tanh %478 : vector<2x32xf32>
    %cst_83 = arith.constant 1.000000e+00 : f32
    %480 = vector.broadcast %cst_83 : f32 to vector<2x32xf32>
    %481 = arith.subf %480, %474 : vector<2x32xf32>
    %482 = arith.mulf %481, %479 : vector<2x32xf32>
    %483 = arith.mulf %474, %426 : vector<2x32xf32>
    %484 = arith.addf %482, %483 : vector<2x32xf32>
    %c0_84 = arith.constant 0 : index
    %c0_85 = arith.constant 0 : index
    %485 = vector.load %arg9[%c0_84, %c0_85] : memref<32x16xf32, #tpu.memory_space<vmem>>, vector<32x16xf32>
    %c0_86 = arith.constant 0 : index
    %c0_87 = arith.constant 0 : index
    %486 = vector.load %arg10[%c0_86, %c0_87] : memref<16x96xf32, #tpu.memory_space<vmem>>, vector<16x96xf32>
    %cst_88 = arith.constant dense<0.000000e+00> : vector<32x96xf32>
    %487 = tpu.matmul %485, %486, %cst_88 {dimension_numbers = #tpu.dot_dimension_numbers<[1], [0], [0], [1], [0, 0, 1, 1], [], []>} : vector<32x16xf32>, vector<16x96xf32>, vector<32x96xf32> -> vector<32x96xf32>
    %c0_89 = arith.constant 0 : index
    %c0_90 = arith.constant 0 : index
    %488 = vector.load %arg12[%c0_89, %c0_90] : memref<1x96xf32, #tpu.memory_space<vmem>>, vector<1x96xf32>
    %489 = vector.broadcast %488 : vector<1x96xf32> to vector<32x96xf32>
    %490 = arith.addf %487, %489 : vector<32x96xf32>
    %cst_91 = arith.constant 0.000000e+00 : f32
    %491 = vector.broadcast %cst_91 : f32 to vector<1x96xf32>
    %c0_92 = arith.constant 0 : index
    %c0_93 = arith.constant 0 : index
    %492 = vector.load %arg11[%c0_92, %c0_93] : memref<32x96xf32, #tpu.memory_space<vmem>>, vector<32x96xf32>
    %c0_94 = arith.constant 0 : index
    %c0_95 = arith.constant 0 : index
    %493 = vector.load %arg13[%c0_94, %c0_95] : memref<1x96xf32, #tpu.memory_space<vmem>>, vector<1x96xf32>
    %494 = vector.extract_strided_slice %490 {offsets = [0, 0], sizes = [32, 64], strides = [1, 1]} : vector<32x96xf32> to vector<32x64xf32>
    %495 = vector.extract_strided_slice %492 {offsets = [0, 0], sizes = [32, 64], strides = [1, 1]} : vector<32x96xf32> to vector<32x64xf32>
    %496 = tpu.concatenate %494, %495 in 0 : vector<32x64xf32>, vector<32x64xf32> -> vector<64x64xf32>
    %497 = vector.extract_strided_slice %490 {offsets = [0, 64], sizes = [32, 32], strides = [1, 1]} : vector<32x96xf32> to vector<32x32xf32>
    %cst_96 = arith.constant 0.000000e+00 : f32
    %498 = vector.broadcast %cst_96 : f32 to vector<32x32xf32>
    %499 = tpu.concatenate %497, %498 in 0 : vector<32x32xf32>, vector<32x32xf32> -> vector<64x32xf32>
    %cst_97 = arith.constant 0.000000e+00 : f32
    %500 = vector.broadcast %cst_97 : f32 to vector<32x32xf32>
    %501 = vector.extract_strided_slice %492 {offsets = [0, 64], sizes = [32, 32], strides = [1, 1]} : vector<32x96xf32> to vector<32x32xf32>
    %502 = tpu.concatenate %500, %501 in 0 : vector<32x32xf32>, vector<32x32xf32> -> vector<64x32xf32>
    %503 = tpu.concatenate %496, %499, %502 in 1 : vector<64x64xf32>, vector<64x32xf32>, vector<64x32xf32> -> vector<64x128xf32>
    %504 = vector.extract_strided_slice %491 {offsets = [0, 0], sizes = [1, 64], strides = [1, 1]} : vector<1x96xf32> to vector<1x64xf32>
    %505 = vector.extract_strided_slice %493 {offsets = [0, 0], sizes = [1, 64], strides = [1, 1]} : vector<1x96xf32> to vector<1x64xf32>
    %506 = arith.addf %504, %505 : vector<1x64xf32>
    %507 = vector.extract_strided_slice %491 {offsets = [0, 64], sizes = [1, 32], strides = [1, 1]} : vector<1x96xf32> to vector<1x32xf32>
    %508 = vector.extract_strided_slice %493 {offsets = [0, 64], sizes = [1, 32], strides = [1, 1]} : vector<1x96xf32> to vector<1x32xf32>
    %509 = tpu.concatenate %506, %507, %508 in 1 : vector<1x64xf32>, vector<1x32xf32>, vector<1x32xf32> -> vector<1x128xf32>
    %510 = vector.shape_cast %509 : vector<1x128xf32> to vector<1x128xf32>
    %511 = vector.broadcast %510 : vector<1x128xf32> to vector<2x128xf32>
    %c0_98 = arith.constant 0 : index
    %c0_99 = arith.constant 0 : index
    %512 = vector.load %arg14[%c0_98, %c0_99] : memref<32x96xf32, #tpu.memory_space<vmem>>, vector<32x96xf32>
    %c0_100 = arith.constant 0 : index
    %c0_101 = arith.constant 0 : index
    %513 = vector.load %arg15[%c0_100, %c0_101] : memref<32x96xf32, #tpu.memory_space<vmem>>, vector<32x96xf32>
    %c0_102 = arith.constant 0 : index
    %c0_103 = arith.constant 0 : index
    %514 = vector.load %arg16[%c0_102, %c0_103] : memref<1x96xf32, #tpu.memory_space<vmem>>, vector<1x96xf32>
    %c0_104 = arith.constant 0 : index
    %c0_105 = arith.constant 0 : index
    %515 = vector.load %arg17[%c0_104, %c0_105] : memref<1x96xf32, #tpu.memory_space<vmem>>, vector<1x96xf32>
    %516 = vector.extract_strided_slice %512 {offsets = [0, 0], sizes = [32, 64], strides = [1, 1]} : vector<32x96xf32> to vector<32x64xf32>
    %517 = vector.extract_strided_slice %513 {offsets = [0, 0], sizes = [32, 64], strides = [1, 1]} : vector<32x96xf32> to vector<32x64xf32>
    %518 = tpu.concatenate %516, %517 in 0 : vector<32x64xf32>, vector<32x64xf32> -> vector<64x64xf32>
    %519 = vector.extract_strided_slice %512 {offsets = [0, 64], sizes = [32, 32], strides = [1, 1]} : vector<32x96xf32> to vector<32x32xf32>
    %cst_106 = arith.constant 0.000000e+00 : f32
    %520 = vector.broadcast %cst_106 : f32 to vector<32x32xf32>
    %521 = tpu.concatenate %519, %520 in 0 : vector<32x32xf32>, vector<32x32xf32> -> vector<64x32xf32>
    %cst_107 = arith.constant 0.000000e+00 : f32
    %522 = vector.broadcast %cst_107 : f32 to vector<32x32xf32>
    %523 = vector.extract_strided_slice %513 {offsets = [0, 64], sizes = [32, 32], strides = [1, 1]} : vector<32x96xf32> to vector<32x32xf32>
    %524 = tpu.concatenate %522, %523 in 0 : vector<32x32xf32>, vector<32x32xf32> -> vector<64x32xf32>
    %525 = tpu.concatenate %518, %521, %524 in 1 : vector<64x64xf32>, vector<64x32xf32>, vector<64x32xf32> -> vector<64x128xf32>
    %526 = vector.extract_strided_slice %514 {offsets = [0, 0], sizes = [1, 64], strides = [1, 1]} : vector<1x96xf32> to vector<1x64xf32>
    %527 = vector.extract_strided_slice %515 {offsets = [0, 0], sizes = [1, 64], strides = [1, 1]} : vector<1x96xf32> to vector<1x64xf32>
    %528 = arith.addf %526, %527 : vector<1x64xf32>
    %529 = vector.extract_strided_slice %514 {offsets = [0, 64], sizes = [1, 32], strides = [1, 1]} : vector<1x96xf32> to vector<1x32xf32>
    %530 = vector.extract_strided_slice %515 {offsets = [0, 64], sizes = [1, 32], strides = [1, 1]} : vector<1x96xf32> to vector<1x32xf32>
    %531 = tpu.concatenate %528, %529, %530 in 1 : vector<1x64xf32>, vector<1x32xf32>, vector<1x32xf32> -> vector<1x128xf32>
    %532 = vector.shape_cast %531 : vector<1x128xf32> to vector<1x128xf32>
    %533 = vector.broadcast %532 : vector<1x128xf32> to vector<2x128xf32>
    %c0_108 = arith.constant 0 : index
    %c0_109 = arith.constant 0 : index
    %534 = vector.load %arg18[%c0_108, %c0_109] : memref<32x32xf32, #tpu.memory_space<vmem>>, vector<32x32xf32>
    %c0_110 = arith.constant 0 : index
    %c0_111 = arith.constant 0 : index
    %535 = vector.load %arg19[%c0_110, %c0_111] : memref<1x32xf32, #tpu.memory_space<vmem>>, vector<1x32xf32>
    %536 = vector.shape_cast %535 : vector<1x32xf32> to vector<1x32xf32>
    %537 = vector.broadcast %536 : vector<1x32xf32> to vector<2x32xf32>
    %538 = tpu.iota {dimensions = array<i32: 1>} : vector<2x32xi32>
    %c0_i32 = arith.constant 0 : i32
    %539 = vector.broadcast %c0_i32 : i32 to vector<2x32xi32>
    %540 = arith.cmpi eq, %538, %539 : vector<2x32xi32>
    %541 = arith.extui %540 : vector<2x32xi1> to vector<2x32xi32>
    %542 = arith.sitofp %541 : vector<2x32xi32> to vector<2x32xf32>
    %543 = tpu.concatenate %542, %455 in 1 : vector<2x32xf32>, vector<2x32xf32> -> vector<2x64xf32>
    %cst_112 = arith.constant dense<0.000000e+00> : vector<2x128xf32>
    %544 = tpu.matmul %543, %503, %cst_112 {dimension_numbers = #tpu.dot_dimension_numbers<[1], [0], [0], [1], [0, 0, 1, 1], [], []>} : vector<2x64xf32>, vector<64x128xf32>, vector<2x128xf32> -> vector<2x128xf32>
    %545 = arith.addf %544, %511 : vector<2x128xf32>
    %546 = vector.extract_strided_slice %545 {offsets = [0, 0], sizes = [2, 32], strides = [1, 1]} : vector<2x128xf32> to vector<2x32xf32>
    %547 = arith.negf %546 : vector<2x32xf32>
    %548 = math.exp %547 : vector<2x32xf32>
    %cst_113 = arith.constant 1.000000e+00 : f32
    %549 = vector.broadcast %cst_113 : f32 to vector<2x32xf32>
    %550 = arith.addf %549, %548 : vector<2x32xf32>
    %551 = arith.divf %549, %550 : vector<2x32xf32>
    %552 = vector.extract_strided_slice %545 {offsets = [0, 32], sizes = [2, 32], strides = [1, 1]} : vector<2x128xf32> to vector<2x32xf32>
    %553 = arith.negf %552 : vector<2x32xf32>
    %554 = math.exp %553 : vector<2x32xf32>
    %cst_114 = arith.constant 1.000000e+00 : f32
    %555 = vector.broadcast %cst_114 : f32 to vector<2x32xf32>
    %556 = arith.addf %555, %554 : vector<2x32xf32>
    %557 = arith.divf %555, %556 : vector<2x32xf32>
    %558 = vector.extract_strided_slice %545 {offsets = [0, 64], sizes = [2, 32], strides = [1, 1]} : vector<2x128xf32> to vector<2x32xf32>
    %559 = vector.extract_strided_slice %545 {offsets = [0, 96], sizes = [2, 32], strides = [1, 1]} : vector<2x128xf32> to vector<2x32xf32>
    %560 = arith.mulf %551, %559 : vector<2x32xf32>
    %561 = arith.addf %558, %560 : vector<2x32xf32>
    %562 = math.tanh %561 : vector<2x32xf32>
    %cst_115 = arith.constant 1.000000e+00 : f32
    %563 = vector.broadcast %cst_115 : f32 to vector<2x32xf32>
    %564 = arith.subf %563, %557 : vector<2x32xf32>
    %565 = arith.mulf %564, %562 : vector<2x32xf32>
    %566 = arith.mulf %557, %455 : vector<2x32xf32>
    %567 = arith.addf %565, %566 : vector<2x32xf32>
    %568 = tpu.concatenate %567, %484 in 1 : vector<2x32xf32>, vector<2x32xf32> -> vector<2x64xf32>
    %cst_116 = arith.constant dense<0.000000e+00> : vector<2x128xf32>
    %569 = tpu.matmul %568, %525, %cst_116 {dimension_numbers = #tpu.dot_dimension_numbers<[1], [0], [0], [1], [0, 0, 1, 1], [], []>} : vector<2x64xf32>, vector<64x128xf32>, vector<2x128xf32> -> vector<2x128xf32>
    %570 = arith.addf %569, %533 : vector<2x128xf32>
    %571 = vector.extract_strided_slice %570 {offsets = [0, 0], sizes = [2, 32], strides = [1, 1]} : vector<2x128xf32> to vector<2x32xf32>
    %572 = arith.negf %571 : vector<2x32xf32>
    %573 = math.exp %572 : vector<2x32xf32>
    %cst_117 = arith.constant 1.000000e+00 : f32
    %574 = vector.broadcast %cst_117 : f32 to vector<2x32xf32>
    %575 = arith.addf %574, %573 : vector<2x32xf32>
    %576 = arith.divf %574, %575 : vector<2x32xf32>
    %577 = vector.extract_strided_slice %570 {offsets = [0, 32], sizes = [2, 32], strides = [1, 1]} : vector<2x128xf32> to vector<2x32xf32>
    %578 = arith.negf %577 : vector<2x32xf32>
    %579 = math.exp %578 : vector<2x32xf32>
    %cst_118 = arith.constant 1.000000e+00 : f32
    %580 = vector.broadcast %cst_118 : f32 to vector<2x32xf32>
    %581 = arith.addf %580, %579 : vector<2x32xf32>
    %582 = arith.divf %580, %581 : vector<2x32xf32>
    %583 = vector.extract_strided_slice %570 {offsets = [0, 64], sizes = [2, 32], strides = [1, 1]} : vector<2x128xf32> to vector<2x32xf32>
    %584 = vector.extract_strided_slice %570 {offsets = [0, 96], sizes = [2, 32], strides = [1, 1]} : vector<2x128xf32> to vector<2x32xf32>
    %585 = arith.mulf %576, %584 : vector<2x32xf32>
    %586 = arith.addf %583, %585 : vector<2x32xf32>
    %587 = math.tanh %586 : vector<2x32xf32>
    %cst_119 = arith.constant 1.000000e+00 : f32
    %588 = vector.broadcast %cst_119 : f32 to vector<2x32xf32>
    %589 = arith.subf %588, %582 : vector<2x32xf32>
    %590 = arith.mulf %589, %587 : vector<2x32xf32>
    %591 = arith.mulf %582, %484 : vector<2x32xf32>
    %592 = arith.addf %590, %591 : vector<2x32xf32>
    %cst_120 = arith.constant dense<0.000000e+00> : vector<2x32xf32>
    %593 = tpu.matmul %592, %534, %cst_120 {dimension_numbers = #tpu.dot_dimension_numbers<[1], [0], [0], [1], [0, 0, 1, 1], [], []>} : vector<2x32xf32>, vector<32x32xf32>, vector<2x32xf32> -> vector<2x32xf32>
    %594 = arith.addf %593, %537 : vector<2x32xf32>
    %cst_121 = arith.constant dense<0xFF800000> : vector<2xf32>
    %595 = vector.multi_reduction <maximumf>, %594, %cst_121 [1] : vector<2x32xf32> to vector<2xf32>
    %596 = vector.shape_cast %595 : vector<2xf32> to vector<2x1xf32>
    %597 = vector.broadcast %596 : vector<2x1xf32> to vector<2x32xf32>
    %598 = arith.subf %594, %597 : vector<2x32xf32>
    %599 = vector.broadcast %596 : vector<2x1xf32> to vector<2x32xf32>
    %600 = arith.subf %594, %599 : vector<2x32xf32>
    %601 = math.exp %600 : vector<2x32xf32>
    %cst_122 = arith.constant dense<0.000000e+00> : vector<2xf32>
    %602 = vector.multi_reduction <add>, %601, %cst_122 [1] : vector<2x32xf32> to vector<2xf32>
    %603 = vector.shape_cast %602 : vector<2xf32> to vector<2x1xf32>
    %604 = math.log %603 : vector<2x1xf32>
    %605 = vector.broadcast %604 : vector<2x1xf32> to vector<2x32xf32>
    %606 = arith.subf %598, %605 : vector<2x32xf32>
    %c0_123 = arith.constant 0 : index
    %c0_124 = arith.constant 0 : index
    %c0_125 = arith.constant 0 : index
    %607 = vector.load %arg20[%c0_123, %c0_124, %c0_125] : memref<8x2x32xf32, #tpu.memory_space<vmem>>, vector<1x2x32xf32>
    %608 = vector.shape_cast %607 : vector<1x2x32xf32> to vector<2x32xf32>
    %609 = vector.shape_cast %606 : vector<2x32xf32> to vector<1x2x32xf32>
    tpu.vector_store %arg20[%c0_123, %c0_124, %c0_125], %609 {strides = array<i32>} : memref<8x2x32xf32, #tpu.memory_space<vmem>>, vector<1x2x32xf32>,
    %cst_126 = arith.constant dense<0xFF800000> : vector<2xf32>
    %610 = vector.multi_reduction <maximumf>, %594, %cst_126 [1] : vector<2x32xf32> to vector<2xf32>
    %611 = vector.shape_cast %610 : vector<2xf32> to vector<2x1xf32>
    %612 = vector.broadcast %611 : vector<2x1xf32> to vector<2x32xf32>
    %613 = arith.cmpf oge, %594, %612 : vector<2x32xf32>
    %c32_i32 = arith.constant 32 : i32
    %614 = vector.broadcast %c32_i32 : i32 to vector<2x32xi32>
    %615 = arith.select %613, %538, %614 : vector<2x32xi1>, vector<2x32xi32>
    %cst_127 = arith.constant dense<2147483647> : vector<2xi32>
    %616 = vector.multi_reduction <minsi>, %615, %cst_127 [1] : vector<2x32xi32> to vector<2xi32>
    %617 = vector.shape_cast %616 : vector<2xi32> to vector<2x1xi32>
    %618 = vector.broadcast %617 : vector<2x1xi32> to vector<2x32xi32>
    %619 = arith.cmpi eq, %538, %618 : vector<2x32xi32>
    %620 = arith.extui %619 : vector<2x32xi1> to vector<2x32xi32>
    %621 = arith.sitofp %620 : vector<2x32xi32> to vector<2x32xf32>
    %622 = tpu.concatenate %621, %567 in 1 : vector<2x32xf32>, vector<2x32xf32> -> vector<2x64xf32>
    %cst_128 = arith.constant dense<0.000000e+00> : vector<2x128xf32>
    %623 = tpu.matmul %622, %503, %cst_128 {dimension_numbers = #tpu.dot_dimension_numbers<[1], [0], [0], [1], [0, 0, 1, 1], [], []>} : vector<2x64xf32>, vector<64x128xf32>, vector<2x128xf32> -> vector<2x128xf32>
    %624 = arith.addf %623, %511 : vector<2x128xf32>
    %625 = vector.extract_strided_slice %624 {offsets = [0, 0], sizes = [2, 32], strides = [1, 1]} : vector<2x128xf32> to vector<2x32xf32>
    %626 = arith.negf %625 : vector<2x32xf32>
    %627 = math.exp %626 : vector<2x32xf32>
    %cst_129 = arith.constant 1.000000e+00 : f32
    %628 = vector.broadcast %cst_129 : f32 to vector<2x32xf32>
    %629 = arith.addf %628, %627 : vector<2x32xf32>
    %630 = arith.divf %628, %629 : vector<2x32xf32>
    %631 = vector.extract_strided_slice %624 {offsets = [0, 32], sizes = [2, 32], strides = [1, 1]} : vector<2x128xf32> to vector<2x32xf32>
    %632 = arith.negf %631 : vector<2x32xf32>
    %633 = math.exp %632 : vector<2x32xf32>
    %cst_130 = arith.constant 1.000000e+00 : f32
    %634 = vector.broadcast %cst_130 : f32 to vector<2x32xf32>
    %635 = arith.addf %634, %633 : vector<2x32xf32>
    %636 = arith.divf %634, %635 : vector<2x32xf32>
    %637 = vector.extract_strided_slice %624 {offsets = [0, 64], sizes = [2, 32], strides = [1, 1]} : vector<2x128xf32> to vector<2x32xf32>
    %638 = vector.extract_strided_slice %624 {offsets = [0, 96], sizes = [2, 32], strides = [1, 1]} : vector<2x128xf32> to vector<2x32xf32>
    %639 = arith.mulf %630, %638 : vector<2x32xf32>
    %640 = arith.addf %637, %639 : vector<2x32xf32>
    %641 = math.tanh %640 : vector<2x32xf32>
    %cst_131 = arith.constant 1.000000e+00 : f32
    %642 = vector.broadcast %cst_131 : f32 to vector<2x32xf32>
    %643 = arith.subf %642, %636 : vector<2x32xf32>
    %644 = arith.mulf %643, %641 : vector<2x32xf32>
    %645 = arith.mulf %636, %567 : vector<2x32xf32>
    %646 = arith.addf %644, %645 : vector<2x32xf32>
    %647 = tpu.concatenate %646, %592 in 1 : vector<2x32xf32>, vector<2x32xf32> -> vector<2x64xf32>
    %cst_132 = arith.constant dense<0.000000e+00> : vector<2x128xf32>
    %648 = tpu.matmul %647, %525, %cst_132 {dimension_numbers = #tpu.dot_dimension_numbers<[1], [0], [0], [1], [0, 0, 1, 1], [], []>} : vector<2x64xf32>, vector<64x128xf32>, vector<2x128xf32> -> vector<2x128xf32>
    %649 = arith.addf %648, %533 : vector<2x128xf32>
    %650 = vector.extract_strided_slice %649 {offsets = [0, 0], sizes = [2, 32], strides = [1, 1]} : vector<2x128xf32> to vector<2x32xf32>
    %651 = arith.negf %650 : vector<2x32xf32>
    %652 = math.exp %651 : vector<2x32xf32>
    %cst_133 = arith.constant 1.000000e+00 : f32
    %653 = vector.broadcast %cst_133 : f32 to vector<2x32xf32>
    %654 = arith.addf %653, %652 : vector<2x32xf32>
    %655 = arith.divf %653, %654 : vector<2x32xf32>
    %656 = vector.extract_strided_slice %649 {offsets = [0, 32], sizes = [2, 32], strides = [1, 1]} : vector<2x128xf32> to vector<2x32xf32>
    %657 = arith.negf %656 : vector<2x32xf32>
    %658 = math.exp %657 : vector<2x32xf32>
    %cst_134 = arith.constant 1.000000e+00 : f32
    %659 = vector.broadcast %cst_134 : f32 to vector<2x32xf32>
    %660 = arith.addf %659, %658 : vector<2x32xf32>
    %661 = arith.divf %659, %660 : vector<2x32xf32>
    %662 = vector.extract_strided_slice %649 {offsets = [0, 64], sizes = [2, 32], strides = [1, 1]} : vector<2x128xf32> to vector<2x32xf32>
    %663 = vector.extract_strided_slice %649 {offsets = [0, 96], sizes = [2, 32], strides = [1, 1]} : vector<2x128xf32> to vector<2x32xf32>
    %664 = arith.mulf %655, %663 : vector<2x32xf32>
    %665 = arith.addf %662, %664 : vector<2x32xf32>
    %666 = math.tanh %665 : vector<2x32xf32>
    %cst_135 = arith.constant 1.000000e+00 : f32
    %667 = vector.broadcast %cst_135 : f32 to vector<2x32xf32>
    %668 = arith.subf %667, %661 : vector<2x32xf32>
    %669 = arith.mulf %668, %666 : vector<2x32xf32>
    %670 = arith.mulf %661, %592 : vector<2x32xf32>
    %671 = arith.addf %669, %670 : vector<2x32xf32>
    %cst_136 = arith.constant dense<0.000000e+00> : vector<2x32xf32>
    %672 = tpu.matmul %671, %534, %cst_136 {dimension_numbers = #tpu.dot_dimension_numbers<[1], [0], [0], [1], [0, 0, 1, 1], [], []>} : vector<2x32xf32>, vector<32x32xf32>, vector<2x32xf32> -> vector<2x32xf32>
    %673 = arith.addf %672, %537 : vector<2x32xf32>
    %cst_137 = arith.constant dense<0xFF800000> : vector<2xf32>
    %674 = vector.multi_reduction <maximumf>, %673, %cst_137 [1] : vector<2x32xf32> to vector<2xf32>
    %675 = vector.shape_cast %674 : vector<2xf32> to vector<2x1xf32>
    %676 = vector.broadcast %675 : vector<2x1xf32> to vector<2x32xf32>
    %677 = arith.subf %673, %676 : vector<2x32xf32>
    %678 = vector.broadcast %675 : vector<2x1xf32> to vector<2x32xf32>
    %679 = arith.subf %673, %678 : vector<2x32xf32>
    %680 = math.exp %679 : vector<2x32xf32>
    %cst_138 = arith.constant dense<0.000000e+00> : vector<2xf32>
    %681 = vector.multi_reduction <add>, %680, %cst_138 [1] : vector<2x32xf32> to vector<2xf32>
    %682 = vector.shape_cast %681 : vector<2xf32> to vector<2x1xf32>
    %683 = math.log %682 : vector<2x1xf32>
    %684 = vector.broadcast %683 : vector<2x1xf32> to vector<2x32xf32>
    %685 = arith.subf %677, %684 : vector<2x32xf32>
    %c1 = arith.constant 1 : index
    %c0_139 = arith.constant 0 : index
    %c0_140 = arith.constant 0 : index
    %686 = vector.load %arg20[%c1, %c0_139, %c0_140] : memref<8x2x32xf32, #tpu.memory_space<vmem>>, vector<1x2x32xf32>
    %687 = vector.shape_cast %686 : vector<1x2x32xf32> to vector<2x32xf32>
    %688 = vector.shape_cast %685 : vector<2x32xf32> to vector<1x2x32xf32>
    tpu.vector_store %arg20[%c1, %c0_139, %c0_140], %688 {strides = array<i32>} : memref<8x2x32xf32, #tpu.memory_space<vmem>>, vector<1x2x32xf32>,
    %cst_141 = arith.constant dense<0xFF800000> : vector<2xf32>
    %689 = vector.multi_reduction <maximumf>, %673, %cst_141 [1] : vector<2x32xf32> to vector<2xf32>
    %690 = vector.shape_cast %689 : vector<2xf32> to vector<2x1xf32>
    %691 = vector.broadcast %690 : vector<2x1xf32> to vector<2x32xf32>
    %692 = arith.cmpf oge, %673, %691 : vector<2x32xf32>
    %c32_i32_142 = arith.constant 32 : i32
    %693 = vector.broadcast %c32_i32_142 : i32 to vector<2x32xi32>
    %694 = arith.select %692, %538, %693 : vector<2x32xi1>, vector<2x32xi32>
    %cst_143 = arith.constant dense<2147483647> : vector<2xi32>
    %695 = vector.multi_reduction <minsi>, %694, %cst_143 [1] : vector<2x32xi32> to vector<2xi32>
    %696 = vector.shape_cast %695 : vector<2xi32> to vector<2x1xi32>
    %697 = vector.broadcast %696 : vector<2x1xi32> to vector<2x32xi32>
    %698 = arith.cmpi eq, %538, %697 : vector<2x32xi32>
    %699 = arith.extui %698 : vector<2x32xi1> to vector<2x32xi32>
    %700 = arith.sitofp %699 : vector<2x32xi32> to vector<2x32xf32>
    %701 = tpu.concatenate %700, %646 in 1 : vector<2x32xf32>, vector<2x32xf32> -> vector<2x64xf32>
    %cst_144 = arith.constant dense<0.000000e+00> : vector<2x128xf32>
    %702 = tpu.matmul %701, %503, %cst_144 {dimension_numbers = #tpu.dot_dimension_numbers<[1], [0], [0], [1], [0, 0, 1, 1], [], []>} : vector<2x64xf32>, vector<64x128xf32>, vector<2x128xf32> -> vector<2x128xf32>
    %703 = arith.addf %702, %511 : vector<2x128xf32>
    %704 = vector.extract_strided_slice %703 {offsets = [0, 0], sizes = [2, 32], strides = [1, 1]} : vector<2x128xf32> to vector<2x32xf32>
    %705 = arith.negf %704 : vector<2x32xf32>
    %706 = math.exp %705 : vector<2x32xf32>
    %cst_145 = arith.constant 1.000000e+00 : f32
    %707 = vector.broadcast %cst_145 : f32 to vector<2x32xf32>
    %708 = arith.addf %707, %706 : vector<2x32xf32>
    %709 = arith.divf %707, %708 : vector<2x32xf32>
    %710 = vector.extract_strided_slice %703 {offsets = [0, 32], sizes = [2, 32], strides = [1, 1]} : vector<2x128xf32> to vector<2x32xf32>
    %711 = arith.negf %710 : vector<2x32xf32>
    %712 = math.exp %711 : vector<2x32xf32>
    %cst_146 = arith.constant 1.000000e+00 : f32
    %713 = vector.broadcast %cst_146 : f32 to vector<2x32xf32>
    %714 = arith.addf %713, %712 : vector<2x32xf32>
    %715 = arith.divf %713, %714 : vector<2x32xf32>
    %716 = vector.extract_strided_slice %703 {offsets = [0, 64], sizes = [2, 32], strides = [1, 1]} : vector<2x128xf32> to vector<2x32xf32>
    %717 = vector.extract_strided_slice %703 {offsets = [0, 96], sizes = [2, 32], strides = [1, 1]} : vector<2x128xf32> to vector<2x32xf32>
    %718 = arith.mulf %709, %717 : vector<2x32xf32>
    %719 = arith.addf %716, %718 : vector<2x32xf32>
    %720 = math.tanh %719 : vector<2x32xf32>
    %cst_147 = arith.constant 1.000000e+00 : f32
    %721 = vector.broadcast %cst_147 : f32 to vector<2x32xf32>
    %722 = arith.subf %721, %715 : vector<2x32xf32>
    %723 = arith.mulf %722, %720 : vector<2x32xf32>
    %724 = arith.mulf %715, %646 : vector<2x32xf32>
    %725 = arith.addf %723, %724 : vector<2x32xf32>
    %726 = tpu.concatenate %725, %671 in 1 : vector<2x32xf32>, vector<2x32xf32> -> vector<2x64xf32>
    %cst_148 = arith.constant dense<0.000000e+00> : vector<2x128xf32>
    %727 = tpu.matmul %726, %525, %cst_148 {dimension_numbers = #tpu.dot_dimension_numbers<[1], [0], [0], [1], [0, 0, 1, 1], [], []>} : vector<2x64xf32>, vector<64x128xf32>, vector<2x128xf32> -> vector<2x128xf32>
    %728 = arith.addf %727, %533 : vector<2x128xf32>
    %729 = vector.extract_strided_slice %728 {offsets = [0, 0], sizes = [2, 32], strides = [1, 1]} : vector<2x128xf32> to vector<2x32xf32>
    %730 = arith.negf %729 : vector<2x32xf32>
    %731 = math.exp %730 : vector<2x32xf32>
    %cst_149 = arith.constant 1.000000e+00 : f32
    %732 = vector.broadcast %cst_149 : f32 to vector<2x32xf32>
    %733 = arith.addf %732, %731 : vector<2x32xf32>
    %734 = arith.divf %732, %733 : vector<2x32xf32>
    %735 = vector.extract_strided_slice %728 {offsets = [0, 32], sizes = [2, 32], strides = [1, 1]} : vector<2x128xf32> to vector<2x32xf32>
    %736 = arith.negf %735 : vector<2x32xf32>
    %737 = math.exp %736 : vector<2x32xf32>
    %cst_150 = arith.constant 1.000000e+00 : f32
    %738 = vector.broadcast %cst_150 : f32 to vector<2x32xf32>
    %739 = arith.addf %738, %737 : vector<2x32xf32>
    %740 = arith.divf %738, %739 : vector<2x32xf32>
    %741 = vector.extract_strided_slice %728 {offsets = [0, 64], sizes = [2, 32], strides = [1, 1]} : vector<2x128xf32> to vector<2x32xf32>
    %742 = vector.extract_strided_slice %728 {offsets = [0, 96], sizes = [2, 32], strides = [1, 1]} : vector<2x128xf32> to vector<2x32xf32>
    %743 = arith.mulf %734, %742 : vector<2x32xf32>
    %744 = arith.addf %741, %743 : vector<2x32xf32>
    %745 = math.tanh %744 : vector<2x32xf32>
    %cst_151 = arith.constant 1.000000e+00 : f32
    %746 = vector.broadcast %cst_151 : f32 to vector<2x32xf32>
    %747 = arith.subf %746, %740 : vector<2x32xf32>
    %748 = arith.mulf %747, %745 : vector<2x32xf32>
    %749 = arith.mulf %740, %671 : vector<2x32xf32>
    %750 = arith.addf %748, %749 : vector<2x32xf32>
    %cst_152 = arith.constant dense<0.000000e+00> : vector<2x32xf32>
    %751 = tpu.matmul %750, %534, %cst_152 {dimension_numbers = #tpu.dot_dimension_numbers<[1], [0], [0], [1], [0, 0, 1, 1], [], []>} : vector<2x32xf32>, vector<32x32xf32>, vector<2x32xf32> -> vector<2x32xf32>
    %752 = arith.addf %751, %537 : vector<2x32xf32>
    %cst_153 = arith.constant dense<0xFF800000> : vector<2xf32>
    %753 = vector.multi_reduction <maximumf>, %752, %cst_153 [1] : vector<2x32xf32> to vector<2xf32>
    %754 = vector.shape_cast %753 : vector<2xf32> to vector<2x1xf32>
    %755 = vector.broadcast %754 : vector<2x1xf32> to vector<2x32xf32>
    %756 = arith.subf %752, %755 : vector<2x32xf32>
    %757 = vector.broadcast %754 : vector<2x1xf32> to vector<2x32xf32>
    %758 = arith.subf %752, %757 : vector<2x32xf32>
    %759 = math.exp %758 : vector<2x32xf32>
    %cst_154 = arith.constant dense<0.000000e+00> : vector<2xf32>
    %760 = vector.multi_reduction <add>, %759, %cst_154 [1] : vector<2x32xf32> to vector<2xf32>
    %761 = vector.shape_cast %760 : vector<2xf32> to vector<2x1xf32>
    %762 = math.log %761 : vector<2x1xf32>
    %763 = vector.broadcast %762 : vector<2x1xf32> to vector<2x32xf32>
    %764 = arith.subf %756, %763 : vector<2x32xf32>
    %c2 = arith.constant 2 : index
    %c0_155 = arith.constant 0 : index
    %c0_156 = arith.constant 0 : index
    %765 = vector.load %arg20[%c2, %c0_155, %c0_156] : memref<8x2x32xf32, #tpu.memory_space<vmem>>, vector<1x2x32xf32>
    %766 = vector.shape_cast %765 : vector<1x2x32xf32> to vector<2x32xf32>
    %767 = vector.shape_cast %764 : vector<2x32xf32> to vector<1x2x32xf32>
    tpu.vector_store %arg20[%c2, %c0_155, %c0_156], %767 {strides = array<i32>} : memref<8x2x32xf32, #tpu.memory_space<vmem>>, vector<1x2x32xf32>,
    %cst_157 = arith.constant dense<0xFF800000> : vector<2xf32>
    %768 = vector.multi_reduction <maximumf>, %752, %cst_157 [1] : vector<2x32xf32> to vector<2xf32>
    %769 = vector.shape_cast %768 : vector<2xf32> to vector<2x1xf32>
    %770 = vector.broadcast %769 : vector<2x1xf32> to vector<2x32xf32>
    %771 = arith.cmpf oge, %752, %770 : vector<2x32xf32>
    %c32_i32_158 = arith.constant 32 : i32
    %772 = vector.broadcast %c32_i32_158 : i32 to vector<2x32xi32>
    %773 = arith.select %771, %538, %772 : vector<2x32xi1>, vector<2x32xi32>
    %cst_159 = arith.constant dense<2147483647> : vector<2xi32>
    %774 = vector.multi_reduction <minsi>, %773, %cst_159 [1] : vector<2x32xi32> to vector<2xi32>
    %775 = vector.shape_cast %774 : vector<2xi32> to vector<2x1xi32>
    %776 = vector.broadcast %775 : vector<2x1xi32> to vector<2x32xi32>
    %777 = arith.cmpi eq, %538, %776 : vector<2x32xi32>
    %778 = arith.extui %777 : vector<2x32xi1> to vector<2x32xi32>
    %779 = arith.sitofp %778 : vector<2x32xi32> to vector<2x32xf32>
    %780 = tpu.concatenate %779, %725 in 1 : vector<2x32xf32>, vector<2x32xf32> -> vector<2x64xf32>
    %cst_160 = arith.constant dense<0.000000e+00> : vector<2x128xf32>
    %781 = tpu.matmul %780, %503, %cst_160 {dimension_numbers = #tpu.dot_dimension_numbers<[1], [0], [0], [1], [0, 0, 1, 1], [], []>} : vector<2x64xf32>, vector<64x128xf32>, vector<2x128xf32> -> vector<2x128xf32>
    %782 = arith.addf %781, %511 : vector<2x128xf32>
    %783 = vector.extract_strided_slice %782 {offsets = [0, 0], sizes = [2, 32], strides = [1, 1]} : vector<2x128xf32> to vector<2x32xf32>
    %784 = arith.negf %783 : vector<2x32xf32>
    %785 = math.exp %784 : vector<2x32xf32>
    %cst_161 = arith.constant 1.000000e+00 : f32
    %786 = vector.broadcast %cst_161 : f32 to vector<2x32xf32>
    %787 = arith.addf %786, %785 : vector<2x32xf32>
    %788 = arith.divf %786, %787 : vector<2x32xf32>
    %789 = vector.extract_strided_slice %782 {offsets = [0, 32], sizes = [2, 32], strides = [1, 1]} : vector<2x128xf32> to vector<2x32xf32>
    %790 = arith.negf %789 : vector<2x32xf32>
    %791 = math.exp %790 : vector<2x32xf32>
    %cst_162 = arith.constant 1.000000e+00 : f32
    %792 = vector.broadcast %cst_162 : f32 to vector<2x32xf32>
    %793 = arith.addf %792, %791 : vector<2x32xf32>
    %794 = arith.divf %792, %793 : vector<2x32xf32>
    %795 = vector.extract_strided_slice %782 {offsets = [0, 64], sizes = [2, 32], strides = [1, 1]} : vector<2x128xf32> to vector<2x32xf32>
    %796 = vector.extract_strided_slice %782 {offsets = [0, 96], sizes = [2, 32], strides = [1, 1]} : vector<2x128xf32> to vector<2x32xf32>
    %797 = arith.mulf %788, %796 : vector<2x32xf32>
    %798 = arith.addf %795, %797 : vector<2x32xf32>
    %799 = math.tanh %798 : vector<2x32xf32>
    %cst_163 = arith.constant 1.000000e+00 : f32
    %800 = vector.broadcast %cst_163 : f32 to vector<2x32xf32>
    %801 = arith.subf %800, %794 : vector<2x32xf32>
    %802 = arith.mulf %801, %799 : vector<2x32xf32>
    %803 = arith.mulf %794, %725 : vector<2x32xf32>
    %804 = arith.addf %802, %803 : vector<2x32xf32>
    %805 = tpu.concatenate %804, %750 in 1 : vector<2x32xf32>, vector<2x32xf32> -> vector<2x64xf32>
    %cst_164 = arith.constant dense<0.000000e+00> : vector<2x128xf32>
    %806 = tpu.matmul %805, %525, %cst_164 {dimension_numbers = #tpu.dot_dimension_numbers<[1], [0], [0], [1], [0, 0, 1, 1], [], []>} : vector<2x64xf32>, vector<64x128xf32>, vector<2x128xf32> -> vector<2x128xf32>
    %807 = arith.addf %806, %533 : vector<2x128xf32>
    %808 = vector.extract_strided_slice %807 {offsets = [0, 0], sizes = [2, 32], strides = [1, 1]} : vector<2x128xf32> to vector<2x32xf32>
    %809 = arith.negf %808 : vector<2x32xf32>
    %810 = math.exp %809 : vector<2x32xf32>
    %cst_165 = arith.constant 1.000000e+00 : f32
    %811 = vector.broadcast %cst_165 : f32 to vector<2x32xf32>
    %812 = arith.addf %811, %810 : vector<2x32xf32>
    %813 = arith.divf %811, %812 : vector<2x32xf32>
    %814 = vector.extract_strided_slice %807 {offsets = [0, 32], sizes = [2, 32], strides = [1, 1]} : vector<2x128xf32> to vector<2x32xf32>
    %815 = arith.negf %814 : vector<2x32xf32>
    %816 = math.exp %815 : vector<2x32xf32>
    %cst_166 = arith.constant 1.000000e+00 : f32
    %817 = vector.broadcast %cst_166 : f32 to vector<2x32xf32>
    %818 = arith.addf %817, %816 : vector<2x32xf32>
    %819 = arith.divf %817, %818 : vector<2x32xf32>
    %820 = vector.extract_strided_slice %807 {offsets = [0, 64], sizes = [2, 32], strides = [1, 1]} : vector<2x128xf32> to vector<2x32xf32>
    %821 = vector.extract_strided_slice %807 {offsets = [0, 96], sizes = [2, 32], strides = [1, 1]} : vector<2x128xf32> to vector<2x32xf32>
    %822 = arith.mulf %813, %821 : vector<2x32xf32>
    %823 = arith.addf %820, %822 : vector<2x32xf32>
    %824 = math.tanh %823 : vector<2x32xf32>
    %cst_167 = arith.constant 1.000000e+00 : f32
    %825 = vector.broadcast %cst_167 : f32 to vector<2x32xf32>
    %826 = arith.subf %825, %819 : vector<2x32xf32>
    %827 = arith.mulf %826, %824 : vector<2x32xf32>
    %828 = arith.mulf %819, %750 : vector<2x32xf32>
    %829 = arith.addf %827, %828 : vector<2x32xf32>
    %cst_168 = arith.constant dense<0.000000e+00> : vector<2x32xf32>
    %830 = tpu.matmul %829, %534, %cst_168 {dimension_numbers = #tpu.dot_dimension_numbers<[1], [0], [0], [1], [0, 0, 1, 1], [], []>} : vector<2x32xf32>, vector<32x32xf32>, vector<2x32xf32> -> vector<2x32xf32>
    %831 = arith.addf %830, %537 : vector<2x32xf32>
    %cst_169 = arith.constant dense<0xFF800000> : vector<2xf32>
    %832 = vector.multi_reduction <maximumf>, %831, %cst_169 [1] : vector<2x32xf32> to vector<2xf32>
    %833 = vector.shape_cast %832 : vector<2xf32> to vector<2x1xf32>
    %834 = vector.broadcast %833 : vector<2x1xf32> to vector<2x32xf32>
    %835 = arith.subf %831, %834 : vector<2x32xf32>
    %836 = vector.broadcast %833 : vector<2x1xf32> to vector<2x32xf32>
    %837 = arith.subf %831, %836 : vector<2x32xf32>
    %838 = math.exp %837 : vector<2x32xf32>
    %cst_170 = arith.constant dense<0.000000e+00> : vector<2xf32>
    %839 = vector.multi_reduction <add>, %838, %cst_170 [1] : vector<2x32xf32> to vector<2xf32>
    %840 = vector.shape_cast %839 : vector<2xf32> to vector<2x1xf32>
    %841 = math.log %840 : vector<2x1xf32>
    %842 = vector.broadcast %841 : vector<2x1xf32> to vector<2x32xf32>
    %843 = arith.subf %835, %842 : vector<2x32xf32>
    %c3 = arith.constant 3 : index
    %c0_171 = arith.constant 0 : index
    %c0_172 = arith.constant 0 : index
    %844 = vector.load %arg20[%c3, %c0_171, %c0_172] : memref<8x2x32xf32, #tpu.memory_space<vmem>>, vector<1x2x32xf32>
    %845 = vector.shape_cast %844 : vector<1x2x32xf32> to vector<2x32xf32>
    %846 = vector.shape_cast %843 : vector<2x32xf32> to vector<1x2x32xf32>
    tpu.vector_store %arg20[%c3, %c0_171, %c0_172], %846 {strides = array<i32>} : memref<8x2x32xf32, #tpu.memory_space<vmem>>, vector<1x2x32xf32>,
    %cst_173 = arith.constant dense<0xFF800000> : vector<2xf32>
    %847 = vector.multi_reduction <maximumf>, %831, %cst_173 [1] : vector<2x32xf32> to vector<2xf32>
    %848 = vector.shape_cast %847 : vector<2xf32> to vector<2x1xf32>
    %849 = vector.broadcast %848 : vector<2x1xf32> to vector<2x32xf32>
    %850 = arith.cmpf oge, %831, %849 : vector<2x32xf32>
    %c32_i32_174 = arith.constant 32 : i32
    %851 = vector.broadcast %c32_i32_174 : i32 to vector<2x32xi32>
    %852 = arith.select %850, %538, %851 : vector<2x32xi1>, vector<2x32xi32>
    %cst_175 = arith.constant dense<2147483647> : vector<2xi32>
    %853 = vector.multi_reduction <minsi>, %852, %cst_175 [1] : vector<2x32xi32> to vector<2xi32>
    %854 = vector.shape_cast %853 : vector<2xi32> to vector<2x1xi32>
    %855 = vector.broadcast %854 : vector<2x1xi32> to vector<2x32xi32>
    %856 = arith.cmpi eq, %538, %855 : vector<2x32xi32>
    %857 = arith.extui %856 : vector<2x32xi1> to vector<2x32xi32>
    %858 = arith.sitofp %857 : vector<2x32xi32> to vector<2x32xf32>
    %859 = tpu.concatenate %858, %804 in 1 : vector<2x32xf32>, vector<2x32xf32> -> vector<2x64xf32>
    %cst_176 = arith.constant dense<0.000000e+00> : vector<2x128xf32>
    %860 = tpu.matmul %859, %503, %cst_176 {dimension_numbers = #tpu.dot_dimension_numbers<[1], [0], [0], [1], [0, 0, 1, 1], [], []>} : vector<2x64xf32>, vector<64x128xf32>, vector<2x128xf32> -> vector<2x128xf32>
    %861 = arith.addf %860, %511 : vector<2x128xf32>
    %862 = vector.extract_strided_slice %861 {offsets = [0, 0], sizes = [2, 32], strides = [1, 1]} : vector<2x128xf32> to vector<2x32xf32>
    %863 = arith.negf %862 : vector<2x32xf32>
    %864 = math.exp %863 : vector<2x32xf32>
    %cst_177 = arith.constant 1.000000e+00 : f32
    %865 = vector.broadcast %cst_177 : f32 to vector<2x32xf32>
    %866 = arith.addf %865, %864 : vector<2x32xf32>
    %867 = arith.divf %865, %866 : vector<2x32xf32>
    %868 = vector.extract_strided_slice %861 {offsets = [0, 32], sizes = [2, 32], strides = [1, 1]} : vector<2x128xf32> to vector<2x32xf32>
    %869 = arith.negf %868 : vector<2x32xf32>
    %870 = math.exp %869 : vector<2x32xf32>
    %cst_178 = arith.constant 1.000000e+00 : f32
    %871 = vector.broadcast %cst_178 : f32 to vector<2x32xf32>
    %872 = arith.addf %871, %870 : vector<2x32xf32>
    %873 = arith.divf %871, %872 : vector<2x32xf32>
    %874 = vector.extract_strided_slice %861 {offsets = [0, 64], sizes = [2, 32], strides = [1, 1]} : vector<2x128xf32> to vector<2x32xf32>
    %875 = vector.extract_strided_slice %861 {offsets = [0, 96], sizes = [2, 32], strides = [1, 1]} : vector<2x128xf32> to vector<2x32xf32>
    %876 = arith.mulf %867, %875 : vector<2x32xf32>
    %877 = arith.addf %874, %876 : vector<2x32xf32>
    %878 = math.tanh %877 : vector<2x32xf32>
    %cst_179 = arith.constant 1.000000e+00 : f32
    %879 = vector.broadcast %cst_179 : f32 to vector<2x32xf32>
    %880 = arith.subf %879, %873 : vector<2x32xf32>
    %881 = arith.mulf %880, %878 : vector<2x32xf32>
    %882 = arith.mulf %873, %804 : vector<2x32xf32>
    %883 = arith.addf %881, %882 : vector<2x32xf32>
    %884 = tpu.concatenate %883, %829 in 1 : vector<2x32xf32>, vector<2x32xf32> -> vector<2x64xf32>
    %cst_180 = arith.constant dense<0.000000e+00> : vector<2x128xf32>
    %885 = tpu.matmul %884, %525, %cst_180 {dimension_numbers = #tpu.dot_dimension_numbers<[1], [0], [0], [1], [0, 0, 1, 1], [], []>} : vector<2x64xf32>, vector<64x128xf32>, vector<2x128xf32> -> vector<2x128xf32>
    %886 = arith.addf %885, %533 : vector<2x128xf32>
    %887 = vector.extract_strided_slice %886 {offsets = [0, 0], sizes = [2, 32], strides = [1, 1]} : vector<2x128xf32> to vector<2x32xf32>
    %888 = arith.negf %887 : vector<2x32xf32>
    %889 = math.exp %888 : vector<2x32xf32>
    %cst_181 = arith.constant 1.000000e+00 : f32
    %890 = vector.broadcast %cst_181 : f32 to vector<2x32xf32>
    %891 = arith.addf %890, %889 : vector<2x32xf32>
    %892 = arith.divf %890, %891 : vector<2x32xf32>
    %893 = vector.extract_strided_slice %886 {offsets = [0, 32], sizes = [2, 32], strides = [1, 1]} : vector<2x128xf32> to vector<2x32xf32>
    %894 = arith.negf %893 : vector<2x32xf32>
    %895 = math.exp %894 : vector<2x32xf32>
    %cst_182 = arith.constant 1.000000e+00 : f32
    %896 = vector.broadcast %cst_182 : f32 to vector<2x32xf32>
    %897 = arith.addf %896, %895 : vector<2x32xf32>
    %898 = arith.divf %896, %897 : vector<2x32xf32>
    %899 = vector.extract_strided_slice %886 {offsets = [0, 64], sizes = [2, 32], strides = [1, 1]} : vector<2x128xf32> to vector<2x32xf32>
    %900 = vector.extract_strided_slice %886 {offsets = [0, 96], sizes = [2, 32], strides = [1, 1]} : vector<2x128xf32> to vector<2x32xf32>
    %901 = arith.mulf %892, %900 : vector<2x32xf32>
    %902 = arith.addf %899, %901 : vector<2x32xf32>
    %903 = math.tanh %902 : vector<2x32xf32>
    %cst_183 = arith.constant 1.000000e+00 : f32
    %904 = vector.broadcast %cst_183 : f32 to vector<2x32xf32>
    %905 = arith.subf %904, %898 : vector<2x32xf32>
    %906 = arith.mulf %905, %903 : vector<2x32xf32>
    %907 = arith.mulf %898, %829 : vector<2x32xf32>
    %908 = arith.addf %906, %907 : vector<2x32xf32>
    %cst_184 = arith.constant dense<0.000000e+00> : vector<2x32xf32>
    %909 = tpu.matmul %908, %534, %cst_184 {dimension_numbers = #tpu.dot_dimension_numbers<[1], [0], [0], [1], [0, 0, 1, 1], [], []>} : vector<2x32xf32>, vector<32x32xf32>, vector<2x32xf32> -> vector<2x32xf32>
    %910 = arith.addf %909, %537 : vector<2x32xf32>
    %cst_185 = arith.constant dense<0xFF800000> : vector<2xf32>
    %911 = vector.multi_reduction <maximumf>, %910, %cst_185 [1] : vector<2x32xf32> to vector<2xf32>
    %912 = vector.shape_cast %911 : vector<2xf32> to vector<2x1xf32>
    %913 = vector.broadcast %912 : vector<2x1xf32> to vector<2x32xf32>
    %914 = arith.subf %910, %913 : vector<2x32xf32>
    %915 = vector.broadcast %912 : vector<2x1xf32> to vector<2x32xf32>
    %916 = arith.subf %910, %915 : vector<2x32xf32>
    %917 = math.exp %916 : vector<2x32xf32>
    %cst_186 = arith.constant dense<0.000000e+00> : vector<2xf32>
    %918 = vector.multi_reduction <add>, %917, %cst_186 [1] : vector<2x32xf32> to vector<2xf32>
    %919 = vector.shape_cast %918 : vector<2xf32> to vector<2x1xf32>
    %920 = math.log %919 : vector<2x1xf32>
    %921 = vector.broadcast %920 : vector<2x1xf32> to vector<2x32xf32>
    %922 = arith.subf %914, %921 : vector<2x32xf32>
    %c4 = arith.constant 4 : index
    %c0_187 = arith.constant 0 : index
    %c0_188 = arith.constant 0 : index
    %923 = vector.load %arg20[%c4, %c0_187, %c0_188] : memref<8x2x32xf32, #tpu.memory_space<vmem>>, vector<1x2x32xf32>
    %924 = vector.shape_cast %923 : vector<1x2x32xf32> to vector<2x32xf32>
    %925 = vector.shape_cast %922 : vector<2x32xf32> to vector<1x2x32xf32>
    tpu.vector_store %arg20[%c4, %c0_187, %c0_188], %925 {strides = array<i32>} : memref<8x2x32xf32, #tpu.memory_space<vmem>>, vector<1x2x32xf32>,
    %cst_189 = arith.constant dense<0xFF800000> : vector<2xf32>
    %926 = vector.multi_reduction <maximumf>, %910, %cst_189 [1] : vector<2x32xf32> to vector<2xf32>
    %927 = vector.shape_cast %926 : vector<2xf32> to vector<2x1xf32>
    %928 = vector.broadcast %927 : vector<2x1xf32> to vector<2x32xf32>
    %929 = arith.cmpf oge, %910, %928 : vector<2x32xf32>
    %c32_i32_190 = arith.constant 32 : i32
    %930 = vector.broadcast %c32_i32_190 : i32 to vector<2x32xi32>
    %931 = arith.select %929, %538, %930 : vector<2x32xi1>, vector<2x32xi32>
    %cst_191 = arith.constant dense<2147483647> : vector<2xi32>
    %932 = vector.multi_reduction <minsi>, %931, %cst_191 [1] : vector<2x32xi32> to vector<2xi32>
    %933 = vector.shape_cast %932 : vector<2xi32> to vector<2x1xi32>
    %934 = vector.broadcast %933 : vector<2x1xi32> to vector<2x32xi32>
    %935 = arith.cmpi eq, %538, %934 : vector<2x32xi32>
    %936 = arith.extui %935 : vector<2x32xi1> to vector<2x32xi32>
    %937 = arith.sitofp %936 : vector<2x32xi32> to vector<2x32xf32>
    %938 = tpu.concatenate %937, %883 in 1 : vector<2x32xf32>, vector<2x32xf32> -> vector<2x64xf32>
    %cst_192 = arith.constant dense<0.000000e+00> : vector<2x128xf32>
    %939 = tpu.matmul %938, %503, %cst_192 {dimension_numbers = #tpu.dot_dimension_numbers<[1], [0], [0], [1], [0, 0, 1, 1], [], []>} : vector<2x64xf32>, vector<64x128xf32>, vector<2x128xf32> -> vector<2x128xf32>
    %940 = arith.addf %939, %511 : vector<2x128xf32>
    %941 = vector.extract_strided_slice %940 {offsets = [0, 0], sizes = [2, 32], strides = [1, 1]} : vector<2x128xf32> to vector<2x32xf32>
    %942 = arith.negf %941 : vector<2x32xf32>
    %943 = math.exp %942 : vector<2x32xf32>
    %cst_193 = arith.constant 1.000000e+00 : f32
    %944 = vector.broadcast %cst_193 : f32 to vector<2x32xf32>
    %945 = arith.addf %944, %943 : vector<2x32xf32>
    %946 = arith.divf %944, %945 : vector<2x32xf32>
    %947 = vector.extract_strided_slice %940 {offsets = [0, 32], sizes = [2, 32], strides = [1, 1]} : vector<2x128xf32> to vector<2x32xf32>
    %948 = arith.negf %947 : vector<2x32xf32>
    %949 = math.exp %948 : vector<2x32xf32>
    %cst_194 = arith.constant 1.000000e+00 : f32
    %950 = vector.broadcast %cst_194 : f32 to vector<2x32xf32>
    %951 = arith.addf %950, %949 : vector<2x32xf32>
    %952 = arith.divf %950, %951 : vector<2x32xf32>
    %953 = vector.extract_strided_slice %940 {offsets = [0, 64], sizes = [2, 32], strides = [1, 1]} : vector<2x128xf32> to vector<2x32xf32>
    %954 = vector.extract_strided_slice %940 {offsets = [0, 96], sizes = [2, 32], strides = [1, 1]} : vector<2x128xf32> to vector<2x32xf32>
    %955 = arith.mulf %946, %954 : vector<2x32xf32>
    %956 = arith.addf %953, %955 : vector<2x32xf32>
    %957 = math.tanh %956 : vector<2x32xf32>
    %cst_195 = arith.constant 1.000000e+00 : f32
    %958 = vector.broadcast %cst_195 : f32 to vector<2x32xf32>
    %959 = arith.subf %958, %952 : vector<2x32xf32>
    %960 = arith.mulf %959, %957 : vector<2x32xf32>
    %961 = arith.mulf %952, %883 : vector<2x32xf32>
    %962 = arith.addf %960, %961 : vector<2x32xf32>
    %963 = tpu.concatenate %962, %908 in 1 : vector<2x32xf32>, vector<2x32xf32> -> vector<2x64xf32>
    %cst_196 = arith.constant dense<0.000000e+00> : vector<2x128xf32>
    %964 = tpu.matmul %963, %525, %cst_196 {dimension_numbers = #tpu.dot_dimension_numbers<[1], [0], [0], [1], [0, 0, 1, 1], [], []>} : vector<2x64xf32>, vector<64x128xf32>, vector<2x128xf32> -> vector<2x128xf32>
    %965 = arith.addf %964, %533 : vector<2x128xf32>
    %966 = vector.extract_strided_slice %965 {offsets = [0, 0], sizes = [2, 32], strides = [1, 1]} : vector<2x128xf32> to vector<2x32xf32>
    %967 = arith.negf %966 : vector<2x32xf32>
    %968 = math.exp %967 : vector<2x32xf32>
    %cst_197 = arith.constant 1.000000e+00 : f32
    %969 = vector.broadcast %cst_197 : f32 to vector<2x32xf32>
    %970 = arith.addf %969, %968 : vector<2x32xf32>
    %971 = arith.divf %969, %970 : vector<2x32xf32>
    %972 = vector.extract_strided_slice %965 {offsets = [0, 32], sizes = [2, 32], strides = [1, 1]} : vector<2x128xf32> to vector<2x32xf32>
    %973 = arith.negf %972 : vector<2x32xf32>
    %974 = math.exp %973 : vector<2x32xf32>
    %cst_198 = arith.constant 1.000000e+00 : f32
    %975 = vector.broadcast %cst_198 : f32 to vector<2x32xf32>
    %976 = arith.addf %975, %974 : vector<2x32xf32>
    %977 = arith.divf %975, %976 : vector<2x32xf32>
    %978 = vector.extract_strided_slice %965 {offsets = [0, 64], sizes = [2, 32], strides = [1, 1]} : vector<2x128xf32> to vector<2x32xf32>
    %979 = vector.extract_strided_slice %965 {offsets = [0, 96], sizes = [2, 32], strides = [1, 1]} : vector<2x128xf32> to vector<2x32xf32>
    %980 = arith.mulf %971, %979 : vector<2x32xf32>
    %981 = arith.addf %978, %980 : vector<2x32xf32>
    %982 = math.tanh %981 : vector<2x32xf32>
    %cst_199 = arith.constant 1.000000e+00 : f32
    %983 = vector.broadcast %cst_199 : f32 to vector<2x32xf32>
    %984 = arith.subf %983, %977 : vector<2x32xf32>
    %985 = arith.mulf %984, %982 : vector<2x32xf32>
    %986 = arith.mulf %977, %908 : vector<2x32xf32>
    %987 = arith.addf %985, %986 : vector<2x32xf32>
    %cst_200 = arith.constant dense<0.000000e+00> : vector<2x32xf32>
    %988 = tpu.matmul %987, %534, %cst_200 {dimension_numbers = #tpu.dot_dimension_numbers<[1], [0], [0], [1], [0, 0, 1, 1], [], []>} : vector<2x32xf32>, vector<32x32xf32>, vector<2x32xf32> -> vector<2x32xf32>
    %989 = arith.addf %988, %537 : vector<2x32xf32>
    %cst_201 = arith.constant dense<0xFF800000> : vector<2xf32>
    %990 = vector.multi_reduction <maximumf>, %989, %cst_201 [1] : vector<2x32xf32> to vector<2xf32>
    %991 = vector.shape_cast %990 : vector<2xf32> to vector<2x1xf32>
    %992 = vector.broadcast %991 : vector<2x1xf32> to vector<2x32xf32>
    %993 = arith.subf %989, %992 : vector<2x32xf32>
    %994 = vector.broadcast %991 : vector<2x1xf32> to vector<2x32xf32>
    %995 = arith.subf %989, %994 : vector<2x32xf32>
    %996 = math.exp %995 : vector<2x32xf32>
    %cst_202 = arith.constant dense<0.000000e+00> : vector<2xf32>
    %997 = vector.multi_reduction <add>, %996, %cst_202 [1] : vector<2x32xf32> to vector<2xf32>
    %998 = vector.shape_cast %997 : vector<2xf32> to vector<2x1xf32>
    %999 = math.log %998 : vector<2x1xf32>
    %1000 = vector.broadcast %999 : vector<2x1xf32> to vector<2x32xf32>
    %1001 = arith.subf %993, %1000 : vector<2x32xf32>
    %c5 = arith.constant 5 : index
    %c0_203 = arith.constant 0 : index
    %c0_204 = arith.constant 0 : index
    %1002 = vector.load %arg20[%c5, %c0_203, %c0_204] : memref<8x2x32xf32, #tpu.memory_space<vmem>>, vector<1x2x32xf32>
    %1003 = vector.shape_cast %1002 : vector<1x2x32xf32> to vector<2x32xf32>
    %1004 = vector.shape_cast %1001 : vector<2x32xf32> to vector<1x2x32xf32>
    tpu.vector_store %arg20[%c5, %c0_203, %c0_204], %1004 {strides = array<i32>} : memref<8x2x32xf32, #tpu.memory_space<vmem>>, vector<1x2x32xf32>,
    %cst_205 = arith.constant dense<0xFF800000> : vector<2xf32>
    %1005 = vector.multi_reduction <maximumf>, %989, %cst_205 [1] : vector<2x32xf32> to vector<2xf32>
    %1006 = vector.shape_cast %1005 : vector<2xf32> to vector<2x1xf32>
    %1007 = vector.broadcast %1006 : vector<2x1xf32> to vector<2x32xf32>
    %1008 = arith.cmpf oge, %989, %1007 : vector<2x32xf32>
    %c32_i32_206 = arith.constant 32 : i32
    %1009 = vector.broadcast %c32_i32_206 : i32 to vector<2x32xi32>
    %1010 = arith.select %1008, %538, %1009 : vector<2x32xi1>, vector<2x32xi32>
    %cst_207 = arith.constant dense<2147483647> : vector<2xi32>
    %1011 = vector.multi_reduction <minsi>, %1010, %cst_207 [1] : vector<2x32xi32> to vector<2xi32>
    %1012 = vector.shape_cast %1011 : vector<2xi32> to vector<2x1xi32>
    %1013 = vector.broadcast %1012 : vector<2x1xi32> to vector<2x32xi32>
    %1014 = arith.cmpi eq, %538, %1013 : vector<2x32xi32>
    %1015 = arith.extui %1014 : vector<2x32xi1> to vector<2x32xi32>
    %1016 = arith.sitofp %1015 : vector<2x32xi32> to vector<2x32xf32>
    %1017 = tpu.concatenate %1016, %962 in 1 : vector<2x32xf32>, vector<2x32xf32> -> vector<2x64xf32>
    %cst_208 = arith.constant dense<0.000000e+00> : vector<2x128xf32>
    %1018 = tpu.matmul %1017, %503, %cst_208 {dimension_numbers = #tpu.dot_dimension_numbers<[1], [0], [0], [1], [0, 0, 1, 1], [], []>} : vector<2x64xf32>, vector<64x128xf32>, vector<2x128xf32> -> vector<2x128xf32>
    %1019 = arith.addf %1018, %511 : vector<2x128xf32>
    %1020 = vector.extract_strided_slice %1019 {offsets = [0, 0], sizes = [2, 32], strides = [1, 1]} : vector<2x128xf32> to vector<2x32xf32>
    %1021 = arith.negf %1020 : vector<2x32xf32>
    %1022 = math.exp %1021 : vector<2x32xf32>
    %cst_209 = arith.constant 1.000000e+00 : f32
    %1023 = vector.broadcast %cst_209 : f32 to vector<2x32xf32>
    %1024 = arith.addf %1023, %1022 : vector<2x32xf32>
    %1025 = arith.divf %1023, %1024 : vector<2x32xf32>
    %1026 = vector.extract_strided_slice %1019 {offsets = [0, 32], sizes = [2, 32], strides = [1, 1]} : vector<2x128xf32> to vector<2x32xf32>
    %1027 = arith.negf %1026 : vector<2x32xf32>
    %1028 = math.exp %1027 : vector<2x32xf32>
    %cst_210 = arith.constant 1.000000e+00 : f32
    %1029 = vector.broadcast %cst_210 : f32 to vector<2x32xf32>
    %1030 = arith.addf %1029, %1028 : vector<2x32xf32>
    %1031 = arith.divf %1029, %1030 : vector<2x32xf32>
    %1032 = vector.extract_strided_slice %1019 {offsets = [0, 64], sizes = [2, 32], strides = [1, 1]} : vector<2x128xf32> to vector<2x32xf32>
    %1033 = vector.extract_strided_slice %1019 {offsets = [0, 96], sizes = [2, 32], strides = [1, 1]} : vector<2x128xf32> to vector<2x32xf32>
    %1034 = arith.mulf %1025, %1033 : vector<2x32xf32>
    %1035 = arith.addf %1032, %1034 : vector<2x32xf32>
    %1036 = math.tanh %1035 : vector<2x32xf32>
    %cst_211 = arith.constant 1.000000e+00 : f32
    %1037 = vector.broadcast %cst_211 : f32 to vector<2x32xf32>
    %1038 = arith.subf %1037, %1031 : vector<2x32xf32>
    %1039 = arith.mulf %1038, %1036 : vector<2x32xf32>
    %1040 = arith.mulf %1031, %962 : vector<2x32xf32>
    %1041 = arith.addf %1039, %1040 : vector<2x32xf32>
    %1042 = tpu.concatenate %1041, %987 in 1 : vector<2x32xf32>, vector<2x32xf32> -> vector<2x64xf32>
    %cst_212 = arith.constant dense<0.000000e+00> : vector<2x128xf32>
    %1043 = tpu.matmul %1042, %525, %cst_212 {dimension_numbers = #tpu.dot_dimension_numbers<[1], [0], [0], [1], [0, 0, 1, 1], [], []>} : vector<2x64xf32>, vector<64x128xf32>, vector<2x128xf32> -> vector<2x128xf32>
    %1044 = arith.addf %1043, %533 : vector<2x128xf32>
    %1045 = vector.extract_strided_slice %1044 {offsets = [0, 0], sizes = [2, 32], strides = [1, 1]} : vector<2x128xf32> to vector<2x32xf32>
    %1046 = arith.negf %1045 : vector<2x32xf32>
    %1047 = math.exp %1046 : vector<2x32xf32>
    %cst_213 = arith.constant 1.000000e+00 : f32
    %1048 = vector.broadcast %cst_213 : f32 to vector<2x32xf32>
    %1049 = arith.addf %1048, %1047 : vector<2x32xf32>
    %1050 = arith.divf %1048, %1049 : vector<2x32xf32>
    %1051 = vector.extract_strided_slice %1044 {offsets = [0, 32], sizes = [2, 32], strides = [1, 1]} : vector<2x128xf32> to vector<2x32xf32>
    %1052 = arith.negf %1051 : vector<2x32xf32>
    %1053 = math.exp %1052 : vector<2x32xf32>
    %cst_214 = arith.constant 1.000000e+00 : f32
    %1054 = vector.broadcast %cst_214 : f32 to vector<2x32xf32>
    %1055 = arith.addf %1054, %1053 : vector<2x32xf32>
    %1056 = arith.divf %1054, %1055 : vector<2x32xf32>
    %1057 = vector.extract_strided_slice %1044 {offsets = [0, 64], sizes = [2, 32], strides = [1, 1]} : vector<2x128xf32> to vector<2x32xf32>
    %1058 = vector.extract_strided_slice %1044 {offsets = [0, 96], sizes = [2, 32], strides = [1, 1]} : vector<2x128xf32> to vector<2x32xf32>
    %1059 = arith.mulf %1050, %1058 : vector<2x32xf32>
    %1060 = arith.addf %1057, %1059 : vector<2x32xf32>
    %1061 = math.tanh %1060 : vector<2x32xf32>
    %cst_215 = arith.constant 1.000000e+00 : f32
    %1062 = vector.broadcast %cst_215 : f32 to vector<2x32xf32>
    %1063 = arith.subf %1062, %1056 : vector<2x32xf32>
    %1064 = arith.mulf %1063, %1061 : vector<2x32xf32>
    %1065 = arith.mulf %1056, %987 : vector<2x32xf32>
    %1066 = arith.addf %1064, %1065 : vector<2x32xf32>
    %cst_216 = arith.constant dense<0.000000e+00> : vector<2x32xf32>
    %1067 = tpu.matmul %1066, %534, %cst_216 {dimension_numbers = #tpu.dot_dimension_numbers<[1], [0], [0], [1], [0, 0, 1, 1], [], []>} : vector<2x32xf32>, vector<32x32xf32>, vector<2x32xf32> -> vector<2x32xf32>
    %1068 = arith.addf %1067, %537 : vector<2x32xf32>
    %cst_217 = arith.constant dense<0xFF800000> : vector<2xf32>
    %1069 = vector.multi_reduction <maximumf>, %1068, %cst_217 [1] : vector<2x32xf32> to vector<2xf32>
    %1070 = vector.shape_cast %1069 : vector<2xf32> to vector<2x1xf32>
    %1071 = vector.broadcast %1070 : vector<2x1xf32> to vector<2x32xf32>
    %1072 = arith.subf %1068, %1071 : vector<2x32xf32>
    %1073 = vector.broadcast %1070 : vector<2x1xf32> to vector<2x32xf32>
    %1074 = arith.subf %1068, %1073 : vector<2x32xf32>
    %1075 = math.exp %1074 : vector<2x32xf32>
    %cst_218 = arith.constant dense<0.000000e+00> : vector<2xf32>
    %1076 = vector.multi_reduction <add>, %1075, %cst_218 [1] : vector<2x32xf32> to vector<2xf32>
    %1077 = vector.shape_cast %1076 : vector<2xf32> to vector<2x1xf32>
    %1078 = math.log %1077 : vector<2x1xf32>
    %1079 = vector.broadcast %1078 : vector<2x1xf32> to vector<2x32xf32>
    %1080 = arith.subf %1072, %1079 : vector<2x32xf32>
    %c6 = arith.constant 6 : index
    %c0_219 = arith.constant 0 : index
    %c0_220 = arith.constant 0 : index
    %1081 = vector.load %arg20[%c6, %c0_219, %c0_220] : memref<8x2x32xf32, #tpu.memory_space<vmem>>, vector<1x2x32xf32>
    %1082 = vector.shape_cast %1081 : vector<1x2x32xf32> to vector<2x32xf32>
    %1083 = vector.shape_cast %1080 : vector<2x32xf32> to vector<1x2x32xf32>
    tpu.vector_store %arg20[%c6, %c0_219, %c0_220], %1083 {strides = array<i32>} : memref<8x2x32xf32, #tpu.memory_space<vmem>>, vector<1x2x32xf32>,
    %cst_221 = arith.constant dense<0xFF800000> : vector<2xf32>
    %1084 = vector.multi_reduction <maximumf>, %1068, %cst_221 [1] : vector<2x32xf32> to vector<2xf32>
    %1085 = vector.shape_cast %1084 : vector<2xf32> to vector<2x1xf32>
    %1086 = vector.broadcast %1085 : vector<2x1xf32> to vector<2x32xf32>
    %1087 = arith.cmpf oge, %1068, %1086 : vector<2x32xf32>
    %c32_i32_222 = arith.constant 32 : i32
    %1088 = vector.broadcast %c32_i32_222 : i32 to vector<2x32xi32>
    %1089 = arith.select %1087, %538, %1088 : vector<2x32xi1>, vector<2x32xi32>
    %cst_223 = arith.constant dense<2147483647> : vector<2xi32>
    %1090 = vector.multi_reduction <minsi>, %1089, %cst_223 [1] : vector<2x32xi32> to vector<2xi32>
    %1091 = vector.shape_cast %1090 : vector<2xi32> to vector<2x1xi32>
    %1092 = vector.broadcast %1091 : vector<2x1xi32> to vector<2x32xi32>
    %1093 = arith.cmpi eq, %538, %1092 : vector<2x32xi32>
    %1094 = arith.extui %1093 : vector<2x32xi1> to vector<2x32xi32>
    %1095 = arith.sitofp %1094 : vector<2x32xi32> to vector<2x32xf32>
    %1096 = tpu.concatenate %1095, %1041 in 1 : vector<2x32xf32>, vector<2x32xf32> -> vector<2x64xf32>
    %cst_224 = arith.constant dense<0.000000e+00> : vector<2x128xf32>
    %1097 = tpu.matmul %1096, %503, %cst_224 {dimension_numbers = #tpu.dot_dimension_numbers<[1], [0], [0], [1], [0, 0, 1, 1], [], []>} : vector<2x64xf32>, vector<64x128xf32>, vector<2x128xf32> -> vector<2x128xf32>
    %1098 = arith.addf %1097, %511 : vector<2x128xf32>
    %1099 = vector.extract_strided_slice %1098 {offsets = [0, 0], sizes = [2, 32], strides = [1, 1]} : vector<2x128xf32> to vector<2x32xf32>
    %1100 = arith.negf %1099 : vector<2x32xf32>
    %1101 = math.exp %1100 : vector<2x32xf32>
    %cst_225 = arith.constant 1.000000e+00 : f32
    %1102 = vector.broadcast %cst_225 : f32 to vector<2x32xf32>
    %1103 = arith.addf %1102, %1101 : vector<2x32xf32>
    %1104 = arith.divf %1102, %1103 : vector<2x32xf32>
    %1105 = vector.extract_strided_slice %1098 {offsets = [0, 32], sizes = [2, 32], strides = [1, 1]} : vector<2x128xf32> to vector<2x32xf32>
    %1106 = arith.negf %1105 : vector<2x32xf32>
    %1107 = math.exp %1106 : vector<2x32xf32>
    %cst_226 = arith.constant 1.000000e+00 : f32
    %1108 = vector.broadcast %cst_226 : f32 to vector<2x32xf32>
    %1109 = arith.addf %1108, %1107 : vector<2x32xf32>
    %1110 = arith.divf %1108, %1109 : vector<2x32xf32>
    %1111 = vector.extract_strided_slice %1098 {offsets = [0, 64], sizes = [2, 32], strides = [1, 1]} : vector<2x128xf32> to vector<2x32xf32>
    %1112 = vector.extract_strided_slice %1098 {offsets = [0, 96], sizes = [2, 32], strides = [1, 1]} : vector<2x128xf32> to vector<2x32xf32>
    %1113 = arith.mulf %1104, %1112 : vector<2x32xf32>
    %1114 = arith.addf %1111, %1113 : vector<2x32xf32>
    %1115 = math.tanh %1114 : vector<2x32xf32>
    %cst_227 = arith.constant 1.000000e+00 : f32
    %1116 = vector.broadcast %cst_227 : f32 to vector<2x32xf32>
    %1117 = arith.subf %1116, %1110 : vector<2x32xf32>
    %1118 = arith.mulf %1117, %1115 : vector<2x32xf32>
    %1119 = arith.mulf %1110, %1041 : vector<2x32xf32>
    %1120 = arith.addf %1118, %1119 : vector<2x32xf32>
    %1121 = tpu.concatenate %1120, %1066 in 1 : vector<2x32xf32>, vector<2x32xf32> -> vector<2x64xf32>
    %cst_228 = arith.constant dense<0.000000e+00> : vector<2x128xf32>
    %1122 = tpu.matmul %1121, %525, %cst_228 {dimension_numbers = #tpu.dot_dimension_numbers<[1], [0], [0], [1], [0, 0, 1, 1], [], []>} : vector<2x64xf32>, vector<64x128xf32>, vector<2x128xf32> -> vector<2x128xf32>
    %1123 = arith.addf %1122, %533 : vector<2x128xf32>
    %1124 = vector.extract_strided_slice %1123 {offsets = [0, 0], sizes = [2, 32], strides = [1, 1]} : vector<2x128xf32> to vector<2x32xf32>
    %1125 = arith.negf %1124 : vector<2x32xf32>
    %1126 = math.exp %1125 : vector<2x32xf32>
    %cst_229 = arith.constant 1.000000e+00 : f32
    %1127 = vector.broadcast %cst_229 : f32 to vector<2x32xf32>
    %1128 = arith.addf %1127, %1126 : vector<2x32xf32>
    %1129 = arith.divf %1127, %1128 : vector<2x32xf32>
    %1130 = vector.extract_strided_slice %1123 {offsets = [0, 32], sizes = [2, 32], strides = [1, 1]} : vector<2x128xf32> to vector<2x32xf32>
    %1131 = arith.negf %1130 : vector<2x32xf32>
    %1132 = math.exp %1131 : vector<2x32xf32>
    %cst_230 = arith.constant 1.000000e+00 : f32
    %1133 = vector.broadcast %cst_230 : f32 to vector<2x32xf32>
    %1134 = arith.addf %1133, %1132 : vector<2x32xf32>
    %1135 = arith.divf %1133, %1134 : vector<2x32xf32>
    %1136 = vector.extract_strided_slice %1123 {offsets = [0, 64], sizes = [2, 32], strides = [1, 1]} : vector<2x128xf32> to vector<2x32xf32>
    %1137 = vector.extract_strided_slice %1123 {offsets = [0, 96], sizes = [2, 32], strides = [1, 1]} : vector<2x128xf32> to vector<2x32xf32>
    %1138 = arith.mulf %1129, %1137 : vector<2x32xf32>
    %1139 = arith.addf %1136, %1138 : vector<2x32xf32>
    %1140 = math.tanh %1139 : vector<2x32xf32>
    %cst_231 = arith.constant 1.000000e+00 : f32
    %1141 = vector.broadcast %cst_231 : f32 to vector<2x32xf32>
    %1142 = arith.subf %1141, %1135 : vector<2x32xf32>
    %1143 = arith.mulf %1142, %1140 : vector<2x32xf32>
    %1144 = arith.mulf %1135, %1066 : vector<2x32xf32>
    %1145 = arith.addf %1143, %1144 : vector<2x32xf32>
    %cst_232 = arith.constant dense<0.000000e+00> : vector<2x32xf32>
    %1146 = tpu.matmul %1145, %534, %cst_232 {dimension_numbers = #tpu.dot_dimension_numbers<[1], [0], [0], [1], [0, 0, 1, 1], [], []>} : vector<2x32xf32>, vector<32x32xf32>, vector<2x32xf32> -> vector<2x32xf32>
    %1147 = arith.addf %1146, %537 : vector<2x32xf32>
    %cst_233 = arith.constant dense<0xFF800000> : vector<2xf32>
    %1148 = vector.multi_reduction <maximumf>, %1147, %cst_233 [1] : vector<2x32xf32> to vector<2xf32>
    %1149 = vector.shape_cast %1148 : vector<2xf32> to vector<2x1xf32>
    %1150 = vector.broadcast %1149 : vector<2x1xf32> to vector<2x32xf32>
    %1151 = arith.subf %1147, %1150 : vector<2x32xf32>
    %1152 = vector.broadcast %1149 : vector<2x1xf32> to vector<2x32xf32>
    %1153 = arith.subf %1147, %1152 : vector<2x32xf32>
    %1154 = math.exp %1153 : vector<2x32xf32>
    %cst_234 = arith.constant dense<0.000000e+00> : vector<2xf32>
    %1155 = vector.multi_reduction <add>, %1154, %cst_234 [1] : vector<2x32xf32> to vector<2xf32>
    %1156 = vector.shape_cast %1155 : vector<2xf32> to vector<2x1xf32>
    %1157 = math.log %1156 : vector<2x1xf32>
    %1158 = vector.broadcast %1157 : vector<2x1xf32> to vector<2x32xf32>
    %1159 = arith.subf %1151, %1158 : vector<2x32xf32>
    %c7 = arith.constant 7 : index
    %c0_235 = arith.constant 0 : index
    %c0_236 = arith.constant 0 : index
    %1160 = vector.load %arg20[%c7, %c0_235, %c0_236] : memref<8x2x32xf32, #tpu.memory_space<vmem>>, vector<1x2x32xf32>
    %1161 = vector.shape_cast %1160 : vector<1x2x32xf32> to vector<2x32xf32>
    %1162 = vector.shape_cast %1159 : vector<2x32xf32> to vector<1x2x32xf32>
    tpu.vector_store %arg20[%c7, %c0_235, %c0_236], %1162 {strides = array<i32>} : memref<8x2x32xf32, #tpu.memory_space<vmem>>, vector<1x2x32xf32>,
    return
  }
}

</mosaic_0001>

<llo_original>
// kernel: seq2seq_gru_forward.1
$region0: #{seq2seq_gru_forward.1}
  #allocation0 [shape = 'u32[]', space=smem, size = 0x4, offset = 0x4, fixed_abs, tag = 'smem constant byte address 0x4 - core index']
  #allocation1 [shape = 'u32[144,128]{1,0:T(1,128)}', space=vmem, size = 0x12000, scoped, tag = 'internal scratch']
  %s0 = inlined_call_operand.vmem [shape: f32[16,16], index: 0, kind: input, shape index: {}]
  %s1 = inlined_call_operand.vmem [shape: f32[16,96], index: 1, kind: input, shape index: {}]
  %s2 = inlined_call_operand.vmem [shape: f32[32,96], index: 2, kind: input, shape index: {}]
  %s3 = inlined_call_operand.vmem [shape: f32[1,96], index: 3, kind: input, shape index: {}]
  %s4 = inlined_call_operand.vmem [shape: f32[1,96], index: 4, kind: input, shape index: {}]
  %s5 = inlined_call_operand.vmem [shape: f32[16,96], index: 5, kind: input, shape index: {}]
  %s6 = inlined_call_operand.vmem [shape: f32[32,96], index: 6, kind: input, shape index: {}]
  %s7 = inlined_call_operand.vmem [shape: f32[1,96], index: 7, kind: input, shape index: {}]
  %s8 = inlined_call_operand.vmem [shape: f32[1,96], index: 8, kind: input, shape index: {}]
  %s9 = inlined_call_operand.vmem [shape: f32[32,16], index: 9, kind: input, shape index: {}]
  %s10 = inlined_call_operand.vmem [shape: f32[16,96], index: 10, kind: input, shape index: {}]
  %s11 = inlined_call_operand.vmem [shape: f32[32,96], index: 11, kind: input, shape index: {}]
  %s12 = inlined_call_operand.vmem [shape: f32[1,96], index: 12, kind: input, shape index: {}]
  %s13 = inlined_call_operand.vmem [shape: f32[1,96], index: 13, kind: input, shape index: {}]
  %s14 = inlined_call_operand.vmem [shape: f32[32,96], index: 14, kind: input, shape index: {}]
  %s15 = inlined_call_operand.vmem [shape: f32[32,96], index: 15, kind: input, shape index: {}]
  %s16 = inlined_call_operand.vmem [shape: f32[1,96], index: 16, kind: input, shape index: {}]
  %s17 = inlined_call_operand.vmem [shape: f32[1,96], index: 17, kind: input, shape index: {}]
  %s18 = inlined_call_operand.vmem [shape: f32[32,32], index: 18, kind: input, shape index: {}]
  %s19 = inlined_call_operand.vmem [shape: f32[1,32], index: 19, kind: input, shape index: {}]
  %s20 = inlined_call_operand.vmem [shape: f32[8,2,32], index: 20, kind: output, shape index: {}]
  %s21 = sld [smem:[#allocation0]]
  $region90: #{seq2seq_gru_forward.1} parent=0
    _
  %s23 = ssub.s32 1, %s21
  %s24 = scalar_select 0, %s23, %s21
  // Predicated region
  $region2: #{seq2seq_gru_forward.1} parent=0 // pred_check
    _
  $region3: #{seq2seq_gru_forward.1} parent=0 // pred_check_branch
    %26 = sbr.rel (0) target = $region5
  $region4: #{seq2seq_gru_forward.1} parent=0 // pred_region
    _
  $region5: #{seq2seq_gru_forward.1} parent=0 // pred_fallthru
    _
  // Predicated region
  $region6: #{seq2seq_gru_forward.1} parent=0 // pred_check
    _
  $region7: #{seq2seq_gru_forward.1} parent=0 // pred_check_branch
    %28 = sbr.rel (0) target = $region9
  $region8: #{seq2seq_gru_forward.1} parent=0 // pred_region
    _
  $region9: #{seq2seq_gru_forward.1} parent=0 // pred_fallthru
    _
  // Predicated region
  $region10: #{seq2seq_gru_forward.1} parent=0 // pred_check
    _
  $region11: #{seq2seq_gru_forward.1} parent=0 // pred_check_branch
    %30 = sbr.rel (0) target = $region13
  $region12: #{seq2seq_gru_forward.1} parent=0 // pred_region
    _
  $region13: #{seq2seq_gru_forward.1} parent=0 // pred_fallthru
    _
  // Predicated region
  $region14: #{seq2seq_gru_forward.1} parent=0 // pred_check
    _
  $region15: #{seq2seq_gru_forward.1} parent=0 // pred_check_branch
    %32 = sbr.rel (0) target = $region17
  $region16: #{seq2seq_gru_forward.1} parent=0 // pred_region
    _
  $region17: #{seq2seq_gru_forward.1} parent=0 // pred_fallthru
    _
  // Predicated region
  $region18: #{seq2seq_gru_forward.1} parent=0 // pred_check
    _
  $region19: #{seq2seq_gru_forward.1} parent=0 // pred_check_branch
    %34 = sbr.rel (0) target = $region21
  $region20: #{seq2seq_gru_forward.1} parent=0 // pred_region
    _
  $region21: #{seq2seq_gru_forward.1} parent=0 // pred_fallthru
    _
  // Predicated region
  $region22: #{seq2seq_gru_forward.1} parent=0 // pred_check
    _
  $region23: #{seq2seq_gru_forward.1} parent=0 // pred_check_branch
    %36 = sbr.rel (0) target = $region25
  $region24: #{seq2seq_gru_forward.1} parent=0 // pred_region
    _
  $region25: #{seq2seq_gru_forward.1} parent=0 // pred_fallthru
    _
  // Predicated region
  $region26: #{seq2seq_gru_forward.1} parent=0 // pred_check
    _
  $region27: #{seq2seq_gru_forward.1} parent=0 // pred_check_branch
    %38 = sbr.rel (0) target = $region29
  $region28: #{seq2seq_gru_forward.1} parent=0 // pred_region
    _
  $region29: #{seq2seq_gru_forward.1} parent=0 // pred_fallthru
    _
  // Predicated region
  $region30: #{seq2seq_gru_forward.1} parent=0 // pred_check
    _
  $region31: #{seq2seq_gru_forward.1} parent=0 // pred_check_branch
    %40 = sbr.rel (0) target = $region33
  $region32: #{seq2seq_gru_forward.1} parent=0 // pred_region
    _
  $region33: #{seq2seq_gru_forward.1} parent=0 // pred_fallthru
    _
  // Predicated region
  $region34: #{seq2seq_gru_forward.1} parent=0 // pred_check
    _
  $region35: #{seq2seq_gru_forward.1} parent=0 // pred_check_branch
    %42 = sbr.rel (0) target = $region37
  $region36: #{seq2seq_gru_forward.1} parent=0 // pred_region
    _
  $region37: #{seq2seq_gru_forward.1} parent=0 // pred_fallthru
    _
  // Predicated region
  $region38: #{seq2seq_gru_forward.1} parent=0 // pred_check
    _
  $region39: #{seq2seq_gru_forward.1} parent=0 // pred_check_branch
    %44 = sbr.rel (0) target = $region41
  $region40: #{seq2seq_gru_forward.1} parent=0 // pred_region
    _
  $region41: #{seq2seq_gru_forward.1} parent=0 // pred_fallthru
    _
  // Predicated region
  $region42: #{seq2seq_gru_forward.1} parent=0 // pred_check
    _
  $region43: #{seq2seq_gru_forward.1} parent=0 // pred_check_branch
    %46 = sbr.rel (0) target = $region45
  $region44: #{seq2seq_gru_forward.1} parent=0 // pred_region
    _
  $region45: #{seq2seq_gru_forward.1} parent=0 // pred_fallthru
    _
  // Predicated region
  $region46: #{seq2seq_gru_forward.1} parent=0 // pred_check
    _
  $region47: #{seq2seq_gru_forward.1} parent=0 // pred_check_branch
    %48 = sbr.rel (0) target = $region49
  $region48: #{seq2seq_gru_forward.1} parent=0 // pred_region
    _
  $region49: #{seq2seq_gru_forward.1} parent=0 // pred_fallthru
    _
  // Predicated region
  $region50: #{seq2seq_gru_forward.1} parent=0 // pred_check
    _
  $region51: #{seq2seq_gru_forward.1} parent=0 // pred_check_branch
    %50 = sbr.rel (0) target = $region53
  $region52: #{seq2seq_gru_forward.1} parent=0 // pred_region
    _
  $region53: #{seq2seq_gru_forward.1} parent=0 // pred_fallthru
    _
  // Predicated region
  $region54: #{seq2seq_gru_forward.1} parent=0 // pred_check
    _
  $region55: #{seq2seq_gru_forward.1} parent=0 // pred_check_branch
    %52 = sbr.rel (0) target = $region57
  $region56: #{seq2seq_gru_forward.1} parent=0 // pred_region
    _
  $region57: #{seq2seq_gru_forward.1} parent=0 // pred_fallthru
    _
  // Predicated region
  $region58: #{seq2seq_gru_forward.1} parent=0 // pred_check
    _
  $region59: #{seq2seq_gru_forward.1} parent=0 // pred_check_branch
    %54 = sbr.rel (0) target = $region61
  $region60: #{seq2seq_gru_forward.1} parent=0 // pred_region
    _
  $region61: #{seq2seq_gru_forward.1} parent=0 // pred_fallthru
    _
  // Predicated region
  $region62: #{seq2seq_gru_forward.1} parent=0 // pred_check
    _
  $region63: #{seq2seq_gru_forward.1} parent=0 // pred_check_branch
    %56 = sbr.rel (0) target = $region65
  $region64: #{seq2seq_gru_forward.1} parent=0 // pred_region
    _
  $region65: #{seq2seq_gru_forward.1} parent=0 // pred_fallthru
    _
  // Predicated region
  $region66: #{seq2seq_gru_forward.1} parent=0 // pred_check
    _
  $region67: #{seq2seq_gru_forward.1} parent=0 // pred_check_branch
    %58 = sbr.rel (0) target = $region69
  $region68: #{seq2seq_gru_forward.1} parent=0 // pred_region
    _
  $region69: #{seq2seq_gru_forward.1} parent=0 // pred_fallthru
    _
  // Predicated region
  $region70: #{seq2seq_gru_forward.1} parent=0 // pred_check
    _
  $region71: #{seq2seq_gru_forward.1} parent=0 // pred_check_branch
    %60 = sbr.rel (0) target = $region73
  $region72: #{seq2seq_gru_forward.1} parent=0 // pred_region
    _
  $region73: #{seq2seq_gru_forward.1} parent=0 // pred_fallthru
    _
  // Predicated region
  $region74: #{seq2seq_gru_forward.1} parent=0 // pred_check
    _
  $region75: #{seq2seq_gru_forward.1} parent=0 // pred_check_branch
    %62 = sbr.rel (0) target = $region77
  $region76: #{seq2seq_gru_forward.1} parent=0 // pred_region
    _
  $region77: #{seq2seq_gru_forward.1} parent=0 // pred_fallthru
    _
  // Predicated region
  $region78: #{seq2seq_gru_forward.1} parent=0 // pred_check
    _
  $region79: #{seq2seq_gru_forward.1} parent=0 // pred_check_branch
    %64 = sbr.rel (0) target = $region81
  $region80: #{seq2seq_gru_forward.1} parent=0 // pred_region
    _
  $region81: #{seq2seq_gru_forward.1} parent=0 // pred_fallthru
    _
  %v65 = vld [vmem:[%s0] sm:$0xff]
  %v66 = vld [vmem:[%s0 + $0x8] sm:$0xff]
  %v67 = vld [vmem:[%s1] sm:$0xff]
  %v68 = vld [vmem:[%s1 + $0x8] sm:$0xff]
  %v69 = vld [vmem:[%s3] sm:$0x1]
  %v71 = vlaneseq
  %v72 = vshrl.u32 %v71, 7
  %v73 = vsub.s32 0, %v72
  %v74 = vrot.slane %v69, %v73
  %vm76 = vcmask 130048
  %v78 = vsel %vm76, %v65, 0
  %v81 = vsel %vm76, %v66, 0
  %83 = vmatprep.subr.mxu0 0.0
  %84 = vmatpush1.msra.mxu0 %v67
  %85 = vmatprep.subr.mxu0 0.0
  %86 = vmatpush1.msra.mxu0 %v68
  %87 = vmatprep.subr.mxu0 0.0
  %88 = vmatpush1.msra.mxu0 0.0
  %89 = vmatprep.subr.mxu0 0.0
  %90 = vmatpush1.msra.mxu0 0.0
  %91 = vmatprep.subr.mxu0 0.0
  %92 = vmatpush1.msra.mxu0 0.0
  %93 = vmatprep.subr.mxu0 0.0
  %94 = vmatpush1.msra.mxu0 0.0
  %95 = vmatprep.subr.mxu0 0.0
  %96 = vmatpush1.msra.mxu0 0.0
  %97 = vmatprep.subr.mxu0 0.0
  %98 = vmatpush1.msra.mxu0 0.0
  %99 = vmatprep.subr.mxu0 0.0
  %100 = vmatpush1.msra.mxu0 0.0
  %101 = vmatprep.subr.mxu0 0.0
  %102 = vmatpush1.msra.mxu0 0.0
  %103 = vmatprep.subr.mxu0 0.0
  %104 = vmatpush1.msra.mxu0 0.0
  %105 = vmatprep.subr.mxu0 0.0
  %106 = vmatpush1.msra.mxu0 0.0
  %107 = vmatprep.subr.mxu0 0.0
  %108 = vmatpush1.msra.mxu0 0.0
  %109 = vmatprep.subr.mxu0 0.0
  %110 = vmatpush1.msra.mxu0 0.0
  %111 = vmatprep.subr.mxu0 0.0
  %112 = vmatpush1.msra.mxu0 0.0
  %113 = vmatprep.subr.mxu0 0.0
  %114 = vmatpush1.msra.mxu0 0.0
  %115 = vmatprep.subr.mxu0 0.0
  %116 = vmatpush1.msra.mxu0 0.0
  %117 = vmatprep.subr.mxu0 0.0
  %118 = vmatpush1.msra.mxu0 0.0
  %119 = vmatprep.subr.mxu0 0.0
  %120 = vmatpush1.msra.mxu0 0.0
  %121 = vmatprep.subr.mxu0 0.0
  %122 = vmatpush1.msra.mxu0 0.0
  %123 = vmatprep.subr.mxu0 0.0
  %124 = vmatpush1.msra.mxu0 0.0
  %125 = vmatprep.subr.mxu0 0.0
  %126 = vmatpush1.msra.mxu0 0.0
  %127 = vmatprep.subr.mxu0 0.0
  %128 = vmatpush1.msra.mxu0 0.0
  %129 = vmatprep.subr.mxu0 0.0
  %130 = vmatpush1.msra.mxu0 0.0
  %131 = vmatprep.subr.mxu0 0.0
  %132 = vmatpush1.msra.mxu0 0.0
  %133 = vmatprep.subr.mxu0 0.0
  %134 = vmatpush1.msra.mxu0 0.0
  %135 = vmatprep.subr.mxu0 0.0
  %136 = vmatpush1.msra.mxu0 0.0
  %137 = vmatprep.subr.mxu0 0.0
  %138 = vmatpush1.msra.mxu0 0.0
  %139 = vmatprep.subr.mxu0 0.0
  %140 = vmatpush1.msra.mxu0 0.0
  %141 = vmatprep.subr.mxu0 0.0
  %142 = vmatpush1.msra.mxu0 0.0
  %143 = vmatprep.subr.mxu0 0.0
  %144 = vmatpush1.msra.mxu0 0.0
  %145 = vmatprep.subr.mxu0 0.0
  %146 = vmatpush1.msra.mxu0 0.0
  %147 = vmatprep.mubr.f32.mxu0 0.0
  %148 = vmatmul.mubr.f32.gmra.mrb[0].mxu0 %v78
  %v149 = vpop.f32.mrb[0].mxu0
  %v150 = vadd.f32 %v74, %v149
  %v151 = vpop.f32.mrb[0].mxu0
  %152 = vmatprep.mubr.f32.mxu0 0.0
  %153 = vmatmul.mubr.f32.gmra.mrb[0].mxu0 %v81
  %v154 = vpop.f32.mrb[0].mxu0
  %v155 = vadd.f32 %v74, %v154
  %v156 = vpop.f32.mrb[0].mxu0
  %157 = vdwg.mxu0
  %v158 = vld [vmem:[%s5] sm:$0xff]
  %v159 = vld [vmem:[%s5 + $0x8] sm:$0xff]
  %v160 = vld [vmem:[%s7] sm:$0x1]
  %v162 = vlaneseq
  %v163 = vshrl.u32 %v162, 7
  %v164 = vsub.s32 0, %v163
  %v165 = vrot.slane %v160, %v164
  %167 = vmatprep.subr.mxu0 0.0
  %168 = vmatpush1.msra.mxu0 %v158
  %169 = vmatprep.subr.mxu0 0.0
  %170 = vmatpush1.msra.mxu0 %v159
  %171 = vmatprep.subr.mxu0 0.0
  %172 = vmatpush1.msra.mxu0 0.0
  %173 = vmatprep.subr.mxu0 0.0
  %174 = vmatpush1.msra.mxu0 0.0
  %175 = vmatprep.subr.mxu0 0.0
  %176 = vmatpush1.msra.mxu0 0.0
  %177 = vmatprep.subr.mxu0 0.0
  %178 = vmatpush1.msra.mxu0 0.0
  %179 = vmatprep.subr.mxu0 0.0
  %180 = vmatpush1.msra.mxu0 0.0
  %181 = vmatprep.subr.mxu0 0.0
  %182 = vmatpush1.msra.mxu0 0.0
  %183 = vmatprep.subr.mxu0 0.0
  %184 = vmatpush1.msra.mxu0 0.0
  %185 = vmatprep.subr.mxu0 0.0
  %186 = vmatpush1.msra.mxu0 0.0
  %187 = vmatprep.subr.mxu0 0.0
  %188 = vmatpush1.msra.mxu0 0.0
  %189 = vmatprep.subr.mxu0 0.0
  %190 = vmatpush1.msra.mxu0 0.0
  %191 = vmatprep.subr.mxu0 0.0
  %192 = vmatpush1.msra.mxu0 0.0
  %193 = vmatprep.subr.mxu0 0.0
  %194 = vmatpush1.msra.mxu0 0.0
  %195 = vmatprep.subr.mxu0 0.0
  %196 = vmatpush1.msra.mxu0 0.0
  %197 = vmatprep.subr.mxu0 0.0
  %198 = vmatpush1.msra.mxu0 0.0
  %199 = vmatprep.subr.mxu0 0.0
  %200 = vmatpush1.msra.mxu0 0.0
  %201 = vmatprep.subr.mxu0 0.0
  %202 = vmatpush1.msra.mxu0 0.0
  %203 = vmatprep.subr.mxu0 0.0
  %204 = vmatpush1.msra.mxu0 0.0
  %205 = vmatprep.subr.mxu0 0.0
  %206 = vmatpush1.msra.mxu0 0.0
  %207 = vmatprep.subr.mxu0 0.0
  %208 = vmatpush1.msra.mxu0 0.0
  %209 = vmatprep.subr.mxu0 0.0
  %210 = vmatpush1.msra.mxu0 0.0
  %211 = vmatprep.subr.mxu0 0.0
  %212 = vmatpush1.msra.mxu0 0.0
  %213 = vmatprep.subr.mxu0 0.0
  %214 = vmatpush1.msra.mxu0 0.0
  %215 = vmatprep.subr.mxu0 0.0
  %216 = vmatpush1.msra.mxu0 0.0
  %217 = vmatprep.subr.mxu0 0.0
  %218 = vmatpush1.msra.mxu0 0.0
  %219 = vmatprep.subr.mxu0 0.0
  %220 = vmatpush1.msra.mxu0 0.0
  %221 = vmatprep.subr.mxu0 0.0
  %222 = vmatpush1.msra.mxu0 0.0
  %223 = vmatprep.subr.mxu0 0.0
  %224 = vmatpush1.msra.mxu0 0.0
  %225 = vmatprep.subr.mxu0 0.0
  %226 = vmatpush1.msra.mxu0 0.0
  %227 = vmatprep.subr.mxu0 0.0
  %228 = vmatpush1.msra.mxu0 0.0
  %229 = vmatprep.subr.mxu0 0.0
  %230 = vmatpush1.msra.mxu0 0.0
  %231 = vmatprep.mubr.f32.mxu0 0.0
  %232 = vmatmul.mubr.f32.gmra.mrb[0].mxu0 %v78
  %v233 = vpop.f32.mrb[0].mxu0
  %v234 = vadd.f32 %v165, %v233
  %v235 = vpop.f32.mrb[0].mxu0
  %236 = vmatprep.mubr.f32.mxu0 0.0
  %237 = vmatmul.mubr.f32.gmra.mrb[0].mxu0 %v81
  %v238 = vpop.f32.mrb[0].mxu0
  %v239 = vadd.f32 %v165, %v238
  %v240 = vpop.f32.mrb[0].mxu0
  %241 = vdwg.mxu0
  %v242 = vld [vmem:[%s2] sm:$0xff]
  %v243 = vld [vmem:[%s2 + $0x8] sm:$0xff]
  %v244 = vld [vmem:[%s2 + $0x10] sm:$0xff]
  %v245 = vld [vmem:[%s2 + $0x18] sm:$0xff]
  %v246 = vld [vmem:[%s6] sm:$0xff]
  %v247 = vld [vmem:[%s6 + $0x8] sm:$0xff]
  %v248 = vld [vmem:[%s6 + $0x10] sm:$0xff]
  %v249 = vld [vmem:[%s6 + $0x18] sm:$0xff]
  %v250 = vld [vmem:[%s4] sm:$0x1]
  %v252 = vlaneseq
  %v253 = vshrl.u32 %v252, 7
  %v254 = vsub.s32 0, %v253
  %v255 = vrot.slane %v250, %v254
  %v257 = vld [vmem:[%s8] sm:$0x1]
  %v259 = vlaneseq
  %v260 = vshrl.u32 %v259, 7
  %v261 = vsub.s32 0, %v260
  %v262 = vrot.slane %v257, %v261
  %vm264 = vcmask 261120
  %v266 = vsel %vm264, 0.0, 0
  %268 = vmatprep.subr.mxu0 0.0
  %269 = vmatpush1.msra.mxu0 %v242
  %270 = vmatprep.subr.mxu0 0.0
  %271 = vmatpush1.msra.mxu0 %v243
  %272 = vmatprep.subr.mxu0 0.0
  %273 = vmatpush1.msra.mxu0 %v244
  %274 = vmatprep.subr.mxu0 0.0
  %275 = vmatpush1.msra.mxu0 %v245
  %276 = vmatprep.subr.mxu0 0.0
  %277 = vmatpush1.msra.mxu0 0.0
  %278 = vmatprep.subr.mxu0 0.0
  %279 = vmatpush1.msra.mxu0 0.0
  %280 = vmatprep.subr.mxu0 0.0
  %281 = vmatpush1.msra.mxu0 0.0
  %282 = vmatprep.subr.mxu0 0.0
  %283 = vmatpush1.msra.mxu0 0.0
  %284 = vmatprep.subr.mxu0 0.0
  %285 = vmatpush1.msra.mxu0 0.0
  %286 = vmatprep.subr.mxu0 0.0
  %287 = vmatpush1.msra.mxu0 0.0
  %288 = vmatprep.subr.mxu0 0.0
  %289 = vmatpush1.msra.mxu0 0.0
  %290 = vmatprep.subr.mxu0 0.0
  %291 = vmatpush1.msra.mxu0 0.0
  %292 = vmatprep.subr.mxu0 0.0
  %293 = vmatpush1.msra.mxu0 0.0
  %294 = vmatprep.subr.mxu0 0.0
  %295 = vmatpush1.msra.mxu0 0.0
  %296 = vmatprep.subr.mxu0 0.0
  %297 = vmatpush1.msra.mxu0 0.0
  %298 = vmatprep.subr.mxu0 0.0
  %299 = vmatpush1.msra.mxu0 0.0
  %300 = vmatprep.subr.mxu0 0.0
  %301 = vmatpush1.msra.mxu0 0.0
  %302 = vmatprep.subr.mxu0 0.0
  %303 = vmatpush1.msra.mxu0 0.0
  %304 = vmatprep.subr.mxu0 0.0
  %305 = vmatpush1.msra.mxu0 0.0
  %306 = vmatprep.subr.mxu0 0.0
  %307 = vmatpush1.msra.mxu0 0.0
  %308 = vmatprep.subr.mxu0 0.0
  %309 = vmatpush1.msra.mxu0 0.0
  %310 = vmatprep.subr.mxu0 0.0
  %311 = vmatpush1.msra.mxu0 0.0
  %312 = vmatprep.subr.mxu0 0.0
  %313 = vmatpush1.msra.mxu0 0.0
  %314 = vmatprep.subr.mxu0 0.0
  %315 = vmatpush1.msra.mxu0 0.0
  %316 = vmatprep.subr.mxu0 0.0
  %317 = vmatpush1.msra.mxu0 0.0
  %318 = vmatprep.subr.mxu0 0.0
  %319 = vmatpush1.msra.mxu0 0.0
  %320 = vmatprep.subr.mxu0 0.0
  %321 = vmatpush1.msra.mxu0 0.0
  %322 = vmatprep.subr.mxu0 0.0
  %323 = vmatpush1.msra.mxu0 0.0
  %324 = vmatprep.subr.mxu0 0.0
  %325 = vmatpush1.msra.mxu0 0.0
  %326 = vmatprep.subr.mxu0 0.0
  %327 = vmatpush1.msra.mxu0 0.0
  %328 = vmatprep.subr.mxu0 0.0
  %329 = vmatpush1.msra.mxu0 0.0
  %330 = vmatprep.subr.mxu0 0.0
  %331 = vmatpush1.msra.mxu0 0.0
  %332 = vmatprep.mubr.f32.mxu0 0.0
  %333 = vmatmul.mubr.f32.gmra.mrb[0].mxu0 %v266
  %v334 = vpop.f32.mrb[0].mxu0
  %v335 = vadd.f32 %v255, %v334
  %v336 = vpop.f32.mrb[0].mxu0
  %337 = vdwg.mxu0
  %v338 = vadd.f32 %v150, %v335
  %v339 = vxor.u32 %v338, 2147483648
  %v340 = vmul.f32 %v339, 1.442695
  %v341 = vpow.pop %v340
  %v342 = vadd.f32 %v341, 1.0
  %v343 = vrcp.pop %v342
  %v344 = vmul.f32 1.0, %v343
  %346 = vrot.lane.b32.xlu0 %v335, 64
  %v347 = vpop.permute.xlu0 %346
  %v349 = vmul.f32 %v344, %v347
  %351 = vrot.lane.b32.xlu0 %v349, 64
  %v352 = vpop.permute.xlu0 %351
  %v354 = vadd.f32 %v150, %v352
  %v355 = vtanh.pop %v354
  %v356 = vsub.f32 1.0, %v344
  %358 = vrot.lane.b32.xlu0 %v355, 96
  %v359 = vpop.permute.xlu0 %358
  %v361 = vmul.f32 %v356, %v359
  %v362 = vmul.f32 %v344, 0.0
  %v363 = vadd.f32 %v361, %v362
  %364 = vmatprep.subr.mxu0 0.0
  %365 = vmatpush1.msra.mxu0 %v246
  %366 = vmatprep.subr.mxu0 0.0
  %367 = vmatpush1.msra.mxu0 %v247
  %368 = vmatprep.subr.mxu0 0.0
  %369 = vmatpush1.msra.mxu0 %v248
  %370 = vmatprep.subr.mxu0 0.0
  %371 = vmatpush1.msra.mxu0 %v249
  %372 = vmatprep.subr.mxu0 0.0
  %373 = vmatpush1.msra.mxu0 0.0
  %374 = vmatprep.subr.mxu0 0.0
  %375 = vmatpush1.msra.mxu0 0.0
  %376 = vmatprep.subr.mxu0 0.0
  %377 = vmatpush1.msra.mxu0 0.0
  %378 = vmatprep.subr.mxu0 0.0
  %379 = vmatpush1.msra.mxu0 0.0
  %380 = vmatprep.subr.mxu0 0.0
  %381 = vmatpush1.msra.mxu0 0.0
  %382 = vmatprep.subr.mxu0 0.0
  %383 = vmatpush1.msra.mxu0 0.0
  %384 = vmatprep.subr.mxu0 0.0
  %385 = vmatpush1.msra.mxu0 0.0
  %386 = vmatprep.subr.mxu0 0.0
  %387 = vmatpush1.msra.mxu0 0.0
  %388 = vmatprep.subr.mxu0 0.0
  %389 = vmatpush1.msra.mxu0 0.0
  %390 = vmatprep.subr.mxu0 0.0
  %391 = vmatpush1.msra.mxu0 0.0
  %392 = vmatprep.subr.mxu0 0.0
  %393 = vmatpush1.msra.mxu0 0.0
  %394 = vmatprep.subr.mxu0 0.0
  %395 = vmatpush1.msra.mxu0 0.0
  %396 = vmatprep.subr.mxu0 0.0
  %397 = vmatpush1.msra.mxu0 0.0
  %398 = vmatprep.subr.mxu0 0.0
  %399 = vmatpush1.msra.mxu0 0.0
  %400 = vmatprep.subr.mxu0 0.0
  %401 = vmatpush1.msra.mxu0 0.0
  %402 = vmatprep.subr.mxu0 0.0
  %403 = vmatpush1.msra.mxu0 0.0
  %404 = vmatprep.subr.mxu0 0.0
  %405 = vmatpush1.msra.mxu0 0.0
  %406 = vmatprep.subr.mxu0 0.0
  %407 = vmatpush1.msra.mxu0 0.0
  %408 = vmatprep.subr.mxu0 0.0
  %409 = vmatpush1.msra.mxu0 0.0
  %410 = vmatprep.subr.mxu0 0.0
  %411 = vmatpush1.msra.mxu0 0.0
  %412 = vmatprep.subr.mxu0 0.0
  %413 = vmatpush1.msra.mxu0 0.0
  %414 = vmatprep.subr.mxu0 0.0
  %415 = vmatpush1.msra.mxu0 0.0
  %416 = vmatprep.subr.mxu0 0.0
  %417 = vmatpush1.msra.mxu0 0.0
  %418 = vmatprep.subr.mxu0 0.0
  %419 = vmatpush1.msra.mxu0 0.0
  %420 = vmatprep.subr.mxu0 0.0
  %421 = vmatpush1.msra.mxu0 0.0
  %422 = vmatprep.subr.mxu0 0.0
  %423 = vmatpush1.msra.mxu0 0.0
  %424 = vmatprep.subr.mxu0 0.0
  %425 = vmatpush1.msra.mxu0 0.0
  %426 = vmatprep.subr.mxu0 0.0
  %427 = vmatpush1.msra.mxu0 0.0
  %428 = vmatprep.mubr.f32.mxu0 0.0
  %429 = vmatmul.mubr.f32.gmra.mrb[0].mxu0 %v266
  %v430 = vpop.f32.mrb[0].mxu0
  %v431 = vadd.f32 %v262, %v430
  %v432 = vpop.f32.mrb[0].mxu0
  %433 = vdwg.mxu0
  %v435 = vrot.slane %v431, 2
  %v437 = vadd.f32 %v239, %v435
  %v438 = vxor.u32 %v437, 2147483648
  %v439 = vmul.f32 %v438, 1.442695
  %v440 = vpow.pop %v439
  %v441 = vadd.f32 %v440, 1.0
  %v442 = vrcp.pop %v441
  %v443 = vmul.f32 1.0, %v442
  %444 = vrot.lane.b32.xlu0 %v435, 64
  %v445 = vpop.permute.xlu0 %444
  %v447 = vmul.f32 %v443, %v445
  %449 = vrot.lane.b32.xlu0 %v447, 64
  %v450 = vpop.permute.xlu0 %449
  %v452 = vadd.f32 %v239, %v450
  %v453 = vtanh.pop %v452
  %v454 = vsub.f32 1.0, %v443
  %456 = vrot.lane.b32.xlu0 %v453, 96
  %v457 = vpop.permute.xlu0 %456
  %v459 = vmul.f32 %v454, %v457
  %v460 = vmul.f32 %v443, 0.0
  %v461 = vadd.f32 %v459, %v460
  %463 = vrot.lane.b32.xlu0 %v363, 96
  %v464 = vpop.permute.xlu0 %463
  %v465 = vsel %vm264, %v464, 0
  %467 = vmatprep.subr.mxu0 0.0
  %468 = vmatpush1.msra.mxu0 %v242
  %469 = vmatprep.subr.mxu0 0.0
  %470 = vmatpush1.msra.mxu0 %v243
  %471 = vmatprep.subr.mxu0 0.0
  %472 = vmatpush1.msra.mxu0 %v244
  %473 = vmatprep.subr.mxu0 0.0
  %474 = vmatpush1.msra.mxu0 %v245
  %475 = vmatprep.subr.mxu0 0.0
  %476 = vmatpush1.msra.mxu0 0.0
  %477 = vmatprep.subr.mxu0 0.0
  %478 = vmatpush1.msra.mxu0 0.0
  %479 = vmatprep.subr.mxu0 0.0
  %480 = vmatpush1.msra.mxu0 0.0
  %481 = vmatprep.subr.mxu0 0.0
  %482 = vmatpush1.msra.mxu0 0.0
  %483 = vmatprep.subr.mxu0 0.0
  %484 = vmatpush1.msra.mxu0 0.0
  %485 = vmatprep.subr.mxu0 0.0
  %486 = vmatpush1.msra.mxu0 0.0
  %487 = vmatprep.subr.mxu0 0.0
  %488 = vmatpush1.msra.mxu0 0.0
  %489 = vmatprep.subr.mxu0 0.0
  %490 = vmatpush1.msra.mxu0 0.0
  %491 = vmatprep.subr.mxu0 0.0
  %492 = vmatpush1.msra.mxu0 0.0
  %493 = vmatprep.subr.mxu0 0.0
  %494 = vmatpush1.msra.mxu0 0.0
  %495 = vmatprep.subr.mxu0 0.0
  %496 = vmatpush1.msra.mxu0 0.0
  %497 = vmatprep.subr.mxu0 0.0
  %498 = vmatpush1.msra.mxu0 0.0
  %499 = vmatprep.subr.mxu0 0.0
  %500 = vmatpush1.msra.mxu0 0.0
  %501 = vmatprep.subr.mxu0 0.0
  %502 = vmatpush1.msra.mxu0 0.0
  %503 = vmatprep.subr.mxu0 0.0
  %504 = vmatpush1.msra.mxu0 0.0
  %505 = vmatprep.subr.mxu0 0.0
  %506 = vmatpush1.msra.mxu0 0.0
  %507 = vmatprep.subr.mxu0 0.0
  %508 = vmatpush1.msra.mxu0 0.0
  %509 = vmatprep.subr.mxu0 0.0
  %510 = vmatpush1.msra.mxu0 0.0
  %511 = vmatprep.subr.mxu0 0.0
  %512 = vmatpush1.msra.mxu0 0.0
  %513 = vmatprep.subr.mxu0 0.0
  %514 = vmatpush1.msra.mxu0 0.0
  %515 = vmatprep.subr.mxu0 0.0
  %516 = vmatpush1.msra.mxu0 0.0
  %517 = vmatprep.subr.mxu0 0.0
  %518 = vmatpush1.msra.mxu0 0.0
  %519 = vmatprep.subr.mxu0 0.0
  %520 = vmatpush1.msra.mxu0 0.0
  %521 = vmatprep.subr.mxu0 0.0
  %522 = vmatpush1.msra.mxu0 0.0
  %523 = vmatprep.subr.mxu0 0.0
  %524 = vmatpush1.msra.mxu0 0.0
  %525 = vmatprep.subr.mxu0 0.0
  %526 = vmatpush1.msra.mxu0 0.0
  %527 = vmatprep.subr.mxu0 0.0
  %528 = vmatpush1.msra.mxu0 0.0
  %529 = vmatprep.subr.mxu0 0.0
  %530 = vmatpush1.msra.mxu0 0.0
  %531 = vmatprep.mubr.f32.mxu0 0.0
  %532 = vmatmul.mubr.f32.gmra.mrb[0].mxu0 %v465
  %v533 = vpop.f32.mrb[0].mxu0
  %v534 = vadd.f32 %v255, %v533
  %v535 = vpop.f32.mrb[0].mxu0
  %536 = vdwg.mxu0
  %v538 = vrot.slane %v534, 6
  %v540 = vadd.f32 %v150, %v538
  %v541 = vxor.u32 %v540, 2147483648
  %v542 = vmul.f32 %v541, 1.442695
  %v543 = vpow.pop %v542
  %v544 = vadd.f32 %v543, 1.0
  %v545 = vrcp.pop %v544
  %v546 = vmul.f32 1.0, %v545
  %547 = vrot.lane.b32.xlu0 %v538, 64
  %v548 = vpop.permute.xlu0 %547
  %v550 = vmul.f32 %v546, %v548
  %552 = vrot.lane.b32.xlu0 %v550, 64
  %v553 = vpop.permute.xlu0 %552
  %v555 = vadd.f32 %v150, %v553
  %v556 = vtanh.pop %v555
  %v557 = vsub.f32 1.0, %v546
  %559 = vrot.lane.b32.xlu0 %v556, 96
  %v560 = vpop.permute.xlu0 %559
  %v562 = vmul.f32 %v557, %v560
  %v563 = vrot.slane %v363, 6
  %v565 = vmul.f32 %v546, %v563
  %v566 = vadd.f32 %v562, %v565
  %v568 = vrot.slane %v461, 6
  %569 = vrot.lane.b32.xlu0 %v568, 96
  %v570 = vpop.permute.xlu0 %569
  %v571 = vsel %vm264, %v570, 0
  %573 = vmatprep.subr.mxu0 0.0
  %574 = vmatpush1.msra.mxu0 %v246
  %575 = vmatprep.subr.mxu0 0.0
  %576 = vmatpush1.msra.mxu0 %v247
  %577 = vmatprep.subr.mxu0 0.0
  %578 = vmatpush1.msra.mxu0 %v248
  %579 = vmatprep.subr.mxu0 0.0
  %580 = vmatpush1.msra.mxu0 %v249
  %581 = vmatprep.subr.mxu0 0.0
  %582 = vmatpush1.msra.mxu0 0.0
  %583 = vmatprep.subr.mxu0 0.0
  %584 = vmatpush1.msra.mxu0 0.0
  %585 = vmatprep.subr.mxu0 0.0
  %586 = vmatpush1.msra.mxu0 0.0
  %587 = vmatprep.subr.mxu0 0.0
  %588 = vmatpush1.msra.mxu0 0.0
  %589 = vmatprep.subr.mxu0 0.0
  %590 = vmatpush1.msra.mxu0 0.0
  %591 = vmatprep.subr.mxu0 0.0
  %592 = vmatpush1.msra.mxu0 0.0
  %593 = vmatprep.subr.mxu0 0.0
  %594 = vmatpush1.msra.mxu0 0.0
  %595 = vmatprep.subr.mxu0 0.0
  %596 = vmatpush1.msra.mxu0 0.0
  %597 = vmatprep.subr.mxu0 0.0
  %598 = vmatpush1.msra.mxu0 0.0
  %599 = vmatprep.subr.mxu0 0.0
  %600 = vmatpush1.msra.mxu0 0.0
  %601 = vmatprep.subr.mxu0 0.0
  %602 = vmatpush1.msra.mxu0 0.0
  %603 = vmatprep.subr.mxu0 0.0
  %604 = vmatpush1.msra.mxu0 0.0
  %605 = vmatprep.subr.mxu0 0.0
  %606 = vmatpush1.msra.mxu0 0.0
  %607 = vmatprep.subr.mxu0 0.0
  %608 = vmatpush1.msra.mxu0 0.0
  %609 = vmatprep.subr.mxu0 0.0
  %610 = vmatpush1.msra.mxu0 0.0
  %611 = vmatprep.subr.mxu0 0.0
  %612 = vmatpush1.msra.mxu0 0.0
  %613 = vmatprep.subr.mxu0 0.0
  %614 = vmatpush1.msra.mxu0 0.0
  %615 = vmatprep.subr.mxu0 0.0
  %616 = vmatpush1.msra.mxu0 0.0
  %617 = vmatprep.subr.mxu0 0.0
  %618 = vmatpush1.msra.mxu0 0.0
  %619 = vmatprep.subr.mxu0 0.0
  %620 = vmatpush1.msra.mxu0 0.0
  %621 = vmatprep.subr.mxu0 0.0
  %622 = vmatpush1.msra.mxu0 0.0
  %623 = vmatprep.subr.mxu0 0.0
  %624 = vmatpush1.msra.mxu0 0.0
  %625 = vmatprep.subr.mxu0 0.0
  %626 = vmatpush1.msra.mxu0 0.0
  %627 = vmatprep.subr.mxu0 0.0
  %628 = vmatpush1.msra.mxu0 0.0
  %629 = vmatprep.subr.mxu0 0.0
  %630 = vmatpush1.msra.mxu0 0.0
  %631 = vmatprep.subr.mxu0 0.0
  %632 = vmatpush1.msra.mxu0 0.0
  %633 = vmatprep.subr.mxu0 0.0
  %634 = vmatpush1.msra.mxu0 0.0
  %635 = vmatprep.subr.mxu0 0.0
  %636 = vmatpush1.msra.mxu0 0.0
  %637 = vmatprep.mubr.f32.mxu0 0.0
  %638 = vmatmul.mubr.f32.gmra.mrb[0].mxu0 %v571
  %v639 = vpop.f32.mrb[0].mxu0
  %v640 = vadd.f32 %v262, %v639
  %v641 = vpop.f32.mrb[0].mxu0
  %642 = vdwg.mxu0
  %v644 = vrot.slane %v640, 4
  %v646 = vadd.f32 %v239, %v644
  %v647 = vxor.u32 %v646, 2147483648
  %v648 = vmul.f32 %v647, 1.442695
  %v649 = vpow.pop %v648
  %v650 = vadd.f32 %v649, 1.0
  %v651 = vrcp.pop %v650
  %v652 = vmul.f32 1.0, %v651
  %653 = vrot.lane.b32.xlu0 %v644, 64
  %v654 = vpop.permute.xlu0 %653
  %v656 = vmul.f32 %v652, %v654
  %658 = vrot.lane.b32.xlu0 %v656, 64
  %v659 = vpop.permute.xlu0 %658
  %v661 = vadd.f32 %v239, %v659
  %v662 = vtanh.pop %v661
  %v663 = vsub.f32 1.0, %v652
  %665 = vrot.lane.b32.xlu0 %v662, 96
  %v666 = vpop.permute.xlu0 %665
  %v668 = vmul.f32 %v663, %v666
  %v669 = vrot.slane %v461, 2
  %v671 = vmul.f32 %v652, %v669
  %v672 = vadd.f32 %v668, %v671
  %v674 = vrot.slane %v566, 2
  %675 = vrot.lane.b32.xlu0 %v674, 96
  %v676 = vpop.permute.xlu0 %675
  %v677 = vsel %vm264, %v676, 0
  %679 = vmatprep.subr.mxu0 0.0
  %680 = vmatpush1.msra.mxu0 %v242
  %681 = vmatprep.subr.mxu0 0.0
  %682 = vmatpush1.msra.mxu0 %v243
  %683 = vmatprep.subr.mxu0 0.0
  %684 = vmatpush1.msra.mxu0 %v244
  %685 = vmatprep.subr.mxu0 0.0
  %686 = vmatpush1.msra.mxu0 %v245
  %687 = vmatprep.subr.mxu0 0.0
  %688 = vmatpush1.msra.mxu0 0.0
  %689 = vmatprep.subr.mxu0 0.0
  %690 = vmatpush1.msra.mxu0 0.0
  %691 = vmatprep.subr.mxu0 0.0
  %692 = vmatpush1.msra.mxu0 0.0
  %693 = vmatprep.subr.mxu0 0.0
  %694 = vmatpush1.msra.mxu0 0.0
  %695 = vmatprep.subr.mxu0 0.0
  %696 = vmatpush1.msra.mxu0 0.0
  %697 = vmatprep.subr.mxu0 0.0
  %698 = vmatpush1.msra.mxu0 0.0
  %699 = vmatprep.subr.mxu0 0.0
  %700 = vmatpush1.msra.mxu0 0.0
  %701 = vmatprep.subr.mxu0 0.0
  %702 = vmatpush1.msra.mxu0 0.0
  %703 = vmatprep.subr.mxu0 0.0
  %704 = vmatpush1.msra.mxu0 0.0
  %705 = vmatprep.subr.mxu0 0.0
  %706 = vmatpush1.msra.mxu0 0.0
  %707 = vmatprep.subr.mxu0 0.0
  %708 = vmatpush1.msra.mxu0 0.0
  %709 = vmatprep.subr.mxu0 0.0
  %710 = vmatpush1.msra.mxu0 0.0
  %711 = vmatprep.subr.mxu0 0.0
  %712 = vmatpush1.msra.mxu0 0.0
  %713 = vmatprep.subr.mxu0 0.0
  %714 = vmatpush1.msra.mxu0 0.0
  %715 = vmatprep.subr.mxu0 0.0
  %716 = vmatpush1.msra.mxu0 0.0
  %717 = vmatprep.subr.mxu0 0.0
  %718 = vmatpush1.msra.mxu0 0.0
  %719 = vmatprep.subr.mxu0 0.0
  %720 = vmatpush1.msra.mxu0 0.0
  %721 = vmatprep.subr.mxu0 0.0
  %722 = vmatpush1.msra.mxu0 0.0
  %723 = vmatprep.subr.mxu0 0.0
  %724 = vmatpush1.msra.mxu0 0.0
  %725 = vmatprep.subr.mxu0 0.0
  %726 = vmatpush1.msra.mxu0 0.0
  %727 = vmatprep.subr.mxu0 0.0
  %728 = vmatpush1.msra.mxu0 0.0
  %729 = vmatprep.subr.mxu0 0.0
  %730 = vmatpush1.msra.mxu0 0.0
  %731 = vmatprep.subr.mxu0 0.0
  %732 = vmatpush1.msra.mxu0 0.0
  %733 = vmatprep.subr.mxu0 0.0
  %734 = vmatpush1.msra.mxu0 0.0
  %735 = vmatprep.subr.mxu0 0.0
  %736 = vmatpush1.msra.mxu0 0.0
  %737 = vmatprep.subr.mxu0 0.0
  %738 = vmatpush1.msra.mxu0 0.0
  %739 = vmatprep.subr.mxu0 0.0
  %740 = vmatpush1.msra.mxu0 0.0
  %741 = vmatprep.subr.mxu0 0.0
  %742 = vmatpush1.msra.mxu0 0.0
  %743 = vmatprep.mubr.f32.mxu0 0.0
  %744 = vmatmul.mubr.f32.gmra.mrb[0].mxu0 %v677
  %v745 = vpop.f32.mrb[0].mxu0
  %v746 = vadd.f32 %v255, %v745
  %v747 = vpop.f32.mrb[0].mxu0
  %748 = vdwg.mxu0
  %v750 = vrot.slane %v746, 4
  %v752 = vadd.f32 %v150, %v750
  %v753 = vxor.u32 %v752, 2147483648
  %v754 = vmul.f32 %v753, 1.442695
  %v755 = vpow.pop %v754
  %v756 = vadd.f32 %v755, 1.0
  %v757 = vrcp.pop %v756
  %v758 = vmul.f32 1.0, %v757
  %759 = vrot.lane.b32.xlu0 %v750, 64
  %v760 = vpop.permute.xlu0 %759
  %v762 = vmul.f32 %v758, %v760
  %764 = vrot.lane.b32.xlu0 %v762, 64
  %v765 = vpop.permute.xlu0 %764
  %v767 = vadd.f32 %v150, %v765
  %v768 = vtanh.pop %v767
  %v769 = vsub.f32 1.0, %v758
  %771 = vrot.lane.b32.xlu0 %v768, 96
  %v772 = vpop.permute.xlu0 %771
  %v774 = vmul.f32 %v769, %v772
  %v775 = vrot.slane %v566, 6
  %v777 = vmul.f32 %v758, %v775
  %v778 = vadd.f32 %v774, %v777
  %v780 = vrot.slane %v672, 4
  %781 = vrot.lane.b32.xlu0 %v780, 96
  %v782 = vpop.permute.xlu0 %781
  %v783 = vsel %vm264, %v782, 0
  %785 = vmatprep.subr.mxu0 0.0
  %786 = vmatpush1.msra.mxu0 %v246
  %787 = vmatprep.subr.mxu0 0.0
  %788 = vmatpush1.msra.mxu0 %v247
  %789 = vmatprep.subr.mxu0 0.0
  %790 = vmatpush1.msra.mxu0 %v248
  %791 = vmatprep.subr.mxu0 0.0
  %792 = vmatpush1.msra.mxu0 %v249
  %793 = vmatprep.subr.mxu0 0.0
  %794 = vmatpush1.msra.mxu0 0.0
  %795 = vmatprep.subr.mxu0 0.0
  %796 = vmatpush1.msra.mxu0 0.0
  %797 = vmatprep.subr.mxu0 0.0
  %798 = vmatpush1.msra.mxu0 0.0
  %799 = vmatprep.subr.mxu0 0.0
  %800 = vmatpush1.msra.mxu0 0.0
  %801 = vmatprep.subr.mxu0 0.0
  %802 = vmatpush1.msra.mxu0 0.0
  %803 = vmatprep.subr.mxu0 0.0
  %804 = vmatpush1.msra.mxu0 0.0
  %805 = vmatprep.subr.mxu0 0.0
  %806 = vmatpush1.msra.mxu0 0.0
  %807 = vmatprep.subr.mxu0 0.0
  %808 = vmatpush1.msra.mxu0 0.0
  %809 = vmatprep.subr.mxu0 0.0
  %810 = vmatpush1.msra.mxu0 0.0
  %811 = vmatprep.subr.mxu0 0.0
  %812 = vmatpush1.msra.mxu0 0.0
  %813 = vmatprep.subr.mxu0 0.0
  %814 = vmatpush1.msra.mxu0 0.0
  %815 = vmatprep.subr.mxu0 0.0
  %816 = vmatpush1.msra.mxu0 0.0
  %817 = vmatprep.subr.mxu0 0.0
  %818 = vmatpush1.msra.mxu0 0.0
  %819 = vmatprep.subr.mxu0 0.0
  %820 = vmatpush1.msra.mxu0 0.0
  %821 = vmatprep.subr.mxu0 0.0
  %822 = vmatpush1.msra.mxu0 0.0
  %823 = vmatprep.subr.mxu0 0.0
  %824 = vmatpush1.msra.mxu0 0.0
  %825 = vmatprep.subr.mxu0 0.0
  %826 = vmatpush1.msra.mxu0 0.0
  %827 = vmatprep.subr.mxu0 0.0
  %828 = vmatpush1.msra.mxu0 0.0
  %829 = vmatprep.subr.mxu0 0.0
  %830 = vmatpush1.msra.mxu0 0.0
  %831 = vmatprep.subr.mxu0 0.0
  %832 = vmatpush1.msra.mxu0 0.0
  %833 = vmatprep.subr.mxu0 0.0
  %834 = vmatpush1.msra.mxu0 0.0
  %835 = vmatprep.subr.mxu0 0.0
  %836 = vmatpush1.msra.mxu0 0.0
  %837 = vmatprep.subr.mxu0 0.0
  %838 = vmatpush1.msra.mxu0 0.0
  %839 = vmatprep.subr.mxu0 0.0
  %840 = vmatpush1.msra.mxu0 0.0
  %841 = vmatprep.subr.mxu0 0.0
  %842 = vmatpush1.msra.mxu0 0.0
  %843 = vmatprep.subr.mxu0 0.0
  %844 = vmatpush1.msra.mxu0 0.0
  %845 = vmatprep.subr.mxu0 0.0
  %846 = vmatpush1.msra.mxu0 0.0
  %847 = vmatprep.subr.mxu0 0.0
  %848 = vmatpush1.msra.mxu0 0.0
  %849 = vmatprep.mubr.f32.mxu0 0.0
  %850 = vmatmul.mubr.f32.gmra.mrb[0].mxu0 %v783
  %v851 = vpop.f32.mrb[0].mxu0
  %v852 = vadd.f32 %v262, %v851
  %v853 = vpop.f32.mrb[0].mxu0
  %854 = vdwg.mxu0
  %v856 = vrot.slane %v852, 6
  %v858 = vadd.f32 %v239, %v856
  %v859 = vxor.u32 %v858, 2147483648
  %v860 = vmul.f32 %v859, 1.442695
  %v861 = vpow.pop %v860
  %v862 = vadd.f32 %v861, 1.0
  %v863 = vrcp.pop %v862
  %v864 = vmul.f32 1.0, %v863
  %865 = vrot.lane.b32.xlu0 %v856, 64
  %v866 = vpop.permute.xlu0 %865
  %v868 = vmul.f32 %v864, %v866
  %870 = vrot.lane.b32.xlu0 %v868, 64
  %v871 = vpop.permute.xlu0 %870
  %v873 = vadd.f32 %v239, %v871
  %v874 = vtanh.pop %v873
  %v875 = vsub.f32 1.0, %v864
  %877 = vrot.lane.b32.xlu0 %v874, 96
  %v878 = vpop.permute.xlu0 %877
  %v880 = vmul.f32 %v875, %v878
  %v881 = vrot.slane %v672, 2
  %v883 = vmul.f32 %v864, %v881
  %v884 = vadd.f32 %v880, %v883
  %v886 = vrot.slane %v778, 4
  %887 = vrot.lane.b32.xlu0 %v886, 96
  %v888 = vpop.permute.xlu0 %887
  %v889 = vsel %vm264, %v888, 0
  %891 = vmatprep.subr.mxu0 0.0
  %892 = vmatpush1.msra.mxu0 %v242
  %893 = vmatprep.subr.mxu0 0.0
  %894 = vmatpush1.msra.mxu0 %v243
  %895 = vmatprep.subr.mxu0 0.0
  %896 = vmatpush1.msra.mxu0 %v244
  %897 = vmatprep.subr.mxu0 0.0
  %898 = vmatpush1.msra.mxu0 %v245
  %899 = vmatprep.subr.mxu0 0.0
  %900 = vmatpush1.msra.mxu0 0.0
  %901 = vmatprep.subr.mxu0 0.0
  %902 = vmatpush1.msra.mxu0 0.0
  %903 = vmatprep.subr.mxu0 0.0
  %904 = vmatpush1.msra.mxu0 0.0
  %905 = vmatprep.subr.mxu0 0.0
  %906 = vmatpush1.msra.mxu0 0.0
  %907 = vmatprep.subr.mxu0 0.0
  %908 = vmatpush1.msra.mxu0 0.0
  %909 = vmatprep.subr.mxu0 0.0
  %910 = vmatpush1.msra.mxu0 0.0
  %911 = vmatprep.subr.mxu0 0.0
  %912 = vmatpush1.msra.mxu0 0.0
  %913 = vmatprep.subr.mxu0 0.0
  %914 = vmatpush1.msra.mxu0 0.0
  %915 = vmatprep.subr.mxu0 0.0
  %916 = vmatpush1.msra.mxu0 0.0
  %917 = vmatprep.subr.mxu0 0.0
  %918 = vmatpush1.msra.mxu0 0.0
  %919 = vmatprep.subr.mxu0 0.0
  %920 = vmatpush1.msra.mxu0 0.0
  %921 = vmatprep.subr.mxu0 0.0
  %922 = vmatpush1.msra.mxu0 0.0
  %923 = vmatprep.subr.mxu0 0.0
  %924 = vmatpush1.msra.mxu0 0.0
  %925 = vmatprep.subr.mxu0 0.0
  %926 = vmatpush1.msra.mxu0 0.0
  %927 = vmatprep.subr.mxu0 0.0
  %928 = vmatpush1.msra.mxu0 0.0
  %929 = vmatprep.subr.mxu0 0.0
  %930 = vmatpush1.msra.mxu0 0.0
  %931 = vmatprep.subr.mxu0 0.0
  %932 = vmatpush1.msra.mxu0 0.0
  %933 = vmatprep.subr.mxu0 0.0
  %934 = vmatpush1.msra.mxu0 0.0
  %935 = vmatprep.subr.mxu0 0.0
  %936 = vmatpush1.msra.mxu0 0.0
  %937 = vmatprep.subr.mxu0 0.0
  %938 = vmatpush1.msra.mxu0 0.0
  %939 = vmatprep.subr.mxu0 0.0
  %940 = vmatpush1.msra.mxu0 0.0
  %941 = vmatprep.subr.mxu0 0.0
  %942 = vmatpush1.msra.mxu0 0.0
  %943 = vmatprep.subr.mxu0 0.0
  %944 = vmatpush1.msra.mxu0 0.0
  %945 = vmatprep.subr.mxu0 0.0
  %946 = vmatpush1.msra.mxu0 0.0
  %947 = vmatprep.subr.mxu0 0.0
  %948 = vmatpush1.msra.mxu0 0.0
  %949 = vmatprep.subr.mxu0 0.0
  %950 = vmatpush1.msra.mxu0 0.0
  %951 = vmatprep.subr.mxu0 0.0
  %952 = vmatpush1.msra.mxu0 0.0
  %953 = vmatprep.subr.mxu0 0.0
  %954 = vmatpush1.msra.mxu0 0.0
  %955 = vmatprep.mubr.f32.mxu0 0.0
  %956 = vmatmul.mubr.f32.gmra.mrb[0].mxu0 %v889
  %v957 = vpop.f32.mrb[0].mxu0
  %v958 = vadd.f32 %v255, %v957
  %v959 = vpop.f32.mrb[0].mxu0
  %960 = vdwg.mxu0
  %v962 = vrot.slane %v958, 2
  %v964 = vadd.f32 %v150, %v962
  %v965 = vxor.u32 %v964, 2147483648
  %v966 = vmul.f32 %v965, 1.442695
  %v967 = vpow.pop %v966
  %v968 = vadd.f32 %v967, 1.0
  %v969 = vrcp.pop %v968
  %v970 = vmul.f32 1.0, %v969
  %971 = vrot.lane.b32.xlu0 %v962, 64
  %v972 = vpop.permute.xlu0 %971
  %v974 = vmul.f32 %v970, %v972
  %976 = vrot.lane.b32.xlu0 %v974, 64
  %v977 = vpop.permute.xlu0 %976
  %v979 = vadd.f32 %v150, %v977
  %v980 = vtanh.pop %v979
  %v981 = vsub.f32 1.0, %v970
  %983 = vrot.lane.b32.xlu0 %v980, 96
  %v984 = vpop.permute.xlu0 %983
  %v986 = vmul.f32 %v981, %v984
  %v987 = vrot.slane %v778, 6
  %v989 = vmul.f32 %v970, %v987
  %v990 = vadd.f32 %v986, %v989
  %v992 = vrot.slane %v884, 2
  %993 = vrot.lane.b32.xlu0 %v992, 96
  %v994 = vpop.permute.xlu0 %993
  %v995 = vsel %vm264, %v994, 0
  %997 = vmatprep.subr.mxu0 0.0
  %998 = vmatpush1.msra.mxu0 %v246
  %999 = vmatprep.subr.mxu0 0.0
  %1000 = vmatpush1.msra.mxu0 %v247
  %1001 = vmatprep.subr.mxu0 0.0
  %1002 = vmatpush1.msra.mxu0 %v248
  %1003 = vmatprep.subr.mxu0 0.0
  %1004 = vmatpush1.msra.mxu0 %v249
  %1005 = vmatprep.subr.mxu0 0.0
  %1006 = vmatpush1.msra.mxu0 0.0
  %1007 = vmatprep.subr.mxu0 0.0
  %1008 = vmatpush1.msra.mxu0 0.0
  %1009 = vmatprep.subr.mxu0 0.0
  %1010 = vmatpush1.msra.mxu0 0.0
  %1011 = vmatprep.subr.mxu0 0.0
  %1012 = vmatpush1.msra.mxu0 0.0
  %1013 = vmatprep.subr.mxu0 0.0
  %1014 = vmatpush1.msra.mxu0 0.0
  %1015 = vmatprep.subr.mxu0 0.0
  %1016 = vmatpush1.msra.mxu0 0.0
  %1017 = vmatprep.subr.mxu0 0.0
  %1018 = vmatpush1.msra.mxu0 0.0
  %1019 = vmatprep.subr.mxu0 0.0
  %1020 = vmatpush1.msra.mxu0 0.0
  %1021 = vmatprep.subr.mxu0 0.0
  %1022 = vmatpush1.msra.mxu0 0.0
  %1023 = vmatprep.subr.mxu0 0.0
  %1024 = vmatpush1.msra.mxu0 0.0
  %1025 = vmatprep.subr.mxu0 0.0
  %1026 = vmatpush1.msra.mxu0 0.0
  %1027 = vmatprep.subr.mxu0 0.0
  %1028 = vmatpush1.msra.mxu0 0.0
  %1029 = vmatprep.subr.mxu0 0.0
  %1030 = vmatpush1.msra.mxu0 0.0
  %1031 = vmatprep.subr.mxu0 0.0
  %1032 = vmatpush1.msra.mxu0 0.0
  %1033 = vmatprep.subr.mxu0 0.0
  %1034 = vmatpush1.msra.mxu0 0.0
  %1035 = vmatprep.subr.mxu0 0.0
  %1036 = vmatpush1.msra.mxu0 0.0
  %1037 = vmatprep.subr.mxu0 0.0
  %1038 = vmatpush1.msra.mxu0 0.0
  %1039 = vmatprep.subr.mxu0 0.0
  %1040 = vmatpush1.msra.mxu0 0.0
  %1041 = vmatprep.subr.mxu0 0.0
  %1042 = vmatpush1.msra.mxu0 0.0
  %1043 = vmatprep.subr.mxu0 0.0
  %1044 = vmatpush1.msra.mxu0 0.0
  %1045 = vmatprep.subr.mxu0 0.0
  %1046 = vmatpush1.msra.mxu0 0.0
  %1047 = vmatprep.subr.mxu0 0.0
  %1048 = vmatpush1.msra.mxu0 0.0
  %1049 = vmatprep.subr.mxu0 0.0
  %1050 = vmatpush1.msra.mxu0 0.0
  %1051 = vmatprep.subr.mxu0 0.0
  %1052 = vmatpush1.msra.mxu0 0.0
  %1053 = vmatprep.subr.mxu0 0.0
  %1054 = vmatpush1.msra.mxu0 0.0
  %1055 = vmatprep.subr.mxu0 0.0
  %1056 = vmatpush1.msra.mxu0 0.0
  %1057 = vmatprep.subr.mxu0 0.0
  %1058 = vmatpush1.msra.mxu0 0.0
  %1059 = vmatprep.subr.mxu0 0.0
  %1060 = vmatpush1.msra.mxu0 0.0
  %1061 = vmatprep.mubr.f32.mxu0 0.0
  %1062 = vmatmul.mubr.f32.gmra.mrb[0].mxu0 %v995
  %v1063 = vpop.f32.mrb[0].mxu0
  %v1064 = vadd.f32 %v262, %v1063
  %v1065 = vpop.f32.mrb[0].mxu0
  %1066 = vdwg.mxu0
  %v1067 = vadd.f32 %v239, %v1064
  %v1068 = vxor.u32 %v1067, 2147483648
  %v1069 = vmul.f32 %v1068, 1.442695
  %v1070 = vpow.pop %v1069
  %v1071 = vadd.f32 %v1070, 1.0
  %v1072 = vrcp.pop %v1071
  %v1073 = vmul.f32 1.0, %v1072
  %1075 = vrot.lane.b32.xlu0 %v1064, 64
  %v1076 = vpop.permute.xlu0 %1075
  %v1078 = vmul.f32 %v1073, %v1076
  %1080 = vrot.lane.b32.xlu0 %v1078, 64
  %v1081 = vpop.permute.xlu0 %1080
  %v1083 = vadd.f32 %v239, %v1081
  %v1084 = vtanh.pop %v1083
  %v1085 = vsub.f32 1.0, %v1073
  %1087 = vrot.lane.b32.xlu0 %v1084, 96
  %v1088 = vpop.permute.xlu0 %1087
  %v1090 = vmul.f32 %v1085, %v1088
  %v1092 = vmul.f32 %v1073, %v992
  %v1093 = vadd.f32 %v1090, %v1092
  %v1095 = vrot.slane %v990, 6
  %1096 = vrot.lane.b32.xlu0 %v1095, 96
  %v1097 = vpop.permute.xlu0 %1096
  %v1098 = vsel %vm264, %v1097, 0
  %1100 = vmatprep.subr.mxu0 0.0
  %1101 = vmatpush1.msra.mxu0 %v242
  %1102 = vmatprep.subr.mxu0 0.0
  %1103 = vmatpush1.msra.mxu0 %v243
  %1104 = vmatprep.subr.mxu0 0.0
  %1105 = vmatpush1.msra.mxu0 %v244
  %1106 = vmatprep.subr.mxu0 0.0
  %1107 = vmatpush1.msra.mxu0 %v245
  %1108 = vmatprep.subr.mxu0 0.0
  %1109 = vmatpush1.msra.mxu0 0.0
  %1110 = vmatprep.subr.mxu0 0.0
  %1111 = vmatpush1.msra.mxu0 0.0
  %1112 = vmatprep.subr.mxu0 0.0
  %1113 = vmatpush1.msra.mxu0 0.0
  %1114 = vmatprep.subr.mxu0 0.0
  %1115 = vmatpush1.msra.mxu0 0.0
  %1116 = vmatprep.subr.mxu0 0.0
  %1117 = vmatpush1.msra.mxu0 0.0
  %1118 = vmatprep.subr.mxu0 0.0
  %1119 = vmatpush1.msra.mxu0 0.0
  %1120 = vmatprep.subr.mxu0 0.0
  %1121 = vmatpush1.msra.mxu0 0.0
  %1122 = vmatprep.subr.mxu0 0.0
  %1123 = vmatpush1.msra.mxu0 0.0
  %1124 = vmatprep.subr.mxu0 0.0
  %1125 = vmatpush1.msra.mxu0 0.0
  %1126 = vmatprep.subr.mxu0 0.0
  %1127 = vmatpush1.msra.mxu0 0.0
  %1128 = vmatprep.subr.mxu0 0.0
  %1129 = vmatpush1.msra.mxu0 0.0
  %1130 = vmatprep.subr.mxu0 0.0
  %1131 = vmatpush1.msra.mxu0 0.0
  %1132 = vmatprep.subr.mxu0 0.0
  %1133 = vmatpush1.msra.mxu0 0.0
  %1134 = vmatprep.subr.mxu0 0.0
  %1135 = vmatpush1.msra.mxu0 0.0
  %1136 = vmatprep.subr.mxu0 0.0
  %1137 = vmatpush1.msra.mxu0 0.0
  %1138 = vmatprep.subr.mxu0 0.0
  %1139 = vmatpush1.msra.mxu0 0.0
  %1140 = vmatprep.subr.mxu0 0.0
  %1141 = vmatpush1.msra.mxu0 0.0
  %1142 = vmatprep.subr.mxu0 0.0
  %1143 = vmatpush1.msra.mxu0 0.0
  %1144 = vmatprep.subr.mxu0 0.0
  %1145 = vmatpush1.msra.mxu0 0.0
  %1146 = vmatprep.subr.mxu0 0.0
  %1147 = vmatpush1.msra.mxu0 0.0
  %1148 = vmatprep.subr.mxu0 0.0
  %1149 = vmatpush1.msra.mxu0 0.0
  %1150 = vmatprep.subr.mxu0 0.0
  %1151 = vmatpush1.msra.mxu0 0.0
  %1152 = vmatprep.subr.mxu0 0.0
  %1153 = vmatpush1.msra.mxu0 0.0
  %1154 = vmatprep.subr.mxu0 0.0
  %1155 = vmatpush1.msra.mxu0 0.0
  %1156 = vmatprep.subr.mxu0 0.0
  %1157 = vmatpush1.msra.mxu0 0.0
  %1158 = vmatprep.subr.mxu0 0.0
  %1159 = vmatpush1.msra.mxu0 0.0
  %1160 = vmatprep.subr.mxu0 0.0
  %1161 = vmatpush1.msra.mxu0 0.0
  %1162 = vmatprep.subr.mxu0 0.0
  %1163 = vmatpush1.msra.mxu0 0.0
  %1164 = vmatprep.mubr.f32.mxu0 0.0
  %1165 = vmatmul.mubr.f32.gmra.mrb[0].mxu0 %v1098
  %v1166 = vpop.f32.mrb[0].mxu0
  %v1167 = vadd.f32 %v255, %v1166
  %v1168 = vpop.f32.mrb[0].mxu0
  %1169 = vdwg.mxu0
  %v1170 = vadd.f32 %v155, %v1167
  %v1171 = vxor.u32 %v1170, 2147483648
  %v1172 = vmul.f32 %v1171, 1.442695
  %v1173 = vpow.pop %v1172
  %v1174 = vadd.f32 %v1173, 1.0
  %v1175 = vrcp.pop %v1174
  %v1176 = vmul.f32 1.0, %v1175
  %1178 = vrot.lane.b32.xlu0 %v1167, 64
  %v1179 = vpop.permute.xlu0 %1178
  %v1181 = vmul.f32 %v1176, %v1179
  %1183 = vrot.lane.b32.xlu0 %v1181, 64
  %v1184 = vpop.permute.xlu0 %1183
  %v1186 = vadd.f32 %v155, %v1184
  %v1187 = vtanh.pop %v1186
  %v1188 = vsub.f32 1.0, %v1176
  %1190 = vrot.lane.b32.xlu0 %v1187, 96
  %v1191 = vpop.permute.xlu0 %1190
  %v1193 = vmul.f32 %v1188, %v1191
  %v1195 = vmul.f32 %v1176, %v1095
  %v1196 = vadd.f32 %v1193, %v1195
  %1198 = vrot.lane.b32.xlu0 %v1093, 96
  %v1199 = vpop.permute.xlu0 %1198
  %v1200 = vsel %vm264, %v1199, 0
  %1202 = vmatprep.subr.mxu0 0.0
  %1203 = vmatpush1.msra.mxu0 %v246
  %1204 = vmatprep.subr.mxu0 0.0
  %1205 = vmatpush1.msra.mxu0 %v247
  %1206 = vmatprep.subr.mxu0 0.0
  %1207 = vmatpush1.msra.mxu0 %v248
  %1208 = vmatprep.subr.mxu0 0.0
  %1209 = vmatpush1.msra.mxu0 %v249
  %1210 = vmatprep.subr.mxu0 0.0
  %1211 = vmatpush1.msra.mxu0 0.0
  %1212 = vmatprep.subr.mxu0 0.0
  %1213 = vmatpush1.msra.mxu0 0.0
  %1214 = vmatprep.subr.mxu0 0.0
  %1215 = vmatpush1.msra.mxu0 0.0
  %1216 = vmatprep.subr.mxu0 0.0
  %1217 = vmatpush1.msra.mxu0 0.0
  %1218 = vmatprep.subr.mxu0 0.0
  %1219 = vmatpush1.msra.mxu0 0.0
  %1220 = vmatprep.subr.mxu0 0.0
  %1221 = vmatpush1.msra.mxu0 0.0
  %1222 = vmatprep.subr.mxu0 0.0
  %1223 = vmatpush1.msra.mxu0 0.0
  %1224 = vmatprep.subr.mxu0 0.0
  %1225 = vmatpush1.msra.mxu0 0.0
  %1226 = vmatprep.subr.mxu0 0.0
  %1227 = vmatpush1.msra.mxu0 0.0
  %1228 = vmatprep.subr.mxu0 0.0
  %1229 = vmatpush1.msra.mxu0 0.0
  %1230 = vmatprep.subr.mxu0 0.0
  %1231 = vmatpush1.msra.mxu0 0.0
  %1232 = vmatprep.subr.mxu0 0.0
  %1233 = vmatpush1.msra.mxu0 0.0
  %1234 = vmatprep.subr.mxu0 0.0
  %1235 = vmatpush1.msra.mxu0 0.0
  %1236 = vmatprep.subr.mxu0 0.0
  %1237 = vmatpush1.msra.mxu0 0.0
  %1238 = vmatprep.subr.mxu0 0.0
  %1239 = vmatpush1.msra.mxu0 0.0
  %1240 = vmatprep.subr.mxu0 0.0
  %1241 = vmatpush1.msra.mxu0 0.0
  %1242 = vmatprep.subr.mxu0 0.0
  %1243 = vmatpush1.msra.mxu0 0.0
  %1244 = vmatprep.subr.mxu0 0.0
  %1245 = vmatpush1.msra.mxu0 0.0
  %1246 = vmatprep.subr.mxu0 0.0
  %1247 = vmatpush1.msra.mxu0 0.0
  %1248 = vmatprep.subr.mxu0 0.0
  %1249 = vmatpush1.msra.mxu0 0.0
  %1250 = vmatprep.subr.mxu0 0.0
  %1251 = vmatpush1.msra.mxu0 0.0
  %1252 = vmatprep.subr.mxu0 0.0
  %1253 = vmatpush1.msra.mxu0 0.0
  %1254 = vmatprep.subr.mxu0 0.0
  %1255 = vmatpush1.msra.mxu0 0.0
  %1256 = vmatprep.subr.mxu0 0.0
  %1257 = vmatpush1.msra.mxu0 0.0
  %1258 = vmatprep.subr.mxu0 0.0
  %1259 = vmatpush1.msra.mxu0 0.0
  %1260 = vmatprep.subr.mxu0 0.0
  %1261 = vmatpush1.msra.mxu0 0.0
  %1262 = vmatprep.subr.mxu0 0.0
  %1263 = vmatpush1.msra.mxu0 0.0
  %1264 = vmatprep.subr.mxu0 0.0
  %1265 = vmatpush1.msra.mxu0 0.0
  %1266 = vmatprep.mubr.f32.mxu0 0.0
  %1267 = vmatmul.mubr.f32.gmra.mrb[0].mxu0 %v1200
  %v1268 = vpop.f32.mrb[0].mxu0
  %v1269 = vadd.f32 %v262, %v1268
  %v1270 = vpop.f32.mrb[0].mxu0
  %1271 = vdwg.mxu0
  %v1273 = vrot.slane %v1269, 2
  %v1275 = vadd.f32 %v234, %v1273
  %v1276 = vxor.u32 %v1275, 2147483648
  %v1277 = vmul.f32 %v1276, 1.442695
  %v1278 = vpow.pop %v1277
  %v1279 = vadd.f32 %v1278, 1.0
  %v1280 = vrcp.pop %v1279
  %v1281 = vmul.f32 1.0, %v1280
  %1282 = vrot.lane.b32.xlu0 %v1273, 64
  %v1283 = vpop.permute.xlu0 %1282
  %v1285 = vmul.f32 %v1281, %v1283
  %1287 = vrot.lane.b32.xlu0 %v1285, 64
  %v1288 = vpop.permute.xlu0 %1287
  %v1290 = vadd.f32 %v234, %v1288
  %v1291 = vtanh.pop %v1290
  %v1292 = vsub.f32 1.0, %v1281
  %1294 = vrot.lane.b32.xlu0 %v1291, 96
  %v1295 = vpop.permute.xlu0 %1294
  %v1297 = vmul.f32 %v1292, %v1295
  %v1298 = vrot.slane %v1093, 2
  %v1300 = vmul.f32 %v1281, %v1298
  %v1301 = vadd.f32 %v1297, %v1300
  %1303 = vrot.lane.b32.xlu0 %v1196, 96
  %v1304 = vpop.permute.xlu0 %1303
  %v1305 = vsel %vm264, %v1304, 0
  %1307 = vmatprep.subr.mxu0 0.0
  %1308 = vmatpush1.msra.mxu0 %v242
  %1309 = vmatprep.subr.mxu0 0.0
  %1310 = vmatpush1.msra.mxu0 %v243
  %1311 = vmatprep.subr.mxu0 0.0
  %1312 = vmatpush1.msra.mxu0 %v244
  %1313 = vmatprep.subr.mxu0 0.0
  %1314 = vmatpush1.msra.mxu0 %v245
  %1315 = vmatprep.subr.mxu0 0.0
  %1316 = vmatpush1.msra.mxu0 0.0
  %1317 = vmatprep.subr.mxu0 0.0
  %1318 = vmatpush1.msra.mxu0 0.0
  %1319 = vmatprep.subr.mxu0 0.0
  %1320 = vmatpush1.msra.mxu0 0.0
  %1321 = vmatprep.subr.mxu0 0.0
  %1322 = vmatpush1.msra.mxu0 0.0
  %1323 = vmatprep.subr.mxu0 0.0
  %1324 = vmatpush1.msra.mxu0 0.0
  %1325 = vmatprep.subr.mxu0 0.0
  %1326 = vmatpush1.msra.mxu0 0.0
  %1327 = vmatprep.subr.mxu0 0.0
  %1328 = vmatpush1.msra.mxu0 0.0
  %1329 = vmatprep.subr.mxu0 0.0
  %1330 = vmatpush1.msra.mxu0 0.0
  %1331 = vmatprep.subr.mxu0 0.0
  %1332 = vmatpush1.msra.mxu0 0.0
  %1333 = vmatprep.subr.mxu0 0.0
  %1334 = vmatpush1.msra.mxu0 0.0
  %1335 = vmatprep.subr.mxu0 0.0
  %1336 = vmatpush1.msra.mxu0 0.0
  %1337 = vmatprep.subr.mxu0 0.0
  %1338 = vmatpush1.msra.mxu0 0.0
  %1339 = vmatprep.subr.mxu0 0.0
  %1340 = vmatpush1.msra.mxu0 0.0
  %1341 = vmatprep.subr.mxu0 0.0
  %1342 = vmatpush1.msra.mxu0 0.0
  %1343 = vmatprep.subr.mxu0 0.0
  %1344 = vmatpush1.msra.mxu0 0.0
  %1345 = vmatprep.subr.mxu0 0.0
  %1346 = vmatpush1.msra.mxu0 0.0
  %1347 = vmatprep.subr.mxu0 0.0
  %1348 = vmatpush1.msra.mxu0 0.0
  %1349 = vmatprep.subr.mxu0 0.0
  %1350 = vmatpush1.msra.mxu0 0.0
  %1351 = vmatprep.subr.mxu0 0.0
  %1352 = vmatpush1.msra.mxu0 0.0
  %1353 = vmatprep.subr.mxu0 0.0
  %1354 = vmatpush1.msra.mxu0 0.0
  %1355 = vmatprep.subr.mxu0 0.0
  %1356 = vmatpush1.msra.mxu0 0.0
  %1357 = vmatprep.subr.mxu0 0.0
  %1358 = vmatpush1.msra.mxu0 0.0
  %1359 = vmatprep.subr.mxu0 0.0
  %1360 = vmatpush1.msra.mxu0 0.0
  %1361 = vmatprep.subr.mxu0 0.0
  %1362 = vmatpush1.msra.mxu0 0.0
  %1363 = vmatprep.subr.mxu0 0.0
  %1364 = vmatpush1.msra.mxu0 0.0
  %1365 = vmatprep.subr.mxu0 0.0
  %1366 = vmatpush1.msra.mxu0 0.0
  %1367 = vmatprep.subr.mxu0 0.0
  %1368 = vmatpush1.msra.mxu0 0.0
  %1369 = vmatprep.subr.mxu0 0.0
  %1370 = vmatpush1.msra.mxu0 0.0
  %1371 = vmatprep.mubr.f32.mxu0 0.0
  %1372 = vmatmul.mubr.f32.gmra.mrb[0].mxu0 %v1305
  %v1373 = vpop.f32.mrb[0].mxu0
  %v1374 = vadd.f32 %v255, %v1373
  %v1375 = vpop.f32.mrb[0].mxu0
  %1376 = vdwg.mxu0
  %v1378 = vrot.slane %v1374, 6
  %v1380 = vadd.f32 %v155, %v1378
  %v1381 = vxor.u32 %v1380, 2147483648
  %v1382 = vmul.f32 %v1381, 1.442695
  %v1383 = vpow.pop %v1382
  %v1384 = vadd.f32 %v1383, 1.0
  %v1385 = vrcp.pop %v1384
  %v1386 = vmul.f32 1.0, %v1385
  %1387 = vrot.lane.b32.xlu0 %v1378, 64
  %v1388 = vpop.permute.xlu0 %1387
  %v1390 = vmul.f32 %v1386, %v1388
  %1392 = vrot.lane.b32.xlu0 %v1390, 64
  %v1393 = vpop.permute.xlu0 %1392
  %v1395 = vadd.f32 %v155, %v1393
  %v1396 = vtanh.pop %v1395
  %v1397 = vsub.f32 1.0, %v1386
  %1399 = vrot.lane.b32.xlu0 %v1396, 96
  %v1400 = vpop.permute.xlu0 %1399
  %v1402 = vmul.f32 %v1397, %v1400
  %v1403 = vrot.slane %v1196, 6
  %v1405 = vmul.f32 %v1386, %v1403
  %v1406 = vadd.f32 %v1402, %v1405
  %v1408 = vrot.slane %v1301, 6
  %1409 = vrot.lane.b32.xlu0 %v1408, 96
  %v1410 = vpop.permute.xlu0 %1409
  %v1411 = vsel %vm264, %v1410, 0
  %1413 = vmatprep.subr.mxu0 0.0
  %1414 = vmatpush1.msra.mxu0 %v246
  %1415 = vmatprep.subr.mxu0 0.0
  %1416 = vmatpush1.msra.mxu0 %v247
  %1417 = vmatprep.subr.mxu0 0.0
  %1418 = vmatpush1.msra.mxu0 %v248
  %1419 = vmatprep.subr.mxu0 0.0
  %1420 = vmatpush1.msra.mxu0 %v249
  %1421 = vmatprep.subr.mxu0 0.0
  %1422 = vmatpush1.msra.mxu0 0.0
  %1423 = vmatprep.subr.mxu0 0.0
  %1424 = vmatpush1.msra.mxu0 0.0
  %1425 = vmatprep.subr.mxu0 0.0
  %1426 = vmatpush1.msra.mxu0 0.0
  %1427 = vmatprep.subr.mxu0 0.0
  %1428 = vmatpush1.msra.mxu0 0.0
  %1429 = vmatprep.subr.mxu0 0.0
  %1430 = vmatpush1.msra.mxu0 0.0
  %1431 = vmatprep.subr.mxu0 0.0
  %1432 = vmatpush1.msra.mxu0 0.0
  %1433 = vmatprep.subr.mxu0 0.0
  %1434 = vmatpush1.msra.mxu0 0.0
  %1435 = vmatprep.subr.mxu0 0.0
  %1436 = vmatpush1.msra.mxu0 0.0
  %1437 = vmatprep.subr.mxu0 0.0
  %1438 = vmatpush1.msra.mxu0 0.0
  %1439 = vmatprep.subr.mxu0 0.0
  %1440 = vmatpush1.msra.mxu0 0.0
  %1441 = vmatprep.subr.mxu0 0.0
  %1442 = vmatpush1.msra.mxu0 0.0
  %1443 = vmatprep.subr.mxu0 0.0
  %1444 = vmatpush1.msra.mxu0 0.0
  %1445 = vmatprep.subr.mxu0 0.0
  %1446 = vmatpush1.msra.mxu0 0.0
  %1447 = vmatprep.subr.mxu0 0.0
  %1448 = vmatpush1.msra.mxu0 0.0
  %1449 = vmatprep.subr.mxu0 0.0
  %1450 = vmatpush1.msra.mxu0 0.0
  %1451 = vmatprep.subr.mxu0 0.0
  %1452 = vmatpush1.msra.mxu0 0.0
  %1453 = vmatprep.subr.mxu0 0.0
  %1454 = vmatpush1.msra.mxu0 0.0
  %1455 = vmatprep.subr.mxu0 0.0
  %1456 = vmatpush1.msra.mxu0 0.0
  %1457 = vmatprep.subr.mxu0 0.0
  %1458 = vmatpush1.msra.mxu0 0.0
  %1459 = vmatprep.subr.mxu0 0.0
  %1460 = vmatpush1.msra.mxu0 0.0
  %1461 = vmatprep.subr.mxu0 0.0
  %1462 = vmatpush1.msra.mxu0 0.0
  %1463 = vmatprep.subr.mxu0 0.0
  %1464 = vmatpush1.msra.mxu0 0.0
  %1465 = vmatprep.subr.mxu0 0.0
  %1466 = vmatpush1.msra.mxu0 0.0
  %1467 = vmatprep.subr.mxu0 0.0
  %1468 = vmatpush1.msra.mxu0 0.0
  %1469 = vmatprep.subr.mxu0 0.0
  %1470 = vmatpush1.msra.mxu0 0.0
  %1471 = vmatprep.subr.mxu0 0.0
  %1472 = vmatpush1.msra.mxu0 0.0
  %1473 = vmatprep.subr.mxu0 0.0
  %1474 = vmatpush1.msra.mxu0 0.0
  %1475 = vmatprep.subr.mxu0 0.0
  %1476 = vmatpush1.msra.mxu0 0.0
  %1477 = vmatprep.mubr.f32.mxu0 0.0
  %1478 = vmatmul.mubr.f32.gmra.mrb[0].mxu0 %v1411
  %v1479 = vpop.f32.mrb[0].mxu0
  %v1480 = vadd.f32 %v262, %v1479
  %v1481 = vpop.f32.mrb[0].mxu0
  %1482 = vdwg.mxu0
  %v1484 = vrot.slane %v1480, 4
  %v1486 = vadd.f32 %v234, %v1484
  %v1487 = vxor.u32 %v1486, 2147483648
  %v1488 = vmul.f32 %v1487, 1.442695
  %v1489 = vpow.pop %v1488
  %v1490 = vadd.f32 %v1489, 1.0
  %v1491 = vrcp.pop %v1490
  %v1492 = vmul.f32 1.0, %v1491
  %1493 = vrot.lane.b32.xlu0 %v1484, 64
  %v1494 = vpop.permute.xlu0 %1493
  %v1496 = vmul.f32 %v1492, %v1494
  %1498 = vrot.lane.b32.xlu0 %v1496, 64
  %v1499 = vpop.permute.xlu0 %1498
  %v1501 = vadd.f32 %v234, %v1499
  %v1502 = vtanh.pop %v1501
  %v1503 = vsub.f32 1.0, %v1492
  %1505 = vrot.lane.b32.xlu0 %v1502, 96
  %v1506 = vpop.permute.xlu0 %1505
  %v1508 = vmul.f32 %v1503, %v1506
  %v1509 = vrot.slane %v1301, 2
  %v1511 = vmul.f32 %v1492, %v1509
  %v1512 = vadd.f32 %v1508, %v1511
  %v1514 = vrot.slane %v1406, 2
  %1515 = vrot.lane.b32.xlu0 %v1514, 96
  %v1516 = vpop.permute.xlu0 %1515
  %v1517 = vsel %vm264, %v1516, 0
  %1519 = vmatprep.subr.mxu0 0.0
  %1520 = vmatpush1.msra.mxu0 %v242
  %1521 = vmatprep.subr.mxu0 0.0
  %1522 = vmatpush1.msra.mxu0 %v243
  %1523 = vmatprep.subr.mxu0 0.0
  %1524 = vmatpush1.msra.mxu0 %v244
  %1525 = vmatprep.subr.mxu0 0.0
  %1526 = vmatpush1.msra.mxu0 %v245
  %1527 = vmatprep.subr.mxu0 0.0
  %1528 = vmatpush1.msra.mxu0 0.0
  %1529 = vmatprep.subr.mxu0 0.0
  %1530 = vmatpush1.msra.mxu0 0.0
  %1531 = vmatprep.subr.mxu0 0.0
  %1532 = vmatpush1.msra.mxu0 0.0
  %1533 = vmatprep.subr.mxu0 0.0
  %1534 = vmatpush1.msra.mxu0 0.0
  %1535 = vmatprep.subr.mxu0 0.0
  %1536 = vmatpush1.msra.mxu0 0.0
  %1537 = vmatprep.subr.mxu0 0.0
  %1538 = vmatpush1.msra.mxu0 0.0
  %1539 = vmatprep.subr.mxu0 0.0
  %1540 = vmatpush1.msra.mxu0 0.0
  %1541 = vmatprep.subr.mxu0 0.0
  %1542 = vmatpush1.msra.mxu0 0.0
  %1543 = vmatprep.subr.mxu0 0.0
  %1544 = vmatpush1.msra.mxu0 0.0
  %1545 = vmatprep.subr.mxu0 0.0
  %1546 = vmatpush1.msra.mxu0 0.0
  %1547 = vmatprep.subr.mxu0 0.0
  %1548 = vmatpush1.msra.mxu0 0.0
  %1549 = vmatprep.subr.mxu0 0.0
  %1550 = vmatpush1.msra.mxu0 0.0
  %1551 = vmatprep.subr.mxu0 0.0
  %1552 = vmatpush1.msra.mxu0 0.0
  %1553 = vmatprep.subr.mxu0 0.0
  %1554 = vmatpush1.msra.mxu0 0.0
  %1555 = vmatprep.subr.mxu0 0.0
  %1556 = vmatpush1.msra.mxu0 0.0
  %1557 = vmatprep.subr.mxu0 0.0
  %1558 = vmatpush1.msra.mxu0 0.0
  %1559 = vmatprep.subr.mxu0 0.0
  %1560 = vmatpush1.msra.mxu0 0.0
  %1561 = vmatprep.subr.mxu0 0.0
  %1562 = vmatpush1.msra.mxu0 0.0
  %1563 = vmatprep.subr.mxu0 0.0
  %1564 = vmatpush1.msra.mxu0 0.0
  %1565 = vmatprep.subr.mxu0 0.0
  %1566 = vmatpush1.msra.mxu0 0.0
  %1567 = vmatprep.subr.mxu0 0.0
  %1568 = vmatpush1.msra.mxu0 0.0
  %1569 = vmatprep.subr.mxu0 0.0
  %1570 = vmatpush1.msra.mxu0 0.0
  %1571 = vmatprep.subr.mxu0 0.0
  %1572 = vmatpush1.msra.mxu0 0.0
  %1573 = vmatprep.subr.mxu0 0.0
  %1574 = vmatpush1.msra.mxu0 0.0
  %1575 = vmatprep.subr.mxu0 0.0
  %1576 = vmatpush1.msra.mxu0 0.0
  %1577 = vmatprep.subr.mxu0 0.0
  %1578 = vmatpush1.msra.mxu0 0.0
  %1579 = vmatprep.subr.mxu0 0.0
  %1580 = vmatpush1.msra.mxu0 0.0
  %1581 = vmatprep.subr.mxu0 0.0
  %1582 = vmatpush1.msra.mxu0 0.0
  %1583 = vmatprep.mubr.f32.mxu0 0.0
  %1584 = vmatmul.mubr.f32.gmra.mrb[0].mxu0 %v1517
  %v1585 = vpop.f32.mrb[0].mxu0
  %v1586 = vadd.f32 %v255, %v1585
  %v1587 = vpop.f32.mrb[0].mxu0
  %1588 = vdwg.mxu0
  %v1590 = vrot.slane %v1586, 4
  %v1592 = vadd.f32 %v155, %v1590
  %v1593 = vxor.u32 %v1592, 2147483648
  %v1594 = vmul.f32 %v1593, 1.442695
  %v1595 = vpow.pop %v1594
  %v1596 = vadd.f32 %v1595, 1.0
  %v1597 = vrcp.pop %v1596
  %v1598 = vmul.f32 1.0, %v1597
  %1599 = vrot.lane.b32.xlu0 %v1590, 64
  %v1600 = vpop.permute.xlu0 %1599
  %v1602 = vmul.f32 %v1598, %v1600
  %1604 = vrot.lane.b32.xlu0 %v1602, 64
  %v1605 = vpop.permute.xlu0 %1604
  %v1607 = vadd.f32 %v155, %v1605
  %v1608 = vtanh.pop %v1607
  %v1609 = vsub.f32 1.0, %v1598
  %1611 = vrot.lane.b32.xlu0 %v1608, 96
  %v1612 = vpop.permute.xlu0 %1611
  %v1614 = vmul.f32 %v1609, %v1612
  %v1615 = vrot.slane %v1406, 6
  %v1617 = vmul.f32 %v1598, %v1615
  %v1618 = vadd.f32 %v1614, %v1617
  %v1620 = vrot.slane %v1512, 4
  %1621 = vrot.lane.b32.xlu0 %v1620, 96
  %v1622 = vpop.permute.xlu0 %1621
  %v1623 = vsel %vm264, %v1622, 0
  %1625 = vmatprep.subr.mxu0 0.0
  %1626 = vmatpush1.msra.mxu0 %v246
  %1627 = vmatprep.subr.mxu0 0.0
  %1628 = vmatpush1.msra.mxu0 %v247
  %1629 = vmatprep.subr.mxu0 0.0
  %1630 = vmatpush1.msra.mxu0 %v248
  %1631 = vmatprep.subr.mxu0 0.0
  %1632 = vmatpush1.msra.mxu0 %v249
  %1633 = vmatprep.subr.mxu0 0.0
  %1634 = vmatpush1.msra.mxu0 0.0
  %1635 = vmatprep.subr.mxu0 0.0
  %1636 = vmatpush1.msra.mxu0 0.0
  %1637 = vmatprep.subr.mxu0 0.0
  %1638 = vmatpush1.msra.mxu0 0.0
  %1639 = vmatprep.subr.mxu0 0.0
  %1640 = vmatpush1.msra.mxu0 0.0
  %1641 = vmatprep.subr.mxu0 0.0
  %1642 = vmatpush1.msra.mxu0 0.0
  %1643 = vmatprep.subr.mxu0 0.0
  %1644 = vmatpush1.msra.mxu0 0.0
  %1645 = vmatprep.subr.mxu0 0.0
  %1646 = vmatpush1.msra.mxu0 0.0
  %1647 = vmatprep.subr.mxu0 0.0
  %1648 = vmatpush1.msra.mxu0 0.0
  %1649 = vmatprep.subr.mxu0 0.0
  %1650 = vmatpush1.msra.mxu0 0.0
  %1651 = vmatprep.subr.mxu0 0.0
  %1652 = vmatpush1.msra.mxu0 0.0
  %1653 = vmatprep.subr.mxu0 0.0
  %1654 = vmatpush1.msra.mxu0 0.0
  %1655 = vmatprep.subr.mxu0 0.0
  %1656 = vmatpush1.msra.mxu0 0.0
  %1657 = vmatprep.subr.mxu0 0.0
  %1658 = vmatpush1.msra.mxu0 0.0
  %1659 = vmatprep.subr.mxu0 0.0
  %1660 = vmatpush1.msra.mxu0 0.0
  %1661 = vmatprep.subr.mxu0 0.0
  %1662 = vmatpush1.msra.mxu0 0.0
  %1663 = vmatprep.subr.mxu0 0.0
  %1664 = vmatpush1.msra.mxu0 0.0
  %1665 = vmatprep.subr.mxu0 0.0
  %1666 = vmatpush1.msra.mxu0 0.0
  %1667 = vmatprep.subr.mxu0 0.0
  %1668 = vmatpush1.msra.mxu0 0.0
  %1669 = vmatprep.subr.mxu0 0.0
  %1670 = vmatpush1.msra.mxu0 0.0
  %1671 = vmatprep.subr.mxu0 0.0
  %1672 = vmatpush1.msra.mxu0 0.0
  %1673 = vmatprep.subr.mxu0 0.0
  %1674 = vmatpush1.msra.mxu0 0.0
  %1675 = vmatprep.subr.mxu0 0.0
  %1676 = vmatpush1.msra.mxu0 0.0
  %1677 = vmatprep.subr.mxu0 0.0
  %1678 = vmatpush1.msra.mxu0 0.0
  %1679 = vmatprep.subr.mxu0 0.0
  %1680 = vmatpush1.msra.mxu0 0.0
  %1681 = vmatprep.subr.mxu0 0.0
  %1682 = vmatpush1.msra.mxu0 0.0
  %1683 = vmatprep.subr.mxu0 0.0
  %1684 = vmatpush1.msra.mxu0 0.0
  %1685 = vmatprep.subr.mxu0 0.0
  %1686 = vmatpush1.msra.mxu0 0.0
  %1687 = vmatprep.subr.mxu0 0.0
  %1688 = vmatpush1.msra.mxu0 0.0
  %1689 = vmatprep.mubr.f32.mxu0 0.0
  %1690 = vmatmul.mubr.f32.gmra.mrb[0].mxu0 %v1623
  %v1691 = vpop.f32.mrb[0].mxu0
  %v1692 = vadd.f32 %v262, %v1691
  %v1693 = vpop.f32.mrb[0].mxu0
  %1694 = vdwg.mxu0
  %v1696 = vrot.slane %v1692, 6
  %v1698 = vadd.f32 %v234, %v1696
  %v1699 = vxor.u32 %v1698, 2147483648
  %v1700 = vmul.f32 %v1699, 1.442695
  %v1701 = vpow.pop %v1700
  %v1702 = vadd.f32 %v1701, 1.0
  %v1703 = vrcp.pop %v1702
  %v1704 = vmul.f32 1.0, %v1703
  %1705 = vrot.lane.b32.xlu0 %v1696, 64
  %v1706 = vpop.permute.xlu0 %1705
  %v1708 = vmul.f32 %v1704, %v1706
  %1710 = vrot.lane.b32.xlu0 %v1708, 64
  %v1711 = vpop.permute.xlu0 %1710
  %v1713 = vadd.f32 %v234, %v1711
  %v1714 = vtanh.pop %v1713
  %v1715 = vsub.f32 1.0, %v1704
  %1717 = vrot.lane.b32.xlu0 %v1714, 96
  %v1718 = vpop.permute.xlu0 %1717
  %v1720 = vmul.f32 %v1715, %v1718
  %v1721 = vrot.slane %v1512, 2
  %v1723 = vmul.f32 %v1704, %v1721
  %v1724 = vadd.f32 %v1720, %v1723
  %v1726 = vrot.slane %v1618, 4
  %1727 = vrot.lane.b32.xlu0 %v1726, 96
  %v1728 = vpop.permute.xlu0 %1727
  %v1729 = vsel %vm264, %v1728, 0
  %1731 = vmatprep.subr.mxu0 0.0
  %1732 = vmatpush1.msra.mxu0 %v242
  %1733 = vmatprep.subr.mxu0 0.0
  %1734 = vmatpush1.msra.mxu0 %v243
  %1735 = vmatprep.subr.mxu0 0.0
  %1736 = vmatpush1.msra.mxu0 %v244
  %1737 = vmatprep.subr.mxu0 0.0
  %1738 = vmatpush1.msra.mxu0 %v245
  %1739 = vmatprep.subr.mxu0 0.0
  %1740 = vmatpush1.msra.mxu0 0.0
  %1741 = vmatprep.subr.mxu0 0.0
  %1742 = vmatpush1.msra.mxu0 0.0
  %1743 = vmatprep.subr.mxu0 0.0
  %1744 = vmatpush1.msra.mxu0 0.0
  %1745 = vmatprep.subr.mxu0 0.0
  %1746 = vmatpush1.msra.mxu0 0.0
  %1747 = vmatprep.subr.mxu0 0.0
  %1748 = vmatpush1.msra.mxu0 0.0
  %1749 = vmatprep.subr.mxu0 0.0
  %1750 = vmatpush1.msra.mxu0 0.0
  %1751 = vmatprep.subr.mxu0 0.0
  %1752 = vmatpush1.msra.mxu0 0.0
  %1753 = vmatprep.subr.mxu0 0.0
  %1754 = vmatpush1.msra.mxu0 0.0
  %1755 = vmatprep.subr.mxu0 0.0
  %1756 = vmatpush1.msra.mxu0 0.0
  %1757 = vmatprep.subr.mxu0 0.0
  %1758 = vmatpush1.msra.mxu0 0.0
  %1759 = vmatprep.subr.mxu0 0.0
  %1760 = vmatpush1.msra.mxu0 0.0
  %1761 = vmatprep.subr.mxu0 0.0
  %1762 = vmatpush1.msra.mxu0 0.0
  %1763 = vmatprep.subr.mxu0 0.0
  %1764 = vmatpush1.msra.mxu0 0.0
  %1765 = vmatprep.subr.mxu0 0.0
  %1766 = vmatpush1.msra.mxu0 0.0
  %1767 = vmatprep.subr.mxu0 0.0
  %1768 = vmatpush1.msra.mxu0 0.0
  %1769 = vmatprep.subr.mxu0 0.0
  %1770 = vmatpush1.msra.mxu0 0.0
  %1771 = vmatprep.subr.mxu0 0.0
  %1772 = vmatpush1.msra.mxu0 0.0
  %1773 = vmatprep.subr.mxu0 0.0
  %1774 = vmatpush1.msra.mxu0 0.0
  %1775 = vmatprep.subr.mxu0 0.0
  %1776 = vmatpush1.msra.mxu0 0.0
  %1777 = vmatprep.subr.mxu0 0.0
  %1778 = vmatpush1.msra.mxu0 0.0
  %1779 = vmatprep.subr.mxu0 0.0
  %1780 = vmatpush1.msra.mxu0 0.0
  %1781 = vmatprep.subr.mxu0 0.0
  %1782 = vmatpush1.msra.mxu0 0.0
  %1783 = vmatprep.subr.mxu0 0.0
  %1784 = vmatpush1.msra.mxu0 0.0
  %1785 = vmatprep.subr.mxu0 0.0
  %1786 = vmatpush1.msra.mxu0 0.0
  %1787 = vmatprep.subr.mxu0 0.0
  %1788 = vmatpush1.msra.mxu0 0.0
  %1789 = vmatprep.subr.mxu0 0.0
  %1790 = vmatpush1.msra.mxu0 0.0
  %1791 = vmatprep.subr.mxu0 0.0
  %1792 = vmatpush1.msra.mxu0 0.0
  %1793 = vmatprep.subr.mxu0 0.0
  %1794 = vmatpush1.msra.mxu0 0.0
  %1795 = vmatprep.mubr.f32.mxu0 0.0
  %1796 = vmatmul.mubr.f32.gmra.mrb[0].mxu0 %v1729
  %v1797 = vpop.f32.mrb[0].mxu0
  %v1798 = vadd.f32 %v255, %v1797
  %v1799 = vpop.f32.mrb[0].mxu0
  %1800 = vdwg.mxu0
  %v1802 = vrot.slane %v1798, 2
  %v1804 = vadd.f32 %v155, %v1802
  %v1805 = vxor.u32 %v1804, 2147483648
  %v1806 = vmul.f32 %v1805, 1.442695
  %v1807 = vpow.pop %v1806
  %v1808 = vadd.f32 %v1807, 1.0
  %v1809 = vrcp.pop %v1808
  %v1810 = vmul.f32 1.0, %v1809
  %1811 = vrot.lane.b32.xlu0 %v1802, 64
  %v1812 = vpop.permute.xlu0 %1811
  %v1814 = vmul.f32 %v1810, %v1812
  %1816 = vrot.lane.b32.xlu0 %v1814, 64
  %v1817 = vpop.permute.xlu0 %1816
  %v1819 = vadd.f32 %v155, %v1817
  %v1820 = vtanh.pop %v1819
  %v1821 = vsub.f32 1.0, %v1810
  %1823 = vrot.lane.b32.xlu0 %v1820, 96
  %v1824 = vpop.permute.xlu0 %1823
  %v1826 = vmul.f32 %v1821, %v1824
  %v1827 = vrot.slane %v1618, 6
  %v1829 = vmul.f32 %v1810, %v1827
  %v1830 = vadd.f32 %v1826, %v1829
  %v1832 = vrot.slane %v1724, 2
  %1833 = vrot.lane.b32.xlu0 %v1832, 96
  %v1834 = vpop.permute.xlu0 %1833
  %v1835 = vsel %vm264, %v1834, 0
  %1837 = vmatprep.subr.mxu0 0.0
  %1838 = vmatpush1.msra.mxu0 %v246
  %1839 = vmatprep.subr.mxu0 0.0
  %1840 = vmatpush1.msra.mxu0 %v247
  %1841 = vmatprep.subr.mxu0 0.0
  %1842 = vmatpush1.msra.mxu0 %v248
  %1843 = vmatprep.subr.mxu0 0.0
  %1844 = vmatpush1.msra.mxu0 %v249
  %1845 = vmatprep.subr.mxu0 0.0
  %1846 = vmatpush1.msra.mxu0 0.0
  %1847 = vmatprep.subr.mxu0 0.0
  %1848 = vmatpush1.msra.mxu0 0.0
  %1849 = vmatprep.subr.mxu0 0.0
  %1850 = vmatpush1.msra.mxu0 0.0
  %1851 = vmatprep.subr.mxu0 0.0
  %1852 = vmatpush1.msra.mxu0 0.0
  %1853 = vmatprep.subr.mxu0 0.0
  %1854 = vmatpush1.msra.mxu0 0.0
  %1855 = vmatprep.subr.mxu0 0.0
  %1856 = vmatpush1.msra.mxu0 0.0
  %1857 = vmatprep.subr.mxu0 0.0
  %1858 = vmatpush1.msra.mxu0 0.0
  %1859 = vmatprep.subr.mxu0 0.0
  %1860 = vmatpush1.msra.mxu0 0.0
  %1861 = vmatprep.subr.mxu0 0.0
  %1862 = vmatpush1.msra.mxu0 0.0
  %1863 = vmatprep.subr.mxu0 0.0
  %1864 = vmatpush1.msra.mxu0 0.0
  %1865 = vmatprep.subr.mxu0 0.0
  %1866 = vmatpush1.msra.mxu0 0.0
  %1867 = vmatprep.subr.mxu0 0.0
  %1868 = vmatpush1.msra.mxu0 0.0
  %1869 = vmatprep.subr.mxu0 0.0
  %1870 = vmatpush1.msra.mxu0 0.0
  %1871 = vmatprep.subr.mxu0 0.0
  %1872 = vmatpush1.msra.mxu0 0.0
  %1873 = vmatprep.subr.mxu0 0.0
  %1874 = vmatpush1.msra.mxu0 0.0
  %1875 = vmatprep.subr.mxu0 0.0
  %1876 = vmatpush1.msra.mxu0 0.0
  %1877 = vmatprep.subr.mxu0 0.0
  %1878 = vmatpush1.msra.mxu0 0.0
  %1879 = vmatprep.subr.mxu0 0.0
  %1880 = vmatpush1.msra.mxu0 0.0
  %1881 = vmatprep.subr.mxu0 0.0
  %1882 = vmatpush1.msra.mxu0 0.0
  %1883 = vmatprep.subr.mxu0 0.0
  %1884 = vmatpush1.msra.mxu0 0.0
  %1885 = vmatprep.subr.mxu0 0.0
  %1886 = vmatpush1.msra.mxu0 0.0
  %1887 = vmatprep.subr.mxu0 0.0
  %1888 = vmatpush1.msra.mxu0 0.0
  %1889 = vmatprep.subr.mxu0 0.0
  %1890 = vmatpush1.msra.mxu0 0.0
  %1891 = vmatprep.subr.mxu0 0.0
  %1892 = vmatpush1.msra.mxu0 0.0
  %1893 = vmatprep.subr.mxu0 0.0
  %1894 = vmatpush1.msra.mxu0 0.0
  %1895 = vmatprep.subr.mxu0 0.0
  %1896 = vmatpush1.msra.mxu0 0.0
  %1897 = vmatprep.subr.mxu0 0.0
  %1898 = vmatpush1.msra.mxu0 0.0
  %1899 = vmatprep.subr.mxu0 0.0
  %1900 = vmatpush1.msra.mxu0 0.0
  %1901 = vmatprep.mubr.f32.mxu0 0.0
  %1902 = vmatmul.mubr.f32.gmra.mrb[0].mxu0 %v1835
  %v1903 = vpop.f32.mrb[0].mxu0
  %v1904 = vadd.f32 %v262, %v1903
  %v1905 = vpop.f32.mrb[0].mxu0
  %1906 = vdwg.mxu0
  %v1907 = vadd.f32 %v234, %v1904
  %v1908 = vxor.u32 %v1907, 2147483648
  %v1909 = vmul.f32 %v1908, 1.442695
  %v1910 = vpow.pop %v1909
  %v1911 = vadd.f32 %v1910, 1.0
  %v1912 = vrcp.pop %v1911
  %v1913 = vmul.f32 1.0, %v1912
  %1915 = vrot.lane.b32.xlu0 %v1904, 64
  %v1916 = vpop.permute.xlu0 %1915
  %v1918 = vmul.f32 %v1913, %v1916
  %1920 = vrot.lane.b32.xlu0 %v1918, 64
  %v1921 = vpop.permute.xlu0 %1920
  %v1923 = vadd.f32 %v234, %v1921
  %v1924 = vtanh.pop %v1923
  %v1925 = vsub.f32 1.0, %v1913
  %1927 = vrot.lane.b32.xlu0 %v1924, 96
  %v1928 = vpop.permute.xlu0 %1927
  %v1930 = vmul.f32 %v1925, %v1928
  %v1932 = vmul.f32 %v1913, %v1832
  %v1933 = vadd.f32 %v1930, %v1932
  %v1934 = vld [vmem:[%s9] sm:$0xff]
  %v1935 = vld [vmem:[%s9 + $0x8] sm:$0xff]
  %v1936 = vld [vmem:[%s9 + $0x10] sm:$0xff]
  %v1937 = vld [vmem:[%s9 + $0x18] sm:$0xff]
  %v1938 = vld [vmem:[%s10] sm:$0xff]
  %v1939 = vld [vmem:[%s10 + $0x8] sm:$0xff]
  %v1940 = vld [vmem:[%s12] sm:$0x1]
  %v1942 = vlaneseq
  %v1943 = vshrl.u32 %v1942, 7
  %v1944 = vsub.s32 0, %v1943
  %v1945 = vrot.slane %v1940, %v1944
  %v1948 = vsel %vm76, %v1934, 0
  %v1951 = vsel %vm76, %v1935, 0
  %v1954 = vsel %vm76, %v1936, 0
  %v1957 = vsel %vm76, %v1937, 0
  %1959 = vmatprep.subr.mxu0 0.0
  %1960 = vmatpush1.msra.mxu0 %v1938
  %1961 = vmatprep.subr.mxu0 0.0
  %1962 = vmatpush1.msra.mxu0 %v1939
  %1963 = vmatprep.subr.mxu0 0.0
  %1964 = vmatpush1.msra.mxu0 0.0
  %1965 = vmatprep.subr.mxu0 0.0
  %1966 = vmatpush1.msra.mxu0 0.0
  %1967 = vmatprep.subr.mxu0 0.0
  %1968 = vmatpush1.msra.mxu0 0.0
  %1969 = vmatprep.subr.mxu0 0.0
  %1970 = vmatpush1.msra.mxu0 0.0
  %1971 = vmatprep.subr.mxu0 0.0
  %1972 = vmatpush1.msra.mxu0 0.0
  %1973 = vmatprep.subr.mxu0 0.0
  %1974 = vmatpush1.msra.mxu0 0.0
  %1975 = vmatprep.subr.mxu0 0.0
  %1976 = vmatpush1.msra.mxu0 0.0
  %1977 = vmatprep.subr.mxu0 0.0
  %1978 = vmatpush1.msra.mxu0 0.0
  %1979 = vmatprep.subr.mxu0 0.0
  %1980 = vmatpush1.msra.mxu0 0.0
  %1981 = vmatprep.subr.mxu0 0.0
  %1982 = vmatpush1.msra.mxu0 0.0
  %1983 = vmatprep.subr.mxu0 0.0
  %1984 = vmatpush1.msra.mxu0 0.0
  %1985 = vmatprep.subr.mxu0 0.0
  %1986 = vmatpush1.msra.mxu0 0.0
  %1987 = vmatprep.subr.mxu0 0.0
  %1988 = vmatpush1.msra.mxu0 0.0
  %1989 = vmatprep.subr.mxu0 0.0
  %1990 = vmatpush1.msra.mxu0 0.0
  %1991 = vmatprep.subr.mxu0 0.0
  %1992 = vmatpush1.msra.mxu0 0.0
  %1993 = vmatprep.subr.mxu0 0.0
  %1994 = vmatpush1.msra.mxu0 0.0
  %1995 = vmatprep.subr.mxu0 0.0
  %1996 = vmatpush1.msra.mxu0 0.0
  %1997 = vmatprep.subr.mxu0 0.0
  %1998 = vmatpush1.msra.mxu0 0.0
  %1999 = vmatprep.subr.mxu0 0.0
  %2000 = vmatpush1.msra.mxu0 0.0
  %2001 = vmatprep.subr.mxu0 0.0
  %2002 = vmatpush1.msra.mxu0 0.0
  %2003 = vmatprep.subr.mxu0 0.0
  %2004 = vmatpush1.msra.mxu0 0.0
  %2005 = vmatprep.subr.mxu0 0.0
  %2006 = vmatpush1.msra.mxu0 0.0
  %2007 = vmatprep.subr.mxu0 0.0
  %2008 = vmatpush1.msra.mxu0 0.0
  %2009 = vmatprep.subr.mxu0 0.0
  %2010 = vmatpush1.msra.mxu0 0.0
  %2011 = vmatprep.subr.mxu0 0.0
  %2012 = vmatpush1.msra.mxu0 0.0
  %2013 = vmatprep.subr.mxu0 0.0
  %2014 = vmatpush1.msra.mxu0 0.0
  %2015 = vmatprep.subr.mxu0 0.0
  %2016 = vmatpush1.msra.mxu0 0.0
  %2017 = vmatprep.subr.mxu0 0.0
  %2018 = vmatpush1.msra.mxu0 0.0
  %2019 = vmatprep.subr.mxu0 0.0
  %2020 = vmatpush1.msra.mxu0 0.0
  %2021 = vmatprep.subr.mxu0 0.0
  %2022 = vmatpush1.msra.mxu0 0.0
  %2023 = vmatprep.mubr.f32.mxu0 0.0
  %2024 = vmatmul.mubr.f32.gmra.mrb[0].mxu0 %v1948
  %v2025 = vpop.f32.mrb[0].mxu0
  %v2026 = vadd.f32 %v1945, %v2025
  %v2027 = vpop.f32.mrb[0].mxu0
  %2028 = vmatprep.mubr.f32.mxu0 0.0
  %2029 = vmatmul.mubr.f32.gmra.mrb[0].mxu0 %v1951
  %v2030 = vpop.f32.mrb[0].mxu0
  %v2031 = vadd.f32 %v1945, %v2030
  %v2032 = vpop.f32.mrb[0].mxu0
  %2033 = vmatprep.mubr.f32.mxu0 0.0
  %2034 = vmatmul.mubr.f32.gmra.mrb[0].mxu0 %v1954
  %v2035 = vpop.f32.mrb[0].mxu0
  %v2036 = vadd.f32 %v1945, %v2035
  %v2037 = vpop.f32.mrb[0].mxu0
  %2038 = vmatprep.mubr.f32.mxu0 0.0
  %2039 = vmatmul.mubr.f32.gmra.mrb[0].mxu0 %v1957
  %v2040 = vpop.f32.mrb[0].mxu0
  %v2041 = vadd.f32 %v1945, %v2040
  %v2042 = vpop.f32.mrb[0].mxu0
  %2043 = vdwg.mxu0
  %v2044 = vld [vmem:[%s11] sm:$0xff]
  %v2045 = vld [vmem:[%s11 + $0x8] sm:$0xff]
  %v2046 = vld [vmem:[%s11 + $0x10] sm:$0xff]
  %v2047 = vld [vmem:[%s11 + $0x18] sm:$0xff]
  %v2048 = vld [vmem:[%s13] sm:$0x1]
  %2053 = vrot.lane.b32.xlu0 %v2044, 64
  %v2054 = vpop.permute.xlu0 %2053
  %2055 = vrot.lane.b32.xlu0 %v2045, 64
  %v2056 = vpop.permute.xlu0 %2055
  %2057 = vrot.lane.b32.xlu0 %v2046, 64
  %v2058 = vpop.permute.xlu0 %2057
  %2059 = vrot.lane.b32.xlu0 %v2047, 64
  %v2060 = vpop.permute.xlu0 %2059
  %2061 = vrot.lane.b32.xlu0 0.0, 96
  %v2062 = vpop.permute.xlu0 %2061
  %2063 = vrot.lane.b32.xlu0 %v2054, 96
  %v2064 = vpop.permute.xlu0 %2063
  %2065 = vrot.lane.b32.xlu0 %v2056, 96
  %v2066 = vpop.permute.xlu0 %2065
  %2067 = vrot.lane.b32.xlu0 %v2058, 96
  %v2068 = vpop.permute.xlu0 %2067
  %2069 = vrot.lane.b32.xlu0 %v2060, 96
  %v2070 = vpop.permute.xlu0 %2069
  %vm2076 = vcmask 523264
  %v2077 = vsel %vm2076, %v2044, 0.0
  %v2078 = vsel %vm2076, %v2045, 0.0
  %v2079 = vsel %vm2076, %v2046, 0.0
  %v2080 = vsel %vm2076, %v2047, 0.0
  %vm2081 = vcmask 785408
  %v2082 = vsel %vm2081, %v2026, %v2062
  %v2083 = vsel %vm2081, %v2031, %v2062
  %v2084 = vsel %vm2081, %v2036, %v2062
  %v2085 = vsel %vm2081, %v2041, %v2062
  %v2086 = vsel %vm2081, %v2077, %v2064
  %v2087 = vsel %vm2081, %v2078, %v2066
  %v2088 = vsel %vm2081, %v2079, %v2068
  %v2089 = vsel %vm2081, %v2080, %v2070
  %v2090 = vadd.f32 %v2048, 0.0
  %v2092 = vlaneseq
  %v2093 = vshrl.u32 %v2092, 7
  %v2094 = vsub.s32 0, %v2093
  %v2095 = vrot.slane %v2048, %v2094
  %2096 = vrot.lane.b32.xlu0 %v2095, 32
  %v2097 = vpop.permute.xlu0 %2096
  %v2099 = vsel %vm2076, %v2090, 0.0
  %v2100 = vsel %vm2081, %v2099, %v2097
  %v2101 = vlaneseq
  %v2102 = vshrl.u32 %v2101, 7
  %v2103 = vsub.s32 0, %v2102
  %v2104 = vrot.slane %v2100, %v2103
  %v2105 = vld [vmem:[%s14] sm:$0xff]
  %v2106 = vld [vmem:[%s14 + $0x8] sm:$0xff]
  %v2107 = vld [vmem:[%s14 + $0x10] sm:$0xff]
  %v2108 = vld [vmem:[%s14 + $0x18] sm:$0xff]
  %v2109 = vld [vmem:[%s15] sm:$0xff]
  %v2110 = vld [vmem:[%s15 + $0x8] sm:$0xff]
  %v2111 = vld [vmem:[%s15 + $0x10] sm:$0xff]
  %v2112 = vld [vmem:[%s15 + $0x18] sm:$0xff]
  %v2113 = vld [vmem:[%s16] sm:$0x1]
  %v2114 = vld [vmem:[%s17] sm:$0x1]
  %2119 = vrot.lane.b32.xlu0 %v2109, 64
  %v2120 = vpop.permute.xlu0 %2119
  %2121 = vrot.lane.b32.xlu0 %v2110, 64
  %v2122 = vpop.permute.xlu0 %2121
  %2123 = vrot.lane.b32.xlu0 %v2111, 64
  %v2124 = vpop.permute.xlu0 %2123
  %2125 = vrot.lane.b32.xlu0 %v2112, 64
  %v2126 = vpop.permute.xlu0 %2125
  %2127 = vrot.lane.b32.xlu0 %v2120, 96
  %v2128 = vpop.permute.xlu0 %2127
  %2129 = vrot.lane.b32.xlu0 %v2122, 96
  %v2130 = vpop.permute.xlu0 %2129
  %2131 = vrot.lane.b32.xlu0 %v2124, 96
  %v2132 = vpop.permute.xlu0 %2131
  %2133 = vrot.lane.b32.xlu0 %v2126, 96
  %v2134 = vpop.permute.xlu0 %2133
  %v2139 = vsel %vm2076, %v2109, 0.0
  %v2140 = vsel %vm2076, %v2110, 0.0
  %v2141 = vsel %vm2076, %v2111, 0.0
  %v2142 = vsel %vm2076, %v2112, 0.0
  %v2143 = vsel %vm2081, %v2105, %v2062
  %v2144 = vsel %vm2081, %v2106, %v2062
  %v2145 = vsel %vm2081, %v2107, %v2062
  %v2146 = vsel %vm2081, %v2108, %v2062
  %v2147 = vsel %vm2081, %v2139, %v2128
  %v2148 = vsel %vm2081, %v2140, %v2130
  %v2149 = vsel %vm2081, %v2141, %v2132
  %v2150 = vsel %vm2081, %v2142, %v2134
  %v2151 = vadd.f32 %v2113, %v2114
  %v2153 = vlaneseq
  %v2154 = vshrl.u32 %v2153, 7
  %v2155 = vsub.s32 0, %v2154
  %v2156 = vrot.slane %v2114, %v2155
  %2157 = vrot.lane.b32.xlu0 %v2156, 32
  %v2158 = vpop.permute.xlu0 %2157
  %v2160 = vsel %vm2076, %v2151, %v2113
  %v2161 = vsel %vm2081, %v2160, %v2158
  %v2162 = vlaneseq
  %v2163 = vshrl.u32 %v2162, 7
  %v2164 = vsub.s32 0, %v2163
  %v2165 = vrot.slane %v2161, %v2164
  %v2166 = vld [vmem:[%s18] sm:$0xff]
  %v2167 = vld [vmem:[%s18 + $0x8] sm:$0xff]
  %v2168 = vld [vmem:[%s18 + $0x10] sm:$0xff]
  %v2169 = vld [vmem:[%s18 + $0x18] sm:$0xff]
  %v2170 = vld [vmem:[%s19] sm:$0x1]
  %v2172 = vlaneseq
  %v2173 = vshrl.u32 %v2172, 7
  %v2174 = vsub.s32 0, %v2173
  %v2175 = vrot.slane %v2170, %v2174
  %v2177 = vlaneseq
  %v2178 = vand.u32 %v2177, 127
  %vm2179 = vcmp.eq.s32.totalorder %v2178, 0
  %v2180 = vsel %vm2179, 1, 0
  %v2181 = vcvt.s32.f32 %v2180
  %v2183 = vrot.slane %v1830, 6
  %v2185 = vsel %vm264, %v2181, %v2183
  %v2187 = vsel %vm2076, %v2185, 0
  %2189 = vmatprep.subr.mxu0 0.0
  %2190 = vmatpush1.msra.mxu0 %v2082
  %2191 = vmatprep.subr.mxu0 0.0
  %2192 = vmatpush1.msra.mxu0 %v2083
  %2193 = vmatprep.subr.mxu0 0.0
  %2194 = vmatpush1.msra.mxu0 %v2084
  %2195 = vmatprep.subr.mxu0 0.0
  %2196 = vmatpush1.msra.mxu0 %v2085
  %2197 = vmatprep.subr.mxu0 0.0
  %2198 = vmatpush1.msra.mxu0 %v2086
  %2199 = vmatprep.subr.mxu0 0.0
  %2200 = vmatpush1.msra.mxu0 %v2087
  %2201 = vmatprep.subr.mxu0 0.0
  %2202 = vmatpush1.msra.mxu0 %v2088
  %2203 = vmatprep.subr.mxu0 0.0
  %2204 = vmatpush1.msra.mxu0 %v2089
  %2205 = vmatprep.subr.mxu0 0.0
  %2206 = vmatpush1.msra.mxu0 0.0
  %2207 = vmatprep.subr.mxu0 0.0
  %2208 = vmatpush1.msra.mxu0 0.0
  %2209 = vmatprep.subr.mxu0 0.0
  %2210 = vmatpush1.msra.mxu0 0.0
  %2211 = vmatprep.subr.mxu0 0.0
  %2212 = vmatpush1.msra.mxu0 0.0
  %2213 = vmatprep.subr.mxu0 0.0
  %2214 = vmatpush1.msra.mxu0 0.0
  %2215 = vmatprep.subr.mxu0 0.0
  %2216 = vmatpush1.msra.mxu0 0.0
  %2217 = vmatprep.subr.mxu0 0.0
  %2218 = vmatpush1.msra.mxu0 0.0
  %2219 = vmatprep.subr.mxu0 0.0
  %2220 = vmatpush1.msra.mxu0 0.0
  %2221 = vmatprep.subr.mxu0 0.0
  %2222 = vmatpush1.msra.mxu0 0.0
  %2223 = vmatprep.subr.mxu0 0.0
  %2224 = vmatpush1.msra.mxu0 0.0
  %2225 = vmatprep.subr.mxu0 0.0
  %2226 = vmatpush1.msra.mxu0 0.0
  %2227 = vmatprep.subr.mxu0 0.0
  %2228 = vmatpush1.msra.mxu0 0.0
  %2229 = vmatprep.subr.mxu0 0.0
  %2230 = vmatpush1.msra.mxu0 0.0
  %2231 = vmatprep.subr.mxu0 0.0
  %2232 = vmatpush1.msra.mxu0 0.0
  %2233 = vmatprep.subr.mxu0 0.0
  %2234 = vmatpush1.msra.mxu0 0.0
  %2235 = vmatprep.subr.mxu0 0.0
  %2236 = vmatpush1.msra.mxu0 0.0
  %2237 = vmatprep.subr.mxu0 0.0
  %2238 = vmatpush1.msra.mxu0 0.0
  %2239 = vmatprep.subr.mxu0 0.0
  %2240 = vmatpush1.msra.mxu0 0.0
  %2241 = vmatprep.subr.mxu0 0.0
  %2242 = vmatpush1.msra.mxu0 0.0
  %2243 = vmatprep.subr.mxu0 0.0
  %2244 = vmatpush1.msra.mxu0 0.0
  %2245 = vmatprep.subr.mxu0 0.0
  %2246 = vmatpush1.msra.mxu0 0.0
  %2247 = vmatprep.subr.mxu0 0.0
  %2248 = vmatpush1.msra.mxu0 0.0
  %2249 = vmatprep.subr.mxu0 0.0
  %2250 = vmatpush1.msra.mxu0 0.0
  %2251 = vmatprep.subr.mxu0 0.0
  %2252 = vmatpush1.msra.mxu0 0.0
  %2253 = vmatprep.mubr.f32.mxu0 0.0
  %2254 = vmatmul.mubr.f32.gmra.mrb[0].mxu0 %v2187
  %v2255 = vpop.f32.mrb[0].mxu0
  %v2256 = vadd.f32 %v2104, %v2255
  %v2257 = vpop.f32.mrb[0].mxu0
  %2258 = vdwg.mxu0
  %v2259 = vxor.u32 %v2256, 2147483648
  %v2260 = vmul.f32 %v2259, 1.442695
  %v2261 = vpow.pop %v2260
  %v2262 = vadd.f32 %v2261, 1.0
  %v2263 = vrcp.pop %v2262
  %v2264 = vmul.f32 1.0, %v2263
  %2266 = vrot.lane.b32.xlu0 %v2256, 32
  %v2267 = vpop.permute.xlu0 %2266
  %v2269 = vmul.f32 %v2264, %v2267
  %2271 = vrot.lane.b32.xlu0 %v2269, 64
  %v2272 = vpop.permute.xlu0 %2271
  %v2274 = vadd.f32 %v2256, %v2272
  %v2275 = vtanh.pop %v2274
  %v2276 = vsub.f32 1.0, %v2264
  %2278 = vrot.lane.b32.xlu0 %v2275, 96
  %v2279 = vpop.permute.xlu0 %2278
  %v2281 = vmul.f32 %v2276, %v2279
  %v2282 = vmul.f32 %v2264, %v2183
  %v2283 = vadd.f32 %v2281, %v2282
  %2285 = vrot.lane.b32.xlu0 %v2283, 96
  %v2286 = vpop.permute.xlu0 %2285
  %v2288 = vsel %vm264, %v2286, %v1933
  %v2290 = vsel %vm2076, %v2288, 0
  %2292 = vmatprep.subr.mxu0 0.0
  %2293 = vmatpush1.msra.mxu0 %v2143
  %2294 = vmatprep.subr.mxu0 0.0
  %2295 = vmatpush1.msra.mxu0 %v2144
  %2296 = vmatprep.subr.mxu0 0.0
  %2297 = vmatpush1.msra.mxu0 %v2145
  %2298 = vmatprep.subr.mxu0 0.0
  %2299 = vmatpush1.msra.mxu0 %v2146
  %2300 = vmatprep.subr.mxu0 0.0
  %2301 = vmatpush1.msra.mxu0 %v2147
  %2302 = vmatprep.subr.mxu0 0.0
  %2303 = vmatpush1.msra.mxu0 %v2148
  %2304 = vmatprep.subr.mxu0 0.0
  %2305 = vmatpush1.msra.mxu0 %v2149
  %2306 = vmatprep.subr.mxu0 0.0
  %2307 = vmatpush1.msra.mxu0 %v2150
  %2308 = vmatprep.subr.mxu0 0.0
  %2309 = vmatpush1.msra.mxu0 0.0
  %2310 = vmatprep.subr.mxu0 0.0
  %2311 = vmatpush1.msra.mxu0 0.0
  %2312 = vmatprep.subr.mxu0 0.0
  %2313 = vmatpush1.msra.mxu0 0.0
  %2314 = vmatprep.subr.mxu0 0.0
  %2315 = vmatpush1.msra.mxu0 0.0
  %2316 = vmatprep.subr.mxu0 0.0
  %2317 = vmatpush1.msra.mxu0 0.0
  %2318 = vmatprep.subr.mxu0 0.0
  %2319 = vmatpush1.msra.mxu0 0.0
  %2320 = vmatprep.subr.mxu0 0.0
  %2321 = vmatpush1.msra.mxu0 0.0
  %2322 = vmatprep.subr.mxu0 0.0
  %2323 = vmatpush1.msra.mxu0 0.0
  %2324 = vmatprep.subr.mxu0 0.0
  %2325 = vmatpush1.msra.mxu0 0.0
  %2326 = vmatprep.subr.mxu0 0.0
  %2327 = vmatpush1.msra.mxu0 0.0
  %2328 = vmatprep.subr.mxu0 0.0
  %2329 = vmatpush1.msra.mxu0 0.0
  %2330 = vmatprep.subr.mxu0 0.0
  %2331 = vmatpush1.msra.mxu0 0.0
  %2332 = vmatprep.subr.mxu0 0.0
  %2333 = vmatpush1.msra.mxu0 0.0
  %2334 = vmatprep.subr.mxu0 0.0
  %2335 = vmatpush1.msra.mxu0 0.0
  %2336 = vmatprep.subr.mxu0 0.0
  %2337 = vmatpush1.msra.mxu0 0.0
  %2338 = vmatprep.subr.mxu0 0.0
  %2339 = vmatpush1.msra.mxu0 0.0
  %2340 = vmatprep.subr.mxu0 0.0
  %2341 = vmatpush1.msra.mxu0 0.0
  %2342 = vmatprep.subr.mxu0 0.0
  %2343 = vmatpush1.msra.mxu0 0.0
  %2344 = vmatprep.subr.mxu0 0.0
  %2345 = vmatpush1.msra.mxu0 0.0
  %2346 = vmatprep.subr.mxu0 0.0
  %2347 = vmatpush1.msra.mxu0 0.0
  %2348 = vmatprep.subr.mxu0 0.0
  %2349 = vmatpush1.msra.mxu0 0.0
  %2350 = vmatprep.subr.mxu0 0.0
  %2351 = vmatpush1.msra.mxu0 0.0
  %2352 = vmatprep.subr.mxu0 0.0
  %2353 = vmatpush1.msra.mxu0 0.0
  %2354 = vmatprep.subr.mxu0 0.0
  %2355 = vmatpush1.msra.mxu0 0.0
  %2356 = vmatprep.mubr.f32.mxu0 0.0
  %2357 = vmatmul.mubr.f32.gmra.mrb[0].mxu0 %v2290
  %v2358 = vpop.f32.mrb[0].mxu0
  %v2359 = vadd.f32 %v2165, %v2358
  %v2360 = vpop.f32.mrb[0].mxu0
  %2361 = vdwg.mxu0
  %v2362 = vxor.u32 %v2359, 2147483648
  %v2363 = vmul.f32 %v2362, 1.442695
  %v2364 = vpow.pop %v2363
  %v2365 = vadd.f32 %v2364, 1.0
  %v2366 = vrcp.pop %v2365
  %v2367 = vmul.f32 1.0, %v2366
  %2369 = vrot.lane.b32.xlu0 %v2359, 32
  %v2370 = vpop.permute.xlu0 %2369
  %v2372 = vmul.f32 %v2367, %v2370
  %2374 = vrot.lane.b32.xlu0 %v2372, 64
  %v2375 = vpop.permute.xlu0 %2374
  %v2377 = vadd.f32 %v2359, %v2375
  %v2378 = vtanh.pop %v2377
  %v2379 = vsub.f32 1.0, %v2367
  %2381 = vrot.lane.b32.xlu0 %v2378, 96
  %v2382 = vpop.permute.xlu0 %2381
  %v2384 = vmul.f32 %v2379, %v2382
  %v2385 = vmul.f32 %v2367, %v1933
  %v2386 = vadd.f32 %v2384, %v2385
  %2388 = vrot.lane.b32.xlu0 %v2386, 96
  %v2389 = vpop.permute.xlu0 %2388
  %v2390 = vsel %vm264, %v2389, 0
  %2392 = vmatprep.subr.mxu0 0.0
  %2393 = vmatpush1.msra.mxu0 %v2166
  %2394 = vmatprep.subr.mxu0 0.0
  %2395 = vmatpush1.msra.mxu0 %v2167
  %2396 = vmatprep.subr.mxu0 0.0
  %2397 = vmatpush1.msra.mxu0 %v2168
  %2398 = vmatprep.subr.mxu0 0.0
  %2399 = vmatpush1.msra.mxu0 %v2169
  %2400 = vmatprep.subr.mxu0 0.0
  %2401 = vmatpush1.msra.mxu0 0.0
  %2402 = vmatprep.subr.mxu0 0.0
  %2403 = vmatpush1.msra.mxu0 0.0
  %2404 = vmatprep.subr.mxu0 0.0
  %2405 = vmatpush1.msra.mxu0 0.0
  %2406 = vmatprep.subr.mxu0 0.0
  %2407 = vmatpush1.msra.mxu0 0.0
  %2408 = vmatprep.subr.mxu0 0.0
  %2409 = vmatpush1.msra.mxu0 0.0
  %2410 = vmatprep.subr.mxu0 0.0
  %2411 = vmatpush1.msra.mxu0 0.0
  %2412 = vmatprep.subr.mxu0 0.0
  %2413 = vmatpush1.msra.mxu0 0.0
  %2414 = vmatprep.subr.mxu0 0.0
  %2415 = vmatpush1.msra.mxu0 0.0
  %2416 = vmatprep.subr.mxu0 0.0
  %2417 = vmatpush1.msra.mxu0 0.0
  %2418 = vmatprep.subr.mxu0 0.0
  %2419 = vmatpush1.msra.mxu0 0.0
  %2420 = vmatprep.subr.mxu0 0.0
  %2421 = vmatpush1.msra.mxu0 0.0
  %2422 = vmatprep.subr.mxu0 0.0
  %2423 = vmatpush1.msra.mxu0 0.0
  %2424 = vmatprep.subr.mxu0 0.0
  %2425 = vmatpush1.msra.mxu0 0.0
  %2426 = vmatprep.subr.mxu0 0.0
  %2427 = vmatpush1.msra.mxu0 0.0
  %2428 = vmatprep.subr.mxu0 0.0
  %2429 = vmatpush1.msra.mxu0 0.0
  %2430 = vmatprep.subr.mxu0 0.0
  %2431 = vmatpush1.msra.mxu0 0.0
  %2432 = vmatprep.subr.mxu0 0.0
  %2433 = vmatpush1.msra.mxu0 0.0
  %2434 = vmatprep.subr.mxu0 0.0
  %2435 = vmatpush1.msra.mxu0 0.0
  %2436 = vmatprep.subr.mxu0 0.0
  %2437 = vmatpush1.msra.mxu0 0.0
  %2438 = vmatprep.subr.mxu0 0.0
  %2439 = vmatpush1.msra.mxu0 0.0
  %2440 = vmatprep.subr.mxu0 0.0
  %2441 = vmatpush1.msra.mxu0 0.0
  %2442 = vmatprep.subr.mxu0 0.0
  %2443 = vmatpush1.msra.mxu0 0.0
  %2444 = vmatprep.subr.mxu0 0.0
  %2445 = vmatpush1.msra.mxu0 0.0
  %2446 = vmatprep.subr.mxu0 0.0
  %2447 = vmatpush1.msra.mxu0 0.0
  %2448 = vmatprep.subr.mxu0 0.0
  %2449 = vmatpush1.msra.mxu0 0.0
  %2450 = vmatprep.subr.mxu0 0.0
  %2451 = vmatpush1.msra.mxu0 0.0
  %2452 = vmatprep.subr.mxu0 0.0
  %2453 = vmatpush1.msra.mxu0 0.0
  %2454 = vmatprep.subr.mxu0 0.0
  %2455 = vmatpush1.msra.mxu0 0.0
  %2456 = vmatprep.mubr.f32.mxu0 0.0
  %2457 = vmatmul.mubr.f32.gmra.mrb[0].mxu0 %v2390
  %v2458 = vpop.f32.mrb[0].mxu0
  %v2459 = vadd.f32 %v2175, %v2458
  %v2460 = vpop.f32.mrb[0].mxu0
  %2461 = vdwg.mxu0
  %vm2462 = vcmask 254976
  %v2463 = vsel %vm2462, %v2459, -inf
  %2464 = vmax.xlane.f32.xlu0 %v2463
  %v2465 = vpop.xlane.xlu0 %2464
  %v2466 = vsub.f32 %v2459, %v2465
  %v2467 = vmul.f32 %v2466, 1.442695
  %v2468 = vpow.pop %v2467
  %v2469 = vsel %vm2462, %v2468, 0.0
  %2470 = vadd.xlane.f32.xlu0 %v2469
  %v2471 = vpop.xlane.xlu0 %2470
  %v2472 = vlog2.pop %v2471
  %v2473 = vmul.f32 %v2472, 0.6931472
  %v2474 = vsub.f32 %v2466, %v2473
  %2475 = vst.msk [vmem:[%s20] sm:$0x3] %vm2462, %v2474
  %vm2476 = vcmp.ge.f32.partialorder %v2459, %v2465
  %v2477 = vsel %vm2476, %v2178, 32
  %v2478 = vsel %vm2462, %v2477, 2147483647
  %v2479 = vand.u32 %v2478, 65535
  %v2480 = vshra.s32 %v2478, 16
  %v2481 = vcvt.s32.f32 %v2479
  %v2482 = vcvt.s32.f32 %v2480
  %2483 = vmin.xlane.f32.xlu0 %v2482
  %v2484 = vpop.xlane.xlu0 %2483
  %vm2485 = vcmp.eq.f32.partialorder %v2482, %v2484
  %v2486 = vsel %vm2485, %v2481, inf
  %2487 = vmin.xlane.f32.xlu0 %v2486
  %v2488 = vpop.xlane.xlu0 %2487
  %v2489 = vcvt.f32.s32 %v2488
  %v2490 = vcvt.f32.s32 %v2484
  %v2491 = vshll.u32 %v2490, 16
  %v2492 = vadd.s32 %v2491, %v2489
  %vm2493 = vcmp.eq.s32.totalorder %v2178, %v2492
  %v2494 = vsel %vm2493, 1, 0
  %v2495 = vcvt.s32.f32 %v2494
  %v2496 = vsel %vm264, %v2495, %v2283
  %v2498 = vsel %vm2076, %v2496, 0
  %2500 = vmatprep.subr.mxu0 0.0
  %2501 = vmatpush1.msra.mxu0 %v2082
  %2502 = vmatprep.subr.mxu0 0.0
  %2503 = vmatpush1.msra.mxu0 %v2083
  %2504 = vmatprep.subr.mxu0 0.0
  %2505 = vmatpush1.msra.mxu0 %v2084
  %2506 = vmatprep.subr.mxu0 0.0
  %2507 = vmatpush1.msra.mxu0 %v2085
  %2508 = vmatprep.subr.mxu0 0.0
  %2509 = vmatpush1.msra.mxu0 %v2086
  %2510 = vmatprep.subr.mxu0 0.0
  %2511 = vmatpush1.msra.mxu0 %v2087
  %2512 = vmatprep.subr.mxu0 0.0
  %2513 = vmatpush1.msra.mxu0 %v2088
  %2514 = vmatprep.subr.mxu0 0.0
  %2515 = vmatpush1.msra.mxu0 %v2089
  %2516 = vmatprep.subr.mxu0 0.0
  %2517 = vmatpush1.msra.mxu0 0.0
  %2518 = vmatprep.subr.mxu0 0.0
  %2519 = vmatpush1.msra.mxu0 0.0
  %2520 = vmatprep.subr.mxu0 0.0
  %2521 = vmatpush1.msra.mxu0 0.0
  %2522 = vmatprep.subr.mxu0 0.0
  %2523 = vmatpush1.msra.mxu0 0.0
  %2524 = vmatprep.subr.mxu0 0.0
  %2525 = vmatpush1.msra.mxu0 0.0
  %2526 = vmatprep.subr.mxu0 0.0
  %2527 = vmatpush1.msra.mxu0 0.0
  %2528 = vmatprep.subr.mxu0 0.0
  %2529 = vmatpush1.msra.mxu0 0.0
  %2530 = vmatprep.subr.mxu0 0.0
  %2531 = vmatpush1.msra.mxu0 0.0
  %2532 = vmatprep.subr.mxu0 0.0
  %2533 = vmatpush1.msra.mxu0 0.0
  %2534 = vmatprep.subr.mxu0 0.0
  %2535 = vmatpush1.msra.mxu0 0.0
  %2536 = vmatprep.subr.mxu0 0.0
  %2537 = vmatpush1.msra.mxu0 0.0
  %2538 = vmatprep.subr.mxu0 0.0
  %2539 = vmatpush1.msra.mxu0 0.0
  %2540 = vmatprep.subr.mxu0 0.0
  %2541 = vmatpush1.msra.mxu0 0.0
  %2542 = vmatprep.subr.mxu0 0.0
  %2543 = vmatpush1.msra.mxu0 0.0
  %2544 = vmatprep.subr.mxu0 0.0
  %2545 = vmatpush1.msra.mxu0 0.0
  %2546 = vmatprep.subr.mxu0 0.0
  %2547 = vmatpush1.msra.mxu0 0.0
  %2548 = vmatprep.subr.mxu0 0.0
  %2549 = vmatpush1.msra.mxu0 0.0
  %2550 = vmatprep.subr.mxu0 0.0
  %2551 = vmatpush1.msra.mxu0 0.0
  %2552 = vmatprep.subr.mxu0 0.0
  %2553 = vmatpush1.msra.mxu0 0.0
  %2554 = vmatprep.subr.mxu0 0.0
  %2555 = vmatpush1.msra.mxu0 0.0
  %2556 = vmatprep.subr.mxu0 0.0
  %2557 = vmatpush1.msra.mxu0 0.0
  %2558 = vmatprep.subr.mxu0 0.0
  %2559 = vmatpush1.msra.mxu0 0.0
  %2560 = vmatprep.subr.mxu0 0.0
  %2561 = vmatpush1.msra.mxu0 0.0
  %2562 = vmatprep.subr.mxu0 0.0
  %2563 = vmatpush1.msra.mxu0 0.0
  %2564 = vmatprep.mubr.f32.mxu0 0.0
  %2565 = vmatmul.mubr.f32.gmra.mrb[0].mxu0 %v2498
  %v2566 = vpop.f32.mrb[0].mxu0
  %v2567 = vadd.f32 %v2104, %v2566
  %v2568 = vpop.f32.mrb[0].mxu0
  %2569 = vdwg.mxu0
  %v2570 = vxor.u32 %v2567, 2147483648
  %v2571 = vmul.f32 %v2570, 1.442695
  %v2572 = vpow.pop %v2571
  %v2573 = vadd.f32 %v2572, 1.0
  %v2574 = vrcp.pop %v2573
  %v2575 = vmul.f32 1.0, %v2574
  %2577 = vrot.lane.b32.xlu0 %v2567, 32
  %v2578 = vpop.permute.xlu0 %2577
  %v2580 = vmul.f32 %v2575, %v2578
  %2582 = vrot.lane.b32.xlu0 %v2580, 64
  %v2583 = vpop.permute.xlu0 %2582
  %v2585 = vadd.f32 %v2567, %v2583
  %v2586 = vtanh.pop %v2585
  %v2587 = vsub.f32 1.0, %v2575
  %2589 = vrot.lane.b32.xlu0 %v2586, 96
  %v2590 = vpop.permute.xlu0 %2589
  %v2592 = vmul.f32 %v2587, %v2590
  %v2593 = vmul.f32 %v2575, %v2283
  %v2594 = vadd.f32 %v2592, %v2593
  %2596 = vrot.lane.b32.xlu0 %v2594, 96
  %v2597 = vpop.permute.xlu0 %2596
  %v2599 = vsel %vm264, %v2597, %v2386
  %v2601 = vsel %vm2076, %v2599, 0
  %2603 = vmatprep.subr.mxu0 0.0
  %2604 = vmatpush1.msra.mxu0 %v2143
  %2605 = vmatprep.subr.mxu0 0.0
  %2606 = vmatpush1.msra.mxu0 %v2144
  %2607 = vmatprep.subr.mxu0 0.0
  %2608 = vmatpush1.msra.mxu0 %v2145
  %2609 = vmatprep.subr.mxu0 0.0
  %2610 = vmatpush1.msra.mxu0 %v2146
  %2611 = vmatprep.subr.mxu0 0.0
  %2612 = vmatpush1.msra.mxu0 %v2147
  %2613 = vmatprep.subr.mxu0 0.0
  %2614 = vmatpush1.msra.mxu0 %v2148
  %2615 = vmatprep.subr.mxu0 0.0
  %2616 = vmatpush1.msra.mxu0 %v2149
  %2617 = vmatprep.subr.mxu0 0.0
  %2618 = vmatpush1.msra.mxu0 %v2150
  %2619 = vmatprep.subr.mxu0 0.0
  %2620 = vmatpush1.msra.mxu0 0.0
  %2621 = vmatprep.subr.mxu0 0.0
  %2622 = vmatpush1.msra.mxu0 0.0
  %2623 = vmatprep.subr.mxu0 0.0
  %2624 = vmatpush1.msra.mxu0 0.0
  %2625 = vmatprep.subr.mxu0 0.0
  %2626 = vmatpush1.msra.mxu0 0.0
  %2627 = vmatprep.subr.mxu0 0.0
  %2628 = vmatpush1.msra.mxu0 0.0
  %2629 = vmatprep.subr.mxu0 0.0
  %2630 = vmatpush1.msra.mxu0 0.0
  %2631 = vmatprep.subr.mxu0 0.0
  %2632 = vmatpush1.msra.mxu0 0.0
  %2633 = vmatprep.subr.mxu0 0.0
  %2634 = vmatpush1.msra.mxu0 0.0
  %2635 = vmatprep.subr.mxu0 0.0
  %2636 = vmatpush1.msra.mxu0 0.0
  %2637 = vmatprep.subr.mxu0 0.0
  %2638 = vmatpush1.msra.mxu0 0.0
  %2639 = vmatprep.subr.mxu0 0.0
  %2640 = vmatpush1.msra.mxu0 0.0
  %2641 = vmatprep.subr.mxu0 0.0
  %2642 = vmatpush1.msra.mxu0 0.0
  %2643 = vmatprep.subr.mxu0 0.0
  %2644 = vmatpush1.msra.mxu0 0.0
  %2645 = vmatprep.subr.mxu0 0.0
  %2646 = vmatpush1.msra.mxu0 0.0
  %2647 = vmatprep.subr.mxu0 0.0
  %2648 = vmatpush1.msra.mxu0 0.0
  %2649 = vmatprep.subr.mxu0 0.0
  %2650 = vmatpush1.msra.mxu0 0.0
  %2651 = vmatprep.subr.mxu0 0.0
  %2652 = vmatpush1.msra.mxu0 0.0
  %2653 = vmatprep.subr.mxu0 0.0
  %2654 = vmatpush1.msra.mxu0 0.0
  %2655 = vmatprep.subr.mxu0 0.0
  %2656 = vmatpush1.msra.mxu0 0.0
  %2657 = vmatprep.subr.mxu0 0.0
  %2658 = vmatpush1.msra.mxu0 0.0
  %2659 = vmatprep.subr.mxu0 0.0
  %2660 = vmatpush1.msra.mxu0 0.0
  %2661 = vmatprep.subr.mxu0 0.0
  %2662 = vmatpush1.msra.mxu0 0.0
  %2663 = vmatprep.subr.mxu0 0.0
  %2664 = vmatpush1.msra.mxu0 0.0
  %2665 = vmatprep.subr.mxu0 0.0
  %2666 = vmatpush1.msra.mxu0 0.0
  %2667 = vmatprep.mubr.f32.mxu0 0.0
  %2668 = vmatmul.mubr.f32.gmra.mrb[0].mxu0 %v2601
  %v2669 = vpop.f32.mrb[0].mxu0
  %v2670 = vadd.f32 %v2165, %v2669
  %v2671 = vpop.f32.mrb[0].mxu0
  %2672 = vdwg.mxu0
  %v2673 = vxor.u32 %v2670, 2147483648
  %v2674 = vmul.f32 %v2673, 1.442695
  %v2675 = vpow.pop %v2674
  %v2676 = vadd.f32 %v2675, 1.0
  %v2677 = vrcp.pop %v2676
  %v2678 = vmul.f32 1.0, %v2677
  %2680 = vrot.lane.b32.xlu0 %v2670, 32
  %v2681 = vpop.permute.xlu0 %2680
  %v2683 = vmul.f32 %v2678, %v2681
  %2685 = vrot.lane.b32.xlu0 %v2683, 64
  %v2686 = vpop.permute.xlu0 %2685
  %v2688 = vadd.f32 %v2670, %v2686
  %v2689 = vtanh.pop %v2688
  %v2690 = vsub.f32 1.0, %v2678
  %2692 = vrot.lane.b32.xlu0 %v2689, 96
  %v2693 = vpop.permute.xlu0 %2692
  %v2695 = vmul.f32 %v2690, %v2693
  %v2696 = vmul.f32 %v2678, %v2386
  %v2697 = vadd.f32 %v2695, %v2696
  %2699 = vrot.lane.b32.xlu0 %v2697, 96
  %v2700 = vpop.permute.xlu0 %2699
  %v2701 = vsel %vm264, %v2700, 0
  %2703 = vmatprep.subr.mxu0 0.0
  %2704 = vmatpush1.msra.mxu0 %v2166
  %2705 = vmatprep.subr.mxu0 0.0
  %2706 = vmatpush1.msra.mxu0 %v2167
  %2707 = vmatprep.subr.mxu0 0.0
  %2708 = vmatpush1.msra.mxu0 %v2168
  %2709 = vmatprep.subr.mxu0 0.0
  %2710 = vmatpush1.msra.mxu0 %v2169
  %2711 = vmatprep.subr.mxu0 0.0
  %2712 = vmatpush1.msra.mxu0 0.0
  %2713 = vmatprep.subr.mxu0 0.0
  %2714 = vmatpush1.msra.mxu0 0.0
  %2715 = vmatprep.subr.mxu0 0.0
  %2716 = vmatpush1.msra.mxu0 0.0
  %2717 = vmatprep.subr.mxu0 0.0
  %2718 = vmatpush1.msra.mxu0 0.0
  %2719 = vmatprep.subr.mxu0 0.0
  %2720 = vmatpush1.msra.mxu0 0.0
  %2721 = vmatprep.subr.mxu0 0.0
  %2722 = vmatpush1.msra.mxu0 0.0
  %2723 = vmatprep.subr.mxu0 0.0
  %2724 = vmatpush1.msra.mxu0 0.0
  %2725 = vmatprep.subr.mxu0 0.0
  %2726 = vmatpush1.msra.mxu0 0.0
  %2727 = vmatprep.subr.mxu0 0.0
  %2728 = vmatpush1.msra.mxu0 0.0
  %2729 = vmatprep.subr.mxu0 0.0
  %2730 = vmatpush1.msra.mxu0 0.0
  %2731 = vmatprep.subr.mxu0 0.0
  %2732 = vmatpush1.msra.mxu0 0.0
  %2733 = vmatprep.subr.mxu0 0.0
  %2734 = vmatpush1.msra.mxu0 0.0
  %2735 = vmatprep.subr.mxu0 0.0
  %2736 = vmatpush1.msra.mxu0 0.0
  %2737 = vmatprep.subr.mxu0 0.0
  %2738 = vmatpush1.msra.mxu0 0.0
  %2739 = vmatprep.subr.mxu0 0.0
  %2740 = vmatpush1.msra.mxu0 0.0
  %2741 = vmatprep.subr.mxu0 0.0
  %2742 = vmatpush1.msra.mxu0 0.0
  %2743 = vmatprep.subr.mxu0 0.0
  %2744 = vmatpush1.msra.mxu0 0.0
  %2745 = vmatprep.subr.mxu0 0.0
  %2746 = vmatpush1.msra.mxu0 0.0
  %2747 = vmatprep.subr.mxu0 0.0
  %2748 = vmatpush1.msra.mxu0 0.0
  %2749 = vmatprep.subr.mxu0 0.0
  %2750 = vmatpush1.msra.mxu0 0.0
  %2751 = vmatprep.subr.mxu0 0.0
  %2752 = vmatpush1.msra.mxu0 0.0
  %2753 = vmatprep.subr.mxu0 0.0
  %2754 = vmatpush1.msra.mxu0 0.0
  %2755 = vmatprep.subr.mxu0 0.0
  %2756 = vmatpush1.msra.mxu0 0.0
  %2757 = vmatprep.subr.mxu0 0.0
  %2758 = vmatpush1.msra.mxu0 0.0
  %2759 = vmatprep.subr.mxu0 0.0
  %2760 = vmatpush1.msra.mxu0 0.0
  %2761 = vmatprep.subr.mxu0 0.0
  %2762 = vmatpush1.msra.mxu0 0.0
  %2763 = vmatprep.subr.mxu0 0.0
  %2764 = vmatpush1.msra.mxu0 0.0
  %2765 = vmatprep.subr.mxu0 0.0
  %2766 = vmatpush1.msra.mxu0 0.0
  %2767 = vmatprep.mubr.f32.mxu0 0.0
  %2768 = vmatmul.mubr.f32.gmra.mrb[0].mxu0 %v2701
  %v2769 = vpop.f32.mrb[0].mxu0
  %v2770 = vadd.f32 %v2175, %v2769
  %v2771 = vpop.f32.mrb[0].mxu0
  %2772 = vdwg.mxu0
  %v2773 = vsel %vm2462, %v2770, -inf
  %2774 = vmax.xlane.f32.xlu0 %v2773
  %v2775 = vpop.xlane.xlu0 %2774
  %v2776 = vsub.f32 %v2770, %v2775
  %v2777 = vmul.f32 %v2776, 1.442695
  %v2778 = vpow.pop %v2777
  %v2779 = vsel %vm2462, %v2778, 0.0
  %2780 = vadd.xlane.f32.xlu0 %v2779
  %v2781 = vpop.xlane.xlu0 %2780
  %v2782 = vlog2.pop %v2781
  %v2783 = vmul.f32 %v2782, 0.6931472
  %v2784 = vsub.f32 %v2776, %v2783
  %s2785 = scalar_lea.vmem %s20, 2
  %2786 = vst.msk [vmem:[%s2785] sm:$0x3] %vm2462, %v2784
  %vm2787 = vcmp.ge.f32.partialorder %v2770, %v2775
  %v2788 = vsel %vm2787, %v2178, 32
  %v2789 = vsel %vm2462, %v2788, 2147483647
  %v2790 = vand.u32 %v2789, 65535
  %v2791 = vshra.s32 %v2789, 16
  %v2792 = vcvt.s32.f32 %v2790
  %v2793 = vcvt.s32.f32 %v2791
  %2794 = vmin.xlane.f32.xlu0 %v2793
  %v2795 = vpop.xlane.xlu0 %2794
  %vm2796 = vcmp.eq.f32.partialorder %v2793, %v2795
  %v2797 = vsel %vm2796, %v2792, inf
  %2798 = vmin.xlane.f32.xlu0 %v2797
  %v2799 = vpop.xlane.xlu0 %2798
  %v2800 = vcvt.f32.s32 %v2799
  %v2801 = vcvt.f32.s32 %v2795
  %v2802 = vshll.u32 %v2801, 16
  %v2803 = vadd.s32 %v2802, %v2800
  %vm2804 = vcmp.eq.s32.totalorder %v2178, %v2803
  %v2805 = vsel %vm2804, 1, 0
  %v2806 = vcvt.s32.f32 %v2805
  %v2807 = vsel %vm264, %v2806, %v2594
  %v2809 = vsel %vm2076, %v2807, 0
  %2811 = vmatprep.subr.mxu0 0.0
  %2812 = vmatpush1.msra.mxu0 %v2082
  %2813 = vmatprep.subr.mxu0 0.0
  %2814 = vmatpush1.msra.mxu0 %v2083
  %2815 = vmatprep.subr.mxu0 0.0
  %2816 = vmatpush1.msra.mxu0 %v2084
  %2817 = vmatprep.subr.mxu0 0.0
  %2818 = vmatpush1.msra.mxu0 %v2085
  %2819 = vmatprep.subr.mxu0 0.0
  %2820 = vmatpush1.msra.mxu0 %v2086
  %2821 = vmatprep.subr.mxu0 0.0
  %2822 = vmatpush1.msra.mxu0 %v2087
  %2823 = vmatprep.subr.mxu0 0.0
  %2824 = vmatpush1.msra.mxu0 %v2088
  %2825 = vmatprep.subr.mxu0 0.0
  %2826 = vmatpush1.msra.mxu0 %v2089
  %2827 = vmatprep.subr.mxu0 0.0
  %2828 = vmatpush1.msra.mxu0 0.0
  %2829 = vmatprep.subr.mxu0 0.0
  %2830 = vmatpush1.msra.mxu0 0.0
  %2831 = vmatprep.subr.mxu0 0.0
  %2832 = vmatpush1.msra.mxu0 0.0
  %2833 = vmatprep.subr.mxu0 0.0
  %2834 = vmatpush1.msra.mxu0 0.0
  %2835 = vmatprep.subr.mxu0 0.0
  %2836 = vmatpush1.msra.mxu0 0.0
  %2837 = vmatprep.subr.mxu0 0.0
  %2838 = vmatpush1.msra.mxu0 0.0
  %2839 = vmatprep.subr.mxu0 0.0
  %2840 = vmatpush1.msra.mxu0 0.0
  %2841 = vmatprep.subr.mxu0 0.0
  %2842 = vmatpush1.msra.mxu0 0.0
  %2843 = vmatprep.subr.mxu0 0.0
  %2844 = vmatpush1.msra.mxu0 0.0
  %2845 = vmatprep.subr.mxu0 0.0
  %2846 = vmatpush1.msra.mxu0 0.0
  %2847 = vmatprep.subr.mxu0 0.0
  %2848 = vmatpush1.msra.mxu0 0.0
  %2849 = vmatprep.subr.mxu0 0.0
  %2850 = vmatpush1.msra.mxu0 0.0
  %2851 = vmatprep.subr.mxu0 0.0
  %2852 = vmatpush1.msra.mxu0 0.0
  %2853 = vmatprep.subr.mxu0 0.0
  %2854 = vmatpush1.msra.mxu0 0.0
  %2855 = vmatprep.subr.mxu0 0.0
  %2856 = vmatpush1.msra.mxu0 0.0
  %2857 = vmatprep.subr.mxu0 0.0
  %2858 = vmatpush1.msra.mxu0 0.0
  %2859 = vmatprep.subr.mxu0 0.0
  %2860 = vmatpush1.msra.mxu0 0.0
  %2861 = vmatprep.subr.mxu0 0.0
  %2862 = vmatpush1.msra.mxu0 0.0
  %2863 = vmatprep.subr.mxu0 0.0
  %2864 = vmatpush1.msra.mxu0 0.0
  %2865 = vmatprep.subr.mxu0 0.0
  %2866 = vmatpush1.msra.mxu0 0.0
  %2867 = vmatprep.subr.mxu0 0.0
  %2868 = vmatpush1.msra.mxu0 0.0
  %2869 = vmatprep.subr.mxu0 0.0
  %2870 = vmatpush1.msra.mxu0 0.0
  %2871 = vmatprep.subr.mxu0 0.0
  %2872 = vmatpush1.msra.mxu0 0.0
  %2873 = vmatprep.subr.mxu0 0.0
  %2874 = vmatpush1.msra.mxu0 0.0
  %2875 = vmatprep.mubr.f32.mxu0 0.0
  %2876 = vmatmul.mubr.f32.gmra.mrb[0].mxu0 %v2809
  %v2877 = vpop.f32.mrb[0].mxu0
  %v2878 = vadd.f32 %v2104, %v2877
  %v2879 = vpop.f32.mrb[0].mxu0
  %2880 = vdwg.mxu0
  %v2881 = vxor.u32 %v2878, 2147483648
  %v2882 = vmul.f32 %v2881, 1.442695
  %v2883 = vpow.pop %v2882
  %v2884 = vadd.f32 %v2883, 1.0
  %v2885 = vrcp.pop %v2884
  %v2886 = vmul.f32 1.0, %v2885
  %2888 = vrot.lane.b32.xlu0 %v2878, 32
  %v2889 = vpop.permute.xlu0 %2888
  %v2891 = vmul.f32 %v2886, %v2889
  %2893 = vrot.lane.b32.xlu0 %v2891, 64
  %v2894 = vpop.permute.xlu0 %2893
  %v2896 = vadd.f32 %v2878, %v2894
  %v2897 = vtanh.pop %v2896
  %v2898 = vsub.f32 1.0, %v2886
  %2900 = vrot.lane.b32.xlu0 %v2897, 96
  %v2901 = vpop.permute.xlu0 %2900
  %v2903 = vmul.f32 %v2898, %v2901
  %v2904 = vmul.f32 %v2886, %v2594
  %v2905 = vadd.f32 %v2903, %v2904
  %2907 = vrot.lane.b32.xlu0 %v2905, 96
  %v2908 = vpop.permute.xlu0 %2907
  %v2910 = vsel %vm264, %v2908, %v2697
  %v2912 = vsel %vm2076, %v2910, 0
  %2914 = vmatprep.subr.mxu0 0.0
  %2915 = vmatpush1.msra.mxu0 %v2143
  %2916 = vmatprep.subr.mxu0 0.0
  %2917 = vmatpush1.msra.mxu0 %v2144
  %2918 = vmatprep.subr.mxu0 0.0
  %2919 = vmatpush1.msra.mxu0 %v2145
  %2920 = vmatprep.subr.mxu0 0.0
  %2921 = vmatpush1.msra.mxu0 %v2146
  %2922 = vmatprep.subr.mxu0 0.0
  %2923 = vmatpush1.msra.mxu0 %v2147
  %2924 = vmatprep.subr.mxu0 0.0
  %2925 = vmatpush1.msra.mxu0 %v2148
  %2926 = vmatprep.subr.mxu0 0.0
  %2927 = vmatpush1.msra.mxu0 %v2149
  %2928 = vmatprep.subr.mxu0 0.0
  %2929 = vmatpush1.msra.mxu0 %v2150
  %2930 = vmatprep.subr.mxu0 0.0
  %2931 = vmatpush1.msra.mxu0 0.0
  %2932 = vmatprep.subr.mxu0 0.0
  %2933 = vmatpush1.msra.mxu0 0.0
  %2934 = vmatprep.subr.mxu0 0.0
  %2935 = vmatpush1.msra.mxu0 0.0
  %2936 = vmatprep.subr.mxu0 0.0
  %2937 = vmatpush1.msra.mxu0 0.0
  %2938 = vmatprep.subr.mxu0 0.0
  %2939 = vmatpush1.msra.mxu0 0.0
  %2940 = vmatprep.subr.mxu0 0.0
  %2941 = vmatpush1.msra.mxu0 0.0
  %2942 = vmatprep.subr.mxu0 0.0
  %2943 = vmatpush1.msra.mxu0 0.0
  %2944 = vmatprep.subr.mxu0 0.0
  %2945 = vmatpush1.msra.mxu0 0.0
  %2946 = vmatprep.subr.mxu0 0.0
  %2947 = vmatpush1.msra.mxu0 0.0
  %2948 = vmatprep.subr.mxu0 0.0
  %2949 = vmatpush1.msra.mxu0 0.0
  %2950 = vmatprep.subr.mxu0 0.0
  %2951 = vmatpush1.msra.mxu0 0.0
  %2952 = vmatprep.subr.mxu0 0.0
  %2953 = vmatpush1.msra.mxu0 0.0
  %2954 = vmatprep.subr.mxu0 0.0
  %2955 = vmatpush1.msra.mxu0 0.0
  %2956 = vmatprep.subr.mxu0 0.0
  %2957 = vmatpush1.msra.mxu0 0.0
  %2958 = vmatprep.subr.mxu0 0.0
  %2959 = vmatpush1.msra.mxu0 0.0
  %2960 = vmatprep.subr.mxu0 0.0
  %2961 = vmatpush1.msra.mxu0 0.0
  %2962 = vmatprep.subr.mxu0 0.0
  %2963 = vmatpush1.msra.mxu0 0.0
  %2964 = vmatprep.subr.mxu0 0.0
  %2965 = vmatpush1.msra.mxu0 0.0
  %2966 = vmatprep.subr.mxu0 0.0
  %2967 = vmatpush1.msra.mxu0 0.0
  %2968 = vmatprep.subr.mxu0 0.0
  %2969 = vmatpush1.msra.mxu0 0.0
  %2970 = vmatprep.subr.mxu0 0.0
  %2971 = vmatpush1.msra.mxu0 0.0
  %2972 = vmatprep.subr.mxu0 0.0
  %2973 = vmatpush1.msra.mxu0 0.0
  %2974 = vmatprep.subr.mxu0 0.0
  %2975 = vmatpush1.msra.mxu0 0.0
  %2976 = vmatprep.subr.mxu0 0.0
  %2977 = vmatpush1.msra.mxu0 0.0
  %2978 = vmatprep.mubr.f32.mxu0 0.0
  %2979 = vmatmul.mubr.f32.gmra.mrb[0].mxu0 %v2912
  %v2980 = vpop.f32.mrb[0].mxu0
  %v2981 = vadd.f32 %v2165, %v2980
  %v2982 = vpop.f32.mrb[0].mxu0
  %2983 = vdwg.mxu0
  %v2984 = vxor.u32 %v2981, 2147483648
  %v2985 = vmul.f32 %v2984, 1.442695
  %v2986 = vpow.pop %v2985
  %v2987 = vadd.f32 %v2986, 1.0
  %v2988 = vrcp.pop %v2987
  %v2989 = vmul.f32 1.0, %v2988
  %2991 = vrot.lane.b32.xlu0 %v2981, 32
  %v2992 = vpop.permute.xlu0 %2991
  %v2994 = vmul.f32 %v2989, %v2992
  %2996 = vrot.lane.b32.xlu0 %v2994, 64
  %v2997 = vpop.permute.xlu0 %2996
  %v2999 = vadd.f32 %v2981, %v2997
  %v3000 = vtanh.pop %v2999
  %v3001 = vsub.f32 1.0, %v2989
  %3003 = vrot.lane.b32.xlu0 %v3000, 96
  %v3004 = vpop.permute.xlu0 %3003
  %v3006 = vmul.f32 %v3001, %v3004
  %v3007 = vmul.f32 %v2989, %v2697
  %v3008 = vadd.f32 %v3006, %v3007
  %3010 = vrot.lane.b32.xlu0 %v3008, 96
  %v3011 = vpop.permute.xlu0 %3010
  %v3012 = vsel %vm264, %v3011, 0
  %3014 = vmatprep.subr.mxu0 0.0
  %3015 = vmatpush1.msra.mxu0 %v2166
  %3016 = vmatprep.subr.mxu0 0.0
  %3017 = vmatpush1.msra.mxu0 %v2167
  %3018 = vmatprep.subr.mxu0 0.0
  %3019 = vmatpush1.msra.mxu0 %v2168
  %3020 = vmatprep.subr.mxu0 0.0
  %3021 = vmatpush1.msra.mxu0 %v2169
  %3022 = vmatprep.subr.mxu0 0.0
  %3023 = vmatpush1.msra.mxu0 0.0
  %3024 = vmatprep.subr.mxu0 0.0
  %3025 = vmatpush1.msra.mxu0 0.0
  %3026 = vmatprep.subr.mxu0 0.0
  %3027 = vmatpush1.msra.mxu0 0.0
  %3028 = vmatprep.subr.mxu0 0.0
  %3029 = vmatpush1.msra.mxu0 0.0
  %3030 = vmatprep.subr.mxu0 0.0
  %3031 = vmatpush1.msra.mxu0 0.0
  %3032 = vmatprep.subr.mxu0 0.0
  %3033 = vmatpush1.msra.mxu0 0.0
  %3034 = vmatprep.subr.mxu0 0.0
  %3035 = vmatpush1.msra.mxu0 0.0
  %3036 = vmatprep.subr.mxu0 0.0
  %3037 = vmatpush1.msra.mxu0 0.0
  %3038 = vmatprep.subr.mxu0 0.0
  %3039 = vmatpush1.msra.mxu0 0.0
  %3040 = vmatprep.subr.mxu0 0.0
  %3041 = vmatpush1.msra.mxu0 0.0
  %3042 = vmatprep.subr.mxu0 0.0
  %3043 = vmatpush1.msra.mxu0 0.0
  %3044 = vmatprep.subr.mxu0 0.0
  %3045 = vmatpush1.msra.mxu0 0.0
  %3046 = vmatprep.subr.mxu0 0.0
  %3047 = vmatpush1.msra.mxu0 0.0
  %3048 = vmatprep.subr.mxu0 0.0
  %3049 = vmatpush1.msra.mxu0 0.0
  %3050 = vmatprep.subr.mxu0 0.0
  %3051 = vmatpush1.msra.mxu0 0.0
  %3052 = vmatprep.subr.mxu0 0.0
  %3053 = vmatpush1.msra.mxu0 0.0
  %3054 = vmatprep.subr.mxu0 0.0
  %3055 = vmatpush1.msra.mxu0 0.0
  %3056 = vmatprep.subr.mxu0 0.0
  %3057 = vmatpush1.msra.mxu0 0.0
  %3058 = vmatprep.subr.mxu0 0.0
  %3059 = vmatpush1.msra.mxu0 0.0
  %3060 = vmatprep.subr.mxu0 0.0
  %3061 = vmatpush1.msra.mxu0 0.0
  %3062 = vmatprep.subr.mxu0 0.0
  %3063 = vmatpush1.msra.mxu0 0.0
  %3064 = vmatprep.subr.mxu0 0.0
  %3065 = vmatpush1.msra.mxu0 0.0
  %3066 = vmatprep.subr.mxu0 0.0
  %3067 = vmatpush1.msra.mxu0 0.0
  %3068 = vmatprep.subr.mxu0 0.0
  %3069 = vmatpush1.msra.mxu0 0.0
  %3070 = vmatprep.subr.mxu0 0.0
  %3071 = vmatpush1.msra.mxu0 0.0
  %3072 = vmatprep.subr.mxu0 0.0
  %3073 = vmatpush1.msra.mxu0 0.0
  %3074 = vmatprep.subr.mxu0 0.0
  %3075 = vmatpush1.msra.mxu0 0.0
  %3076 = vmatprep.subr.mxu0 0.0
  %3077 = vmatpush1.msra.mxu0 0.0
  %3078 = vmatprep.mubr.f32.mxu0 0.0
  %3079 = vmatmul.mubr.f32.gmra.mrb[0].mxu0 %v3012
  %v3080 = vpop.f32.mrb[0].mxu0
  %v3081 = vadd.f32 %v2175, %v3080
  %v3082 = vpop.f32.mrb[0].mxu0
  %3083 = vdwg.mxu0
  %v3084 = vsel %vm2462, %v3081, -inf
  %3085 = vmax.xlane.f32.xlu0 %v3084
  %v3086 = vpop.xlane.xlu0 %3085
  %v3087 = vsub.f32 %v3081, %v3086
  %v3088 = vmul.f32 %v3087, 1.442695
  %v3089 = vpow.pop %v3088
  %v3090 = vsel %vm2462, %v3089, 0.0
  %3091 = vadd.xlane.f32.xlu0 %v3090
  %v3092 = vpop.xlane.xlu0 %3091
  %v3093 = vlog2.pop %v3092
  %v3094 = vmul.f32 %v3093, 0.6931472
  %v3095 = vsub.f32 %v3087, %v3094
  %s3096 = scalar_lea.vmem %s20, 4
  %3097 = vst.msk [vmem:[%s3096] sm:$0x3] %vm2462, %v3095
  %vm3098 = vcmp.ge.f32.partialorder %v3081, %v3086
  %v3099 = vsel %vm3098, %v2178, 32
  %v3100 = vsel %vm2462, %v3099, 2147483647
  %v3101 = vand.u32 %v3100, 65535
  %v3102 = vshra.s32 %v3100, 16
  %v3103 = vcvt.s32.f32 %v3101
  %v3104 = vcvt.s32.f32 %v3102
  %3105 = vmin.xlane.f32.xlu0 %v3104
  %v3106 = vpop.xlane.xlu0 %3105
  %vm3107 = vcmp.eq.f32.partialorder %v3104, %v3106
  %v3108 = vsel %vm3107, %v3103, inf
  %3109 = vmin.xlane.f32.xlu0 %v3108
  %v3110 = vpop.xlane.xlu0 %3109
  %v3111 = vcvt.f32.s32 %v3110
  %v3112 = vcvt.f32.s32 %v3106
  %v3113 = vshll.u32 %v3112, 16
  %v3114 = vadd.s32 %v3113, %v3111
  %vm3115 = vcmp.eq.s32.totalorder %v2178, %v3114
  %v3116 = vsel %vm3115, 1, 0
  %v3117 = vcvt.s32.f32 %v3116
  %v3118 = vsel %vm264, %v3117, %v2905
  %v3120 = vsel %vm2076, %v3118, 0
  %3122 = vmatprep.subr.mxu0 0.0
  %3123 = vmatpush1.msra.mxu0 %v2082
  %3124 = vmatprep.subr.mxu0 0.0
  %3125 = vmatpush1.msra.mxu0 %v2083
  %3126 = vmatprep.subr.mxu0 0.0
  %3127 = vmatpush1.msra.mxu0 %v2084
  %3128 = vmatprep.subr.mxu0 0.0
  %3129 = vmatpush1.msra.mxu0 %v2085
  %3130 = vmatprep.subr.mxu0 0.0
  %3131 = vmatpush1.msra.mxu0 %v2086
  %3132 = vmatprep.subr.mxu0 0.0
  %3133 = vmatpush1.msra.mxu0 %v2087
  %3134 = vmatprep.subr.mxu0 0.0
  %3135 = vmatpush1.msra.mxu0 %v2088
  %3136 = vmatprep.subr.mxu0 0.0
  %3137 = vmatpush1.msra.mxu0 %v2089
  %3138 = vmatprep.subr.mxu0 0.0
  %3139 = vmatpush1.msra.mxu0 0.0
  %3140 = vmatprep.subr.mxu0 0.0
  %3141 = vmatpush1.msra.mxu0 0.0
  %3142 = vmatprep.subr.mxu0 0.0
  %3143 = vmatpush1.msra.mxu0 0.0
  %3144 = vmatprep.subr.mxu0 0.0
  %3145 = vmatpush1.msra.mxu0 0.0
  %3146 = vmatprep.subr.mxu0 0.0
  %3147 = vmatpush1.msra.mxu0 0.0
  %3148 = vmatprep.subr.mxu0 0.0
  %3149 = vmatpush1.msra.mxu0 0.0
  %3150 = vmatprep.subr.mxu0 0.0
  %3151 = vmatpush1.msra.mxu0 0.0
  %3152 = vmatprep.subr.mxu0 0.0
  %3153 = vmatpush1.msra.mxu0 0.0
  %3154 = vmatprep.subr.mxu0 0.0
  %3155 = vmatpush1.msra.mxu0 0.0
  %3156 = vmatprep.subr.mxu0 0.0
  %3157 = vmatpush1.msra.mxu0 0.0
  %3158 = vmatprep.subr.mxu0 0.0
  %3159 = vmatpush1.msra.mxu0 0.0
  %3160 = vmatprep.subr.mxu0 0.0
  %3161 = vmatpush1.msra.mxu0 0.0
  %3162 = vmatprep.subr.mxu0 0.0
  %3163 = vmatpush1.msra.mxu0 0.0
  %3164 = vmatprep.subr.mxu0 0.0
  %3165 = vmatpush1.msra.mxu0 0.0
  %3166 = vmatprep.subr.mxu0 0.0
  %3167 = vmatpush1.msra.mxu0 0.0
  %3168 = vmatprep.subr.mxu0 0.0
  %3169 = vmatpush1.msra.mxu0 0.0
  %3170 = vmatprep.subr.mxu0 0.0
  %3171 = vmatpush1.msra.mxu0 0.0
  %3172 = vmatprep.subr.mxu0 0.0
  %3173 = vmatpush1.msra.mxu0 0.0
  %3174 = vmatprep.subr.mxu0 0.0
  %3175 = vmatpush1.msra.mxu0 0.0
  %3176 = vmatprep.subr.mxu0 0.0
  %3177 = vmatpush1.msra.mxu0 0.0
  %3178 = vmatprep.subr.mxu0 0.0
  %3179 = vmatpush1.msra.mxu0 0.0
  %3180 = vmatprep.subr.mxu0 0.0
  %3181 = vmatpush1.msra.mxu0 0.0
  %3182 = vmatprep.subr.mxu0 0.0
  %3183 = vmatpush1.msra.mxu0 0.0
  %3184 = vmatprep.subr.mxu0 0.0
  %3185 = vmatpush1.msra.mxu0 0.0
  %3186 = vmatprep.mubr.f32.mxu0 0.0
  %3187 = vmatmul.mubr.f32.gmra.mrb[0].mxu0 %v3120
  %v3188 = vpop.f32.mrb[0].mxu0
  %v3189 = vadd.f32 %v2104, %v3188
  %v3190 = vpop.f32.mrb[0].mxu0
  %3191 = vdwg.mxu0
  %v3192 = vxor.u32 %v3189, 2147483648
  %v3193 = vmul.f32 %v3192, 1.442695
  %v3194 = vpow.pop %v3193
  %v3195 = vadd.f32 %v3194, 1.0
  %v3196 = vrcp.pop %v3195
  %v3197 = vmul.f32 1.0, %v3196
  %3199 = vrot.lane.b32.xlu0 %v3189, 32
  %v3200 = vpop.permute.xlu0 %3199
  %v3202 = vmul.f32 %v3197, %v3200
  %3204 = vrot.lane.b32.xlu0 %v3202, 64
  %v3205 = vpop.permute.xlu0 %3204
  %v3207 = vadd.f32 %v3189, %v3205
  %v3208 = vtanh.pop %v3207
  %v3209 = vsub.f32 1.0, %v3197
  %3211 = vrot.lane.b32.xlu0 %v3208, 96
  %v3212 = vpop.permute.xlu0 %3211
  %v3214 = vmul.f32 %v3209, %v3212
  %v3215 = vmul.f32 %v3197, %v2905
  %v3216 = vadd.f32 %v3214, %v3215
  %3218 = vrot.lane.b32.xlu0 %v3216, 96
  %v3219 = vpop.permute.xlu0 %3218
  %v3221 = vsel %vm264, %v3219, %v3008
  %v3223 = vsel %vm2076, %v3221, 0
  %3225 = vmatprep.subr.mxu0 0.0
  %3226 = vmatpush1.msra.mxu0 %v2143
  %3227 = vmatprep.subr.mxu0 0.0
  %3228 = vmatpush1.msra.mxu0 %v2144
  %3229 = vmatprep.subr.mxu0 0.0
  %3230 = vmatpush1.msra.mxu0 %v2145
  %3231 = vmatprep.subr.mxu0 0.0
  %3232 = vmatpush1.msra.mxu0 %v2146
  %3233 = vmatprep.subr.mxu0 0.0
  %3234 = vmatpush1.msra.mxu0 %v2147
  %3235 = vmatprep.subr.mxu0 0.0
  %3236 = vmatpush1.msra.mxu0 %v2148
  %3237 = vmatprep.subr.mxu0 0.0
  %3238 = vmatpush1.msra.mxu0 %v2149
  %3239 = vmatprep.subr.mxu0 0.0
  %3240 = vmatpush1.msra.mxu0 %v2150
  %3241 = vmatprep.subr.mxu0 0.0
  %3242 = vmatpush1.msra.mxu0 0.0
  %3243 = vmatprep.subr.mxu0 0.0
  %3244 = vmatpush1.msra.mxu0 0.0
  %3245 = vmatprep.subr.mxu0 0.0
  %3246 = vmatpush1.msra.mxu0 0.0
  %3247 = vmatprep.subr.mxu0 0.0
  %3248 = vmatpush1.msra.mxu0 0.0
  %3249 = vmatprep.subr.mxu0 0.0
  %3250 = vmatpush1.msra.mxu0 0.0
  %3251 = vmatprep.subr.mxu0 0.0
  %3252 = vmatpush1.msra.mxu0 0.0
  %3253 = vmatprep.subr.mxu0 0.0
  %3254 = vmatpush1.msra.mxu0 0.0
  %3255 = vmatprep.subr.mxu0 0.0
  %3256 = vmatpush1.msra.mxu0 0.0
  %3257 = vmatprep.subr.mxu0 0.0
  %3258 = vmatpush1.msra.mxu0 0.0
  %3259 = vmatprep.subr.mxu0 0.0
  %3260 = vmatpush1.msra.mxu0 0.0
  %3261 = vmatprep.subr.mxu0 0.0
  %3262 = vmatpush1.msra.mxu0 0.0
  %3263 = vmatprep.subr.mxu0 0.0
  %3264 = vmatpush1.msra.mxu0 0.0
  %3265 = vmatprep.subr.mxu0 0.0
  %3266 = vmatpush1.msra.mxu0 0.0
  %3267 = vmatprep.subr.mxu0 0.0
  %3268 = vmatpush1.msra.mxu0 0.0
  %3269 = vmatprep.subr.mxu0 0.0
  %3270 = vmatpush1.msra.mxu0 0.0
  %3271 = vmatprep.subr.mxu0 0.0
  %3272 = vmatpush1.msra.mxu0 0.0
  %3273 = vmatprep.subr.mxu0 0.0
  %3274 = vmatpush1.msra.mxu0 0.0
  %3275 = vmatprep.subr.mxu0 0.0
  %3276 = vmatpush1.msra.mxu0 0.0
  %3277 = vmatprep.subr.mxu0 0.0
  %3278 = vmatpush1.msra.mxu0 0.0
  %3279 = vmatprep.subr.mxu0 0.0
  %3280 = vmatpush1.msra.mxu0 0.0
  %3281 = vmatprep.subr.mxu0 0.0
  %3282 = vmatpush1.msra.mxu0 0.0
  %3283 = vmatprep.subr.mxu0 0.0
  %3284 = vmatpush1.msra.mxu0 0.0
  %3285 = vmatprep.subr.mxu0 0.0
  %3286 = vmatpush1.msra.mxu0 0.0
  %3287 = vmatprep.subr.mxu0 0.0
  %3288 = vmatpush1.msra.mxu0 0.0
  %3289 = vmatprep.mubr.f32.mxu0 0.0
  %3290 = vmatmul.mubr.f32.gmra.mrb[0].mxu0 %v3223
  %v3291 = vpop.f32.mrb[0].mxu0
  %v3292 = vadd.f32 %v2165, %v3291
  %v3293 = vpop.f32.mrb[0].mxu0
  %3294 = vdwg.mxu0
  %v3295 = vxor.u32 %v3292, 2147483648
  %v3296 = vmul.f32 %v3295, 1.442695
  %v3297 = vpow.pop %v3296
  %v3298 = vadd.f32 %v3297, 1.0
  %v3299 = vrcp.pop %v3298
  %v3300 = vmul.f32 1.0, %v3299
  %3302 = vrot.lane.b32.xlu0 %v3292, 32
  %v3303 = vpop.permute.xlu0 %3302
  %v3305 = vmul.f32 %v3300, %v3303
  %3307 = vrot.lane.b32.xlu0 %v3305, 64
  %v3308 = vpop.permute.xlu0 %3307
  %v3310 = vadd.f32 %v3292, %v3308
  %v3311 = vtanh.pop %v3310
  %v3312 = vsub.f32 1.0, %v3300
  %3314 = vrot.lane.b32.xlu0 %v3311, 96
  %v3315 = vpop.permute.xlu0 %3314
  %v3317 = vmul.f32 %v3312, %v3315
  %v3318 = vmul.f32 %v3300, %v3008
  %v3319 = vadd.f32 %v3317, %v3318
  %3321 = vrot.lane.b32.xlu0 %v3319, 96
  %v3322 = vpop.permute.xlu0 %3321
  %v3323 = vsel %vm264, %v3322, 0
  %3325 = vmatprep.subr.mxu0 0.0
  %3326 = vmatpush1.msra.mxu0 %v2166
  %3327 = vmatprep.subr.mxu0 0.0
  %3328 = vmatpush1.msra.mxu0 %v2167
  %3329 = vmatprep.subr.mxu0 0.0
  %3330 = vmatpush1.msra.mxu0 %v2168
  %3331 = vmatprep.subr.mxu0 0.0
  %3332 = vmatpush1.msra.mxu0 %v2169
  %3333 = vmatprep.subr.mxu0 0.0
  %3334 = vmatpush1.msra.mxu0 0.0
  %3335 = vmatprep.subr.mxu0 0.0
  %3336 = vmatpush1.msra.mxu0 0.0
  %3337 = vmatprep.subr.mxu0 0.0
  %3338 = vmatpush1.msra.mxu0 0.0
  %3339 = vmatprep.subr.mxu0 0.0
  %3340 = vmatpush1.msra.mxu0 0.0
  %3341 = vmatprep.subr.mxu0 0.0
  %3342 = vmatpush1.msra.mxu0 0.0
  %3343 = vmatprep.subr.mxu0 0.0
  %3344 = vmatpush1.msra.mxu0 0.0
  %3345 = vmatprep.subr.mxu0 0.0
  %3346 = vmatpush1.msra.mxu0 0.0
  %3347 = vmatprep.subr.mxu0 0.0
  %3348 = vmatpush1.msra.mxu0 0.0
  %3349 = vmatprep.subr.mxu0 0.0
  %3350 = vmatpush1.msra.mxu0 0.0
  %3351 = vmatprep.subr.mxu0 0.0
  %3352 = vmatpush1.msra.mxu0 0.0
  %3353 = vmatprep.subr.mxu0 0.0
  %3354 = vmatpush1.msra.mxu0 0.0
  %3355 = vmatprep.subr.mxu0 0.0
  %3356 = vmatpush1.msra.mxu0 0.0
  %3357 = vmatprep.subr.mxu0 0.0
  %3358 = vmatpush1.msra.mxu0 0.0
  %3359 = vmatprep.subr.mxu0 0.0
  %3360 = vmatpush1.msra.mxu0 0.0
  %3361 = vmatprep.subr.mxu0 0.0
  %3362 = vmatpush1.msra.mxu0 0.0
  %3363 = vmatprep.subr.mxu0 0.0
  %3364 = vmatpush1.msra.mxu0 0.0
  %3365 = vmatprep.subr.mxu0 0.0
  %3366 = vmatpush1.msra.mxu0 0.0
  %3367 = vmatprep.subr.mxu0 0.0
  %3368 = vmatpush1.msra.mxu0 0.0
  %3369 = vmatprep.subr.mxu0 0.0
  %3370 = vmatpush1.msra.mxu0 0.0
  %3371 = vmatprep.subr.mxu0 0.0
  %3372 = vmatpush1.msra.mxu0 0.0
  %3373 = vmatprep.subr.mxu0 0.0
  %3374 = vmatpush1.msra.mxu0 0.0
  %3375 = vmatprep.subr.mxu0 0.0
  %3376 = vmatpush1.msra.mxu0 0.0
  %3377 = vmatprep.subr.mxu0 0.0
  %3378 = vmatpush1.msra.mxu0 0.0
  %3379 = vmatprep.subr.mxu0 0.0
  %3380 = vmatpush1.msra.mxu0 0.0
  %3381 = vmatprep.subr.mxu0 0.0
  %3382 = vmatpush1.msra.mxu0 0.0
  %3383 = vmatprep.subr.mxu0 0.0
  %3384 = vmatpush1.msra.mxu0 0.0
  %3385 = vmatprep.subr.mxu0 0.0
  %3386 = vmatpush1.msra.mxu0 0.0
  %3387 = vmatprep.subr.mxu0 0.0
  %3388 = vmatpush1.msra.mxu0 0.0
  %3389 = vmatprep.mubr.f32.mxu0 0.0
  %3390 = vmatmul.mubr.f32.gmra.mrb[0].mxu0 %v3323
  %v3391 = vpop.f32.mrb[0].mxu0
  %v3392 = vadd.f32 %v2175, %v3391
  %v3393 = vpop.f32.mrb[0].mxu0
  %3394 = vdwg.mxu0
  %v3395 = vsel %vm2462, %v3392, -inf
  %3396 = vmax.xlane.f32.xlu0 %v3395
  %v3397 = vpop.xlane.xlu0 %3396
  %v3398 = vsub.f32 %v3392, %v3397
  %v3399 = vmul.f32 %v3398, 1.442695
  %v3400 = vpow.pop %v3399
  %v3401 = vsel %vm2462, %v3400, 0.0
  %3402 = vadd.xlane.f32.xlu0 %v3401
  %v3403 = vpop.xlane.xlu0 %3402
  %v3404 = vlog2.pop %v3403
  %v3405 = vmul.f32 %v3404, 0.6931472
  %v3406 = vsub.f32 %v3398, %v3405
  %s3407 = scalar_lea.vmem %s20, 6
  %3408 = vst.msk [vmem:[%s3407] sm:$0x3] %vm2462, %v3406
  %vm3409 = vcmp.ge.f32.partialorder %v3392, %v3397
  %v3410 = vsel %vm3409, %v2178, 32
  %v3411 = vsel %vm2462, %v3410, 2147483647
  %v3412 = vand.u32 %v3411, 65535
  %v3413 = vshra.s32 %v3411, 16
  %v3414 = vcvt.s32.f32 %v3412
  %v3415 = vcvt.s32.f32 %v3413
  %3416 = vmin.xlane.f32.xlu0 %v3415
  %v3417 = vpop.xlane.xlu0 %3416
  %vm3418 = vcmp.eq.f32.partialorder %v3415, %v3417
  %v3419 = vsel %vm3418, %v3414, inf
  %3420 = vmin.xlane.f32.xlu0 %v3419
  %v3421 = vpop.xlane.xlu0 %3420
  %v3422 = vcvt.f32.s32 %v3421
  %v3423 = vcvt.f32.s32 %v3417
  %v3424 = vshll.u32 %v3423, 16
  %v3425 = vadd.s32 %v3424, %v3422
  %vm3426 = vcmp.eq.s32.totalorder %v2178, %v3425
  %v3427 = vsel %vm3426, 1, 0
  %v3428 = vcvt.s32.f32 %v3427
  %v3429 = vsel %vm264, %v3428, %v3216
  %v3431 = vsel %vm2076, %v3429, 0
  %3433 = vmatprep.subr.mxu0 0.0
  %3434 = vmatpush1.msra.mxu0 %v2082
  %3435 = vmatprep.subr.mxu0 0.0
  %3436 = vmatpush1.msra.mxu0 %v2083
  %3437 = vmatprep.subr.mxu0 0.0
  %3438 = vmatpush1.msra.mxu0 %v2084
  %3439 = vmatprep.subr.mxu0 0.0
  %3440 = vmatpush1.msra.mxu0 %v2085
  %3441 = vmatprep.subr.mxu0 0.0
  %3442 = vmatpush1.msra.mxu0 %v2086
  %3443 = vmatprep.subr.mxu0 0.0
  %3444 = vmatpush1.msra.mxu0 %v2087
  %3445 = vmatprep.subr.mxu0 0.0
  %3446 = vmatpush1.msra.mxu0 %v2088
  %3447 = vmatprep.subr.mxu0 0.0
  %3448 = vmatpush1.msra.mxu0 %v2089
  %3449 = vmatprep.subr.mxu0 0.0
  %3450 = vmatpush1.msra.mxu0 0.0
  %3451 = vmatprep.subr.mxu0 0.0
  %3452 = vmatpush1.msra.mxu0 0.0
  %3453 = vmatprep.subr.mxu0 0.0
  %3454 = vmatpush1.msra.mxu0 0.0
  %3455 = vmatprep.subr.mxu0 0.0
  %3456 = vmatpush1.msra.mxu0 0.0
  %3457 = vmatprep.subr.mxu0 0.0
  %3458 = vmatpush1.msra.mxu0 0.0
  %3459 = vmatprep.subr.mxu0 0.0
  %3460 = vmatpush1.msra.mxu0 0.0
  %3461 = vmatprep.subr.mxu0 0.0
  %3462 = vmatpush1.msra.mxu0 0.0
  %3463 = vmatprep.subr.mxu0 0.0
  %3464 = vmatpush1.msra.mxu0 0.0
  %3465 = vmatprep.subr.mxu0 0.0
  %3466 = vmatpush1.msra.mxu0 0.0
  %3467 = vmatprep.subr.mxu0 0.0
  %3468 = vmatpush1.msra.mxu0 0.0
  %3469 = vmatprep.subr.mxu0 0.0
  %3470 = vmatpush1.msra.mxu0 0.0
  %3471 = vmatprep.subr.mxu0 0.0
  %3472 = vmatpush1.msra.mxu0 0.0
  %3473 = vmatprep.subr.mxu0 0.0
  %3474 = vmatpush1.msra.mxu0 0.0
  %3475 = vmatprep.subr.mxu0 0.0
  %3476 = vmatpush1.msra.mxu0 0.0
  %3477 = vmatprep.subr.mxu0 0.0
  %3478 = vmatpush1.msra.mxu0 0.0
  %3479 = vmatprep.subr.mxu0 0.0
  %3480 = vmatpush1.msra.mxu0 0.0
  %3481 = vmatprep.subr.mxu0 0.0
  %3482 = vmatpush1.msra.mxu0 0.0
  %3483 = vmatprep.subr.mxu0 0.0
  %3484 = vmatpush1.msra.mxu0 0.0
  %3485 = vmatprep.subr.mxu0 0.0
  %3486 = vmatpush1.msra.mxu0 0.0
  %3487 = vmatprep.subr.mxu0 0.0
  %3488 = vmatpush1.msra.mxu0 0.0
  %3489 = vmatprep.subr.mxu0 0.0
  %3490 = vmatpush1.msra.mxu0 0.0
  %3491 = vmatprep.subr.mxu0 0.0
  %3492 = vmatpush1.msra.mxu0 0.0
  %3493 = vmatprep.subr.mxu0 0.0
  %3494 = vmatpush1.msra.mxu0 0.0
  %3495 = vmatprep.subr.mxu0 0.0
  %3496 = vmatpush1.msra.mxu0 0.0
  %3497 = vmatprep.mubr.f32.mxu0 0.0
  %3498 = vmatmul.mubr.f32.gmra.mrb[0].mxu0 %v3431
  %v3499 = vpop.f32.mrb[0].mxu0
  %v3500 = vadd.f32 %v2104, %v3499
  %v3501 = vpop.f32.mrb[0].mxu0
  %3502 = vdwg.mxu0
  %v3503 = vxor.u32 %v3500, 2147483648
  %v3504 = vmul.f32 %v3503, 1.442695
  %v3505 = vpow.pop %v3504
  %v3506 = vadd.f32 %v3505, 1.0
  %v3507 = vrcp.pop %v3506
  %v3508 = vmul.f32 1.0, %v3507
  %3510 = vrot.lane.b32.xlu0 %v3500, 32
  %v3511 = vpop.permute.xlu0 %3510
  %v3513 = vmul.f32 %v3508, %v3511
  %3515 = vrot.lane.b32.xlu0 %v3513, 64
  %v3516 = vpop.permute.xlu0 %3515
  %v3518 = vadd.f32 %v3500, %v3516
  %v3519 = vtanh.pop %v3518
  %v3520 = vsub.f32 1.0, %v3508
  %3522 = vrot.lane.b32.xlu0 %v3519, 96
  %v3523 = vpop.permute.xlu0 %3522
  %v3525 = vmul.f32 %v3520, %v3523
  %v3526 = vmul.f32 %v3508, %v3216
  %v3527 = vadd.f32 %v3525, %v3526
  %3529 = vrot.lane.b32.xlu0 %v3527, 96
  %v3530 = vpop.permute.xlu0 %3529
  %v3532 = vsel %vm264, %v3530, %v3319
  %v3534 = vsel %vm2076, %v3532, 0
  %3536 = vmatprep.subr.mxu0 0.0
  %3537 = vmatpush1.msra.mxu0 %v2143
  %3538 = vmatprep.subr.mxu0 0.0
  %3539 = vmatpush1.msra.mxu0 %v2144
  %3540 = vmatprep.subr.mxu0 0.0
  %3541 = vmatpush1.msra.mxu0 %v2145
  %3542 = vmatprep.subr.mxu0 0.0
  %3543 = vmatpush1.msra.mxu0 %v2146
  %3544 = vmatprep.subr.mxu0 0.0
  %3545 = vmatpush1.msra.mxu0 %v2147
  %3546 = vmatprep.subr.mxu0 0.0
  %3547 = vmatpush1.msra.mxu0 %v2148
  %3548 = vmatprep.subr.mxu0 0.0
  %3549 = vmatpush1.msra.mxu0 %v2149
  %3550 = vmatprep.subr.mxu0 0.0
  %3551 = vmatpush1.msra.mxu0 %v2150
  %3552 = vmatprep.subr.mxu0 0.0
  %3553 = vmatpush1.msra.mxu0 0.0
  %3554 = vmatprep.subr.mxu0 0.0
  %3555 = vmatpush1.msra.mxu0 0.0
  %3556 = vmatprep.subr.mxu0 0.0
  %3557 = vmatpush1.msra.mxu0 0.0
  %3558 = vmatprep.subr.mxu0 0.0
  %3559 = vmatpush1.msra.mxu0 0.0
  %3560 = vmatprep.subr.mxu0 0.0
  %3561 = vmatpush1.msra.mxu0 0.0
  %3562 = vmatprep.subr.mxu0 0.0
  %3563 = vmatpush1.msra.mxu0 0.0
  %3564 = vmatprep.subr.mxu0 0.0
  %3565 = vmatpush1.msra.mxu0 0.0
  %3566 = vmatprep.subr.mxu0 0.0
  %3567 = vmatpush1.msra.mxu0 0.0
  %3568 = vmatprep.subr.mxu0 0.0
  %3569 = vmatpush1.msra.mxu0 0.0
  %3570 = vmatprep.subr.mxu0 0.0
  %3571 = vmatpush1.msra.mxu0 0.0
  %3572 = vmatprep.subr.mxu0 0.0
  %3573 = vmatpush1.msra.mxu0 0.0
  %3574 = vmatprep.subr.mxu0 0.0
  %3575 = vmatpush1.msra.mxu0 0.0
  %3576 = vmatprep.subr.mxu0 0.0
  %3577 = vmatpush1.msra.mxu0 0.0
  %3578 = vmatprep.subr.mxu0 0.0
  %3579 = vmatpush1.msra.mxu0 0.0
  %3580 = vmatprep.subr.mxu0 0.0
  %3581 = vmatpush1.msra.mxu0 0.0
  %3582 = vmatprep.subr.mxu0 0.0
  %3583 = vmatpush1.msra.mxu0 0.0
  %3584 = vmatprep.subr.mxu0 0.0
  %3585 = vmatpush1.msra.mxu0 0.0
  %3586 = vmatprep.subr.mxu0 0.0
  %3587 = vmatpush1.msra.mxu0 0.0
  %3588 = vmatprep.subr.mxu0 0.0
  %3589 = vmatpush1.msra.mxu0 0.0
  %3590 = vmatprep.subr.mxu0 0.0
  %3591 = vmatpush1.msra.mxu0 0.0
  %3592 = vmatprep.subr.mxu0 0.0
  %3593 = vmatpush1.msra.mxu0 0.0
  %3594 = vmatprep.subr.mxu0 0.0
  %3595 = vmatpush1.msra.mxu0 0.0
  %3596 = vmatprep.subr.mxu0 0.0
  %3597 = vmatpush1.msra.mxu0 0.0
  %3598 = vmatprep.subr.mxu0 0.0
  %3599 = vmatpush1.msra.mxu0 0.0
  %3600 = vmatprep.mubr.f32.mxu0 0.0
  %3601 = vmatmul.mubr.f32.gmra.mrb[0].mxu0 %v3534
  %v3602 = vpop.f32.mrb[0].mxu0
  %v3603 = vadd.f32 %v2165, %v3602
  %v3604 = vpop.f32.mrb[0].mxu0
  %3605 = vdwg.mxu0
  %v3606 = vxor.u32 %v3603, 2147483648
  %v3607 = vmul.f32 %v3606, 1.442695
  %v3608 = vpow.pop %v3607
  %v3609 = vadd.f32 %v3608, 1.0
  %v3610 = vrcp.pop %v3609
  %v3611 = vmul.f32 1.0, %v3610
  %3613 = vrot.lane.b32.xlu0 %v3603, 32
  %v3614 = vpop.permute.xlu0 %3613
  %v3616 = vmul.f32 %v3611, %v3614
  %3618 = vrot.lane.b32.xlu0 %v3616, 64
  %v3619 = vpop.permute.xlu0 %3618
  %v3621 = vadd.f32 %v3603, %v3619
  %v3622 = vtanh.pop %v3621
  %v3623 = vsub.f32 1.0, %v3611
  %3625 = vrot.lane.b32.xlu0 %v3622, 96
  %v3626 = vpop.permute.xlu0 %3625
  %v3628 = vmul.f32 %v3623, %v3626
  %v3629 = vmul.f32 %v3611, %v3319
  %v3630 = vadd.f32 %v3628, %v3629
  %3632 = vrot.lane.b32.xlu0 %v3630, 96
  %v3633 = vpop.permute.xlu0 %3632
  %v3634 = vsel %vm264, %v3633, 0
  %3636 = vmatprep.subr.mxu0 0.0
  %3637 = vmatpush1.msra.mxu0 %v2166
  %3638 = vmatprep.subr.mxu0 0.0
  %3639 = vmatpush1.msra.mxu0 %v2167
  %3640 = vmatprep.subr.mxu0 0.0
  %3641 = vmatpush1.msra.mxu0 %v2168
  %3642 = vmatprep.subr.mxu0 0.0
  %3643 = vmatpush1.msra.mxu0 %v2169
  %3644 = vmatprep.subr.mxu0 0.0
  %3645 = vmatpush1.msra.mxu0 0.0
  %3646 = vmatprep.subr.mxu0 0.0
  %3647 = vmatpush1.msra.mxu0 0.0
  %3648 = vmatprep.subr.mxu0 0.0
  %3649 = vmatpush1.msra.mxu0 0.0
  %3650 = vmatprep.subr.mxu0 0.0
  %3651 = vmatpush1.msra.mxu0 0.0
  %3652 = vmatprep.subr.mxu0 0.0
  %3653 = vmatpush1.msra.mxu0 0.0
  %3654 = vmatprep.subr.mxu0 0.0
  %3655 = vmatpush1.msra.mxu0 0.0
  %3656 = vmatprep.subr.mxu0 0.0
  %3657 = vmatpush1.msra.mxu0 0.0
  %3658 = vmatprep.subr.mxu0 0.0
  %3659 = vmatpush1.msra.mxu0 0.0
  %3660 = vmatprep.subr.mxu0 0.0
  %3661 = vmatpush1.msra.mxu0 0.0
  %3662 = vmatprep.subr.mxu0 0.0
  %3663 = vmatpush1.msra.mxu0 0.0
  %3664 = vmatprep.subr.mxu0 0.0
  %3665 = vmatpush1.msra.mxu0 0.0
  %3666 = vmatprep.subr.mxu0 0.0
  %3667 = vmatpush1.msra.mxu0 0.0
  %3668 = vmatprep.subr.mxu0 0.0
  %3669 = vmatpush1.msra.mxu0 0.0
  %3670 = vmatprep.subr.mxu0 0.0
  %3671 = vmatpush1.msra.mxu0 0.0
  %3672 = vmatprep.subr.mxu0 0.0
  %3673 = vmatpush1.msra.mxu0 0.0
  %3674 = vmatprep.subr.mxu0 0.0
  %3675 = vmatpush1.msra.mxu0 0.0
  %3676 = vmatprep.subr.mxu0 0.0
  %3677 = vmatpush1.msra.mxu0 0.0
  %3678 = vmatprep.subr.mxu0 0.0
  %3679 = vmatpush1.msra.mxu0 0.0
  %3680 = vmatprep.subr.mxu0 0.0
  %3681 = vmatpush1.msra.mxu0 0.0
  %3682 = vmatprep.subr.mxu0 0.0
  %3683 = vmatpush1.msra.mxu0 0.0
  %3684 = vmatprep.subr.mxu0 0.0
  %3685 = vmatpush1.msra.mxu0 0.0
  %3686 = vmatprep.subr.mxu0 0.0
  %3687 = vmatpush1.msra.mxu0 0.0
  %3688 = vmatprep.subr.mxu0 0.0
  %3689 = vmatpush1.msra.mxu0 0.0
  %3690 = vmatprep.subr.mxu0 0.0
  %3691 = vmatpush1.msra.mxu0 0.0
  %3692 = vmatprep.subr.mxu0 0.0
  %3693 = vmatpush1.msra.mxu0 0.0
  %3694 = vmatprep.subr.mxu0 0.0
  %3695 = vmatpush1.msra.mxu0 0.0
  %3696 = vmatprep.subr.mxu0 0.0
  %3697 = vmatpush1.msra.mxu0 0.0
  %3698 = vmatprep.subr.mxu0 0.0
  %3699 = vmatpush1.msra.mxu0 0.0
  %3700 = vmatprep.mubr.f32.mxu0 0.0
  %3701 = vmatmul.mubr.f32.gmra.mrb[0].mxu0 %v3634
  %v3702 = vpop.f32.mrb[0].mxu0
  %v3703 = vadd.f32 %v2175, %v3702
  %v3704 = vpop.f32.mrb[0].mxu0
  %3705 = vdwg.mxu0
  %v3706 = vsel %vm2462, %v3703, -inf
  %3707 = vmax.xlane.f32.xlu0 %v3706
  %v3708 = vpop.xlane.xlu0 %3707
  %v3709 = vsub.f32 %v3703, %v3708
  %v3710 = vmul.f32 %v3709, 1.442695
  %v3711 = vpow.pop %v3710
  %v3712 = vsel %vm2462, %v3711, 0.0
  %3713 = vadd.xlane.f32.xlu0 %v3712
  %v3714 = vpop.xlane.xlu0 %3713
  %v3715 = vlog2.pop %v3714
  %v3716 = vmul.f32 %v3715, 0.6931472
  %v3717 = vsub.f32 %v3709, %v3716
  %s3718 = scalar_lea.vmem %s20, 8
  %3719 = vst.msk [vmem:[%s3718] sm:$0x3] %vm2462, %v3717
  %vm3720 = vcmp.ge.f32.partialorder %v3703, %v3708
  %v3721 = vsel %vm3720, %v2178, 32
  %v3722 = vsel %vm2462, %v3721, 2147483647
  %v3723 = vand.u32 %v3722, 65535
  %v3724 = vshra.s32 %v3722, 16
  %v3725 = vcvt.s32.f32 %v3723
  %v3726 = vcvt.s32.f32 %v3724
  %3727 = vmin.xlane.f32.xlu0 %v3726
  %v3728 = vpop.xlane.xlu0 %3727
  %vm3729 = vcmp.eq.f32.partialorder %v3726, %v3728
  %v3730 = vsel %vm3729, %v3725, inf
  %3731 = vmin.xlane.f32.xlu0 %v3730
  %v3732 = vpop.xlane.xlu0 %3731
  %v3733 = vcvt.f32.s32 %v3732
  %v3734 = vcvt.f32.s32 %v3728
  %v3735 = vshll.u32 %v3734, 16
  %v3736 = vadd.s32 %v3735, %v3733
  %vm3737 = vcmp.eq.s32.totalorder %v2178, %v3736
  %v3738 = vsel %vm3737, 1, 0
  %v3739 = vcvt.s32.f32 %v3738
  %v3740 = vsel %vm264, %v3739, %v3527
  %v3742 = vsel %vm2076, %v3740, 0
  %3744 = vmatprep.subr.mxu0 0.0
  %3745 = vmatpush1.msra.mxu0 %v2082
  %3746 = vmatprep.subr.mxu0 0.0
  %3747 = vmatpush1.msra.mxu0 %v2083
  %3748 = vmatprep.subr.mxu0 0.0
  %3749 = vmatpush1.msra.mxu0 %v2084
  %3750 = vmatprep.subr.mxu0 0.0
  %3751 = vmatpush1.msra.mxu0 %v2085
  %3752 = vmatprep.subr.mxu0 0.0
  %3753 = vmatpush1.msra.mxu0 %v2086
  %3754 = vmatprep.subr.mxu0 0.0
  %3755 = vmatpush1.msra.mxu0 %v2087
  %3756 = vmatprep.subr.mxu0 0.0
  %3757 = vmatpush1.msra.mxu0 %v2088
  %3758 = vmatprep.subr.mxu0 0.0
  %3759 = vmatpush1.msra.mxu0 %v2089
  %3760 = vmatprep.subr.mxu0 0.0
  %3761 = vmatpush1.msra.mxu0 0.0
  %3762 = vmatprep.subr.mxu0 0.0
  %3763 = vmatpush1.msra.mxu0 0.0
  %3764 = vmatprep.subr.mxu0 0.0
  %3765 = vmatpush1.msra.mxu0 0.0
  %3766 = vmatprep.subr.mxu0 0.0
  %3767 = vmatpush1.msra.mxu0 0.0
  %3768 = vmatprep.subr.mxu0 0.0
  %3769 = vmatpush1.msra.mxu0 0.0
  %3770 = vmatprep.subr.mxu0 0.0
  %3771 = vmatpush1.msra.mxu0 0.0
  %3772 = vmatprep.subr.mxu0 0.0
  %3773 = vmatpush1.msra.mxu0 0.0
  %3774 = vmatprep.subr.mxu0 0.0
  %3775 = vmatpush1.msra.mxu0 0.0
  %3776 = vmatprep.subr.mxu0 0.0
  %3777 = vmatpush1.msra.mxu0 0.0
  %3778 = vmatprep.subr.mxu0 0.0
  %3779 = vmatpush1.msra.mxu0 0.0
  %3780 = vmatprep.subr.mxu0 0.0
  %3781 = vmatpush1.msra.mxu0 0.0
  %3782 = vmatprep.subr.mxu0 0.0
  %3783 = vmatpush1.msra.mxu0 0.0
  %3784 = vmatprep.subr.mxu0 0.0
  %3785 = vmatpush1.msra.mxu0 0.0
  %3786 = vmatprep.subr.mxu0 0.0
  %3787 = vmatpush1.msra.mxu0 0.0
  %3788 = vmatprep.subr.mxu0 0.0
  %3789 = vmatpush1.msra.mxu0 0.0
  %3790 = vmatprep.subr.mxu0 0.0
  %3791 = vmatpush1.msra.mxu0 0.0
  %3792 = vmatprep.subr.mxu0 0.0
  %3793 = vmatpush1.msra.mxu0 0.0
  %3794 = vmatprep.subr.mxu0 0.0
  %3795 = vmatpush1.msra.mxu0 0.0
  %3796 = vmatprep.subr.mxu0 0.0
  %3797 = vmatpush1.msra.mxu0 0.0
  %3798 = vmatprep.subr.mxu0 0.0
  %3799 = vmatpush1.msra.mxu0 0.0
  %3800 = vmatprep.subr.mxu0 0.0
  %3801 = vmatpush1.msra.mxu0 0.0
  %3802 = vmatprep.subr.mxu0 0.0
  %3803 = vmatpush1.msra.mxu0 0.0
  %3804 = vmatprep.subr.mxu0 0.0
  %3805 = vmatpush1.msra.mxu0 0.0
  %3806 = vmatprep.subr.mxu0 0.0
  %3807 = vmatpush1.msra.mxu0 0.0
  %3808 = vmatprep.mubr.f32.mxu0 0.0
  %3809 = vmatmul.mubr.f32.gmra.mrb[0].mxu0 %v3742
  %v3810 = vpop.f32.mrb[0].mxu0
  %v3811 = vadd.f32 %v2104, %v3810
  %v3812 = vpop.f32.mrb[0].mxu0
  %3813 = vdwg.mxu0
  %v3814 = vxor.u32 %v3811, 2147483648
  %v3815 = vmul.f32 %v3814, 1.442695
  %v3816 = vpow.pop %v3815
  %v3817 = vadd.f32 %v3816, 1.0
  %v3818 = vrcp.pop %v3817
  %v3819 = vmul.f32 1.0, %v3818
  %3821 = vrot.lane.b32.xlu0 %v3811, 32
  %v3822 = vpop.permute.xlu0 %3821
  %v3824 = vmul.f32 %v3819, %v3822
  %3826 = vrot.lane.b32.xlu0 %v3824, 64
  %v3827 = vpop.permute.xlu0 %3826
  %v3829 = vadd.f32 %v3811, %v3827
  %v3830 = vtanh.pop %v3829
  %v3831 = vsub.f32 1.0, %v3819
  %3833 = vrot.lane.b32.xlu0 %v3830, 96
  %v3834 = vpop.permute.xlu0 %3833
  %v3836 = vmul.f32 %v3831, %v3834
  %v3837 = vmul.f32 %v3819, %v3527
  %v3838 = vadd.f32 %v3836, %v3837
  %3840 = vrot.lane.b32.xlu0 %v3838, 96
  %v3841 = vpop.permute.xlu0 %3840
  %v3843 = vsel %vm264, %v3841, %v3630
  %v3845 = vsel %vm2076, %v3843, 0
  %3847 = vmatprep.subr.mxu0 0.0
  %3848 = vmatpush1.msra.mxu0 %v2143
  %3849 = vmatprep.subr.mxu0 0.0
  %3850 = vmatpush1.msra.mxu0 %v2144
  %3851 = vmatprep.subr.mxu0 0.0
  %3852 = vmatpush1.msra.mxu0 %v2145
  %3853 = vmatprep.subr.mxu0 0.0
  %3854 = vmatpush1.msra.mxu0 %v2146
  %3855 = vmatprep.subr.mxu0 0.0
  %3856 = vmatpush1.msra.mxu0 %v2147
  %3857 = vmatprep.subr.mxu0 0.0
  %3858 = vmatpush1.msra.mxu0 %v2148
  %3859 = vmatprep.subr.mxu0 0.0
  %3860 = vmatpush1.msra.mxu0 %v2149
  %3861 = vmatprep.subr.mxu0 0.0
  %3862 = vmatpush1.msra.mxu0 %v2150
  %3863 = vmatprep.subr.mxu0 0.0
  %3864 = vmatpush1.msra.mxu0 0.0
  %3865 = vmatprep.subr.mxu0 0.0
  %3866 = vmatpush1.msra.mxu0 0.0
  %3867 = vmatprep.subr.mxu0 0.0
  %3868 = vmatpush1.msra.mxu0 0.0
  %3869 = vmatprep.subr.mxu0 0.0
  %3870 = vmatpush1.msra.mxu0 0.0
  %3871 = vmatprep.subr.mxu0 0.0
  %3872 = vmatpush1.msra.mxu0 0.0
  %3873 = vmatprep.subr.mxu0 0.0
  %3874 = vmatpush1.msra.mxu0 0.0
  %3875 = vmatprep.subr.mxu0 0.0
  %3876 = vmatpush1.msra.mxu0 0.0
  %3877 = vmatprep.subr.mxu0 0.0
  %3878 = vmatpush1.msra.mxu0 0.0
  %3879 = vmatprep.subr.mxu0 0.0
  %3880 = vmatpush1.msra.mxu0 0.0
  %3881 = vmatprep.subr.mxu0 0.0
  %3882 = vmatpush1.msra.mxu0 0.0
  %3883 = vmatprep.subr.mxu0 0.0
  %3884 = vmatpush1.msra.mxu0 0.0
  %3885 = vmatprep.subr.mxu0 0.0
  %3886 = vmatpush1.msra.mxu0 0.0
  %3887 = vmatprep.subr.mxu0 0.0
  %3888 = vmatpush1.msra.mxu0 0.0
  %3889 = vmatprep.subr.mxu0 0.0
  %3890 = vmatpush1.msra.mxu0 0.0
  %3891 = vmatprep.subr.mxu0 0.0
  %3892 = vmatpush1.msra.mxu0 0.0
  %3893 = vmatprep.subr.mxu0 0.0
  %3894 = vmatpush1.msra.mxu0 0.0
  %3895 = vmatprep.subr.mxu0 0.0
  %3896 = vmatpush1.msra.mxu0 0.0
  %3897 = vmatprep.subr.mxu0 0.0
  %3898 = vmatpush1.msra.mxu0 0.0
  %3899 = vmatprep.subr.mxu0 0.0
  %3900 = vmatpush1.msra.mxu0 0.0
  %3901 = vmatprep.subr.mxu0 0.0
  %3902 = vmatpush1.msra.mxu0 0.0
  %3903 = vmatprep.subr.mxu0 0.0
  %3904 = vmatpush1.msra.mxu0 0.0
  %3905 = vmatprep.subr.mxu0 0.0
  %3906 = vmatpush1.msra.mxu0 0.0
  %3907 = vmatprep.subr.mxu0 0.0
  %3908 = vmatpush1.msra.mxu0 0.0
  %3909 = vmatprep.subr.mxu0 0.0
  %3910 = vmatpush1.msra.mxu0 0.0
  %3911 = vmatprep.mubr.f32.mxu0 0.0
  %3912 = vmatmul.mubr.f32.gmra.mrb[0].mxu0 %v3845
  %v3913 = vpop.f32.mrb[0].mxu0
  %v3914 = vadd.f32 %v2165, %v3913
  %v3915 = vpop.f32.mrb[0].mxu0
  %3916 = vdwg.mxu0
  %v3917 = vxor.u32 %v3914, 2147483648
  %v3918 = vmul.f32 %v3917, 1.442695
  %v3919 = vpow.pop %v3918
  %v3920 = vadd.f32 %v3919, 1.0
  %v3921 = vrcp.pop %v3920
  %v3922 = vmul.f32 1.0, %v3921
  %3924 = vrot.lane.b32.xlu0 %v3914, 32
  %v3925 = vpop.permute.xlu0 %3924
  %v3927 = vmul.f32 %v3922, %v3925
  %3929 = vrot.lane.b32.xlu0 %v3927, 64
  %v3930 = vpop.permute.xlu0 %3929
  %v3932 = vadd.f32 %v3914, %v3930
  %v3933 = vtanh.pop %v3932
  %v3934 = vsub.f32 1.0, %v3922
  %3936 = vrot.lane.b32.xlu0 %v3933, 96
  %v3937 = vpop.permute.xlu0 %3936
  %v3939 = vmul.f32 %v3934, %v3937
  %v3940 = vmul.f32 %v3922, %v3630
  %v3941 = vadd.f32 %v3939, %v3940
  %3943 = vrot.lane.b32.xlu0 %v3941, 96
  %v3944 = vpop.permute.xlu0 %3943
  %v3945 = vsel %vm264, %v3944, 0
  %3947 = vmatprep.subr.mxu0 0.0
  %3948 = vmatpush1.msra.mxu0 %v2166
  %3949 = vmatprep.subr.mxu0 0.0
  %3950 = vmatpush1.msra.mxu0 %v2167
  %3951 = vmatprep.subr.mxu0 0.0
  %3952 = vmatpush1.msra.mxu0 %v2168
  %3953 = vmatprep.subr.mxu0 0.0
  %3954 = vmatpush1.msra.mxu0 %v2169
  %3955 = vmatprep.subr.mxu0 0.0
  %3956 = vmatpush1.msra.mxu0 0.0
  %3957 = vmatprep.subr.mxu0 0.0
  %3958 = vmatpush1.msra.mxu0 0.0
  %3959 = vmatprep.subr.mxu0 0.0
  %3960 = vmatpush1.msra.mxu0 0.0
  %3961 = vmatprep.subr.mxu0 0.0
  %3962 = vmatpush1.msra.mxu0 0.0
  %3963 = vmatprep.subr.mxu0 0.0
  %3964 = vmatpush1.msra.mxu0 0.0
  %3965 = vmatprep.subr.mxu0 0.0
  %3966 = vmatpush1.msra.mxu0 0.0
  %3967 = vmatprep.subr.mxu0 0.0
  %3968 = vmatpush1.msra.mxu0 0.0
  %3969 = vmatprep.subr.mxu0 0.0
  %3970 = vmatpush1.msra.mxu0 0.0
  %3971 = vmatprep.subr.mxu0 0.0
  %3972 = vmatpush1.msra.mxu0 0.0
  %3973 = vmatprep.subr.mxu0 0.0
  %3974 = vmatpush1.msra.mxu0 0.0
  %3975 = vmatprep.subr.mxu0 0.0
  %3976 = vmatpush1.msra.mxu0 0.0
  %3977 = vmatprep.subr.mxu0 0.0
  %3978 = vmatpush1.msra.mxu0 0.0
  %3979 = vmatprep.subr.mxu0 0.0
  %3980 = vmatpush1.msra.mxu0 0.0
  %3981 = vmatprep.subr.mxu0 0.0
  %3982 = vmatpush1.msra.mxu0 0.0
  %3983 = vmatprep.subr.mxu0 0.0
  %3984 = vmatpush1.msra.mxu0 0.0
  %3985 = vmatprep.subr.mxu0 0.0
  %3986 = vmatpush1.msra.mxu0 0.0
  %3987 = vmatprep.subr.mxu0 0.0
  %3988 = vmatpush1.msra.mxu0 0.0
  %3989 = vmatprep.subr.mxu0 0.0
  %3990 = vmatpush1.msra.mxu0 0.0
  %3991 = vmatprep.subr.mxu0 0.0
  %3992 = vmatpush1.msra.mxu0 0.0
  %3993 = vmatprep.subr.mxu0 0.0
  %3994 = vmatpush1.msra.mxu0 0.0
  %3995 = vmatprep.subr.mxu0 0.0
  %3996 = vmatpush1.msra.mxu0 0.0
  %3997 = vmatprep.subr.mxu0 0.0
  %3998 = vmatpush1.msra.mxu0 0.0
  %3999 = vmatprep.subr.mxu0 0.0
  %4000 = vmatpush1.msra.mxu0 0.0
  %4001 = vmatprep.subr.mxu0 0.0
  %4002 = vmatpush1.msra.mxu0 0.0
  %4003 = vmatprep.subr.mxu0 0.0
  %4004 = vmatpush1.msra.mxu0 0.0
  %4005 = vmatprep.subr.mxu0 0.0
  %4006 = vmatpush1.msra.mxu0 0.0
  %4007 = vmatprep.subr.mxu0 0.0
  %4008 = vmatpush1.msra.mxu0 0.0
  %4009 = vmatprep.subr.mxu0 0.0
  %4010 = vmatpush1.msra.mxu0 0.0
  %4011 = vmatprep.mubr.f32.mxu0 0.0
  %4012 = vmatmul.mubr.f32.gmra.mrb[0].mxu0 %v3945
  %v4013 = vpop.f32.mrb[0].mxu0
  %v4014 = vadd.f32 %v2175, %v4013
  %v4015 = vpop.f32.mrb[0].mxu0
  %4016 = vdwg.mxu0
  %v4017 = vsel %vm2462, %v4014, -inf
  %4018 = vmax.xlane.f32.xlu0 %v4017
  %v4019 = vpop.xlane.xlu0 %4018
  %v4020 = vsub.f32 %v4014, %v4019
  %v4021 = vmul.f32 %v4020, 1.442695
  %v4022 = vpow.pop %v4021
  %v4023 = vsel %vm2462, %v4022, 0.0
  %4024 = vadd.xlane.f32.xlu0 %v4023
  %v4025 = vpop.xlane.xlu0 %4024
  %v4026 = vlog2.pop %v4025
  %v4027 = vmul.f32 %v4026, 0.6931472
  %v4028 = vsub.f32 %v4020, %v4027
  %s4029 = scalar_lea.vmem %s20, 10
  %4030 = vst.msk [vmem:[%s4029] sm:$0x3] %vm2462, %v4028
  %vm4031 = vcmp.ge.f32.partialorder %v4014, %v4019
  %v4032 = vsel %vm4031, %v2178, 32
  %v4033 = vsel %vm2462, %v4032, 2147483647
  %v4034 = vand.u32 %v4033, 65535
  %v4035 = vshra.s32 %v4033, 16
  %v4036 = vcvt.s32.f32 %v4034
  %v4037 = vcvt.s32.f32 %v4035
  %4038 = vmin.xlane.f32.xlu0 %v4037
  %v4039 = vpop.xlane.xlu0 %4038
  %vm4040 = vcmp.eq.f32.partialorder %v4037, %v4039
  %v4041 = vsel %vm4040, %v4036, inf
  %4042 = vmin.xlane.f32.xlu0 %v4041
  %v4043 = vpop.xlane.xlu0 %4042
  %v4044 = vcvt.f32.s32 %v4043
  %v4045 = vcvt.f32.s32 %v4039
  %v4046 = vshll.u32 %v4045, 16
  %v4047 = vadd.s32 %v4046, %v4044
  %vm4048 = vcmp.eq.s32.totalorder %v2178, %v4047
  %v4049 = vsel %vm4048, 1, 0
  %v4050 = vcvt.s32.f32 %v4049
  %v4051 = vsel %vm264, %v4050, %v3838
  %v4053 = vsel %vm2076, %v4051, 0
  %4055 = vmatprep.subr.mxu0 0.0
  %4056 = vmatpush1.msra.mxu0 %v2082
  %4057 = vmatprep.subr.mxu0 0.0
  %4058 = vmatpush1.msra.mxu0 %v2083
  %4059 = vmatprep.subr.mxu0 0.0
  %4060 = vmatpush1.msra.mxu0 %v2084
  %4061 = vmatprep.subr.mxu0 0.0
  %4062 = vmatpush1.msra.mxu0 %v2085
  %4063 = vmatprep.subr.mxu0 0.0
  %4064 = vmatpush1.msra.mxu0 %v2086
  %4065 = vmatprep.subr.mxu0 0.0
  %4066 = vmatpush1.msra.mxu0 %v2087
  %4067 = vmatprep.subr.mxu0 0.0
  %4068 = vmatpush1.msra.mxu0 %v2088
  %4069 = vmatprep.subr.mxu0 0.0
  %4070 = vmatpush1.msra.mxu0 %v2089
  %4071 = vmatprep.subr.mxu0 0.0
  %4072 = vmatpush1.msra.mxu0 0.0
  %4073 = vmatprep.subr.mxu0 0.0
  %4074 = vmatpush1.msra.mxu0 0.0
  %4075 = vmatprep.subr.mxu0 0.0
  %4076 = vmatpush1.msra.mxu0 0.0
  %4077 = vmatprep.subr.mxu0 0.0
  %4078 = vmatpush1.msra.mxu0 0.0
  %4079 = vmatprep.subr.mxu0 0.0
  %4080 = vmatpush1.msra.mxu0 0.0
  %4081 = vmatprep.subr.mxu0 0.0
  %4082 = vmatpush1.msra.mxu0 0.0
  %4083 = vmatprep.subr.mxu0 0.0
  %4084 = vmatpush1.msra.mxu0 0.0
  %4085 = vmatprep.subr.mxu0 0.0
  %4086 = vmatpush1.msra.mxu0 0.0
  %4087 = vmatprep.subr.mxu0 0.0
  %4088 = vmatpush1.msra.mxu0 0.0
  %4089 = vmatprep.subr.mxu0 0.0
  %4090 = vmatpush1.msra.mxu0 0.0
  %4091 = vmatprep.subr.mxu0 0.0
  %4092 = vmatpush1.msra.mxu0 0.0
  %4093 = vmatprep.subr.mxu0 0.0
  %4094 = vmatpush1.msra.mxu0 0.0
  %4095 = vmatprep.subr.mxu0 0.0
  %4096 = vmatpush1.msra.mxu0 0.0
  %4097 = vmatprep.subr.mxu0 0.0
  %4098 = vmatpush1.msra.mxu0 0.0
  %4099 = vmatprep.subr.mxu0 0.0
  %4100 = vmatpush1.msra.mxu0 0.0
  %4101 = vmatprep.subr.mxu0 0.0
  %4102 = vmatpush1.msra.mxu0 0.0
  %4103 = vmatprep.subr.mxu0 0.0
  %4104 = vmatpush1.msra.mxu0 0.0
  %4105 = vmatprep.subr.mxu0 0.0
  %4106 = vmatpush1.msra.mxu0 0.0
  %4107 = vmatprep.subr.mxu0 0.0
  %4108 = vmatpush1.msra.mxu0 0.0
  %4109 = vmatprep.subr.mxu0 0.0
  %4110 = vmatpush1.msra.mxu0 0.0
  %4111 = vmatprep.subr.mxu0 0.0
  %4112 = vmatpush1.msra.mxu0 0.0
  %4113 = vmatprep.subr.mxu0 0.0
  %4114 = vmatpush1.msra.mxu0 0.0
  %4115 = vmatprep.subr.mxu0 0.0
  %4116 = vmatpush1.msra.mxu0 0.0
  %4117 = vmatprep.subr.mxu0 0.0
  %4118 = vmatpush1.msra.mxu0 0.0
  %4119 = vmatprep.mubr.f32.mxu0 0.0
  %4120 = vmatmul.mubr.f32.gmra.mrb[0].mxu0 %v4053
  %v4121 = vpop.f32.mrb[0].mxu0
  %v4122 = vadd.f32 %v2104, %v4121
  %v4123 = vpop.f32.mrb[0].mxu0
  %4124 = vdwg.mxu0
  %v4125 = vxor.u32 %v4122, 2147483648
  %v4126 = vmul.f32 %v4125, 1.442695
  %v4127 = vpow.pop %v4126
  %v4128 = vadd.f32 %v4127, 1.0
  %v4129 = vrcp.pop %v4128
  %v4130 = vmul.f32 1.0, %v4129
  %4132 = vrot.lane.b32.xlu0 %v4122, 32
  %v4133 = vpop.permute.xlu0 %4132
  %v4135 = vmul.f32 %v4130, %v4133
  %4137 = vrot.lane.b32.xlu0 %v4135, 64
  %v4138 = vpop.permute.xlu0 %4137
  %v4140 = vadd.f32 %v4122, %v4138
  %v4141 = vtanh.pop %v4140
  %v4142 = vsub.f32 1.0, %v4130
  %4144 = vrot.lane.b32.xlu0 %v4141, 96
  %v4145 = vpop.permute.xlu0 %4144
  %v4147 = vmul.f32 %v4142, %v4145
  %v4148 = vmul.f32 %v4130, %v3838
  %v4149 = vadd.f32 %v4147, %v4148
  %4151 = vrot.lane.b32.xlu0 %v4149, 96
  %v4152 = vpop.permute.xlu0 %4151
  %v4154 = vsel %vm264, %v4152, %v3941
  %v4156 = vsel %vm2076, %v4154, 0
  %4158 = vmatprep.subr.mxu0 0.0
  %4159 = vmatpush1.msra.mxu0 %v2143
  %4160 = vmatprep.subr.mxu0 0.0
  %4161 = vmatpush1.msra.mxu0 %v2144
  %4162 = vmatprep.subr.mxu0 0.0
  %4163 = vmatpush1.msra.mxu0 %v2145
  %4164 = vmatprep.subr.mxu0 0.0
  %4165 = vmatpush1.msra.mxu0 %v2146
  %4166 = vmatprep.subr.mxu0 0.0
  %4167 = vmatpush1.msra.mxu0 %v2147
  %4168 = vmatprep.subr.mxu0 0.0
  %4169 = vmatpush1.msra.mxu0 %v2148
  %4170 = vmatprep.subr.mxu0 0.0
  %4171 = vmatpush1.msra.mxu0 %v2149
  %4172 = vmatprep.subr.mxu0 0.0
  %4173 = vmatpush1.msra.mxu0 %v2150
  %4174 = vmatprep.subr.mxu0 0.0
  %4175 = vmatpush1.msra.mxu0 0.0
  %4176 = vmatprep.subr.mxu0 0.0
  %4177 = vmatpush1.msra.mxu0 0.0
  %4178 = vmatprep.subr.mxu0 0.0
  %4179 = vmatpush1.msra.mxu0 0.0
  %4180 = vmatprep.subr.mxu0 0.0
  %4181 = vmatpush1.msra.mxu0 0.0
  %4182 = vmatprep.subr.mxu0 0.0
  %4183 = vmatpush1.msra.mxu0 0.0
  %4184 = vmatprep.subr.mxu0 0.0
  %4185 = vmatpush1.msra.mxu0 0.0
  %4186 = vmatprep.subr.mxu0 0.0
  %4187 = vmatpush1.msra.mxu0 0.0
  %4188 = vmatprep.subr.mxu0 0.0
  %4189 = vmatpush1.msra.mxu0 0.0
  %4190 = vmatprep.subr.mxu0 0.0
  %4191 = vmatpush1.msra.mxu0 0.0
  %4192 = vmatprep.subr.mxu0 0.0
  %4193 = vmatpush1.msra.mxu0 0.0
  %4194 = vmatprep.subr.mxu0 0.0
  %4195 = vmatpush1.msra.mxu0 0.0
  %4196 = vmatprep.subr.mxu0 0.0
  %4197 = vmatpush1.msra.mxu0 0.0
  %4198 = vmatprep.subr.mxu0 0.0
  %4199 = vmatpush1.msra.mxu0 0.0
  %4200 = vmatprep.subr.mxu0 0.0
  %4201 = vmatpush1.msra.mxu0 0.0
  %4202 = vmatprep.subr.mxu0 0.0
  %4203 = vmatpush1.msra.mxu0 0.0
  %4204 = vmatprep.subr.mxu0 0.0
  %4205 = vmatpush1.msra.mxu0 0.0
  %4206 = vmatprep.subr.mxu0 0.0
  %4207 = vmatpush1.msra.mxu0 0.0
  %4208 = vmatprep.subr.mxu0 0.0
  %4209 = vmatpush1.msra.mxu0 0.0
  %4210 = vmatprep.subr.mxu0 0.0
  %4211 = vmatpush1.msra.mxu0 0.0
  %4212 = vmatprep.subr.mxu0 0.0
  %4213 = vmatpush1.msra.mxu0 0.0
  %4214 = vmatprep.subr.mxu0 0.0
  %4215 = vmatpush1.msra.mxu0 0.0
  %4216 = vmatprep.subr.mxu0 0.0
  %4217 = vmatpush1.msra.mxu0 0.0
  %4218 = vmatprep.subr.mxu0 0.0
  %4219 = vmatpush1.msra.mxu0 0.0
  %4220 = vmatprep.subr.mxu0 0.0
  %4221 = vmatpush1.msra.mxu0 0.0
  %4222 = vmatprep.mubr.f32.mxu0 0.0
  %4223 = vmatmul.mubr.f32.gmra.mrb[0].mxu0 %v4156
  %v4224 = vpop.f32.mrb[0].mxu0
  %v4225 = vadd.f32 %v2165, %v4224
  %v4226 = vpop.f32.mrb[0].mxu0
  %4227 = vdwg.mxu0
  %v4228 = vxor.u32 %v4225, 2147483648
  %v4229 = vmul.f32 %v4228, 1.442695
  %v4230 = vpow.pop %v4229
  %v4231 = vadd.f32 %v4230, 1.0
  %v4232 = vrcp.pop %v4231
  %v4233 = vmul.f32 1.0, %v4232
  %4235 = vrot.lane.b32.xlu0 %v4225, 32
  %v4236 = vpop.permute.xlu0 %4235
  %v4238 = vmul.f32 %v4233, %v4236
  %4240 = vrot.lane.b32.xlu0 %v4238, 64
  %v4241 = vpop.permute.xlu0 %4240
  %v4243 = vadd.f32 %v4225, %v4241
  %v4244 = vtanh.pop %v4243
  %v4245 = vsub.f32 1.0, %v4233
  %4247 = vrot.lane.b32.xlu0 %v4244, 96
  %v4248 = vpop.permute.xlu0 %4247
  %v4250 = vmul.f32 %v4245, %v4248
  %v4251 = vmul.f32 %v4233, %v3941
  %v4252 = vadd.f32 %v4250, %v4251
  %4254 = vrot.lane.b32.xlu0 %v4252, 96
  %v4255 = vpop.permute.xlu0 %4254
  %v4256 = vsel %vm264, %v4255, 0
  %4258 = vmatprep.subr.mxu0 0.0
  %4259 = vmatpush1.msra.mxu0 %v2166
  %4260 = vmatprep.subr.mxu0 0.0
  %4261 = vmatpush1.msra.mxu0 %v2167
  %4262 = vmatprep.subr.mxu0 0.0
  %4263 = vmatpush1.msra.mxu0 %v2168
  %4264 = vmatprep.subr.mxu0 0.0
  %4265 = vmatpush1.msra.mxu0 %v2169
  %4266 = vmatprep.subr.mxu0 0.0
  %4267 = vmatpush1.msra.mxu0 0.0
  %4268 = vmatprep.subr.mxu0 0.0
  %4269 = vmatpush1.msra.mxu0 0.0
  %4270 = vmatprep.subr.mxu0 0.0
  %4271 = vmatpush1.msra.mxu0 0.0
  %4272 = vmatprep.subr.mxu0 0.0
  %4273 = vmatpush1.msra.mxu0 0.0
  %4274 = vmatprep.subr.mxu0 0.0
  %4275 = vmatpush1.msra.mxu0 0.0
  %4276 = vmatprep.subr.mxu0 0.0
  %4277 = vmatpush1.msra.mxu0 0.0
  %4278 = vmatprep.subr.mxu0 0.0
  %4279 = vmatpush1.msra.mxu0 0.0
  %4280 = vmatprep.subr.mxu0 0.0
  %4281 = vmatpush1.msra.mxu0 0.0
  %4282 = vmatprep.subr.mxu0 0.0
  %4283 = vmatpush1.msra.mxu0 0.0
  %4284 = vmatprep.subr.mxu0 0.0
  %4285 = vmatpush1.msra.mxu0 0.0
  %4286 = vmatprep.subr.mxu0 0.0
  %4287 = vmatpush1.msra.mxu0 0.0
  %4288 = vmatprep.subr.mxu0 0.0
  %4289 = vmatpush1.msra.mxu0 0.0
  %4290 = vmatprep.subr.mxu0 0.0
  %4291 = vmatpush1.msra.mxu0 0.0
  %4292 = vmatprep.subr.mxu0 0.0
  %4293 = vmatpush1.msra.mxu0 0.0
  %4294 = vmatprep.subr.mxu0 0.0
  %4295 = vmatpush1.msra.mxu0 0.0
  %4296 = vmatprep.subr.mxu0 0.0
  %4297 = vmatpush1.msra.mxu0 0.0
  %4298 = vmatprep.subr.mxu0 0.0
  %4299 = vmatpush1.msra.mxu0 0.0
  %4300 = vmatprep.subr.mxu0 0.0
  %4301 = vmatpush1.msra.mxu0 0.0
  %4302 = vmatprep.subr.mxu0 0.0
  %4303 = vmatpush1.msra.mxu0 0.0
  %4304 = vmatprep.subr.mxu0 0.0
  %4305 = vmatpush1.msra.mxu0 0.0
  %4306 = vmatprep.subr.mxu0 0.0
  %4307 = vmatpush1.msra.mxu0 0.0
  %4308 = vmatprep.subr.mxu0 0.0
  %4309 = vmatpush1.msra.mxu0 0.0
  %4310 = vmatprep.subr.mxu0 0.0
  %4311 = vmatpush1.msra.mxu0 0.0
  %4312 = vmatprep.subr.mxu0 0.0
  %4313 = vmatpush1.msra.mxu0 0.0
  %4314 = vmatprep.subr.mxu0 0.0
  %4315 = vmatpush1.msra.mxu0 0.0
  %4316 = vmatprep.subr.mxu0 0.0
  %4317 = vmatpush1.msra.mxu0 0.0
  %4318 = vmatprep.subr.mxu0 0.0
  %4319 = vmatpush1.msra.mxu0 0.0
  %4320 = vmatprep.subr.mxu0 0.0
  %4321 = vmatpush1.msra.mxu0 0.0
  %4322 = vmatprep.mubr.f32.mxu0 0.0
  %4323 = vmatmul.mubr.f32.gmra.mrb[0].mxu0 %v4256
  %v4324 = vpop.f32.mrb[0].mxu0
  %v4325 = vadd.f32 %v2175, %v4324
  %v4326 = vpop.f32.mrb[0].mxu0
  %4327 = vdwg.mxu0
  %v4328 = vsel %vm2462, %v4325, -inf
  %4329 = vmax.xlane.f32.xlu0 %v4328
  %v4330 = vpop.xlane.xlu0 %4329
  %v4331 = vsub.f32 %v4325, %v4330
  %v4332 = vmul.f32 %v4331, 1.442695
  %v4333 = vpow.pop %v4332
  %v4334 = vsel %vm2462, %v4333, 0.0
  %4335 = vadd.xlane.f32.xlu0 %v4334
  %v4336 = vpop.xlane.xlu0 %4335
  %v4337 = vlog2.pop %v4336
  %v4338 = vmul.f32 %v4337, 0.6931472
  %v4339 = vsub.f32 %v4331, %v4338
  %s4340 = scalar_lea.vmem %s20, 12
  %4341 = vst.msk [vmem:[%s4340] sm:$0x3] %vm2462, %v4339
  %vm4342 = vcmp.ge.f32.partialorder %v4325, %v4330
  %v4343 = vsel %vm4342, %v2178, 32
  %v4344 = vsel %vm2462, %v4343, 2147483647
  %v4345 = vand.u32 %v4344, 65535
  %v4346 = vshra.s32 %v4344, 16
  %v4347 = vcvt.s32.f32 %v4345
  %v4348 = vcvt.s32.f32 %v4346
  %4349 = vmin.xlane.f32.xlu0 %v4348
  %v4350 = vpop.xlane.xlu0 %4349
  %vm4351 = vcmp.eq.f32.partialorder %v4348, %v4350
  %v4352 = vsel %vm4351, %v4347, inf
  %4353 = vmin.xlane.f32.xlu0 %v4352
  %v4354 = vpop.xlane.xlu0 %4353
  %v4355 = vcvt.f32.s32 %v4354
  %v4356 = vcvt.f32.s32 %v4350
  %v4357 = vshll.u32 %v4356, 16
  %v4358 = vadd.s32 %v4357, %v4355
  %vm4359 = vcmp.eq.s32.totalorder %v2178, %v4358
  %v4360 = vsel %vm4359, 1, 0
  %v4361 = vcvt.s32.f32 %v4360
  %v4362 = vsel %vm264, %v4361, %v4149
  %v4364 = vsel %vm2076, %v4362, 0
  %4366 = vmatprep.subr.mxu0 0.0
  %4367 = vmatpush1.msra.mxu0 %v2082
  %4368 = vmatprep.subr.mxu0 0.0
  %4369 = vmatpush1.msra.mxu0 %v2083
  %4370 = vmatprep.subr.mxu0 0.0
  %4371 = vmatpush1.msra.mxu0 %v2084
  %4372 = vmatprep.subr.mxu0 0.0
  %4373 = vmatpush1.msra.mxu0 %v2085
  %4374 = vmatprep.subr.mxu0 0.0
  %4375 = vmatpush1.msra.mxu0 %v2086
  %4376 = vmatprep.subr.mxu0 0.0
  %4377 = vmatpush1.msra.mxu0 %v2087
  %4378 = vmatprep.subr.mxu0 0.0
  %4379 = vmatpush1.msra.mxu0 %v2088
  %4380 = vmatprep.subr.mxu0 0.0
  %4381 = vmatpush1.msra.mxu0 %v2089
  %4382 = vmatprep.subr.mxu0 0.0
  %4383 = vmatpush1.msra.mxu0 0.0
  %4384 = vmatprep.subr.mxu0 0.0
  %4385 = vmatpush1.msra.mxu0 0.0
  %4386 = vmatprep.subr.mxu0 0.0
  %4387 = vmatpush1.msra.mxu0 0.0
  %4388 = vmatprep.subr.mxu0 0.0
  %4389 = vmatpush1.msra.mxu0 0.0
  %4390 = vmatprep.subr.mxu0 0.0
  %4391 = vmatpush1.msra.mxu0 0.0
  %4392 = vmatprep.subr.mxu0 0.0
  %4393 = vmatpush1.msra.mxu0 0.0
  %4394 = vmatprep.subr.mxu0 0.0
  %4395 = vmatpush1.msra.mxu0 0.0
  %4396 = vmatprep.subr.mxu0 0.0
  %4397 = vmatpush1.msra.mxu0 0.0
  %4398 = vmatprep.subr.mxu0 0.0
  %4399 = vmatpush1.msra.mxu0 0.0
  %4400 = vmatprep.subr.mxu0 0.0
  %4401 = vmatpush1.msra.mxu0 0.0
  %4402 = vmatprep.subr.mxu0 0.0
  %4403 = vmatpush1.msra.mxu0 0.0
  %4404 = vmatprep.subr.mxu0 0.0
  %4405 = vmatpush1.msra.mxu0 0.0
  %4406 = vmatprep.subr.mxu0 0.0
  %4407 = vmatpush1.msra.mxu0 0.0
  %4408 = vmatprep.subr.mxu0 0.0
  %4409 = vmatpush1.msra.mxu0 0.0
  %4410 = vmatprep.subr.mxu0 0.0
  %4411 = vmatpush1.msra.mxu0 0.0
  %4412 = vmatprep.subr.mxu0 0.0
  %4413 = vmatpush1.msra.mxu0 0.0
  %4414 = vmatprep.subr.mxu0 0.0
  %4415 = vmatpush1.msra.mxu0 0.0
  %4416 = vmatprep.subr.mxu0 0.0
  %4417 = vmatpush1.msra.mxu0 0.0
  %4418 = vmatprep.subr.mxu0 0.0
  %4419 = vmatpush1.msra.mxu0 0.0
  %4420 = vmatprep.subr.mxu0 0.0
  %4421 = vmatpush1.msra.mxu0 0.0
  %4422 = vmatprep.subr.mxu0 0.0
  %4423 = vmatpush1.msra.mxu0 0.0
  %4424 = vmatprep.subr.mxu0 0.0
  %4425 = vmatpush1.msra.mxu0 0.0
  %4426 = vmatprep.subr.mxu0 0.0
  %4427 = vmatpush1.msra.mxu0 0.0
  %4428 = vmatprep.subr.mxu0 0.0
  %4429 = vmatpush1.msra.mxu0 0.0
  %4430 = vmatprep.mubr.f32.mxu0 0.0
  %4431 = vmatmul.mubr.f32.gmra.mrb[0].mxu0 %v4364
  %v4432 = vpop.f32.mrb[0].mxu0
  %v4433 = vadd.f32 %v2104, %v4432
  %v4434 = vpop.f32.mrb[0].mxu0
  %4435 = vdwg.mxu0
  %v4436 = vxor.u32 %v4433, 2147483648
  %v4437 = vmul.f32 %v4436, 1.442695
  %v4438 = vpow.pop %v4437
  %v4439 = vadd.f32 %v4438, 1.0
  %v4440 = vrcp.pop %v4439
  %v4441 = vmul.f32 1.0, %v4440
  %4443 = vrot.lane.b32.xlu0 %v4433, 32
  %v4444 = vpop.permute.xlu0 %4443
  %v4446 = vmul.f32 %v4441, %v4444
  %4448 = vrot.lane.b32.xlu0 %v4446, 64
  %v4449 = vpop.permute.xlu0 %4448
  %v4451 = vadd.f32 %v4433, %v4449
  %v4452 = vtanh.pop %v4451
  %v4453 = vsub.f32 1.0, %v4441
  %4455 = vrot.lane.b32.xlu0 %v4452, 96
  %v4456 = vpop.permute.xlu0 %4455
  %v4458 = vmul.f32 %v4453, %v4456
  %v4459 = vmul.f32 %v4441, %v4149
  %v4460 = vadd.f32 %v4458, %v4459
  %4462 = vrot.lane.b32.xlu0 %v4460, 96
  %v4463 = vpop.permute.xlu0 %4462
  %v4465 = vsel %vm264, %v4463, %v4252
  %v4467 = vsel %vm2076, %v4465, 0
  %4469 = vmatprep.subr.mxu0 0.0
  %4470 = vmatpush1.msra.mxu0 %v2143
  %4471 = vmatprep.subr.mxu0 0.0
  %4472 = vmatpush1.msra.mxu0 %v2144
  %4473 = vmatprep.subr.mxu0 0.0
  %4474 = vmatpush1.msra.mxu0 %v2145
  %4475 = vmatprep.subr.mxu0 0.0
  %4476 = vmatpush1.msra.mxu0 %v2146
  %4477 = vmatprep.subr.mxu0 0.0
  %4478 = vmatpush1.msra.mxu0 %v2147
  %4479 = vmatprep.subr.mxu0 0.0
  %4480 = vmatpush1.msra.mxu0 %v2148
  %4481 = vmatprep.subr.mxu0 0.0
  %4482 = vmatpush1.msra.mxu0 %v2149
  %4483 = vmatprep.subr.mxu0 0.0
  %4484 = vmatpush1.msra.mxu0 %v2150
  %4485 = vmatprep.subr.mxu0 0.0
  %4486 = vmatpush1.msra.mxu0 0.0
  %4487 = vmatprep.subr.mxu0 0.0
  %4488 = vmatpush1.msra.mxu0 0.0
  %4489 = vmatprep.subr.mxu0 0.0
  %4490 = vmatpush1.msra.mxu0 0.0
  %4491 = vmatprep.subr.mxu0 0.0
  %4492 = vmatpush1.msra.mxu0 0.0
  %4493 = vmatprep.subr.mxu0 0.0
  %4494 = vmatpush1.msra.mxu0 0.0
  %4495 = vmatprep.subr.mxu0 0.0
  %4496 = vmatpush1.msra.mxu0 0.0
  %4497 = vmatprep.subr.mxu0 0.0
  %4498 = vmatpush1.msra.mxu0 0.0
  %4499 = vmatprep.subr.mxu0 0.0
  %4500 = vmatpush1.msra.mxu0 0.0
  %4501 = vmatprep.subr.mxu0 0.0
  %4502 = vmatpush1.msra.mxu0 0.0
  %4503 = vmatprep.subr.mxu0 0.0
  %4504 = vmatpush1.msra.mxu0 0.0
  %4505 = vmatprep.subr.mxu0 0.0
  %4506 = vmatpush1.msra.mxu0 0.0
  %4507 = vmatprep.subr.mxu0 0.0
  %4508 = vmatpush1.msra.mxu0 0.0
  %4509 = vmatprep.subr.mxu0 0.0
  %4510 = vmatpush1.msra.mxu0 0.0
  %4511 = vmatprep.subr.mxu0 0.0
  %4512 = vmatpush1.msra.mxu0 0.0
  %4513 = vmatprep.subr.mxu0 0.0
  %4514 = vmatpush1.msra.mxu0 0.0
  %4515 = vmatprep.subr.mxu0 0.0
  %4516 = vmatpush1.msra.mxu0 0.0
  %4517 = vmatprep.subr.mxu0 0.0
  %4518 = vmatpush1.msra.mxu0 0.0
  %4519 = vmatprep.subr.mxu0 0.0
  %4520 = vmatpush1.msra.mxu0 0.0
  %4521 = vmatprep.subr.mxu0 0.0
  %4522 = vmatpush1.msra.mxu0 0.0
  %4523 = vmatprep.subr.mxu0 0.0
  %4524 = vmatpush1.msra.mxu0 0.0
  %4525 = vmatprep.subr.mxu0 0.0
  %4526 = vmatpush1.msra.mxu0 0.0
  %4527 = vmatprep.subr.mxu0 0.0
  %4528 = vmatpush1.msra.mxu0 0.0
  %4529 = vmatprep.subr.mxu0 0.0
  %4530 = vmatpush1.msra.mxu0 0.0
  %4531 = vmatprep.subr.mxu0 0.0
  %4532 = vmatpush1.msra.mxu0 0.0
  %4533 = vmatprep.mubr.f32.mxu0 0.0
  %4534 = vmatmul.mubr.f32.gmra.mrb[0].mxu0 %v4467
  %v4535 = vpop.f32.mrb[0].mxu0
  %v4536 = vadd.f32 %v2165, %v4535
  %v4537 = vpop.f32.mrb[0].mxu0
  %4538 = vdwg.mxu0
  %v4539 = vxor.u32 %v4536, 2147483648
  %v4540 = vmul.f32 %v4539, 1.442695
  %v4541 = vpow.pop %v4540
  %v4542 = vadd.f32 %v4541, 1.0
  %v4543 = vrcp.pop %v4542
  %v4544 = vmul.f32 1.0, %v4543
  %4546 = vrot.lane.b32.xlu0 %v4536, 32
  %v4547 = vpop.permute.xlu0 %4546
  %v4549 = vmul.f32 %v4544, %v4547
  %4551 = vrot.lane.b32.xlu0 %v4549, 64
  %v4552 = vpop.permute.xlu0 %4551
  %v4554 = vadd.f32 %v4536, %v4552
  %v4555 = vtanh.pop %v4554
  %v4556 = vsub.f32 1.0, %v4544
  %4558 = vrot.lane.b32.xlu0 %v4555, 96
  %v4559 = vpop.permute.xlu0 %4558
  %v4561 = vmul.f32 %v4556, %v4559
  %v4562 = vmul.f32 %v4544, %v4252
  %v4563 = vadd.f32 %v4561, %v4562
  %4565 = vrot.lane.b32.xlu0 %v4563, 96
  %v4566 = vpop.permute.xlu0 %4565
  %v4567 = vsel %vm264, %v4566, 0
  %4569 = vmatprep.subr.mxu0 0.0
  %4570 = vmatpush1.msra.mxu0 %v2166
  %4571 = vmatprep.subr.mxu0 0.0
  %4572 = vmatpush1.msra.mxu0 %v2167
  %4573 = vmatprep.subr.mxu0 0.0
  %4574 = vmatpush1.msra.mxu0 %v2168
  %4575 = vmatprep.subr.mxu0 0.0
  %4576 = vmatpush1.msra.mxu0 %v2169
  %4577 = vmatprep.subr.mxu0 0.0
  %4578 = vmatpush1.msra.mxu0 0.0
  %4579 = vmatprep.subr.mxu0 0.0
  %4580 = vmatpush1.msra.mxu0 0.0
  %4581 = vmatprep.subr.mxu0 0.0
  %4582 = vmatpush1.msra.mxu0 0.0
  %4583 = vmatprep.subr.mxu0 0.0
  %4584 = vmatpush1.msra.mxu0 0.0
  %4585 = vmatprep.subr.mxu0 0.0
  %4586 = vmatpush1.msra.mxu0 0.0
  %4587 = vmatprep.subr.mxu0 0.0
  %4588 = vmatpush1.msra.mxu0 0.0
  %4589 = vmatprep.subr.mxu0 0.0
  %4590 = vmatpush1.msra.mxu0 0.0
  %4591 = vmatprep.subr.mxu0 0.0
  %4592 = vmatpush1.msra.mxu0 0.0
  %4593 = vmatprep.subr.mxu0 0.0
  %4594 = vmatpush1.msra.mxu0 0.0
  %4595 = vmatprep.subr.mxu0 0.0
  %4596 = vmatpush1.msra.mxu0 0.0
  %4597 = vmatprep.subr.mxu0 0.0
  %4598 = vmatpush1.msra.mxu0 0.0
  %4599 = vmatprep.subr.mxu0 0.0
  %4600 = vmatpush1.msra.mxu0 0.0
  %4601 = vmatprep.subr.mxu0 0.0
  %4602 = vmatpush1.msra.mxu0 0.0
  %4603 = vmatprep.subr.mxu0 0.0
  %4604 = vmatpush1.msra.mxu0 0.0
  %4605 = vmatprep.subr.mxu0 0.0
  %4606 = vmatpush1.msra.mxu0 0.0
  %4607 = vmatprep.subr.mxu0 0.0
  %4608 = vmatpush1.msra.mxu0 0.0
  %4609 = vmatprep.subr.mxu0 0.0
  %4610 = vmatpush1.msra.mxu0 0.0
  %4611 = vmatprep.subr.mxu0 0.0
  %4612 = vmatpush1.msra.mxu0 0.0
  %4613 = vmatprep.subr.mxu0 0.0
  %4614 = vmatpush1.msra.mxu0 0.0
  %4615 = vmatprep.subr.mxu0 0.0
  %4616 = vmatpush1.msra.mxu0 0.0
  %4617 = vmatprep.subr.mxu0 0.0
  %4618 = vmatpush1.msra.mxu0 0.0
  %4619 = vmatprep.subr.mxu0 0.0
  %4620 = vmatpush1.msra.mxu0 0.0
  %4621 = vmatprep.subr.mxu0 0.0
  %4622 = vmatpush1.msra.mxu0 0.0
  %4623 = vmatprep.subr.mxu0 0.0
  %4624 = vmatpush1.msra.mxu0 0.0
  %4625 = vmatprep.subr.mxu0 0.0
  %4626 = vmatpush1.msra.mxu0 0.0
  %4627 = vmatprep.subr.mxu0 0.0
  %4628 = vmatpush1.msra.mxu0 0.0
  %4629 = vmatprep.subr.mxu0 0.0
  %4630 = vmatpush1.msra.mxu0 0.0
  %4631 = vmatprep.subr.mxu0 0.0
  %4632 = vmatpush1.msra.mxu0 0.0
  %4633 = vmatprep.mubr.f32.mxu0 0.0
  %4634 = vmatmul.mubr.f32.gmra.mrb[0].mxu0 %v4567
  %v4635 = vpop.f32.mrb[0].mxu0
  %v4636 = vadd.f32 %v2175, %v4635
  %v4637 = vpop.f32.mrb[0].mxu0
  %4638 = vdwg.mxu0
  %v4639 = vsel %vm2462, %v4636, -inf
  %4640 = vmax.xlane.f32.xlu0 %v4639
  %v4641 = vpop.xlane.xlu0 %4640
  %v4642 = vsub.f32 %v4636, %v4641
  %v4643 = vmul.f32 %v4642, 1.442695
  %v4644 = vpow.pop %v4643
  %v4645 = vsel %vm2462, %v4644, 0.0
  %4646 = vadd.xlane.f32.xlu0 %v4645
  %v4647 = vpop.xlane.xlu0 %4646
  %v4648 = vlog2.pop %v4647
  %v4649 = vmul.f32 %v4648, 0.6931472
  %v4650 = vsub.f32 %v4642, %v4649
  %s4651 = scalar_lea.vmem %s20, 14
  %4652 = vst.msk [vmem:[%s4651] sm:$0x3] %vm2462, %v4650
  // Predicated region
  $region82: #{seq2seq_gru_forward.1} parent=0 // pred_check
    _
  $region83: #{seq2seq_gru_forward.1} parent=0 // pred_check_branch
    %4654 = sbr.rel (0) target = $region85
  $region84: #{seq2seq_gru_forward.1} parent=0 // pred_region
    _
  $region85: #{seq2seq_gru_forward.1} parent=0 // pred_fallthru
    _
  // Predicated region
  $region86: #{seq2seq_gru_forward.1} parent=0 // pred_check
    _
  $region87: #{seq2seq_gru_forward.1} parent=0 // pred_check_branch
    %4656 = sbr.rel (0) target = $region89
  $region88: #{seq2seq_gru_forward.1} parent=0 // pred_region
    _
  $region89: #{seq2seq_gru_forward.1} parent=0 // pred_fallthru
    _

</llo_original>
